<compile_context>
chip_gen: v7x
topology: tpu7x:2x2x1
jax: 0.10.0
libtpu: 0.0.40
codegen_flags: <defaults>
</compile_context>

<pallas_src>
import functools
import math

import numpy as np
import jax
import jax.numpy as jnp
from jax.experimental import pallas as pl
from jax.experimental.pallas import tpu as pltpu


# ----------------------------------------------------------------------------- #
# Small helpers
# ----------------------------------------------------------------------------- #
def _round_up(x, m):
    return (x + m - 1) // m * m


def _layernorm(v, g, b, eps=1e-5):
    mu = jnp.mean(v, axis=-1, keepdims=True)
    var = jnp.mean((v - mu) ** 2, axis=-1, keepdims=True)
    return (v - mu) * jax.lax.rsqrt(var + eps) * g + b


def _gelu_exact(x):
    # nn.GELU default (exact, erf-based)
    return 0.5 * x * (1.0 + jax.lax.erf(x * (1.0 / math.sqrt(2.0))))


# ----------------------------------------------------------------------------- #
# Pallas kernels
# ----------------------------------------------------------------------------- #
def _linear_kernel(x_ref, w_ref, b_ref, o_ref):
    o_ref[...] = (
        jnp.dot(x_ref[...], w_ref[...], preferred_element_type=jnp.float32)
        + b_ref[...]
    ).astype(o_ref.dtype)


def pallas_linear(x, w, b, tm=512):
    """y = x @ w + b, x: (M, K), w: (K, N), b: (N,).  Tiled over M, parallel grid."""
    M, K = x.shape
    N = w.shape[1]
    tm = min(tm, _round_up(M, 8))
    M_pad = _round_up(M, tm)
    if M_pad != M:
        x = jnp.pad(x, ((0, M_pad - M), (0, 0)))
    out = pl.pallas_call(
        _linear_kernel,
        out_shape=jax.ShapeDtypeStruct((M_pad, N), x.dtype),
        grid=(M_pad // tm,),
        in_specs=[
            pl.BlockSpec((tm, K), lambda i: (i, 0)),
            pl.BlockSpec((K, N), lambda i: (0, 0)),
            pl.BlockSpec((1, N), lambda i: (0, 0)),
        ],
        out_specs=pl.BlockSpec((tm, N), lambda i: (i, 0)),
        compiler_params=pltpu.CompilerParams(dimension_semantics=("parallel",)),
    )(x, w, b.reshape(1, N))
    return out[:M]


def _transformer_block_kernel(
    x_ref, ln1g_ref, ln1b_ref, wqkv_ref, bqkv_ref, wo_ref, bo_ref,
    ln2g_ref, ln2b_ref, w1_ref, b1_ref, w2_ref, b2_ref, o_ref,
    *, num_heads, ws,
):
    """One grid step = one (batch b, row-strip i) of ws rows covering Wp//ws windows."""
    _, _, wp, C = x_ref.shape           # block shape (1, ws, Wp, C)
    nww = wp // ws                      # windows in this strip (static)
    T = ws * ws                         # tokens per window (64)
    M = nww * T                         # tokens per strip
    hd = C // num_heads
    scale = 1.0 / math.sqrt(hd)

    xs = x_ref[0]                       # (ws, Wp, C)

    # ---- fused window partition: strip -> (M, C), window-major, row-major inside ---
    parts = [xs[:, j * ws:(j + 1) * ws, :].reshape(T, C) for j in range(nww)]
    xw = parts[0] if nww == 1 else jnp.concatenate(parts, axis=0)      # (M, C)

    # ---- attention: pre-norm -> fused QKV -> head/window-batched SDPA -> out proj --
    xn = _layernorm(xw, ln1g_ref[...], ln1b_ref[...])
    qkv = (
        jnp.dot(xn, wqkv_ref[...], preferred_element_type=jnp.float32)
        + bqkv_ref[...]
    )                                    # (M, 3C)  layout: [q heads | k heads | v heads]

    def gather_heads(base):
        # build (num_heads * nww, T, hd) batch: batch index = head * nww + window
        cols = [
            qkv[:, base + h * hd: base + (h + 1) * hd].reshape(nww, T, hd)
            for h in range(num_heads)
        ]
        return cols[0] if num_heads == 1 else jnp.concatenate(cols, axis=0)

    q = gather_heads(0) * scale
    k = gather_heads(C)
    v = gather_heads(2 * C)

    s = jnp.einsum("bqd,bkd->bqk", q, k, preferred_element_type=jnp.float32)
    s = s - jnp.max(s, axis=-1, keepdims=True)
    p = jnp.exp(s)
    p = p * pl.reciprocal(jnp.sum(p, axis=-1, keepdims=True), approx=True)
    ctx = jnp.einsum("bqk,bkd->bqd", p, v, preferred_element_type=jnp.float32)  # (H*nww, T, hd)

    heads_out = [ctx[h * nww:(h + 1) * nww].reshape(M, hd) for h in range(num_heads)]
    ctx2 = heads_out[0] if num_heads == 1 else jnp.concatenate(heads_out, axis=-1)  # (M, C)

    attn = (
        jnp.dot(ctx2, wo_ref[...], preferred_element_type=jnp.float32)
        + bo_ref[...]
    )
    x1 = xw + attn

    # ---- MLP ----
    xn2 = _layernorm(x1, ln2g_ref[...], ln2b_ref[...])
    h1 = (
        jnp.dot(xn2, w1_ref[...], preferred_element_type=jnp.float32)
        + b1_ref[...]
    )
    h1 = _gelu_exact(h1)
    h2 = (
        jnp.dot(h1, w2_ref[...], preferred_element_type=jnp.float32)
        + b2_ref[...]
    )
    y = x1 + h2                          # (M, C)

    # ---- fused window un-partition: (M, C) -> strip (ws, Wp, C), single dense store -
    wins = [y[j * T:(j + 1) * T].reshape(ws, ws, C) for j in range(nww)]
    ys = wins[0] if nww == 1 else jnp.concatenate(wins, axis=1)
    o_ref[0] = ys.astype(o_ref.dtype)


def transformer_block_grid(xg, p, num_heads=4, ws=8):
    """xg: (B, Hp, Wp, C) with Hp, Wp multiples of ws.  Grid = (B, Hp//ws) strips."""
    B, Hp, Wp, C = xg.shape
    hidden = p["w1"].shape[1]
    kernel = functools.partial(_transformer_block_kernel, num_heads=num_heads, ws=ws)

    def wspec(shape):
        return pl.BlockSpec(shape, lambda b, i: (0, 0))

    in_specs = [
        pl.BlockSpec((1, ws, Wp, C), lambda b, i: (b, i, 0, 0)),
        wspec((1, C)), wspec((1, C)),
        wspec((C, 3 * C)), wspec((1, 3 * C)),
        wspec((C, C)), wspec((1, C)),
        wspec((1, C)), wspec((1, C)),
        wspec((C, hidden)), wspec((1, hidden)),
        wspec((hidden, C)), wspec((1, C)),
    ]
    return pl.pallas_call(
        kernel,
        out_shape=jax.ShapeDtypeStruct((B, Hp, Wp, C), xg.dtype),
        grid=(B, Hp // ws),
        in_specs=in_specs,
        out_specs=pl.BlockSpec((1, ws, Wp, C), lambda b, i: (b, i, 0, 0)),
        compiler_params=pltpu.CompilerParams(
            dimension_semantics=("parallel", "parallel")),
    )(
        xg,
        p["ln1g"].reshape(1, C), p["ln1b"].reshape(1, C),
        p["wqkv"], p["bqkv"].reshape(1, 3 * C),
        p["wo"], p["bo"].reshape(1, C),
        p["ln2g"].reshape(1, C), p["ln2b"].reshape(1, C),
        p["w1"], p["b1"].reshape(1, hidden),
        p["w2"], p["b2"].reshape(1, C),
    )


def run_transformer_block(x, p, h, w, num_heads=4, ws=8):
    """x: (B, h*w, C); reference always calls shift=False.  Zero-pad to ws grid
    (padded tokens participate unmasked, exactly like the PyTorch reference)."""
    B, L, C = x.shape
    xg = x.reshape(B, h, w, C)
    pad_h = (-h) % ws
    pad_w = (-w) % ws
    if pad_h or pad_w:
        xg = jnp.pad(xg, ((0, 0), (0, pad_h), (0, pad_w), (0, 0)))
    yg = transformer_block_grid(xg, p, num_heads=num_heads, ws=ws)
    y = yg[:, :h, :w, :]
    return y.reshape(B, h * w, C)


# ----------------------------------------------------------------------------- #
# Glue: bicubic residual (PyTorch F.interpolate semantics, a=-0.75, no align_corners)
# ----------------------------------------------------------------------------- #
def _bicubic_weight_matrix(in_size, out_size):
    a = -0.75

    def cubic(t):
        t = abs(t)
        if t <= 1.0:
            return (a + 2.0) * t ** 3 - (a + 3.0) * t ** 2 + 1.0
        if t < 2.0:
            return a * t ** 3 - 5.0 * a * t ** 2 + 8.0 * a * t - 4.0 * a
        return 0.0

    W = np.zeros((out_size, in_size), dtype=np.float32)
    for o in range(out_size):
        src = (o + 0.5) * in_size / out_size - 0.5
        i0 = int(np.floor(src)) - 1
        for k in range(4):
            idx = i0 + k
            wgt = cubic(src - idx)
            idx_c = min(max(idx, 0), in_size - 1)
            W[o, idx_c] += wgt
    return jnp.asarray(W)


def bicubic_upsample(x, scale):
    B, C, H, W = x.shape
    Wh = _bicubic_weight_matrix(H, H * scale)
    Ww = _bicubic_weight_matrix(W, W * scale)
    return jnp.einsum("oh,bchw,pw->bcop", Wh, x, Ww)


# ----------------------------------------------------------------------------- #
# Parameter init (deterministic, synthetic; matches module's trunc_normal/zeros)
# ----------------------------------------------------------------------------- #
def _init_linear(key, in_dim, out_dim, std=0.02):
    w = std * jax.random.truncated_normal(key, -2.0, 2.0, (in_dim, out_dim), jnp.float32)
    b = jnp.zeros((out_dim,), jnp.float32)
    return w, b


def _init_block(key, dim, mlp_ratio=4.0):
    ks = jax.random.split(key, 4)
    hidden = int(dim * mlp_ratio)
    wqkv, bqkv = _init_linear(ks[0], dim, 3 * dim)
    wo, bo = _init_linear(ks[1], dim, dim)
    w1, b1 = _init_linear(ks[2], dim, hidden)
    w2, b2 = _init_linear(ks[3], hidden, dim)
    return dict(
        ln1g=jnp.ones((dim,), jnp.float32), ln1b=jnp.zeros((dim,), jnp.float32),
        wqkv=wqkv, bqkv=bqkv, wo=wo, bo=bo,
        ln2g=jnp.ones((dim,), jnp.float32), ln2b=jnp.zeros((dim,), jnp.float32),
        w1=w1, b1=b1, w2=w2, b2=b2,
    )


def init_params(key, embed_dim=64):
    ks = jax.random.split(key, 11)
    params = {}
    params["pe_w"], params["pe_b"] = _init_linear(ks[0], 4 * 4 * 3, embed_dim)
    params["stage1"] = [_init_block(ks[1 + i], embed_dim) for i in range(4)]
    params["merge_w"], params["merge_b"] = _init_linear(ks[5], 4 * embed_dim, 2 * embed_dim)
    params["stage2"] = [_init_block(ks[6 + i], 2 * embed_dim) for i in range(2)]
    params["expand_w"], params["expand_b"] = _init_linear(ks[8], 2 * embed_dim, 4 * embed_dim)
    params["stage3"] = [_init_block(ks[9], embed_dim)]
    params["pu_w"], params["pu_b"] = _init_linear(ks[10], embed_dim, 3 * 16 * 16)
    return params


# ----------------------------------------------------------------------------- #
# Full forward pass
# ----------------------------------------------------------------------------- #
def transformer_sr_forward(params, x, scale):
    B, C, H, W = x.shape
    embed_dim = 64

    pad_h = (-H) % 4
    pad_w = (-W) % 4
    if pad_h or pad_w:
        x = jnp.pad(x, ((0, 0), (0, 0), (0, pad_h), (0, pad_w)), mode="reflect")
    x_input = x
    H_pad, W_pad = x.shape[2], x.shape[3]
    h, w = H_pad // 4, W_pad // 4

    # patch embed: (B,C,H,W) -> (B*h*w, 48) -> Linear -> (B, h*w, 64)
    p = 4
    xe = x.reshape(B, C, h, p, w, p).transpose(0, 2, 4, 1, 3, 5).reshape(B * h * w, C * p * p)
    xe = pallas_linear(xe, params["pe_w"], params["pe_b"]).reshape(B, h * w, embed_dim)

    # stage 1
    for bp in params["stage1"]:
        xe = run_transformer_block(xe, bp, h, w, num_heads=4, ws=8)

    # merge (pixel-unshuffle 2x2 + Linear 256->128)
    xm = xe.reshape(B, h, w, embed_dim)
    ph2, pw2 = h % 2, w % 2
    if ph2 or pw2:
        xm = jnp.pad(xm, ((0, 0), (0, ph2), (0, pw2), (0, 0)))
    hm, wm = xm.shape[1] // 2, xm.shape[2] // 2
    xm = jnp.concatenate(
        [xm[:, 0::2, 0::2, :], xm[:, 1::2, 0::2, :],
         xm[:, 0::2, 1::2, :], xm[:, 1::2, 1::2, :]], axis=-1
    ).reshape(B * hm * wm, 4 * embed_dim)
    xm = pallas_linear(xm, params["merge_w"], params["merge_b"]).reshape(B, hm * wm, 2 * embed_dim)

    # stage 2
    for bp in params["stage2"]:
        xm = run_transformer_block(xm, bp, hm, wm, num_heads=4, ws=8)

    # expand (Linear 128->256 + 2x2 pixel-shuffle)
    xex = pallas_linear(xm.reshape(B * hm * wm, 2 * embed_dim),
                        params["expand_w"], params["expand_b"])
    xex = xex.reshape(B, hm, wm, 2, 2, embed_dim).transpose(0, 1, 3, 2, 4, 5)
    xex = xex.reshape(B, hm * 2 * wm * 2, embed_dim)

    # stage 3
    for bp in params["stage3"]:
        xex = run_transformer_block(xex, bp, hm * 2, wm * 2, num_heads=4, ws=8)

    # patch unembed: Linear 64 -> 3*16*16, assemble image
    h3, w3 = hm * 2, wm * 2
    pu = 16
    xo = pallas_linear(xex.reshape(B * h3 * w3, embed_dim), params["pu_w"], params["pu_b"])
    xo = xo.reshape(B, h3, w3, 3, pu, pu).transpose(0, 3, 1, 4, 2, 5)
    xo = xo.reshape(B, 3, h3 * pu, w3 * pu)

    # bicubic residual
    up = bicubic_upsample(x_input, scale)
    out = xo[:, :, :H * scale, :W * scale] + up[:, :, :H * scale, :W * scale]
    return out


# ----------------------------------------------------------------------------- #
if __name__ == "__main__":
    scale = 2
    params = init_params(jax.random.PRNGKey(42))
    x = jax.random.normal(jax.random.PRNGKey(0), (2, 3, 16, 16), jnp.float32)

    fwd = jax.jit(functools.partial(transformer_sr_forward, scale=scale))
    out = jax.block_until_ready(fwd(params, x))

    assert out.shape == (2, 3, 16 * scale, 16 * scale), out.shape
    assert bool(jnp.all(jnp.isfinite(out)))
    print("KERNEL_OK")
</pallas_src>

<mosaic_0001>
module attributes {stable_mosaic.version = 11 : i64} {
  func.func @_linear_kernel(%arg0: i32, %arg1: memref<32x48xf32, #tpu.memory_space<vmem>>, %arg2: memref<48x64xf32, #tpu.memory_space<vmem>>, %arg3: memref<1x64xf32, #tpu.memory_space<vmem>>, %arg4: memref<32x64xf32, #tpu.memory_space<vmem>>) attributes {dimension_semantics = [#tpu.dimension_semantics<parallel>], iteration_bounds = array<i64: 1>, scalar_prefetch = 0 : i64, scratch_operands = 0 : i64, tpu.core_type = #tpu.core_type<tc>, window_params = [{transform_indices = @transform_0, window_bounds = array<i64: 32, 48>}, {pipeline_mode = #tpu.pipeline_mode<synchronous>, transform_indices = @transform_1, window_bounds = array<i64: 48, 64>}, {pipeline_mode = #tpu.pipeline_mode<synchronous>, transform_indices = @transform_2, window_bounds = array<i64: 1, 64>}, {transform_indices = @transform_3, window_bounds = array<i64: 32, 64>}]} {
    %c0 = arith.constant 0 : index
    %c0_0 = arith.constant 0 : index
    %0 = vector.load %arg1[%c0, %c0_0] : memref<32x48xf32, #tpu.memory_space<vmem>>, vector<32x48xf32>
    %c0_1 = arith.constant 0 : index
    %c0_2 = arith.constant 0 : index
    %1 = vector.load %arg2[%c0_1, %c0_2] : memref<48x64xf32, #tpu.memory_space<vmem>>, vector<48x64xf32>
    %cst = arith.constant dense<0.000000e+00> : vector<32x64xf32>
    %2 = tpu.matmul %0, %1, %cst {dimension_numbers = #tpu.dot_dimension_numbers<[1], [0], [0], [1], [0, 0, 1, 1], [], []>} : vector<32x48xf32>, vector<48x64xf32>, vector<32x64xf32> -> vector<32x64xf32>
    %c0_3 = arith.constant 0 : index
    %c0_4 = arith.constant 0 : index
    %3 = vector.load %arg3[%c0_3, %c0_4] : memref<1x64xf32, #tpu.memory_space<vmem>>, vector<1x64xf32>
    %4 = vector.broadcast %3 : vector<1x64xf32> to vector<32x64xf32>
    %5 = arith.addf %2, %4 : vector<32x64xf32>
    %c0_5 = arith.constant 0 : index
    %c0_6 = arith.constant 0 : index
    %6 = vector.load %arg4[%c0_5, %c0_6] : memref<32x64xf32, #tpu.memory_space<vmem>>, vector<32x64xf32>
    tpu.vector_store %arg4[%c0_5, %c0_6], %5 {strides = array<i32>} : memref<32x64xf32, #tpu.memory_space<vmem>>, vector<32x64xf32>,
    return
  }
  func.func @transform_0(%arg0: i32) -> (i32, i32) {
    %c0_i32 = arith.constant 0 : i32
    %c0_i32_0 = arith.constant 0 : i32
    return %arg0, %c0_i32 : i32, i32
  }
  func.func @transform_1(%arg0: i32) -> (i32, i32) {
    %c0_i32 = arith.constant 0 : i32
    %c0_i32_0 = arith.constant 0 : i32
    %c0_i32_1 = arith.constant 0 : i32
    return %c0_i32, %c0_i32_0 : i32, i32
  }
  func.func @transform_2(%arg0: i32) -> (i32, i32) {
    %c0_i32 = arith.constant 0 : i32
    %c0_i32_0 = arith.constant 0 : i32
    %c0_i32_1 = arith.constant 0 : i32
    return %c0_i32, %c0_i32_0 : i32, i32
  }
  func.func @transform_3(%arg0: i32) -> (i32, i32) {
    %c0_i32 = arith.constant 0 : i32
    %c0_i32_0 = arith.constant 0 : i32
    return %arg0, %c0_i32 : i32, i32
  }
}

module attributes {stable_mosaic.version = 11 : i64} {
  func.func @_transformer_block_kernel(%arg0: i32, %arg1: i32, %arg2: memref<1x8x8x64xf32, #tpu.memory_space<vmem>>, %arg3: memref<1x64xf32, #tpu.memory_space<vmem>>, %arg4: memref<1x64xf32, #tpu.memory_space<vmem>>, %arg5: memref<64x192xf32, #tpu.memory_space<vmem>>, %arg6: memref<1x192xf32, #tpu.memory_space<vmem>>, %arg7: memref<64x64xf32, #tpu.memory_space<vmem>>, %arg8: memref<1x64xf32, #tpu.memory_space<vmem>>, %arg9: memref<1x64xf32, #tpu.memory_space<vmem>>, %arg10: memref<1x64xf32, #tpu.memory_space<vmem>>, %arg11: memref<64x256xf32, #tpu.memory_space<vmem>>, %arg12: memref<1x256xf32, #tpu.memory_space<vmem>>, %arg13: memref<256x64xf32, #tpu.memory_space<vmem>>, %arg14: memref<1x64xf32, #tpu.memory_space<vmem>>, %arg15: memref<1x8x8x64xf32, #tpu.memory_space<vmem>>) attributes {dimension_semantics = [#tpu.dimension_semantics<parallel>, #tpu.dimension_semantics<parallel>], iteration_bounds = array<i64: 2, 1>, scalar_prefetch = 0 : i64, scratch_operands = 0 : i64, tpu.core_type = #tpu.core_type<tc>, window_params = [{transform_indices = @transform_0, window_bounds = array<i64: 1, 8, 8, 64>}, {pipeline_mode = #tpu.pipeline_mode<synchronous>, transform_indices = @transform_1, window_bounds = array<i64: 1, 64>}, {pipeline_mode = #tpu.pipeline_mode<synchronous>, transform_indices = @transform_2, window_bounds = array<i64: 1, 64>}, {pipeline_mode = #tpu.pipeline_mode<synchronous>, transform_indices = @transform_3, window_bounds = array<i64: 64, 192>}, {pipeline_mode = #tpu.pipeline_mode<synchronous>, transform_indices = @transform_4, window_bounds = array<i64: 1, 192>}, {pipeline_mode = #tpu.pipeline_mode<synchronous>, transform_indices = @transform_5, window_bounds = array<i64: 64, 64>}, {pipeline_mode = #tpu.pipeline_mode<synchronous>, transform_indices = @transform_6, window_bounds = array<i64: 1, 64>}, {pipeline_mode = #tpu.pipeline_mode<synchronous>, transform_indices = @transform_7, window_bounds = array<i64: 1, 64>}, {pipeline_mode = #tpu.pipeline_mode<synchronous>, transform_indices = @transform_8, window_bounds = array<i64: 1, 64>}, {pipeline_mode = #tpu.pipeline_mode<synchronous>, transform_indices = @transform_9, window_bounds = array<i64: 64, 256>}, {pipeline_mode = #tpu.pipeline_mode<synchronous>, transform_indices = @transform_10, window_bounds = array<i64: 1, 256>}, {pipeline_mode = #tpu.pipeline_mode<synchronous>, transform_indices = @transform_11, window_bounds = array<i64: 256, 64>}, {pipeline_mode = #tpu.pipeline_mode<synchronous>, transform_indices = @transform_12, window_bounds = array<i64: 1, 64>}, {transform_indices = @transform_13, window_bounds = array<i64: 1, 8, 8, 64>}]} {
    %c0 = arith.constant 0 : index
    %c0_0 = arith.constant 0 : index
    %c0_1 = arith.constant 0 : index
    %c0_2 = arith.constant 0 : index
    %0 = vector.load %arg2[%c0, %c0_0, %c0_1, %c0_2] : memref<1x8x8x64xf32, #tpu.memory_space<vmem>>, vector<1x8x8x64xf32>
    %1 = vector.shape_cast %0 : vector<1x8x8x64xf32> to vector<8x8x64xf32>
    %2 = vector.shape_cast %1 : vector<8x8x64xf32> to vector<64x64xf32>
    %c0_3 = arith.constant 0 : index
    %c0_4 = arith.constant 0 : index
    %3 = vector.load %arg3[%c0_3, %c0_4] : memref<1x64xf32, #tpu.memory_space<vmem>>, vector<1x64xf32>
    %c0_5 = arith.constant 0 : index
    %c0_6 = arith.constant 0 : index
    %4 = vector.load %arg4[%c0_5, %c0_6] : memref<1x64xf32, #tpu.memory_space<vmem>>, vector<1x64xf32>
    %cst = arith.constant dense<0.000000e+00> : vector<64xf32>
    %5 = vector.multi_reduction <add>, %2, %cst [1] : vector<64x64xf32> to vector<64xf32>
    %6 = vector.shape_cast %5 : vector<64xf32> to vector<64x1xf32>
    %cst_7 = arith.constant 6.400000e+01 : f32
    %7 = vector.broadcast %cst_7 : f32 to vector<64x1xf32>
    %8 = arith.divf %6, %7 : vector<64x1xf32>
    %9 = vector.broadcast %8 : vector<64x1xf32> to vector<64x64xf32>
    %10 = arith.subf %2, %9 : vector<64x64xf32>
    %11 = arith.mulf %10, %10 : vector<64x64xf32>
    %cst_8 = arith.constant dense<0.000000e+00> : vector<64xf32>
    %12 = vector.multi_reduction <add>, %11, %cst_8 [1] : vector<64x64xf32> to vector<64xf32>
    %13 = vector.shape_cast %12 : vector<64xf32> to vector<64x1xf32>
    %cst_9 = arith.constant 6.400000e+01 : f32
    %14 = vector.broadcast %cst_9 : f32 to vector<64x1xf32>
    %15 = arith.divf %13, %14 : vector<64x1xf32>
    %16 = vector.broadcast %8 : vector<64x1xf32> to vector<64x64xf32>
    %17 = arith.subf %2, %16 : vector<64x64xf32>
    %cst_10 = arith.constant 9.99999974E-6 : f32
    %18 = vector.broadcast %cst_10 : f32 to vector<64x1xf32>
    %19 = arith.addf %15, %18 : vector<64x1xf32>
    %20 = math.rsqrt %19 : vector<64x1xf32>
    %21 = vector.broadcast %20 : vector<64x1xf32> to vector<64x64xf32>
    %22 = arith.mulf %17, %21 : vector<64x64xf32>
    %23 = vector.broadcast %3 : vector<1x64xf32> to vector<64x64xf32>
    %24 = arith.mulf %22, %23 : vector<64x64xf32>
    %25 = vector.broadcast %4 : vector<1x64xf32> to vector<64x64xf32>
    %26 = arith.addf %24, %25 : vector<64x64xf32>
    %c0_11 = arith.constant 0 : index
    %c0_12 = arith.constant 0 : index
    %27 = vector.load %arg5[%c0_11, %c0_12] : memref<64x192xf32, #tpu.memory_space<vmem>>, vector<64x192xf32>
    %cst_13 = arith.constant dense<0.000000e+00> : vector<64x192xf32>
    %28 = tpu.matmul %26, %27, %cst_13 {dimension_numbers = #tpu.dot_dimension_numbers<[1], [0], [0], [1], [0, 0, 1, 1], [], []>} : vector<64x64xf32>, vector<64x192xf32>, vector<64x192xf32> -> vector<64x192xf32>
    %c0_14 = arith.constant 0 : index
    %c0_15 = arith.constant 0 : index
    %29 = vector.load %arg6[%c0_14, %c0_15] : memref<1x192xf32, #tpu.memory_space<vmem>>, vector<1x192xf32>
    %30 = vector.broadcast %29 : vector<1x192xf32> to vector<64x192xf32>
    %31 = arith.addf %28, %30 : vector<64x192xf32>
    %32 = vector.extract_strided_slice %31 {offsets = [0, 0], sizes = [64, 16], strides = [1, 1]} : vector<64x192xf32> to vector<64x16xf32>
    %33 = vector.shape_cast %32 : vector<64x16xf32> to vector<1x64x16xf32>
    %34 = vector.extract_strided_slice %31 {offsets = [0, 16], sizes = [64, 16], strides = [1, 1]} : vector<64x192xf32> to vector<64x16xf32>
    %35 = vector.shape_cast %34 : vector<64x16xf32> to vector<1x64x16xf32>
    %36 = vector.extract_strided_slice %31 {offsets = [0, 32], sizes = [64, 16], strides = [1, 1]} : vector<64x192xf32> to vector<64x16xf32>
    %37 = vector.shape_cast %36 : vector<64x16xf32> to vector<1x64x16xf32>
    %38 = vector.extract_strided_slice %31 {offsets = [0, 48], sizes = [64, 16], strides = [1, 1]} : vector<64x192xf32> to vector<64x16xf32>
    %39 = vector.shape_cast %38 : vector<64x16xf32> to vector<1x64x16xf32>
    %40 = tpu.concatenate %33, %35, %37, %39 in 0 : vector<1x64x16xf32>, vector<1x64x16xf32>, vector<1x64x16xf32>, vector<1x64x16xf32> -> vector<4x64x16xf32>
    %cst_16 = arith.constant 2.500000e-01 : f32
    %41 = vector.broadcast %cst_16 : f32 to vector<4x64x16xf32>
    %42 = arith.mulf %40, %41 : vector<4x64x16xf32>
    %43 = vector.extract_strided_slice %31 {offsets = [0, 64], sizes = [64, 16], strides = [1, 1]} : vector<64x192xf32> to vector<64x16xf32>
    %44 = vector.shape_cast %43 : vector<64x16xf32> to vector<1x64x16xf32>
    %45 = vector.extract_strided_slice %31 {offsets = [0, 80], sizes = [64, 16], strides = [1, 1]} : vector<64x192xf32> to vector<64x16xf32>
    %46 = vector.shape_cast %45 : vector<64x16xf32> to vector<1x64x16xf32>
    %47 = vector.extract_strided_slice %31 {offsets = [0, 96], sizes = [64, 16], strides = [1, 1]} : vector<64x192xf32> to vector<64x16xf32>
    %48 = vector.shape_cast %47 : vector<64x16xf32> to vector<1x64x16xf32>
    %49 = vector.extract_strided_slice %31 {offsets = [0, 112], sizes = [64, 16], strides = [1, 1]} : vector<64x192xf32> to vector<64x16xf32>
    %50 = vector.shape_cast %49 : vector<64x16xf32> to vector<1x64x16xf32>
    %51 = tpu.concatenate %44, %46, %48, %50 in 0 : vector<1x64x16xf32>, vector<1x64x16xf32>, vector<1x64x16xf32>, vector<1x64x16xf32> -> vector<4x64x16xf32>
    %52 = vector.extract_strided_slice %31 {offsets = [0, 128], sizes = [64, 16], strides = [1, 1]} : vector<64x192xf32> to vector<64x16xf32>
    %53 = vector.shape_cast %52 : vector<64x16xf32> to vector<1x64x16xf32>
    %54 = vector.extract_strided_slice %31 {offsets = [0, 144], sizes = [64, 16], strides = [1, 1]} : vector<64x192xf32> to vector<64x16xf32>
    %55 = vector.shape_cast %54 : vector<64x16xf32> to vector<1x64x16xf32>
    %56 = vector.extract_strided_slice %31 {offsets = [0, 160], sizes = [64, 16], strides = [1, 1]} : vector<64x192xf32> to vector<64x16xf32>
    %57 = vector.shape_cast %56 : vector<64x16xf32> to vector<1x64x16xf32>
    %58 = vector.extract_strided_slice %31 {offsets = [0, 176], sizes = [64, 16], strides = [1, 1]} : vector<64x192xf32> to vector<64x16xf32>
    %59 = vector.shape_cast %58 : vector<64x16xf32> to vector<1x64x16xf32>
    %60 = tpu.concatenate %53, %55, %57, %59 in 0 : vector<1x64x16xf32>, vector<1x64x16xf32>, vector<1x64x16xf32>, vector<1x64x16xf32> -> vector<4x64x16xf32>
    "tpu.trace_start"() <{level = 10 : i32, message = "bqd,bkd->bqk"}> : () -> ()
    %cst_17 = arith.constant dense<0.000000e+00> : vector<4x64x64xf32>
    %61 = tpu.matmul %42, %51, %cst_17 {dimension_numbers = #tpu.dot_dimension_numbers<[2], [2], [1], [1], [0, 0, 0, 1, 1, 1], [0], [0]>} : vector<4x64x16xf32>, vector<4x64x16xf32>, vector<4x64x64xf32> -> vector<4x64x64xf32>
    "tpu.trace_stop"() : () -> ()
    %cst_18 = arith.constant dense<0xFF800000> : vector<4x64xf32>
    %62 = vector.multi_reduction <maximumf>, %61, %cst_18 [2] : vector<4x64x64xf32> to vector<4x64xf32>
    %63 = vector.shape_cast %62 : vector<4x64xf32> to vector<4x64x1xf32>
    %64 = vector.broadcast %63 : vector<4x64x1xf32> to vector<4x64x64xf32>
    %65 = arith.subf %61, %64 : vector<4x64x64xf32>
    %66 = math.exp %65 : vector<4x64x64xf32>
    %cst_19 = arith.constant dense<0.000000e+00> : vector<4x64xf32>
    %67 = vector.multi_reduction <add>, %66, %cst_19 [2] : vector<4x64x64xf32> to vector<4x64xf32>
    %68 = vector.shape_cast %67 : vector<4x64xf32> to vector<4x64x1xf32>
    %69 = tpu.reciprocal %68 {approx = true} : vector<4x64x1xf32> -> vector<4x64x1xf32>
    %70 = vector.broadcast %69 : vector<4x64x1xf32> to vector<4x64x64xf32>
    %71 = arith.mulf %66, %70 : vector<4x64x64xf32>
    "tpu.trace_start"() <{level = 10 : i32, message = "bqk,bkd->bqd"}> : () -> ()
    %cst_20 = arith.constant dense<0.000000e+00> : vector<4x64x16xf32>
    %72 = tpu.matmul %71, %60, %cst_20 {dimension_numbers = #tpu.dot_dimension_numbers<[2], [1], [1], [2], [0, 0, 0, 1, 1, 2], [0], [0]>} : vector<4x64x64xf32>, vector<4x64x16xf32>, vector<4x64x16xf32> -> vector<4x64x16xf32>
    "tpu.trace_stop"() : () -> ()
    %73 = vector.extract_strided_slice %72 {offsets = [0, 0, 0], sizes = [1, 64, 16], strides = [1, 1, 1]} : vector<4x64x16xf32> to vector<1x64x16xf32>
    %74 = vector.shape_cast %73 : vector<1x64x16xf32> to vector<64x16xf32>
    %75 = vector.extract_strided_slice %72 {offsets = [1, 0, 0], sizes = [1, 64, 16], strides = [1, 1, 1]} : vector<4x64x16xf32> to vector<1x64x16xf32>
    %76 = vector.shape_cast %75 : vector<1x64x16xf32> to vector<64x16xf32>
    %77 = vector.extract_strided_slice %72 {offsets = [2, 0, 0], sizes = [1, 64, 16], strides = [1, 1, 1]} : vector<4x64x16xf32> to vector<1x64x16xf32>
    %78 = vector.shape_cast %77 : vector<1x64x16xf32> to vector<64x16xf32>
    %79 = vector.extract_strided_slice %72 {offsets = [3, 0, 0], sizes = [1, 64, 16], strides = [1, 1, 1]} : vector<4x64x16xf32> to vector<1x64x16xf32>
    %80 = vector.shape_cast %79 : vector<1x64x16xf32> to vector<64x16xf32>
    %81 = tpu.concatenate %74, %76, %78, %80 in 1 : vector<64x16xf32>, vector<64x16xf32>, vector<64x16xf32>, vector<64x16xf32> -> vector<64x64xf32>
    %c0_21 = arith.constant 0 : index
    %c0_22 = arith.constant 0 : index
    %82 = vector.load %arg7[%c0_21, %c0_22] : memref<64x64xf32, #tpu.memory_space<vmem>>, vector<64x64xf32>
    %cst_23 = arith.constant dense<0.000000e+00> : vector<64x64xf32>
    %83 = tpu.matmul %81, %82, %cst_23 {dimension_numbers = #tpu.dot_dimension_numbers<[1], [0], [0], [1], [0, 0, 1, 1], [], []>} : vector<64x64xf32>, vector<64x64xf32>, vector<64x64xf32> -> vector<64x64xf32>
    %c0_24 = arith.constant 0 : index
    %c0_25 = arith.constant 0 : index
    %84 = vector.load %arg8[%c0_24, %c0_25] : memref<1x64xf32, #tpu.memory_space<vmem>>, vector<1x64xf32>
    %85 = vector.broadcast %84 : vector<1x64xf32> to vector<64x64xf32>
    %86 = arith.addf %83, %85 : vector<64x64xf32>
    %87 = arith.addf %2, %86 : vector<64x64xf32>
    %c0_26 = arith.constant 0 : index
    %c0_27 = arith.constant 0 : index
    %88 = vector.load %arg9[%c0_26, %c0_27] : memref<1x64xf32, #tpu.memory_space<vmem>>, vector<1x64xf32>
    %c0_28 = arith.constant 0 : index
    %c0_29 = arith.constant 0 : index
    %89 = vector.load %arg10[%c0_28, %c0_29] : memref<1x64xf32, #tpu.memory_space<vmem>>, vector<1x64xf32>
    %cst_30 = arith.constant dense<0.000000e+00> : vector<64xf32>
    %90 = vector.multi_reduction <add>, %87, %cst_30 [1] : vector<64x64xf32> to vector<64xf32>
    %91 = vector.shape_cast %90 : vector<64xf32> to vector<64x1xf32>
    %cst_31 = arith.constant 6.400000e+01 : f32
    %92 = vector.broadcast %cst_31 : f32 to vector<64x1xf32>
    %93 = arith.divf %91, %92 : vector<64x1xf32>
    %94 = vector.broadcast %93 : vector<64x1xf32> to vector<64x64xf32>
    %95 = arith.subf %87, %94 : vector<64x64xf32>
    %96 = arith.mulf %95, %95 : vector<64x64xf32>
    %cst_32 = arith.constant dense<0.000000e+00> : vector<64xf32>
    %97 = vector.multi_reduction <add>, %96, %cst_32 [1] : vector<64x64xf32> to vector<64xf32>
    %98 = vector.shape_cast %97 : vector<64xf32> to vector<64x1xf32>
    %cst_33 = arith.constant 6.400000e+01 : f32
    %99 = vector.broadcast %cst_33 : f32 to vector<64x1xf32>
    %100 = arith.divf %98, %99 : vector<64x1xf32>
    %101 = vector.broadcast %93 : vector<64x1xf32> to vector<64x64xf32>
    %102 = arith.subf %87, %101 : vector<64x64xf32>
    %cst_34 = arith.constant 9.99999974E-6 : f32
    %103 = vector.broadcast %cst_34 : f32 to vector<64x1xf32>
    %104 = arith.addf %100, %103 : vector<64x1xf32>
    %105 = math.rsqrt %104 : vector<64x1xf32>
    %106 = vector.broadcast %105 : vector<64x1xf32> to vector<64x64xf32>
    %107 = arith.mulf %102, %106 : vector<64x64xf32>
    %108 = vector.broadcast %88 : vector<1x64xf32> to vector<64x64xf32>
    %109 = arith.mulf %107, %108 : vector<64x64xf32>
    %110 = vector.broadcast %89 : vector<1x64xf32> to vector<64x64xf32>
    %111 = arith.addf %109, %110 : vector<64x64xf32>
    %c0_35 = arith.constant 0 : index
    %c0_36 = arith.constant 0 : index
    %112 = vector.load %arg11[%c0_35, %c0_36] : memref<64x256xf32, #tpu.memory_space<vmem>>, vector<64x256xf32>
    %cst_37 = arith.constant dense<0.000000e+00> : vector<64x256xf32>
    %113 = tpu.matmul %111, %112, %cst_37 {dimension_numbers = #tpu.dot_dimension_numbers<[1], [0], [0], [1], [0, 0, 1, 1], [], []>} : vector<64x64xf32>, vector<64x256xf32>, vector<64x256xf32> -> vector<64x256xf32>
    %c0_38 = arith.constant 0 : index
    %c0_39 = arith.constant 0 : index
    %114 = vector.load %arg12[%c0_38, %c0_39] : memref<1x256xf32, #tpu.memory_space<vmem>>, vector<1x256xf32>
    %115 = vector.broadcast %114 : vector<1x256xf32> to vector<64x256xf32>
    %116 = arith.addf %113, %115 : vector<64x256xf32>
    %cst_40 = arith.constant 5.000000e-01 : f32
    %117 = vector.broadcast %cst_40 : f32 to vector<64x256xf32>
    %118 = arith.mulf %117, %116 : vector<64x256xf32>
    %cst_41 = arith.constant 0.707106769 : f32
    %119 = vector.broadcast %cst_41 : f32 to vector<64x256xf32>
    %120 = arith.mulf %116, %119 : vector<64x256xf32>
    %121 = math.erf %120 : vector<64x256xf32>
    %cst_42 = arith.constant 1.000000e+00 : f32
    %122 = vector.broadcast %cst_42 : f32 to vector<64x256xf32>
    %123 = arith.addf %122, %121 : vector<64x256xf32>
    %124 = arith.mulf %118, %123 : vector<64x256xf32>
    %c0_43 = arith.constant 0 : index
    %c0_44 = arith.constant 0 : index
    %125 = vector.load %arg13[%c0_43, %c0_44] : memref<256x64xf32, #tpu.memory_space<vmem>>, vector<256x64xf32>
    %cst_45 = arith.constant dense<0.000000e+00> : vector<64x64xf32>
    %126 = tpu.matmul %124, %125, %cst_45 {dimension_numbers = #tpu.dot_dimension_numbers<[1], [0], [0], [1], [0, 0, 1, 1], [], []>} : vector<64x256xf32>, vector<256x64xf32>, vector<64x64xf32> -> vector<64x64xf32>
    %c0_46 = arith.constant 0 : index
    %c0_47 = arith.constant 0 : index
    %127 = vector.load %arg14[%c0_46, %c0_47] : memref<1x64xf32, #tpu.memory_space<vmem>>, vector<1x64xf32>
    %128 = vector.broadcast %127 : vector<1x64xf32> to vector<64x64xf32>
    %129 = arith.addf %126, %128 : vector<64x64xf32>
    %130 = arith.addf %87, %129 : vector<64x64xf32>
    %131 = vector.shape_cast %130 : vector<64x64xf32> to vector<8x8x64xf32>
    %c0_48 = arith.constant 0 : index
    %c0_49 = arith.constant 0 : index
    %c0_50 = arith.constant 0 : index
    %c0_51 = arith.constant 0 : index
    %132 = vector.load %arg15[%c0_48, %c0_49, %c0_50, %c0_51] : memref<1x8x8x64xf32, #tpu.memory_space<vmem>>, vector<1x8x8x64xf32>
    %133 = vector.shape_cast %132 : vector<1x8x8x64xf32> to vector<8x8x64xf32>
    %134 = vector.shape_cast %131 : vector<8x8x64xf32> to vector<1x8x8x64xf32>
    tpu.vector_store %arg15[%c0_48, %c0_49, %c0_50, %c0_51], %134 {strides = array<i32>} : memref<1x8x8x64xf32, #tpu.memory_space<vmem>>, vector<1x8x8x64xf32>,
    return
  }
  func.func @transform_0(%arg0: i32, %arg1: i32) -> (i32, i32, i32, i32) {
    %c0_i32 = arith.constant 0 : i32
    %c0_i32_0 = arith.constant 0 : i32
    %c0_i32_1 = arith.constant 0 : i32
    return %arg0, %arg1, %c0_i32, %c0_i32_0 : i32, i32, i32, i32
  }
  func.func @transform_1(%arg0: i32, %arg1: i32) -> (i32, i32) {
    %c0_i32 = arith.constant 0 : i32
    %c0_i32_0 = arith.constant 0 : i32
    %c0_i32_1 = arith.constant 0 : i32
    return %c0_i32, %c0_i32_0 : i32, i32
  }
  func.func @transform_2(%arg0: i32, %arg1: i32) -> (i32, i32) {
    %c0_i32 = arith.constant 0 : i32
    %c0_i32_0 = arith.constant 0 : i32
    %c0_i32_1 = arith.constant 0 : i32
    return %c0_i32, %c0_i32_0 : i32, i32
  }
  func.func @transform_3(%arg0: i32, %arg1: i32) -> (i32, i32) {
    %c0_i32 = arith.constant 0 : i32
    %c0_i32_0 = arith.constant 0 : i32
    %c0_i32_1 = arith.constant 0 : i32
    return %c0_i32, %c0_i32_0 : i32, i32
  }
  func.func @transform_4(%arg0: i32, %arg1: i32) -> (i32, i32) {
    %c0_i32 = arith.constant 0 : i32
    %c0_i32_0 = arith.constant 0 : i32
    %c0_i32_1 = arith.constant 0 : i32
    return %c0_i32, %c0_i32_0 : i32, i32
  }
  func.func @transform_5(%arg0: i32, %arg1: i32) -> (i32, i32) {
    %c0_i32 = arith.constant 0 : i32
    %c0_i32_0 = arith.constant 0 : i32
    %c0_i32_1 = arith.constant 0 : i32
    return %c0_i32, %c0_i32_0 : i32, i32
  }
  func.func @transform_6(%arg0: i32, %arg1: i32) -> (i32, i32) {
    %c0_i32 = arith.constant 0 : i32
    %c0_i32_0 = arith.constant 0 : i32
    %c0_i32_1 = arith.constant 0 : i32
    return %c0_i32, %c0_i32_0 : i32, i32
  }
  func.func @transform_7(%arg0: i32, %arg1: i32) -> (i32, i32) {
    %c0_i32 = arith.constant 0 : i32
    %c0_i32_0 = arith.constant 0 : i32
    %c0_i32_1 = arith.constant 0 : i32
    return %c0_i32, %c0_i32_0 : i32, i32
  }
  func.func @transform_8(%arg0: i32, %arg1: i32) -> (i32, i32) {
    %c0_i32 = arith.constant 0 : i32
    %c0_i32_0 = arith.constant 0 : i32
    %c0_i32_1 = arith.constant 0 : i32
    return %c0_i32, %c0_i32_0 : i32, i32
  }
  func.func @transform_9(%arg0: i32, %arg1: i32) -> (i32, i32) {
    %c0_i32 = arith.constant 0 : i32
    %c0_i32_0 = arith.constant 0 : i32
    %c0_i32_1 = arith.constant 0 : i32
    return %c0_i32, %c0_i32_0 : i32, i32
  }
  func.func @transform_10(%arg0: i32, %arg1: i32) -> (i32, i32) {
    %c0_i32 = arith.constant 0 : i32
    %c0_i32_0 = arith.constant 0 : i32
    %c0_i32_1 = arith.constant 0 : i32
    return %c0_i32, %c0_i32_0 : i32, i32
  }
  func.func @transform_11(%arg0: i32, %arg1: i32) -> (i32, i32) {
    %c0_i32 = arith.constant 0 : i32
    %c0_i32_0 = arith.constant 0 : i32
    %c0_i32_1 = arith.constant 0 : i32
    return %c0_i32, %c0_i32_0 : i32, i32
  }
  func.func @transform_12(%arg0: i32, %arg1: i32) -> (i32, i32) {
    %c0_i32 = arith.constant 0 : i32
    %c0_i32_0 = arith.constant 0 : i32
    %c0_i32_1 = arith.constant 0 : i32
    return %c0_i32, %c0_i32_0 : i32, i32
  }
  func.func @transform_13(%arg0: i32, %arg1: i32) -> (i32, i32, i32, i32) {
    %c0_i32 = arith.constant 0 : i32
    %c0_i32_0 = arith.constant 0 : i32
    %c0_i32_1 = arith.constant 0 : i32
    return %arg0, %arg1, %c0_i32, %c0_i32_0 : i32, i32, i32, i32
  }
}

module attributes {stable_mosaic.version = 11 : i64} {
  func.func @_linear_kernel(%arg0: i32, %arg1: memref<8x256xf32, #tpu.memory_space<vmem>>, %arg2: memref<256x128xf32, #tpu.memory_space<vmem>>, %arg3: memref<1x128xf32, #tpu.memory_space<vmem>>, %arg4: memref<8x128xf32, #tpu.memory_space<vmem>>) attributes {dimension_semantics = [#tpu.dimension_semantics<parallel>], iteration_bounds = array<i64: 1>, scalar_prefetch = 0 : i64, scratch_operands = 0 : i64, tpu.core_type = #tpu.core_type<tc>, window_params = [{transform_indices = @transform_0, window_bounds = array<i64: 8, 256>}, {pipeline_mode = #tpu.pipeline_mode<synchronous>, transform_indices = @transform_1, window_bounds = array<i64: 256, 128>}, {pipeline_mode = #tpu.pipeline_mode<synchronous>, transform_indices = @transform_2, window_bounds = array<i64: 1, 128>}, {transform_indices = @transform_3, window_bounds = array<i64: 8, 128>}]} {
    %c0 = arith.constant 0 : index
    %c0_0 = arith.constant 0 : index
    %0 = vector.load %arg1[%c0, %c0_0] : memref<8x256xf32, #tpu.memory_space<vmem>>, vector<8x256xf32>
    %c0_1 = arith.constant 0 : index
    %c0_2 = arith.constant 0 : index
    %1 = vector.load %arg2[%c0_1, %c0_2] : memref<256x128xf32, #tpu.memory_space<vmem>>, vector<256x128xf32>
    %cst = arith.constant dense<0.000000e+00> : vector<8x128xf32>
    %2 = tpu.matmul %0, %1, %cst {dimension_numbers = #tpu.dot_dimension_numbers<[1], [0], [0], [1], [0, 0, 1, 1], [], []>} : vector<8x256xf32>, vector<256x128xf32>, vector<8x128xf32> -> vector<8x128xf32>
    %c0_3 = arith.constant 0 : index
    %c0_4 = arith.constant 0 : index
    %3 = vector.load %arg3[%c0_3, %c0_4] : memref<1x128xf32, #tpu.memory_space<vmem>>, vector<1x128xf32>
    %4 = vector.broadcast %3 : vector<1x128xf32> to vector<8x128xf32>
    %5 = arith.addf %2, %4 : vector<8x128xf32>
    %c0_5 = arith.constant 0 : index
    %c0_6 = arith.constant 0 : index
    %6 = vector.load %arg4[%c0_5, %c0_6] : memref<8x128xf32, #tpu.memory_space<vmem>>, vector<8x128xf32>
    tpu.vector_store %arg4[%c0_5, %c0_6], %5 {strides = array<i32>} : memref<8x128xf32, #tpu.memory_space<vmem>>, vector<8x128xf32>,
    return
  }
  func.func @transform_0(%arg0: i32) -> (i32, i32) {
    %c0_i32 = arith.constant 0 : i32
    %c0_i32_0 = arith.constant 0 : i32
    return %arg0, %c0_i32 : i32, i32
  }
  func.func @transform_1(%arg0: i32) -> (i32, i32) {
    %c0_i32 = arith.constant 0 : i32
    %c0_i32_0 = arith.constant 0 : i32
    %c0_i32_1 = arith.constant 0 : i32
    return %c0_i32, %c0_i32_0 : i32, i32
  }
  func.func @transform_2(%arg0: i32) -> (i32, i32) {
    %c0_i32 = arith.constant 0 : i32
    %c0_i32_0 = arith.constant 0 : i32
    %c0_i32_1 = arith.constant 0 : i32
    return %c0_i32, %c0_i32_0 : i32, i32
  }
  func.func @transform_3(%arg0: i32) -> (i32, i32) {
    %c0_i32 = arith.constant 0 : i32
    %c0_i32_0 = arith.constant 0 : i32
    return %arg0, %c0_i32 : i32, i32
  }
}

module attributes {stable_mosaic.version = 11 : i64} {
  func.func @_transformer_block_kernel(%arg0: i32, %arg1: i32, %arg2: memref<1x8x8x128xf32, #tpu.memory_space<vmem>>, %arg3: memref<1x128xf32, #tpu.memory_space<vmem>>, %arg4: memref<1x128xf32, #tpu.memory_space<vmem>>, %arg5: memref<128x384xf32, #tpu.memory_space<vmem>>, %arg6: memref<1x384xf32, #tpu.memory_space<vmem>>, %arg7: memref<128x128xf32, #tpu.memory_space<vmem>>, %arg8: memref<1x128xf32, #tpu.memory_space<vmem>>, %arg9: memref<1x128xf32, #tpu.memory_space<vmem>>, %arg10: memref<1x128xf32, #tpu.memory_space<vmem>>, %arg11: memref<128x512xf32, #tpu.memory_space<vmem>>, %arg12: memref<1x512xf32, #tpu.memory_space<vmem>>, %arg13: memref<512x128xf32, #tpu.memory_space<vmem>>, %arg14: memref<1x128xf32, #tpu.memory_space<vmem>>, %arg15: memref<1x8x8x128xf32, #tpu.memory_space<vmem>>) attributes {dimension_semantics = [#tpu.dimension_semantics<parallel>, #tpu.dimension_semantics<parallel>], iteration_bounds = array<i64: 2, 1>, scalar_prefetch = 0 : i64, scratch_operands = 0 : i64, tpu.core_type = #tpu.core_type<tc>, window_params = [{transform_indices = @transform_0, window_bounds = array<i64: 1, 8, 8, 128>}, {pipeline_mode = #tpu.pipeline_mode<synchronous>, transform_indices = @transform_1, window_bounds = array<i64: 1, 128>}, {pipeline_mode = #tpu.pipeline_mode<synchronous>, transform_indices = @transform_2, window_bounds = array<i64: 1, 128>}, {pipeline_mode = #tpu.pipeline_mode<synchronous>, transform_indices = @transform_3, window_bounds = array<i64: 128, 384>}, {pipeline_mode = #tpu.pipeline_mode<synchronous>, transform_indices = @transform_4, window_bounds = array<i64: 1, 384>}, {pipeline_mode = #tpu.pipeline_mode<synchronous>, transform_indices = @transform_5, window_bounds = array<i64: 128, 128>}, {pipeline_mode = #tpu.pipeline_mode<synchronous>, transform_indices = @transform_6, window_bounds = array<i64: 1, 128>}, {pipeline_mode = #tpu.pipeline_mode<synchronous>, transform_indices = @transform_7, window_bounds = array<i64: 1, 128>}, {pipeline_mode = #tpu.pipeline_mode<synchronous>, transform_indices = @transform_8, window_bounds = array<i64: 1, 128>}, {pipeline_mode = #tpu.pipeline_mode<synchronous>, transform_indices = @transform_9, window_bounds = array<i64: 128, 512>}, {pipeline_mode = #tpu.pipeline_mode<synchronous>, transform_indices = @transform_10, window_bounds = array<i64: 1, 512>}, {pipeline_mode = #tpu.pipeline_mode<synchronous>, transform_indices = @transform_11, window_bounds = array<i64: 512, 128>}, {pipeline_mode = #tpu.pipeline_mode<synchronous>, transform_indices = @transform_12, window_bounds = array<i64: 1, 128>}, {transform_indices = @transform_13, window_bounds = array<i64: 1, 8, 8, 128>}]} {
    %c0 = arith.constant 0 : index
    %c0_0 = arith.constant 0 : index
    %c0_1 = arith.constant 0 : index
    %c0_2 = arith.constant 0 : index
    %0 = vector.load %arg2[%c0, %c0_0, %c0_1, %c0_2] : memref<1x8x8x128xf32, #tpu.memory_space<vmem>>, vector<1x8x8x128xf32>
    %1 = vector.shape_cast %0 : vector<1x8x8x128xf32> to vector<8x8x128xf32>
    %2 = vector.shape_cast %1 : vector<8x8x128xf32> to vector<64x128xf32>
    %c0_3 = arith.constant 0 : index
    %c0_4 = arith.constant 0 : index
    %3 = vector.load %arg3[%c0_3, %c0_4] : memref<1x128xf32, #tpu.memory_space<vmem>>, vector<1x128xf32>
    %c0_5 = arith.constant 0 : index
    %c0_6 = arith.constant 0 : index
    %4 = vector.load %arg4[%c0_5, %c0_6] : memref<1x128xf32, #tpu.memory_space<vmem>>, vector<1x128xf32>
    %cst = arith.constant dense<0.000000e+00> : vector<64xf32>
    %5 = vector.multi_reduction <add>, %2, %cst [1] : vector<64x128xf32> to vector<64xf32>
    %6 = vector.shape_cast %5 : vector<64xf32> to vector<64x1xf32>
    %cst_7 = arith.constant 1.280000e+02 : f32
    %7 = vector.broadcast %cst_7 : f32 to vector<64x1xf32>
    %8 = arith.divf %6, %7 : vector<64x1xf32>
    %9 = vector.broadcast %8 : vector<64x1xf32> to vector<64x128xf32>
    %10 = arith.subf %2, %9 : vector<64x128xf32>
    %11 = arith.mulf %10, %10 : vector<64x128xf32>
    %cst_8 = arith.constant dense<0.000000e+00> : vector<64xf32>
    %12 = vector.multi_reduction <add>, %11, %cst_8 [1] : vector<64x128xf32> to vector<64xf32>
    %13 = vector.shape_cast %12 : vector<64xf32> to vector<64x1xf32>
    %cst_9 = arith.constant 1.280000e+02 : f32
    %14 = vector.broadcast %cst_9 : f32 to vector<64x1xf32>
    %15 = arith.divf %13, %14 : vector<64x1xf32>
    %16 = vector.broadcast %8 : vector<64x1xf32> to vector<64x128xf32>
    %17 = arith.subf %2, %16 : vector<64x128xf32>
    %cst_10 = arith.constant 9.99999974E-6 : f32
    %18 = vector.broadcast %cst_10 : f32 to vector<64x1xf32>
    %19 = arith.addf %15, %18 : vector<64x1xf32>
    %20 = math.rsqrt %19 : vector<64x1xf32>
    %21 = vector.broadcast %20 : vector<64x1xf32> to vector<64x128xf32>
    %22 = arith.mulf %17, %21 : vector<64x128xf32>
    %23 = vector.broadcast %3 : vector<1x128xf32> to vector<64x128xf32>
    %24 = arith.mulf %22, %23 : vector<64x128xf32>
    %25 = vector.broadcast %4 : vector<1x128xf32> to vector<64x128xf32>
    %26 = arith.addf %24, %25 : vector<64x128xf32>
    %c0_11 = arith.constant 0 : index
    %c0_12 = arith.constant 0 : index
    %27 = vector.load %arg5[%c0_11, %c0_12] : memref<128x384xf32, #tpu.memory_space<vmem>>, vector<128x384xf32>
    %cst_13 = arith.constant dense<0.000000e+00> : vector<64x384xf32>
    %28 = tpu.matmul %26, %27, %cst_13 {dimension_numbers = #tpu.dot_dimension_numbers<[1], [0], [0], [1], [0, 0, 1, 1], [], []>} : vector<64x128xf32>, vector<128x384xf32>, vector<64x384xf32> -> vector<64x384xf32>
    %c0_14 = arith.constant 0 : index
    %c0_15 = arith.constant 0 : index
    %29 = vector.load %arg6[%c0_14, %c0_15] : memref<1x384xf32, #tpu.memory_space<vmem>>, vector<1x384xf32>
    %30 = vector.broadcast %29 : vector<1x384xf32> to vector<64x384xf32>
    %31 = arith.addf %28, %30 : vector<64x384xf32>
    %32 = vector.extract_strided_slice %31 {offsets = [0, 0], sizes = [64, 32], strides = [1, 1]} : vector<64x384xf32> to vector<64x32xf32>
    %33 = vector.shape_cast %32 : vector<64x32xf32> to vector<1x64x32xf32>
    %34 = vector.extract_strided_slice %31 {offsets = [0, 32], sizes = [64, 32], strides = [1, 1]} : vector<64x384xf32> to vector<64x32xf32>
    %35 = vector.shape_cast %34 : vector<64x32xf32> to vector<1x64x32xf32>
    %36 = vector.extract_strided_slice %31 {offsets = [0, 64], sizes = [64, 32], strides = [1, 1]} : vector<64x384xf32> to vector<64x32xf32>
    %37 = vector.shape_cast %36 : vector<64x32xf32> to vector<1x64x32xf32>
    %38 = vector.extract_strided_slice %31 {offsets = [0, 96], sizes = [64, 32], strides = [1, 1]} : vector<64x384xf32> to vector<64x32xf32>
    %39 = vector.shape_cast %38 : vector<64x32xf32> to vector<1x64x32xf32>
    %40 = tpu.concatenate %33, %35, %37, %39 in 0 : vector<1x64x32xf32>, vector<1x64x32xf32>, vector<1x64x32xf32>, vector<1x64x32xf32> -> vector<4x64x32xf32>
    %cst_16 = arith.constant 0.176776692 : f32
    %41 = vector.broadcast %cst_16 : f32 to vector<4x64x32xf32>
    %42 = arith.mulf %40, %41 : vector<4x64x32xf32>
    %43 = vector.extract_strided_slice %31 {offsets = [0, 128], sizes = [64, 32], strides = [1, 1]} : vector<64x384xf32> to vector<64x32xf32>
    %44 = vector.shape_cast %43 : vector<64x32xf32> to vector<1x64x32xf32>
    %45 = vector.extract_strided_slice %31 {offsets = [0, 160], sizes = [64, 32], strides = [1, 1]} : vector<64x384xf32> to vector<64x32xf32>
    %46 = vector.shape_cast %45 : vector<64x32xf32> to vector<1x64x32xf32>
    %47 = vector.extract_strided_slice %31 {offsets = [0, 192], sizes = [64, 32], strides = [1, 1]} : vector<64x384xf32> to vector<64x32xf32>
    %48 = vector.shape_cast %47 : vector<64x32xf32> to vector<1x64x32xf32>
    %49 = vector.extract_strided_slice %31 {offsets = [0, 224], sizes = [64, 32], strides = [1, 1]} : vector<64x384xf32> to vector<64x32xf32>
    %50 = vector.shape_cast %49 : vector<64x32xf32> to vector<1x64x32xf32>
    %51 = tpu.concatenate %44, %46, %48, %50 in 0 : vector<1x64x32xf32>, vector<1x64x32xf32>, vector<1x64x32xf32>, vector<1x64x32xf32> -> vector<4x64x32xf32>
    %52 = vector.extract_strided_slice %31 {offsets = [0, 256], sizes = [64, 32], strides = [1, 1]} : vector<64x384xf32> to vector<64x32xf32>
    %53 = vector.shape_cast %52 : vector<64x32xf32> to vector<1x64x32xf32>
    %54 = vector.extract_strided_slice %31 {offsets = [0, 288], sizes = [64, 32], strides = [1, 1]} : vector<64x384xf32> to vector<64x32xf32>
    %55 = vector.shape_cast %54 : vector<64x32xf32> to vector<1x64x32xf32>
    %56 = vector.extract_strided_slice %31 {offsets = [0, 320], sizes = [64, 32], strides = [1, 1]} : vector<64x384xf32> to vector<64x32xf32>
    %57 = vector.shape_cast %56 : vector<64x32xf32> to vector<1x64x32xf32>
    %58 = vector.extract_strided_slice %31 {offsets = [0, 352], sizes = [64, 32], strides = [1, 1]} : vector<64x384xf32> to vector<64x32xf32>
    %59 = vector.shape_cast %58 : vector<64x32xf32> to vector<1x64x32xf32>
    %60 = tpu.concatenate %53, %55, %57, %59 in 0 : vector<1x64x32xf32>, vector<1x64x32xf32>, vector<1x64x32xf32>, vector<1x64x32xf32> -> vector<4x64x32xf32>
    "tpu.trace_start"() <{level = 10 : i32, message = "bqd,bkd->bqk"}> : () -> ()
    %cst_17 = arith.constant dense<0.000000e+00> : vector<4x64x64xf32>
    %61 = tpu.matmul %42, %51, %cst_17 {dimension_numbers = #tpu.dot_dimension_numbers<[2], [2], [1], [1], [0, 0, 0, 1, 1, 1], [0], [0]>} : vector<4x64x32xf32>, vector<4x64x32xf32>, vector<4x64x64xf32> -> vector<4x64x64xf32>
    "tpu.trace_stop"() : () -> ()
    %cst_18 = arith.constant dense<0xFF800000> : vector<4x64xf32>
    %62 = vector.multi_reduction <maximumf>, %61, %cst_18 [2] : vector<4x64x64xf32> to vector<4x64xf32>
    %63 = vector.shape_cast %62 : vector<4x64xf32> to vector<4x64x1xf32>
    %64 = vector.broadcast %63 : vector<4x64x1xf32> to vector<4x64x64xf32>
    %65 = arith.subf %61, %64 : vector<4x64x64xf32>
    %66 = math.exp %65 : vector<4x64x64xf32>
    %cst_19 = arith.constant dense<0.000000e+00> : vector<4x64xf32>
    %67 = vector.multi_reduction <add>, %66, %cst_19 [2] : vector<4x64x64xf32> to vector<4x64xf32>
    %68 = vector.shape_cast %67 : vector<4x64xf32> to vector<4x64x1xf32>
    %69 = tpu.reciprocal %68 {approx = true} : vector<4x64x1xf32> -> vector<4x64x1xf32>
    %70 = vector.broadcast %69 : vector<4x64x1xf32> to vector<4x64x64xf32>
    %71 = arith.mulf %66, %70 : vector<4x64x64xf32>
    "tpu.trace_start"() <{level = 10 : i32, message = "bqk,bkd->bqd"}> : () -> ()
    %cst_20 = arith.constant dense<0.000000e+00> : vector<4x64x32xf32>
    %72 = tpu.matmul %71, %60, %cst_20 {dimension_numbers = #tpu.dot_dimension_numbers<[2], [1], [1], [2], [0, 0, 0, 1, 1, 2], [0], [0]>} : vector<4x64x64xf32>, vector<4x64x32xf32>, vector<4x64x32xf32> -> vector<4x64x32xf32>
    "tpu.trace_stop"() : () -> ()
    %73 = vector.extract_strided_slice %72 {offsets = [0, 0, 0], sizes = [1, 64, 32], strides = [1, 1, 1]} : vector<4x64x32xf32> to vector<1x64x32xf32>
    %74 = vector.shape_cast %73 : vector<1x64x32xf32> to vector<64x32xf32>
    %75 = vector.extract_strided_slice %72 {offsets = [1, 0, 0], sizes = [1, 64, 32], strides = [1, 1, 1]} : vector<4x64x32xf32> to vector<1x64x32xf32>
    %76 = vector.shape_cast %75 : vector<1x64x32xf32> to vector<64x32xf32>
    %77 = vector.extract_strided_slice %72 {offsets = [2, 0, 0], sizes = [1, 64, 32], strides = [1, 1, 1]} : vector<4x64x32xf32> to vector<1x64x32xf32>
    %78 = vector.shape_cast %77 : vector<1x64x32xf32> to vector<64x32xf32>
    %79 = vector.extract_strided_slice %72 {offsets = [3, 0, 0], sizes = [1, 64, 32], strides = [1, 1, 1]} : vector<4x64x32xf32> to vector<1x64x32xf32>
    %80 = vector.shape_cast %79 : vector<1x64x32xf32> to vector<64x32xf32>
    %81 = tpu.concatenate %74, %76, %78, %80 in 1 : vector<64x32xf32>, vector<64x32xf32>, vector<64x32xf32>, vector<64x32xf32> -> vector<64x128xf32>
    %c0_21 = arith.constant 0 : index
    %c0_22 = arith.constant 0 : index
    %82 = vector.load %arg7[%c0_21, %c0_22] : memref<128x128xf32, #tpu.memory_space<vmem>>, vector<128x128xf32>
    %cst_23 = arith.constant dense<0.000000e+00> : vector<64x128xf32>
    %83 = tpu.matmul %81, %82, %cst_23 {dimension_numbers = #tpu.dot_dimension_numbers<[1], [0], [0], [1], [0, 0, 1, 1], [], []>} : vector<64x128xf32>, vector<128x128xf32>, vector<64x128xf32> -> vector<64x128xf32>
    %c0_24 = arith.constant 0 : index
    %c0_25 = arith.constant 0 : index
    %84 = vector.load %arg8[%c0_24, %c0_25] : memref<1x128xf32, #tpu.memory_space<vmem>>, vector<1x128xf32>
    %85 = vector.broadcast %84 : vector<1x128xf32> to vector<64x128xf32>
    %86 = arith.addf %83, %85 : vector<64x128xf32>
    %87 = arith.addf %2, %86 : vector<64x128xf32>
    %c0_26 = arith.constant 0 : index
    %c0_27 = arith.constant 0 : index
    %88 = vector.load %arg9[%c0_26, %c0_27] : memref<1x128xf32, #tpu.memory_space<vmem>>, vector<1x128xf32>
    %c0_28 = arith.constant 0 : index
    %c0_29 = arith.constant 0 : index
    %89 = vector.load %arg10[%c0_28, %c0_29] : memref<1x128xf32, #tpu.memory_space<vmem>>, vector<1x128xf32>
    %cst_30 = arith.constant dense<0.000000e+00> : vector<64xf32>
    %90 = vector.multi_reduction <add>, %87, %cst_30 [1] : vector<64x128xf32> to vector<64xf32>
    %91 = vector.shape_cast %90 : vector<64xf32> to vector<64x1xf32>
    %cst_31 = arith.constant 1.280000e+02 : f32
    %92 = vector.broadcast %cst_31 : f32 to vector<64x1xf32>
    %93 = arith.divf %91, %92 : vector<64x1xf32>
    %94 = vector.broadcast %93 : vector<64x1xf32> to vector<64x128xf32>
    %95 = arith.subf %87, %94 : vector<64x128xf32>
    %96 = arith.mulf %95, %95 : vector<64x128xf32>
    %cst_32 = arith.constant dense<0.000000e+00> : vector<64xf32>
    %97 = vector.multi_reduction <add>, %96, %cst_32 [1] : vector<64x128xf32> to vector<64xf32>
    %98 = vector.shape_cast %97 : vector<64xf32> to vector<64x1xf32>
    %cst_33 = arith.constant 1.280000e+02 : f32
    %99 = vector.broadcast %cst_33 : f32 to vector<64x1xf32>
    %100 = arith.divf %98, %99 : vector<64x1xf32>
    %101 = vector.broadcast %93 : vector<64x1xf32> to vector<64x128xf32>
    %102 = arith.subf %87, %101 : vector<64x128xf32>
    %cst_34 = arith.constant 9.99999974E-6 : f32
    %103 = vector.broadcast %cst_34 : f32 to vector<64x1xf32>
    %104 = arith.addf %100, %103 : vector<64x1xf32>
    %105 = math.rsqrt %104 : vector<64x1xf32>
    %106 = vector.broadcast %105 : vector<64x1xf32> to vector<64x128xf32>
    %107 = arith.mulf %102, %106 : vector<64x128xf32>
    %108 = vector.broadcast %88 : vector<1x128xf32> to vector<64x128xf32>
    %109 = arith.mulf %107, %108 : vector<64x128xf32>
    %110 = vector.broadcast %89 : vector<1x128xf32> to vector<64x128xf32>
    %111 = arith.addf %109, %110 : vector<64x128xf32>
    %c0_35 = arith.constant 0 : index
    %c0_36 = arith.constant 0 : index
    %112 = vector.load %arg11[%c0_35, %c0_36] : memref<128x512xf32, #tpu.memory_space<vmem>>, vector<128x512xf32>
    %cst_37 = arith.constant dense<0.000000e+00> : vector<64x512xf32>
    %113 = tpu.matmul %111, %112, %cst_37 {dimension_numbers = #tpu.dot_dimension_numbers<[1], [0], [0], [1], [0, 0, 1, 1], [], []>} : vector<64x128xf32>, vector<128x512xf32>, vector<64x512xf32> -> vector<64x512xf32>
    %c0_38 = arith.constant 0 : index
    %c0_39 = arith.constant 0 : index
    %114 = vector.load %arg12[%c0_38, %c0_39] : memref<1x512xf32, #tpu.memory_space<vmem>>, vector<1x512xf32>
    %115 = vector.broadcast %114 : vector<1x512xf32> to vector<64x512xf32>
    %116 = arith.addf %113, %115 : vector<64x512xf32>
    %cst_40 = arith.constant 5.000000e-01 : f32
    %117 = vector.broadcast %cst_40 : f32 to vector<64x512xf32>
    %118 = arith.mulf %117, %116 : vector<64x512xf32>
    %cst_41 = arith.constant 0.707106769 : f32
    %119 = vector.broadcast %cst_41 : f32 to vector<64x512xf32>
    %120 = arith.mulf %116, %119 : vector<64x512xf32>
    %121 = math.erf %120 : vector<64x512xf32>
    %cst_42 = arith.constant 1.000000e+00 : f32
    %122 = vector.broadcast %cst_42 : f32 to vector<64x512xf32>
    %123 = arith.addf %122, %121 : vector<64x512xf32>
    %124 = arith.mulf %118, %123 : vector<64x512xf32>
    %c0_43 = arith.constant 0 : index
    %c0_44 = arith.constant 0 : index
    %125 = vector.load %arg13[%c0_43, %c0_44] : memref<512x128xf32, #tpu.memory_space<vmem>>, vector<512x128xf32>
    %cst_45 = arith.constant dense<0.000000e+00> : vector<64x128xf32>
    %126 = tpu.matmul %124, %125, %cst_45 {dimension_numbers = #tpu.dot_dimension_numbers<[1], [0], [0], [1], [0, 0, 1, 1], [], []>} : vector<64x512xf32>, vector<512x128xf32>, vector<64x128xf32> -> vector<64x128xf32>
    %c0_46 = arith.constant 0 : index
    %c0_47 = arith.constant 0 : index
    %127 = vector.load %arg14[%c0_46, %c0_47] : memref<1x128xf32, #tpu.memory_space<vmem>>, vector<1x128xf32>
    %128 = vector.broadcast %127 : vector<1x128xf32> to vector<64x128xf32>
    %129 = arith.addf %126, %128 : vector<64x128xf32>
    %130 = arith.addf %87, %129 : vector<64x128xf32>
    %131 = vector.shape_cast %130 : vector<64x128xf32> to vector<8x8x128xf32>
    %c0_48 = arith.constant 0 : index
    %c0_49 = arith.constant 0 : index
    %c0_50 = arith.constant 0 : index
    %c0_51 = arith.constant 0 : index
    %132 = vector.load %arg15[%c0_48, %c0_49, %c0_50, %c0_51] : memref<1x8x8x128xf32, #tpu.memory_space<vmem>>, vector<1x8x8x128xf32>
    %133 = vector.shape_cast %132 : vector<1x8x8x128xf32> to vector<8x8x128xf32>
    %134 = vector.shape_cast %131 : vector<8x8x128xf32> to vector<1x8x8x128xf32>
    tpu.vector_store %arg15[%c0_48, %c0_49, %c0_50, %c0_51], %134 {strides = array<i32>} : memref<1x8x8x128xf32, #tpu.memory_space<vmem>>, vector<1x8x8x128xf32>,
    return
  }
  func.func @transform_0(%arg0: i32, %arg1: i32) -> (i32, i32, i32, i32) {
    %c0_i32 = arith.constant 0 : i32
    %c0_i32_0 = arith.constant 0 : i32
    %c0_i32_1 = arith.constant 0 : i32
    return %arg0, %arg1, %c0_i32, %c0_i32_0 : i32, i32, i32, i32
  }
  func.func @transform_1(%arg0: i32, %arg1: i32) -> (i32, i32) {
    %c0_i32 = arith.constant 0 : i32
    %c0_i32_0 = arith.constant 0 : i32
    %c0_i32_1 = arith.constant 0 : i32
    return %c0_i32, %c0_i32_0 : i32, i32
  }
  func.func @transform_2(%arg0: i32, %arg1: i32) -> (i32, i32) {
    %c0_i32 = arith.constant 0 : i32
    %c0_i32_0 = arith.constant 0 : i32
    %c0_i32_1 = arith.constant 0 : i32
    return %c0_i32, %c0_i32_0 : i32, i32
  }
  func.func @transform_3(%arg0: i32, %arg1: i32) -> (i32, i32) {
    %c0_i32 = arith.constant 0 : i32
    %c0_i32_0 = arith.constant 0 : i32
    %c0_i32_1 = arith.constant 0 : i32
    return %c0_i32, %c0_i32_0 : i32, i32
  }
  func.func @transform_4(%arg0: i32, %arg1: i32) -> (i32, i32) {
    %c0_i32 = arith.constant 0 : i32
    %c0_i32_0 = arith.constant 0 : i32
    %c0_i32_1 = arith.constant 0 : i32
    return %c0_i32, %c0_i32_0 : i32, i32
  }
  func.func @transform_5(%arg0: i32, %arg1: i32) -> (i32, i32) {
    %c0_i32 = arith.constant 0 : i32
    %c0_i32_0 = arith.constant 0 : i32
    %c0_i32_1 = arith.constant 0 : i32
    return %c0_i32, %c0_i32_0 : i32, i32
  }
  func.func @transform_6(%arg0: i32, %arg1: i32) -> (i32, i32) {
    %c0_i32 = arith.constant 0 : i32
    %c0_i32_0 = arith.constant 0 : i32
    %c0_i32_1 = arith.constant 0 : i32
    return %c0_i32, %c0_i32_0 : i32, i32
  }
  func.func @transform_7(%arg0: i32, %arg1: i32) -> (i32, i32) {
    %c0_i32 = arith.constant 0 : i32
    %c0_i32_0 = arith.constant 0 : i32
    %c0_i32_1 = arith.constant 0 : i32
    return %c0_i32, %c0_i32_0 : i32, i32
  }
  func.func @transform_8(%arg0: i32, %arg1: i32) -> (i32, i32) {
    %c0_i32 = arith.constant 0 : i32
    %c0_i32_0 = arith.constant 0 : i32
    %c0_i32_1 = arith.constant 0 : i32
    return %c0_i32, %c0_i32_0 : i32, i32
  }
  func.func @transform_9(%arg0: i32, %arg1: i32) -> (i32, i32) {
    %c0_i32 = arith.constant 0 : i32
    %c0_i32_0 = arith.constant 0 : i32
    %c0_i32_1 = arith.constant 0 : i32
    return %c0_i32, %c0_i32_0 : i32, i32
  }
  func.func @transform_10(%arg0: i32, %arg1: i32) -> (i32, i32) {
    %c0_i32 = arith.constant 0 : i32
    %c0_i32_0 = arith.constant 0 : i32
    %c0_i32_1 = arith.constant 0 : i32
    return %c0_i32, %c0_i32_0 : i32, i32
  }
  func.func @transform_11(%arg0: i32, %arg1: i32) -> (i32, i32) {
    %c0_i32 = arith.constant 0 : i32
    %c0_i32_0 = arith.constant 0 : i32
    %c0_i32_1 = arith.constant 0 : i32
    return %c0_i32, %c0_i32_0 : i32, i32
  }
  func.func @transform_12(%arg0: i32, %arg1: i32) -> (i32, i32) {
    %c0_i32 = arith.constant 0 : i32
    %c0_i32_0 = arith.constant 0 : i32
    %c0_i32_1 = arith.constant 0 : i32
    return %c0_i32, %c0_i32_0 : i32, i32
  }
  func.func @transform_13(%arg0: i32, %arg1: i32) -> (i32, i32, i32, i32) {
    %c0_i32 = arith.constant 0 : i32
    %c0_i32_0 = arith.constant 0 : i32
    %c0_i32_1 = arith.constant 0 : i32
    return %arg0, %arg1, %c0_i32, %c0_i32_0 : i32, i32, i32, i32
  }
}

module attributes {stable_mosaic.version = 11 : i64} {
  func.func @_linear_kernel(%arg0: i32, %arg1: memref<8x128xf32, #tpu.memory_space<vmem>>, %arg2: memref<128x256xf32, #tpu.memory_space<vmem>>, %arg3: memref<1x256xf32, #tpu.memory_space<vmem>>, %arg4: memref<8x256xf32, #tpu.memory_space<vmem>>) attributes {dimension_semantics = [#tpu.dimension_semantics<parallel>], iteration_bounds = array<i64: 1>, scalar_prefetch = 0 : i64, scratch_operands = 0 : i64, tpu.core_type = #tpu.core_type<tc>, window_params = [{transform_indices = @transform_0, window_bounds = array<i64: 8, 128>}, {pipeline_mode = #tpu.pipeline_mode<synchronous>, transform_indices = @transform_1, window_bounds = array<i64: 128, 256>}, {pipeline_mode = #tpu.pipeline_mode<synchronous>, transform_indices = @transform_2, window_bounds = array<i64: 1, 256>}, {transform_indices = @transform_3, window_bounds = array<i64: 8, 256>}]} {
    %c0 = arith.constant 0 : index
    %c0_0 = arith.constant 0 : index
    %0 = vector.load %arg1[%c0, %c0_0] : memref<8x128xf32, #tpu.memory_space<vmem>>, vector<8x128xf32>
    %c0_1 = arith.constant 0 : index
    %c0_2 = arith.constant 0 : index
    %1 = vector.load %arg2[%c0_1, %c0_2] : memref<128x256xf32, #tpu.memory_space<vmem>>, vector<128x256xf32>
    %cst = arith.constant dense<0.000000e+00> : vector<8x256xf32>
    %2 = tpu.matmul %0, %1, %cst {dimension_numbers = #tpu.dot_dimension_numbers<[1], [0], [0], [1], [0, 0, 1, 1], [], []>} : vector<8x128xf32>, vector<128x256xf32>, vector<8x256xf32> -> vector<8x256xf32>
    %c0_3 = arith.constant 0 : index
    %c0_4 = arith.constant 0 : index
    %3 = vector.load %arg3[%c0_3, %c0_4] : memref<1x256xf32, #tpu.memory_space<vmem>>, vector<1x256xf32>
    %4 = vector.broadcast %3 : vector<1x256xf32> to vector<8x256xf32>
    %5 = arith.addf %2, %4 : vector<8x256xf32>
    %c0_5 = arith.constant 0 : index
    %c0_6 = arith.constant 0 : index
    %6 = vector.load %arg4[%c0_5, %c0_6] : memref<8x256xf32, #tpu.memory_space<vmem>>, vector<8x256xf32>
    tpu.vector_store %arg4[%c0_5, %c0_6], %5 {strides = array<i32>} : memref<8x256xf32, #tpu.memory_space<vmem>>, vector<8x256xf32>,
    return
  }
  func.func @transform_0(%arg0: i32) -> (i32, i32) {
    %c0_i32 = arith.constant 0 : i32
    %c0_i32_0 = arith.constant 0 : i32
    return %arg0, %c0_i32 : i32, i32
  }
  func.func @transform_1(%arg0: i32) -> (i32, i32) {
    %c0_i32 = arith.constant 0 : i32
    %c0_i32_0 = arith.constant 0 : i32
    %c0_i32_1 = arith.constant 0 : i32
    return %c0_i32, %c0_i32_0 : i32, i32
  }
  func.func @transform_2(%arg0: i32) -> (i32, i32) {
    %c0_i32 = arith.constant 0 : i32
    %c0_i32_0 = arith.constant 0 : i32
    %c0_i32_1 = arith.constant 0 : i32
    return %c0_i32, %c0_i32_0 : i32, i32
  }
  func.func @transform_3(%arg0: i32) -> (i32, i32) {
    %c0_i32 = arith.constant 0 : i32
    %c0_i32_0 = arith.constant 0 : i32
    return %arg0, %c0_i32 : i32, i32
  }
}

module attributes {stable_mosaic.version = 11 : i64} {
  func.func @_linear_kernel(%arg0: i32, %arg1: memref<32x64xf32, #tpu.memory_space<vmem>>, %arg2: memref<64x768xf32, #tpu.memory_space<vmem>>, %arg3: memref<1x768xf32, #tpu.memory_space<vmem>>, %arg4: memref<32x768xf32, #tpu.memory_space<vmem>>) attributes {dimension_semantics = [#tpu.dimension_semantics<parallel>], iteration_bounds = array<i64: 1>, scalar_prefetch = 0 : i64, scratch_operands = 0 : i64, tpu.core_type = #tpu.core_type<tc>, window_params = [{transform_indices = @transform_0, window_bounds = array<i64: 32, 64>}, {pipeline_mode = #tpu.pipeline_mode<synchronous>, transform_indices = @transform_1, window_bounds = array<i64: 64, 768>}, {pipeline_mode = #tpu.pipeline_mode<synchronous>, transform_indices = @transform_2, window_bounds = array<i64: 1, 768>}, {transform_indices = @transform_3, window_bounds = array<i64: 32, 768>}]} {
    %c0 = arith.constant 0 : index
    %c0_0 = arith.constant 0 : index
    %0 = vector.load %arg1[%c0, %c0_0] : memref<32x64xf32, #tpu.memory_space<vmem>>, vector<32x64xf32>
    %c0_1 = arith.constant 0 : index
    %c0_2 = arith.constant 0 : index
    %1 = vector.load %arg2[%c0_1, %c0_2] : memref<64x768xf32, #tpu.memory_space<vmem>>, vector<64x768xf32>
    %cst = arith.constant dense<0.000000e+00> : vector<32x768xf32>
    %2 = tpu.matmul %0, %1, %cst {dimension_numbers = #tpu.dot_dimension_numbers<[1], [0], [0], [1], [0, 0, 1, 1], [], []>} : vector<32x64xf32>, vector<64x768xf32>, vector<32x768xf32> -> vector<32x768xf32>
    %c0_3 = arith.constant 0 : index
    %c0_4 = arith.constant 0 : index
    %3 = vector.load %arg3[%c0_3, %c0_4] : memref<1x768xf32, #tpu.memory_space<vmem>>, vector<1x768xf32>
    %4 = vector.broadcast %3 : vector<1x768xf32> to vector<32x768xf32>
    %5 = arith.addf %2, %4 : vector<32x768xf32>
    %c0_5 = arith.constant 0 : index
    %c0_6 = arith.constant 0 : index
    %6 = vector.load %arg4[%c0_5, %c0_6] : memref<32x768xf32, #tpu.memory_space<vmem>>, vector<32x768xf32>
    tpu.vector_store %arg4[%c0_5, %c0_6], %5 {strides = array<i32>} : memref<32x768xf32, #tpu.memory_space<vmem>>, vector<32x768xf32>,
    return
  }
  func.func @transform_0(%arg0: i32) -> (i32, i32) {
    %c0_i32 = arith.constant 0 : i32
    %c0_i32_0 = arith.constant 0 : i32
    return %arg0, %c0_i32 : i32, i32
  }
  func.func @transform_1(%arg0: i32) -> (i32, i32) {
    %c0_i32 = arith.constant 0 : i32
    %c0_i32_0 = arith.constant 0 : i32
    %c0_i32_1 = arith.constant 0 : i32
    return %c0_i32, %c0_i32_0 : i32, i32
  }
  func.func @transform_2(%arg0: i32) -> (i32, i32) {
    %c0_i32 = arith.constant 0 : i32
    %c0_i32_0 = arith.constant 0 : i32
    %c0_i32_1 = arith.constant 0 : i32
    return %c0_i32, %c0_i32_0 : i32, i32
  }
  func.func @transform_3(%arg0: i32) -> (i32, i32) {
    %c0_i32 = arith.constant 0 : i32
    %c0_i32_0 = arith.constant 0 : i32
    return %arg0, %c0_i32 : i32, i32
  }
}

</mosaic_0001>

<llo_original>
// kernel: transformer_sr_forward.11
$region0: #{transformer_sr_forward.11}
  #allocation0 [shape = 'u32[]', space=smem, size = 0x4, offset = 0x4, fixed_abs, tag = 'smem constant byte address 0x4 - core index']
  #allocation1 [shape = 'u32[144,128]{1,0:T(1,128)}', space=vmem, size = 0x12000, scoped, tag = 'internal scratch']
  %s0 = inlined_call_operand.vmem [shape: f32[32,48], index: 0, kind: input, shape index: {}]
  %s1 = inlined_call_operand.vmem [shape: f32[48,64], index: 1, kind: input, shape index: {}]
  %s2 = inlined_call_operand.vmem [shape: f32[1,64], index: 2, kind: input, shape index: {}]
  %s3 = inlined_call_operand.vmem [shape: f32[32,64], index: 3, kind: output, shape index: {}]
  %s4 = sld [smem:[#allocation0]]
  $region22: #{transformer_sr_forward.11} parent=0
    _
  %s6 = ssub.s32 1, %s4
  %s7 = scalar_select 0, %s6, %s4
  // Predicated region
  $region2: #{transformer_sr_forward.11} parent=0 // pred_check
    _
  $region3: #{transformer_sr_forward.11} parent=0 // pred_check_branch
    %9 = sbr.rel (0) target = $region5
  $region4: #{transformer_sr_forward.11} parent=0 // pred_region
    _
  $region5: #{transformer_sr_forward.11} parent=0 // pred_fallthru
    _
  // Predicated region
  $region6: #{transformer_sr_forward.11} parent=0 // pred_check
    _
  $region7: #{transformer_sr_forward.11} parent=0 // pred_check_branch
    %11 = sbr.rel (0) target = $region9
  $region8: #{transformer_sr_forward.11} parent=0 // pred_region
    _
  $region9: #{transformer_sr_forward.11} parent=0 // pred_fallthru
    _
  // Predicated region
  $region10: #{transformer_sr_forward.11} parent=0 // pred_check
    _
  $region11: #{transformer_sr_forward.11} parent=0 // pred_check_branch
    %13 = sbr.rel (0) target = $region13
  $region12: #{transformer_sr_forward.11} parent=0 // pred_region
    _
  $region13: #{transformer_sr_forward.11} parent=0 // pred_fallthru
    _
  %v14 = vld [vmem:[%s0] sm:$0xff]
  %v15 = vld [vmem:[%s0 + $0x8] sm:$0xff]
  %v16 = vld [vmem:[%s0 + $0x10] sm:$0xff]
  %v17 = vld [vmem:[%s0 + $0x18] sm:$0xff]
  %v18 = vld [vmem:[%s1] sm:$0xff]
  %v19 = vld [vmem:[%s1 + $0x8] sm:$0xff]
  %v20 = vld [vmem:[%s1 + $0x10] sm:$0xff]
  %v21 = vld [vmem:[%s1 + $0x18] sm:$0xff]
  %v22 = vld [vmem:[%s1 + $0x20] sm:$0xff]
  %v23 = vld [vmem:[%s1 + $0x28] sm:$0xff]
  %v24 = vld [vmem:[%s2] sm:$0x1]
  %v26 = vlaneseq
  %v27 = vshrl.u32 %v26, 7
  %v28 = vsub.s32 0, %v27
  %v29 = vrot.slane %v24, %v28
  %vm31 = vcmask 392192
  %v33 = vsel %vm31, %v14, 0
  %v36 = vsel %vm31, %v15, 0
  %v39 = vsel %vm31, %v16, 0
  %v42 = vsel %vm31, %v17, 0
  %44 = vmatprep.subr.mxu0 0.0
  %45 = vmatpush1.msra.mxu0 %v18
  %46 = vmatprep.subr.mxu0 0.0
  %47 = vmatpush1.msra.mxu0 %v19
  %48 = vmatprep.subr.mxu0 0.0
  %49 = vmatpush1.msra.mxu0 %v20
  %50 = vmatprep.subr.mxu0 0.0
  %51 = vmatpush1.msra.mxu0 %v21
  %52 = vmatprep.subr.mxu0 0.0
  %53 = vmatpush1.msra.mxu0 %v22
  %54 = vmatprep.subr.mxu0 0.0
  %55 = vmatpush1.msra.mxu0 %v23
  %56 = vmatprep.subr.mxu0 0.0
  %57 = vmatpush1.msra.mxu0 0.0
  %58 = vmatprep.subr.mxu0 0.0
  %59 = vmatpush1.msra.mxu0 0.0
  %60 = vmatprep.subr.mxu0 0.0
  %61 = vmatpush1.msra.mxu0 0.0
  %62 = vmatprep.subr.mxu0 0.0
  %63 = vmatpush1.msra.mxu0 0.0
  %64 = vmatprep.subr.mxu0 0.0
  %65 = vmatpush1.msra.mxu0 0.0
  %66 = vmatprep.subr.mxu0 0.0
  %67 = vmatpush1.msra.mxu0 0.0
  %68 = vmatprep.subr.mxu0 0.0
  %69 = vmatpush1.msra.mxu0 0.0
  %70 = vmatprep.subr.mxu0 0.0
  %71 = vmatpush1.msra.mxu0 0.0
  %72 = vmatprep.subr.mxu0 0.0
  %73 = vmatpush1.msra.mxu0 0.0
  %74 = vmatprep.subr.mxu0 0.0
  %75 = vmatpush1.msra.mxu0 0.0
  %76 = vmatprep.subr.mxu0 0.0
  %77 = vmatpush1.msra.mxu0 0.0
  %78 = vmatprep.subr.mxu0 0.0
  %79 = vmatpush1.msra.mxu0 0.0
  %80 = vmatprep.subr.mxu0 0.0
  %81 = vmatpush1.msra.mxu0 0.0
  %82 = vmatprep.subr.mxu0 0.0
  %83 = vmatpush1.msra.mxu0 0.0
  %84 = vmatprep.subr.mxu0 0.0
  %85 = vmatpush1.msra.mxu0 0.0
  %86 = vmatprep.subr.mxu0 0.0
  %87 = vmatpush1.msra.mxu0 0.0
  %88 = vmatprep.subr.mxu0 0.0
  %89 = vmatpush1.msra.mxu0 0.0
  %90 = vmatprep.subr.mxu0 0.0
  %91 = vmatpush1.msra.mxu0 0.0
  %92 = vmatprep.subr.mxu0 0.0
  %93 = vmatpush1.msra.mxu0 0.0
  %94 = vmatprep.subr.mxu0 0.0
  %95 = vmatpush1.msra.mxu0 0.0
  %96 = vmatprep.subr.mxu0 0.0
  %97 = vmatpush1.msra.mxu0 0.0
  %98 = vmatprep.subr.mxu0 0.0
  %99 = vmatpush1.msra.mxu0 0.0
  %100 = vmatprep.subr.mxu0 0.0
  %101 = vmatpush1.msra.mxu0 0.0
  %102 = vmatprep.subr.mxu0 0.0
  %103 = vmatpush1.msra.mxu0 0.0
  %104 = vmatprep.subr.mxu0 0.0
  %105 = vmatpush1.msra.mxu0 0.0
  %106 = vmatprep.subr.mxu0 0.0
  %107 = vmatpush1.msra.mxu0 0.0
  %108 = vmatprep.mubr.f32.mxu0 0.0
  %109 = vmatmul.mubr.f32.gmra.mrb[0].mxu0 %v33
  %v110 = vpop.f32.mrb[0].mxu0
  %v111 = vadd.f32 %v29, %v110
  %v112 = vpop.f32.mrb[0].mxu0
  %113 = vmatprep.mubr.f32.mxu0 0.0
  %114 = vmatmul.mubr.f32.gmra.mrb[0].mxu0 %v36
  %v115 = vpop.f32.mrb[0].mxu0
  %v116 = vadd.f32 %v29, %v115
  %v117 = vpop.f32.mrb[0].mxu0
  %118 = vmatprep.mubr.f32.mxu0 0.0
  %119 = vmatmul.mubr.f32.gmra.mrb[0].mxu0 %v39
  %v120 = vpop.f32.mrb[0].mxu0
  %v121 = vadd.f32 %v29, %v120
  %v122 = vpop.f32.mrb[0].mxu0
  %123 = vmatprep.mubr.f32.mxu0 0.0
  %124 = vmatmul.mubr.f32.gmra.mrb[0].mxu0 %v42
  %v125 = vpop.f32.mrb[0].mxu0
  %v126 = vadd.f32 %v29, %v125
  %v127 = vpop.f32.mrb[0].mxu0
  %128 = vdwg.mxu0
  %vm129 = vcmask 523264
  %130 = vst.msk [vmem:[%s3] sm:$0xff] %vm129, %v111
  %131 = vst.msk [vmem:[%s3 + $0x8] sm:$0xff] %vm129, %v116
  %132 = vst.msk [vmem:[%s3 + $0x10] sm:$0xff] %vm129, %v121
  %133 = vst.msk [vmem:[%s3 + $0x18] sm:$0xff] %vm129, %v126
  // Predicated region
  $region14: #{transformer_sr_forward.11} parent=0 // pred_check
    _
  $region15: #{transformer_sr_forward.11} parent=0 // pred_check_branch
    %135 = sbr.rel (0) target = $region17
  $region16: #{transformer_sr_forward.11} parent=0 // pred_region
    _
  $region17: #{transformer_sr_forward.11} parent=0 // pred_fallthru
    _
  // Predicated region
  $region18: #{transformer_sr_forward.11} parent=0 // pred_check
    _
  $region19: #{transformer_sr_forward.11} parent=0 // pred_check_branch
    %137 = sbr.rel (0) target = $region21
  $region20: #{transformer_sr_forward.11} parent=0 // pred_region
    _
  $region21: #{transformer_sr_forward.11} parent=0 // pred_fallthru
    _

// kernel: transformer_sr_forward.16
$region0: #{transformer_sr_forward.16}
  #allocation0 [shape = 'u32[]', space=smem, size = 0x4, offset = 0x4, fixed_abs, tag = 'smem constant byte address 0x4 - core index']
  #allocation1 [shape = 'u32[144,128]{1,0:T(1,128)}', space=vmem, size = 0x12000, scoped, tag = 'internal scratch']
  %s0 = inlined_call_operand.vmem [shape: f32[8,256], index: 0, kind: input, shape index: {}]
  %s1 = inlined_call_operand.vmem [shape: f32[256,128], index: 1, kind: input, shape index: {}]
  %s2 = inlined_call_operand.vmem [shape: f32[1,128], index: 2, kind: input, shape index: {}]
  %s3 = inlined_call_operand.vmem [shape: f32[8,128], index: 3, kind: output, shape index: {}]
  %s4 = sld [smem:[#allocation0]]
  $region22: #{transformer_sr_forward.16} parent=0
    _
  %s6 = ssub.s32 1, %s4
  %s7 = scalar_select 0, %s6, %s4
  // Predicated region
  $region2: #{transformer_sr_forward.16} parent=0 // pred_check
    _
  $region3: #{transformer_sr_forward.16} parent=0 // pred_check_branch
    %9 = sbr.rel (0) target = $region5
  $region4: #{transformer_sr_forward.16} parent=0 // pred_region
    _
  $region5: #{transformer_sr_forward.16} parent=0 // pred_fallthru
    _
  // Predicated region
  $region6: #{transformer_sr_forward.16} parent=0 // pred_check
    _
  $region7: #{transformer_sr_forward.16} parent=0 // pred_check_branch
    %11 = sbr.rel (0) target = $region9
  $region8: #{transformer_sr_forward.16} parent=0 // pred_region
    _
  $region9: #{transformer_sr_forward.16} parent=0 // pred_fallthru
    _
  // Predicated region
  $region10: #{transformer_sr_forward.16} parent=0 // pred_check
    _
  $region11: #{transformer_sr_forward.16} parent=0 // pred_check_branch
    %13 = sbr.rel (0) target = $region13
  $region12: #{transformer_sr_forward.16} parent=0 // pred_region
    _
  $region13: #{transformer_sr_forward.16} parent=0 // pred_fallthru
    _
  %v14 = vld [vmem:[%s0] sm:$0xff]
  %v15 = vld [vmem:[%s0 + $0x8] sm:$0xff]
  %v16 = vld [vmem:[%s1] sm:$0xff]
  %v17 = vld [vmem:[%s1 + $0x8] sm:$0xff]
  %v18 = vld [vmem:[%s1 + $0x10] sm:$0xff]
  %v19 = vld [vmem:[%s1 + $0x18] sm:$0xff]
  %v20 = vld [vmem:[%s1 + $0x20] sm:$0xff]
  %v21 = vld [vmem:[%s1 + $0x28] sm:$0xff]
  %v22 = vld [vmem:[%s1 + $0x30] sm:$0xff]
  %v23 = vld [vmem:[%s1 + $0x38] sm:$0xff]
  %v24 = vld [vmem:[%s1 + $0x40] sm:$0xff]
  %v25 = vld [vmem:[%s1 + $0x48] sm:$0xff]
  %v26 = vld [vmem:[%s1 + $0x50] sm:$0xff]
  %v27 = vld [vmem:[%s1 + $0x58] sm:$0xff]
  %v28 = vld [vmem:[%s1 + $0x60] sm:$0xff]
  %v29 = vld [vmem:[%s1 + $0x68] sm:$0xff]
  %v30 = vld [vmem:[%s1 + $0x70] sm:$0xff]
  %v31 = vld [vmem:[%s1 + $0x78] sm:$0xff]
  %v32 = vld [vmem:[%s1 + $0x80] sm:$0xff]
  %v33 = vld [vmem:[%s1 + $0x88] sm:$0xff]
  %v34 = vld [vmem:[%s1 + $0x90] sm:$0xff]
  %v35 = vld [vmem:[%s1 + $0x98] sm:$0xff]
  %v36 = vld [vmem:[%s1 + $0xa0] sm:$0xff]
  %v37 = vld [vmem:[%s1 + $0xa8] sm:$0xff]
  %v38 = vld [vmem:[%s1 + $0xb0] sm:$0xff]
  %v39 = vld [vmem:[%s1 + $0xb8] sm:$0xff]
  %v40 = vld [vmem:[%s1 + $0xc0] sm:$0xff]
  %v41 = vld [vmem:[%s1 + $0xc8] sm:$0xff]
  %v42 = vld [vmem:[%s1 + $0xd0] sm:$0xff]
  %v43 = vld [vmem:[%s1 + $0xd8] sm:$0xff]
  %v44 = vld [vmem:[%s1 + $0xe0] sm:$0xff]
  %v45 = vld [vmem:[%s1 + $0xe8] sm:$0xff]
  %v46 = vld [vmem:[%s1 + $0xf0] sm:$0xff]
  %v47 = vld [vmem:[%s1 + $0xf8] sm:$0xff]
  %v48 = vld [vmem:[%s2] sm:$0x1]
  %v50 = vlaneseq
  %v51 = vshrl.u32 %v50, 7
  %v52 = vsub.s32 0, %v51
  %v53 = vrot.slane %v48, %v52
  %55 = vmatprep.subr.mxu0 0.0
  %56 = vmatpush1.msra.mxu0 %v16
  %57 = vmatprep.subr.mxu0 0.0
  %58 = vmatpush1.msra.mxu0 %v17
  %59 = vmatprep.subr.mxu0 0.0
  %60 = vmatpush1.msra.mxu0 %v18
  %61 = vmatprep.subr.mxu0 0.0
  %62 = vmatpush1.msra.mxu0 %v19
  %63 = vmatprep.subr.mxu0 0.0
  %64 = vmatpush1.msra.mxu0 %v20
  %65 = vmatprep.subr.mxu0 0.0
  %66 = vmatpush1.msra.mxu0 %v21
  %67 = vmatprep.subr.mxu0 0.0
  %68 = vmatpush1.msra.mxu0 %v22
  %69 = vmatprep.subr.mxu0 0.0
  %70 = vmatpush1.msra.mxu0 %v23
  %71 = vmatprep.subr.mxu0 0.0
  %72 = vmatpush1.msra.mxu0 %v24
  %73 = vmatprep.subr.mxu0 0.0
  %74 = vmatpush1.msra.mxu0 %v25
  %75 = vmatprep.subr.mxu0 0.0
  %76 = vmatpush1.msra.mxu0 %v26
  %77 = vmatprep.subr.mxu0 0.0
  %78 = vmatpush1.msra.mxu0 %v27
  %79 = vmatprep.subr.mxu0 0.0
  %80 = vmatpush1.msra.mxu0 %v28
  %81 = vmatprep.subr.mxu0 0.0
  %82 = vmatpush1.msra.mxu0 %v29
  %83 = vmatprep.subr.mxu0 0.0
  %84 = vmatpush1.msra.mxu0 %v30
  %85 = vmatprep.subr.mxu0 0.0
  %86 = vmatpush1.msra.mxu0 %v31
  %87 = vmatprep.subr.mxu0 0.0
  %88 = vmatpush1.msra.mxu0 %v32
  %89 = vmatprep.subr.mxu0 0.0
  %90 = vmatpush1.msra.mxu0 %v33
  %91 = vmatprep.subr.mxu0 0.0
  %92 = vmatpush1.msra.mxu0 %v34
  %93 = vmatprep.subr.mxu0 0.0
  %94 = vmatpush1.msra.mxu0 %v35
  %95 = vmatprep.subr.mxu0 0.0
  %96 = vmatpush1.msra.mxu0 %v36
  %97 = vmatprep.subr.mxu0 0.0
  %98 = vmatpush1.msra.mxu0 %v37
  %99 = vmatprep.subr.mxu0 0.0
  %100 = vmatpush1.msra.mxu0 %v38
  %101 = vmatprep.subr.mxu0 0.0
  %102 = vmatpush1.msra.mxu0 %v39
  %103 = vmatprep.subr.mxu0 0.0
  %104 = vmatpush1.msra.mxu0 %v40
  %105 = vmatprep.subr.mxu0 0.0
  %106 = vmatpush1.msra.mxu0 %v41
  %107 = vmatprep.subr.mxu0 0.0
  %108 = vmatpush1.msra.mxu0 %v42
  %109 = vmatprep.subr.mxu0 0.0
  %110 = vmatpush1.msra.mxu0 %v43
  %111 = vmatprep.subr.mxu0 0.0
  %112 = vmatpush1.msra.mxu0 %v44
  %113 = vmatprep.subr.mxu0 0.0
  %114 = vmatpush1.msra.mxu0 %v45
  %115 = vmatprep.subr.mxu0 0.0
  %116 = vmatpush1.msra.mxu0 %v46
  %117 = vmatprep.subr.mxu0 0.0
  %118 = vmatpush1.msra.mxu0 %v47
  %119 = vmatprep.mubr.f32.mxu0 %v15
  %120 = vmatmul.mubr.f32.gmra.mrb[0].mxu0 %v14
  %v121 = vpop.f32.mrb[0].mxu0
  %v122 = vadd.f32 %v53, %v121
  %v123 = vpop.f32.mrb[0].mxu0
  %124 = vdwg.mxu0
  %125 = vst [vmem:[%s3] sm:$0xff] %v122
  // Predicated region
  $region14: #{transformer_sr_forward.16} parent=0 // pred_check
    _
  $region15: #{transformer_sr_forward.16} parent=0 // pred_check_branch
    %127 = sbr.rel (0) target = $region17
  $region16: #{transformer_sr_forward.16} parent=0 // pred_region
    _
  $region17: #{transformer_sr_forward.16} parent=0 // pred_fallthru
    _
  // Predicated region
  $region18: #{transformer_sr_forward.16} parent=0 // pred_check
    _
  $region19: #{transformer_sr_forward.16} parent=0 // pred_check_branch
    %129 = sbr.rel (0) target = $region21
  $region20: #{transformer_sr_forward.16} parent=0 // pred_region
    _
  $region21: #{transformer_sr_forward.16} parent=0 // pred_fallthru
    _

// kernel: transformer_sr_forward.19
$region0: #{transformer_sr_forward.19}
  #allocation0 [shape = 'u32[]', space=smem, size = 0x4, offset = 0x4, fixed_abs, tag = 'smem constant byte address 0x4 - core index']
  #allocation1 [shape = 'u32[144,128]{1,0:T(1,128)}', space=vmem, size = 0x12000, scoped, tag = 'internal scratch']
  %s0 = inlined_call_operand.vmem [shape: f32[8,128], index: 0, kind: input, shape index: {}]
  %s1 = inlined_call_operand.vmem [shape: f32[128,256], index: 1, kind: input, shape index: {}]
  %s2 = inlined_call_operand.vmem [shape: f32[1,256], index: 2, kind: input, shape index: {}]
  %s3 = inlined_call_operand.vmem [shape: f32[8,256], index: 3, kind: output, shape index: {}]
  %s4 = sld [smem:[#allocation0]]
  $region22: #{transformer_sr_forward.19} parent=0
    _
  %s6 = ssub.s32 1, %s4
  %s7 = scalar_select 0, %s6, %s4
  // Predicated region
  $region2: #{transformer_sr_forward.19} parent=0 // pred_check
    _
  $region3: #{transformer_sr_forward.19} parent=0 // pred_check_branch
    %9 = sbr.rel (0) target = $region5
  $region4: #{transformer_sr_forward.19} parent=0 // pred_region
    _
  $region5: #{transformer_sr_forward.19} parent=0 // pred_fallthru
    _
  // Predicated region
  $region6: #{transformer_sr_forward.19} parent=0 // pred_check
    _
  $region7: #{transformer_sr_forward.19} parent=0 // pred_check_branch
    %11 = sbr.rel (0) target = $region9
  $region8: #{transformer_sr_forward.19} parent=0 // pred_region
    _
  $region9: #{transformer_sr_forward.19} parent=0 // pred_fallthru
    _
  // Predicated region
  $region10: #{transformer_sr_forward.19} parent=0 // pred_check
    _
  $region11: #{transformer_sr_forward.19} parent=0 // pred_check_branch
    %13 = sbr.rel (0) target = $region13
  $region12: #{transformer_sr_forward.19} parent=0 // pred_region
    _
  $region13: #{transformer_sr_forward.19} parent=0 // pred_fallthru
    _
  %v14 = vld [vmem:[%s0] sm:$0xff]
  %v15 = vld [vmem:[%s1] sm:$0xff]
  %v16 = vld [vmem:[%s1 + $0x8] sm:$0xff]
  %v17 = vld [vmem:[%s1 + $0x10] sm:$0xff]
  %v18 = vld [vmem:[%s1 + $0x18] sm:$0xff]
  %v19 = vld [vmem:[%s1 + $0x20] sm:$0xff]
  %v20 = vld [vmem:[%s1 + $0x28] sm:$0xff]
  %v21 = vld [vmem:[%s1 + $0x30] sm:$0xff]
  %v22 = vld [vmem:[%s1 + $0x38] sm:$0xff]
  %v23 = vld [vmem:[%s1 + $0x40] sm:$0xff]
  %v24 = vld [vmem:[%s1 + $0x48] sm:$0xff]
  %v25 = vld [vmem:[%s1 + $0x50] sm:$0xff]
  %v26 = vld [vmem:[%s1 + $0x58] sm:$0xff]
  %v27 = vld [vmem:[%s1 + $0x60] sm:$0xff]
  %v28 = vld [vmem:[%s1 + $0x68] sm:$0xff]
  %v29 = vld [vmem:[%s1 + $0x70] sm:$0xff]
  %v30 = vld [vmem:[%s1 + $0x78] sm:$0xff]
  %v31 = vld [vmem:[%s1 + $0x80] sm:$0xff]
  %v32 = vld [vmem:[%s1 + $0x88] sm:$0xff]
  %v33 = vld [vmem:[%s1 + $0x90] sm:$0xff]
  %v34 = vld [vmem:[%s1 + $0x98] sm:$0xff]
  %v35 = vld [vmem:[%s1 + $0xa0] sm:$0xff]
  %v36 = vld [vmem:[%s1 + $0xa8] sm:$0xff]
  %v37 = vld [vmem:[%s1 + $0xb0] sm:$0xff]
  %v38 = vld [vmem:[%s1 + $0xb8] sm:$0xff]
  %v39 = vld [vmem:[%s1 + $0xc0] sm:$0xff]
  %v40 = vld [vmem:[%s1 + $0xc8] sm:$0xff]
  %v41 = vld [vmem:[%s1 + $0xd0] sm:$0xff]
  %v42 = vld [vmem:[%s1 + $0xd8] sm:$0xff]
  %v43 = vld [vmem:[%s1 + $0xe0] sm:$0xff]
  %v44 = vld [vmem:[%s1 + $0xe8] sm:$0xff]
  %v45 = vld [vmem:[%s1 + $0xf0] sm:$0xff]
  %v46 = vld [vmem:[%s1 + $0xf8] sm:$0xff]
  %v47 = vld [vmem:[%s2] sm:$0x3]
  %v49 = vlaneseq
  %v50 = vshrl.u32 %v49, 7
  %v51 = vsub.s32 0, %v50
  %v52 = vrot.slane %v47, %v51
  %v53 = vlaneseq
  %v54 = vshrl.u32 %v53, 7
  %v55 = vsub.s32 1, %v54
  %v56 = vrot.slane %v47, %v55
  %59 = vmatprep.subr.mxu0 %v16
  %60 = vmatpush1.msra.mxu0 %v15
  %61 = vmatprep.subr.mxu0 %v18
  %62 = vmatpush1.msra.mxu0 %v17
  %63 = vmatprep.subr.mxu0 %v20
  %64 = vmatpush1.msra.mxu0 %v19
  %65 = vmatprep.subr.mxu0 %v22
  %66 = vmatpush1.msra.mxu0 %v21
  %67 = vmatprep.subr.mxu0 %v24
  %68 = vmatpush1.msra.mxu0 %v23
  %69 = vmatprep.subr.mxu0 %v26
  %70 = vmatpush1.msra.mxu0 %v25
  %71 = vmatprep.subr.mxu0 %v28
  %72 = vmatpush1.msra.mxu0 %v27
  %73 = vmatprep.subr.mxu0 %v30
  %74 = vmatpush1.msra.mxu0 %v29
  %75 = vmatprep.subr.mxu0 %v32
  %76 = vmatpush1.msra.mxu0 %v31
  %77 = vmatprep.subr.mxu0 %v34
  %78 = vmatpush1.msra.mxu0 %v33
  %79 = vmatprep.subr.mxu0 %v36
  %80 = vmatpush1.msra.mxu0 %v35
  %81 = vmatprep.subr.mxu0 %v38
  %82 = vmatpush1.msra.mxu0 %v37
  %83 = vmatprep.subr.mxu0 %v40
  %84 = vmatpush1.msra.mxu0 %v39
  %85 = vmatprep.subr.mxu0 %v42
  %86 = vmatpush1.msra.mxu0 %v41
  %87 = vmatprep.subr.mxu0 %v44
  %88 = vmatpush1.msra.mxu0 %v43
  %89 = vmatprep.subr.mxu0 %v46
  %90 = vmatpush1.msra.mxu0 %v45
  %91 = vmatprep.subr.mxu0 0.0
  %92 = vmatpush1.msra.mxu0 0.0
  %93 = vmatprep.subr.mxu0 0.0
  %94 = vmatpush1.msra.mxu0 0.0
  %95 = vmatprep.subr.mxu0 0.0
  %96 = vmatpush1.msra.mxu0 0.0
  %97 = vmatprep.subr.mxu0 0.0
  %98 = vmatpush1.msra.mxu0 0.0
  %99 = vmatprep.subr.mxu0 0.0
  %100 = vmatpush1.msra.mxu0 0.0
  %101 = vmatprep.subr.mxu0 0.0
  %102 = vmatpush1.msra.mxu0 0.0
  %103 = vmatprep.subr.mxu0 0.0
  %104 = vmatpush1.msra.mxu0 0.0
  %105 = vmatprep.subr.mxu0 0.0
  %106 = vmatpush1.msra.mxu0 0.0
  %107 = vmatprep.subr.mxu0 0.0
  %108 = vmatpush1.msra.mxu0 0.0
  %109 = vmatprep.subr.mxu0 0.0
  %110 = vmatpush1.msra.mxu0 0.0
  %111 = vmatprep.subr.mxu0 0.0
  %112 = vmatpush1.msra.mxu0 0.0
  %113 = vmatprep.subr.mxu0 0.0
  %114 = vmatpush1.msra.mxu0 0.0
  %115 = vmatprep.subr.mxu0 0.0
  %116 = vmatpush1.msra.mxu0 0.0
  %117 = vmatprep.subr.mxu0 0.0
  %118 = vmatpush1.msra.mxu0 0.0
  %119 = vmatprep.subr.mxu0 0.0
  %120 = vmatpush1.msra.mxu0 0.0
  %121 = vmatprep.subr.mxu0 0.0
  %122 = vmatpush1.msra.mxu0 0.0
  %123 = vmatprep.mubr.f32.mxu0 0.0
  %124 = vmatmul.mubr.f32.gmra.mrb[0].mxu0 %v14
  %v125 = vpop.f32.mrb[0].mxu0
  %v126 = vadd.f32 %v52, %v125
  %v127 = vpop.f32.mrb[0].mxu0
  %v128 = vadd.f32 %v56, %v127
  %129 = vdwg.mxu0
  %130 = vst [vmem:[%s3] sm:$0xff] %v126
  %131 = vst [vmem:[%s3 + $0x8] sm:$0xff] %v128
  // Predicated region
  $region14: #{transformer_sr_forward.19} parent=0 // pred_check
    _
  $region15: #{transformer_sr_forward.19} parent=0 // pred_check_branch
    %133 = sbr.rel (0) target = $region17
  $region16: #{transformer_sr_forward.19} parent=0 // pred_region
    _
  $region17: #{transformer_sr_forward.19} parent=0 // pred_fallthru
    _
  // Predicated region
  $region18: #{transformer_sr_forward.19} parent=0 // pred_check
    _
  $region19: #{transformer_sr_forward.19} parent=0 // pred_check_branch
    %135 = sbr.rel (0) target = $region21
  $region20: #{transformer_sr_forward.19} parent=0 // pred_region
    _
  $region21: #{transformer_sr_forward.19} parent=0 // pred_fallthru
    _

// kernel: transformer_sr_forward.12
$region0: #{transformer_sr_forward.12}
  #allocation0 [shape = 'u32[]', space=smem, size = 0x4, offset = 0x4, fixed_abs, tag = 'smem constant byte address 0x4 - core index']
  #allocation1 [shape = 'u32[144,128]{1,0:T(1,128)}', space=vmem, size = 0x12000, scoped, tag = 'internal scratch']
  %s0 = inlined_call_operand.vmem [shape: f32[2,8,8,64], index: 0, kind: input, shape index: {}]
  %s1 = inlined_call_operand.vmem [shape: f32[1,64], index: 1, kind: input, shape index: {}]
  %s2 = inlined_call_operand.vmem [shape: f32[1,64], index: 2, kind: input, shape index: {}]
  %s3 = inlined_call_operand.vmem [shape: f32[64,192], index: 3, kind: input, shape index: {}]
  %s4 = inlined_call_operand.vmem [shape: f32[1,192], index: 4, kind: input, shape index: {}]
  %s5 = inlined_call_operand.vmem [shape: f32[64,64], index: 5, kind: input, shape index: {}]
  %s6 = inlined_call_operand.vmem [shape: f32[1,64], index: 6, kind: input, shape index: {}]
  %s7 = inlined_call_operand.vmem [shape: f32[1,64], index: 7, kind: input, shape index: {}]
  %s8 = inlined_call_operand.vmem [shape: f32[1,64], index: 8, kind: input, shape index: {}]
  %s9 = inlined_call_operand.vmem [shape: f32[64,256], index: 9, kind: input, shape index: {}]
  %s10 = inlined_call_operand.vmem [shape: f32[1,256], index: 10, kind: input, shape index: {}]
  %s11 = inlined_call_operand.vmem [shape: f32[256,64], index: 11, kind: input, shape index: {}]
  %s12 = inlined_call_operand.vmem [shape: f32[1,64], index: 12, kind: input, shape index: {}]
  %s13 = inlined_call_operand.vmem [shape: f32[2,8,8,64], index: 13, kind: output, shape index: {}]
  %s14 = sld [smem:[#allocation0]]
  $region85: #{transformer_sr_forward.12} parent=0
    _
  %s16 = ssub.s32 1, %s14
  %s17 = scalar_select 0, %s16, %s14
  loop: start=0, step=1, limit=4
  $region2: #{transformer_sr_forward.12} parent=0 // loop_pre_header
    _
  $region3: #{transformer_sr_forward.12} parent=0 // loop_header
    %s19 = sphi 0, %s23
    %p20 = scmp.ge.s32.totalorder %s19, 4
    %s26 = sphi 0, %s38
    %s27 = sphi 0, %s34
    %s28 = sphi 0, %s26
    %s29 = sphi 0, %s27
    %s30 = sphi 0, %s28
    %s31 = sphi 0, %s29
    %s43 = sphi 0, %s45
    %s46 = sphi 0, %s43
    %s47 = sphi 0, %s46
    %s63 = sphi 0, %s47
    %s67 = sphi 0, %s67
    %s69 = sphi 0, %s67
    %s70 = sphi 0, %s69
    %s84 = sphi 0, %s70
    %s88 = sphi 0, %s88
    %s90 = sphi 0, %s88
    %s91 = sphi 0, %s90
    %s105 = sphi 0, %s91
    %s109 = sphi 0, %s109
    %s111 = sphi 0, %s109
    %s112 = sphi 0, %s111
    %s126 = sphi 0, %s112
    %s130 = sphi 0, %s130
    %s132 = sphi 0, %s130
    %s133 = sphi 0, %s132
    %s147 = sphi 0, %s133
    %s151 = sphi 0, %s151
    %s153 = sphi 0, %s151
    %s154 = sphi 0, %s153
    %s168 = sphi 0, %s154
    %s172 = sphi 0, %s172
    %s174 = sphi 0, %s172
    %s175 = sphi 0, %s174
    %s189 = sphi 0, %s175
    %s193 = sphi 0, %s193
    %s195 = sphi 0, %s193
    %s196 = sphi 0, %s195
    %s210 = sphi 0, %s196
    %s214 = sphi 0, %s214
    %s216 = sphi 0, %s214
    %s217 = sphi 0, %s216
    %s231 = sphi 0, %s217
    %s235 = sphi 0, %s235
    %s237 = sphi 0, %s235
    %s238 = sphi 0, %s237
    %s252 = sphi 0, %s238
    %s256 = sphi 0, %s256
    %s258 = sphi 0, %s256
    %s259 = sphi 0, %s258
    %s273 = sphi 0, %s259
    %s277 = sphi 0, %s277
    %s279 = sphi 0, %s277
    %s280 = sphi 0, %s279
    %s294 = sphi 0, %s280
    %s298 = sphi 0, %s298
    %s300 = sphi 0, %s298
    %s301 = sphi 0, %s300
    %s315 = sphi 0, %s301
    %s323 = sphi 0, %s325
    %s326 = sphi 0, %s323
    %s327 = sphi 0, %s326
    %s343 = sphi 0, %s327
  $region4: #{transformer_sr_forward.12} parent=0 // loop_header_branch
    %22 = sbr.rel (%p20) target = $region8
  $region5: #{transformer_sr_forward.12} parent=0 // loop_body
    %s24 = ssub.s32 %s19, 1
    %s25 = ssub.s32 %s19, 2
    %s32 = sadd.s32 1, %s27
    %p33 = scmp.ge.s32.totalorder %s32, 1
    %s34 = scalar_select %p33, 0, %s32
    %s35 = sadd.s32 1, %s26
    %s36 = scalar_select %p33, %s35, %s26
    %p37 = scmp.ge.s32.totalorder %s36, 2
    %s38 = scalar_select %p37, 0, %s36
    %s39 = ssub.s32 %s26, %s38
    %s40 = ssub.s32 %s27, %s34
    %s41 = sor.u32 %s39, %s40
    %p42 = scmp.eq.s32.totalorder %s41, 0
    %s44 = sadd.s32 %s43, 1
    %s45 = scalar_select %p42, %s43, %s44
    %p48 = pneg %p42
    %p49 = scmp.eq.s32.totalorder %s19, 1
    %p50 = por %p48, %p49
    %p51 = scmp.ne.s32.totalorder %s43, %s46
    %p52 = scmp.eq.s32.totalorder %s19, 0
    %p53 = por %p51, %p52
    %p54 = scmp.ne.s32.totalorder %s43, %s46
    %p55 = scmp.eq.s32.totalorder %s24, 1
    %p56 = por %p54, %p55
    %p57 = scmp.ne.s32.totalorder %s46, %s47
    %p58 = scmp.eq.s32.totalorder %s24, 0
    %p59 = por %p57, %p58
    %p60 = scmp.ne.s32.totalorder %s46, %s47
    %p61 = scmp.eq.s32.totalorder %s25, 1
    %p62 = por %p60, %p61
    %p64 = scmp.ne.s32.totalorder %s47, %s63
    %p65 = scmp.eq.s32.totalorder %s25, 0
    %p66 = por %p64, %p65
    %s68 = sadd.s32 %s67, 1
    %p71 = scmp.eq.s32.totalorder %s19, 1
    %p72 = scmp.ne.s32.totalorder %s67, %s69
    %p73 = scmp.eq.s32.totalorder %s19, 0
    %p74 = por %p72, %p73
    %p75 = scmp.ne.s32.totalorder %s67, %s69
    %p76 = scmp.eq.s32.totalorder %s24, 1
    %p77 = por %p75, %p76
    %p78 = scmp.ne.s32.totalorder %s69, %s70
    %p79 = scmp.eq.s32.totalorder %s24, 0
    %p80 = por %p78, %p79
    %p81 = scmp.ne.s32.totalorder %s69, %s70
    %p82 = scmp.eq.s32.totalorder %s25, 1
    %p83 = por %p81, %p82
    %p85 = scmp.ne.s32.totalorder %s70, %s84
    %p86 = scmp.eq.s32.totalorder %s25, 0
    %p87 = por %p85, %p86
    %s89 = sadd.s32 %s88, 1
    %p92 = scmp.eq.s32.totalorder %s19, 1
    %p93 = scmp.ne.s32.totalorder %s88, %s90
    %p94 = scmp.eq.s32.totalorder %s19, 0
    %p95 = por %p93, %p94
    %p96 = scmp.ne.s32.totalorder %s88, %s90
    %p97 = scmp.eq.s32.totalorder %s24, 1
    %p98 = por %p96, %p97
    %p99 = scmp.ne.s32.totalorder %s90, %s91
    %p100 = scmp.eq.s32.totalorder %s24, 0
    %p101 = por %p99, %p100
    %p102 = scmp.ne.s32.totalorder %s90, %s91
    %p103 = scmp.eq.s32.totalorder %s25, 1
    %p104 = por %p102, %p103
    %p106 = scmp.ne.s32.totalorder %s91, %s105
    %p107 = scmp.eq.s32.totalorder %s25, 0
    %p108 = por %p106, %p107
    %s110 = sadd.s32 %s109, 1
    %p113 = scmp.eq.s32.totalorder %s19, 1
    %p114 = scmp.ne.s32.totalorder %s109, %s111
    %p115 = scmp.eq.s32.totalorder %s19, 0
    %p116 = por %p114, %p115
    %p117 = scmp.ne.s32.totalorder %s109, %s111
    %p118 = scmp.eq.s32.totalorder %s24, 1
    %p119 = por %p117, %p118
    %p120 = scmp.ne.s32.totalorder %s111, %s112
    %p121 = scmp.eq.s32.totalorder %s24, 0
    %p122 = por %p120, %p121
    %p123 = scmp.ne.s32.totalorder %s111, %s112
    %p124 = scmp.eq.s32.totalorder %s25, 1
    %p125 = por %p123, %p124
    %p127 = scmp.ne.s32.totalorder %s112, %s126
    %p128 = scmp.eq.s32.totalorder %s25, 0
    %p129 = por %p127, %p128
    %s131 = sadd.s32 %s130, 1
    %p134 = scmp.eq.s32.totalorder %s19, 1
    %p135 = scmp.ne.s32.totalorder %s130, %s132
    %p136 = scmp.eq.s32.totalorder %s19, 0
    %p137 = por %p135, %p136
    %p138 = scmp.ne.s32.totalorder %s130, %s132
    %p139 = scmp.eq.s32.totalorder %s24, 1
    %p140 = por %p138, %p139
    %p141 = scmp.ne.s32.totalorder %s132, %s133
    %p142 = scmp.eq.s32.totalorder %s24, 0
    %p143 = por %p141, %p142
    %p144 = scmp.ne.s32.totalorder %s132, %s133
    %p145 = scmp.eq.s32.totalorder %s25, 1
    %p146 = por %p144, %p145
    %p148 = scmp.ne.s32.totalorder %s133, %s147
    %p149 = scmp.eq.s32.totalorder %s25, 0
    %p150 = por %p148, %p149
    %s152 = sadd.s32 %s151, 1
    %p155 = scmp.eq.s32.totalorder %s19, 1
    %p156 = scmp.ne.s32.totalorder %s151, %s153
    %p157 = scmp.eq.s32.totalorder %s19, 0
    %p158 = por %p156, %p157
    %p159 = scmp.ne.s32.totalorder %s151, %s153
    %p160 = scmp.eq.s32.totalorder %s24, 1
    %p161 = por %p159, %p160
    %p162 = scmp.ne.s32.totalorder %s153, %s154
    %p163 = scmp.eq.s32.totalorder %s24, 0
    %p164 = por %p162, %p163
    %p165 = scmp.ne.s32.totalorder %s153, %s154
    %p166 = scmp.eq.s32.totalorder %s25, 1
    %p167 = por %p165, %p166
    %p169 = scmp.ne.s32.totalorder %s154, %s168
    %p170 = scmp.eq.s32.totalorder %s25, 0
    %p171 = por %p169, %p170
    %s173 = sadd.s32 %s172, 1
    %p176 = scmp.eq.s32.totalorder %s19, 1
    %p177 = scmp.ne.s32.totalorder %s172, %s174
    %p178 = scmp.eq.s32.totalorder %s19, 0
    %p179 = por %p177, %p178
    %p180 = scmp.ne.s32.totalorder %s172, %s174
    %p181 = scmp.eq.s32.totalorder %s24, 1
    %p182 = por %p180, %p181
    %p183 = scmp.ne.s32.totalorder %s174, %s175
    %p184 = scmp.eq.s32.totalorder %s24, 0
    %p185 = por %p183, %p184
    %p186 = scmp.ne.s32.totalorder %s174, %s175
    %p187 = scmp.eq.s32.totalorder %s25, 1
    %p188 = por %p186, %p187
    %p190 = scmp.ne.s32.totalorder %s175, %s189
    %p191 = scmp.eq.s32.totalorder %s25, 0
    %p192 = por %p190, %p191
    %s194 = sadd.s32 %s193, 1
    %p197 = scmp.eq.s32.totalorder %s19, 1
    %p198 = scmp.ne.s32.totalorder %s193, %s195
    %p199 = scmp.eq.s32.totalorder %s19, 0
    %p200 = por %p198, %p199
    %p201 = scmp.ne.s32.totalorder %s193, %s195
    %p202 = scmp.eq.s32.totalorder %s24, 1
    %p203 = por %p201, %p202
    %p204 = scmp.ne.s32.totalorder %s195, %s196
    %p205 = scmp.eq.s32.totalorder %s24, 0
    %p206 = por %p204, %p205
    %p207 = scmp.ne.s32.totalorder %s195, %s196
    %p208 = scmp.eq.s32.totalorder %s25, 1
    %p209 = por %p207, %p208
    %p211 = scmp.ne.s32.totalorder %s196, %s210
    %p212 = scmp.eq.s32.totalorder %s25, 0
    %p213 = por %p211, %p212
    %s215 = sadd.s32 %s214, 1
    %p218 = scmp.eq.s32.totalorder %s19, 1
    %p219 = scmp.ne.s32.totalorder %s214, %s216
    %p220 = scmp.eq.s32.totalorder %s19, 0
    %p221 = por %p219, %p220
    %p222 = scmp.ne.s32.totalorder %s214, %s216
    %p223 = scmp.eq.s32.totalorder %s24, 1
    %p224 = por %p222, %p223
    %p225 = scmp.ne.s32.totalorder %s216, %s217
    %p226 = scmp.eq.s32.totalorder %s24, 0
    %p227 = por %p225, %p226
    %p228 = scmp.ne.s32.totalorder %s216, %s217
    %p229 = scmp.eq.s32.totalorder %s25, 1
    %p230 = por %p228, %p229
    %p232 = scmp.ne.s32.totalorder %s217, %s231
    %p233 = scmp.eq.s32.totalorder %s25, 0
    %p234 = por %p232, %p233
    %s236 = sadd.s32 %s235, 1
    %p239 = scmp.eq.s32.totalorder %s19, 1
    %p240 = scmp.ne.s32.totalorder %s235, %s237
    %p241 = scmp.eq.s32.totalorder %s19, 0
    %p242 = por %p240, %p241
    %p243 = scmp.ne.s32.totalorder %s235, %s237
    %p244 = scmp.eq.s32.totalorder %s24, 1
    %p245 = por %p243, %p244
    %p246 = scmp.ne.s32.totalorder %s237, %s238
    %p247 = scmp.eq.s32.totalorder %s24, 0
    %p248 = por %p246, %p247
    %p249 = scmp.ne.s32.totalorder %s237, %s238
    %p250 = scmp.eq.s32.totalorder %s25, 1
    %p251 = por %p249, %p250
    %p253 = scmp.ne.s32.totalorder %s238, %s252
    %p254 = scmp.eq.s32.totalorder %s25, 0
    %p255 = por %p253, %p254
    %s257 = sadd.s32 %s256, 1
    %p260 = scmp.eq.s32.totalorder %s19, 1
    %p261 = scmp.ne.s32.totalorder %s256, %s258
    %p262 = scmp.eq.s32.totalorder %s19, 0
    %p263 = por %p261, %p262
    %p264 = scmp.ne.s32.totalorder %s256, %s258
    %p265 = scmp.eq.s32.totalorder %s24, 1
    %p266 = por %p264, %p265
    %p267 = scmp.ne.s32.totalorder %s258, %s259
    %p268 = scmp.eq.s32.totalorder %s24, 0
    %p269 = por %p267, %p268
    %p270 = scmp.ne.s32.totalorder %s258, %s259
    %p271 = scmp.eq.s32.totalorder %s25, 1
    %p272 = por %p270, %p271
    %p274 = scmp.ne.s32.totalorder %s259, %s273
    %p275 = scmp.eq.s32.totalorder %s25, 0
    %p276 = por %p274, %p275
    %s278 = sadd.s32 %s277, 1
    %p281 = scmp.eq.s32.totalorder %s19, 1
    %p282 = scmp.ne.s32.totalorder %s277, %s279
    %p283 = scmp.eq.s32.totalorder %s19, 0
    %p284 = por %p282, %p283
    %p285 = scmp.ne.s32.totalorder %s277, %s279
    %p286 = scmp.eq.s32.totalorder %s24, 1
    %p287 = por %p285, %p286
    %p288 = scmp.ne.s32.totalorder %s279, %s280
    %p289 = scmp.eq.s32.totalorder %s24, 0
    %p290 = por %p288, %p289
    %p291 = scmp.ne.s32.totalorder %s279, %s280
    %p292 = scmp.eq.s32.totalorder %s25, 1
    %p293 = por %p291, %p292
    %p295 = scmp.ne.s32.totalorder %s280, %s294
    %p296 = scmp.eq.s32.totalorder %s25, 0
    %p297 = por %p295, %p296
    %s299 = sadd.s32 %s298, 1
    %p302 = scmp.eq.s32.totalorder %s19, 1
    %p303 = scmp.ne.s32.totalorder %s298, %s300
    %p304 = scmp.eq.s32.totalorder %s19, 0
    %p305 = por %p303, %p304
    %p306 = scmp.ne.s32.totalorder %s298, %s300
    %p307 = scmp.eq.s32.totalorder %s24, 1
    %p308 = por %p306, %p307
    %p309 = scmp.ne.s32.totalorder %s300, %s301
    %p310 = scmp.eq.s32.totalorder %s24, 0
    %p311 = por %p309, %p310
    %p312 = scmp.ne.s32.totalorder %s300, %s301
    %p313 = scmp.eq.s32.totalorder %s25, 1
    %p314 = por %p312, %p313
    %p316 = scmp.ne.s32.totalorder %s301, %s315
    %p317 = scmp.eq.s32.totalorder %s25, 0
    %p318 = por %p316, %p317
    %s319 = ssub.s32 %s26, %s38
    %s320 = ssub.s32 %s27, %s34
    %s321 = sor.u32 %s319, %s320
    %p322 = scmp.eq.s32.totalorder %s321, 0
    %s324 = sadd.s32 %s323, 1
    %s325 = scalar_select %p322, %s323, %s324
    %p328 = pneg %p322
    %p329 = scmp.eq.s32.totalorder %s19, 1
    %p330 = por %p328, %p329
    %p331 = scmp.ne.s32.totalorder %s323, %s326
    %p332 = scmp.eq.s32.totalorder %s19, 0
    %p333 = por %p331, %p332
    %p334 = scmp.ne.s32.totalorder %s323, %s326
    %p335 = scmp.eq.s32.totalorder %s24, 1
    %p336 = por %p334, %p335
    %p337 = scmp.ne.s32.totalorder %s326, %s327
    %p338 = scmp.eq.s32.totalorder %s24, 0
    %p339 = por %p337, %p338
    %p340 = scmp.ne.s32.totalorder %s326, %s327
    %p341 = scmp.eq.s32.totalorder %s25, 1
    %p342 = por %p340, %p341
    %p344 = scmp.ne.s32.totalorder %s327, %s343
    %p345 = scmp.eq.s32.totalorder %s25, 0
    %p346 = por %p344, %p345
    %p347 = scmp.le.s32.totalorder 1, %s19
    %p348 = scmp.lt.s32.totalorder %s19, 3
    %p349 = pnand %p347, %p348
    %p350 = pneg %p349
    // Predicated region
    $region9: #{transformer_sr_forward.12} parent=5 // pred_check
      _
    $region10: #{transformer_sr_forward.12} parent=5 // pred_check_branch
      %352 = sbr.rel (%p349) target = $region12
    $region11: #{transformer_sr_forward.12} parent=5 // pred_region
      %s353 = ssub.s32 %s19, 1
      // Predicated region
      $region13: #{transformer_sr_forward.12} parent=11 // pred_check
        %p354 = pneg %p80
      $region14: #{transformer_sr_forward.12} parent=11 // pred_check_branch
        %356 = sbr.rel (%p354) target = $region16
      $region15: #{transformer_sr_forward.12} parent=11 // pred_region
        _
      $region16: #{transformer_sr_forward.12} parent=11 // pred_fallthru
        _
      // Predicated region
      $region17: #{transformer_sr_forward.12} parent=11 // pred_check
        %p357 = pneg %p101
      $region18: #{transformer_sr_forward.12} parent=11 // pred_check_branch
        %359 = sbr.rel (%p357) target = $region20
      $region19: #{transformer_sr_forward.12} parent=11 // pred_region
        _
      $region20: #{transformer_sr_forward.12} parent=11 // pred_fallthru
        _
      // Predicated region
      $region21: #{transformer_sr_forward.12} parent=11 // pred_check
        %p360 = pneg %p122
      $region22: #{transformer_sr_forward.12} parent=11 // pred_check_branch
        %362 = sbr.rel (%p360) target = $region24
      $region23: #{transformer_sr_forward.12} parent=11 // pred_region
        _
      $region24: #{transformer_sr_forward.12} parent=11 // pred_fallthru
        _
      // Predicated region
      $region25: #{transformer_sr_forward.12} parent=11 // pred_check
        %p363 = pneg %p143
      $region26: #{transformer_sr_forward.12} parent=11 // pred_check_branch
        %365 = sbr.rel (%p363) target = $region28
      $region27: #{transformer_sr_forward.12} parent=11 // pred_region
        _
      $region28: #{transformer_sr_forward.12} parent=11 // pred_fallthru
        _
      // Predicated region
      $region29: #{transformer_sr_forward.12} parent=11 // pred_check
        %p366 = pneg %p164
      $region30: #{transformer_sr_forward.12} parent=11 // pred_check_branch
        %368 = sbr.rel (%p366) target = $region32
      $region31: #{transformer_sr_forward.12} parent=11 // pred_region
        _
      $region32: #{transformer_sr_forward.12} parent=11 // pred_fallthru
        _
      // Predicated region
      $region33: #{transformer_sr_forward.12} parent=11 // pred_check
        %p369 = pneg %p185
      $region34: #{transformer_sr_forward.12} parent=11 // pred_check_branch
        %371 = sbr.rel (%p369) target = $region36
      $region35: #{transformer_sr_forward.12} parent=11 // pred_region
        _
      $region36: #{transformer_sr_forward.12} parent=11 // pred_fallthru
        _
      // Predicated region
      $region37: #{transformer_sr_forward.12} parent=11 // pred_check
        %p372 = pneg %p206
      $region38: #{transformer_sr_forward.12} parent=11 // pred_check_branch
        %374 = sbr.rel (%p372) target = $region40
      $region39: #{transformer_sr_forward.12} parent=11 // pred_region
        _
      $region40: #{transformer_sr_forward.12} parent=11 // pred_fallthru
        _
      // Predicated region
      $region41: #{transformer_sr_forward.12} parent=11 // pred_check
        %p375 = pneg %p227
      $region42: #{transformer_sr_forward.12} parent=11 // pred_check_branch
        %377 = sbr.rel (%p375) target = $region44
      $region43: #{transformer_sr_forward.12} parent=11 // pred_region
        _
      $region44: #{transformer_sr_forward.12} parent=11 // pred_fallthru
        _
      // Predicated region
      $region45: #{transformer_sr_forward.12} parent=11 // pred_check
        %p378 = pneg %p248
      $region46: #{transformer_sr_forward.12} parent=11 // pred_check_branch
        %380 = sbr.rel (%p378) target = $region48
      $region47: #{transformer_sr_forward.12} parent=11 // pred_region
        _
      $region48: #{transformer_sr_forward.12} parent=11 // pred_fallthru
        _
      // Predicated region
      $region49: #{transformer_sr_forward.12} parent=11 // pred_check
        %p381 = pneg %p269
      $region50: #{transformer_sr_forward.12} parent=11 // pred_check_branch
        %383 = sbr.rel (%p381) target = $region52
      $region51: #{transformer_sr_forward.12} parent=11 // pred_region
        _
      $region52: #{transformer_sr_forward.12} parent=11 // pred_fallthru
        _
      // Predicated region
      $region53: #{transformer_sr_forward.12} parent=11 // pred_check
        %p384 = pneg %p290
      $region54: #{transformer_sr_forward.12} parent=11 // pred_check_branch
        %386 = sbr.rel (%p384) target = $region56
      $region55: #{transformer_sr_forward.12} parent=11 // pred_region
        _
      $region56: #{transformer_sr_forward.12} parent=11 // pred_fallthru
        _
      // Predicated region
      $region57: #{transformer_sr_forward.12} parent=11 // pred_check
        %p387 = pneg %p311
      $region58: #{transformer_sr_forward.12} parent=11 // pred_check_branch
        %389 = sbr.rel (%p387) target = $region60
      $region59: #{transformer_sr_forward.12} parent=11 // pred_region
        _
      $region60: #{transformer_sr_forward.12} parent=11 // pred_fallthru
        _
    $region12: #{transformer_sr_forward.12} parent=5 // pred_fallthru
      _
    %p390 = scmp.lt.s32.totalorder %s19, 2
    // Predicated region
    $region61: #{transformer_sr_forward.12} parent=5 // pred_check
      %p391 = pneg %p390
    $region62: #{transformer_sr_forward.12} parent=5 // pred_check_branch
      %393 = sbr.rel (%p391) target = $region64
    $region63: #{transformer_sr_forward.12} parent=5 // pred_region
      // Predicated region
      $region65: #{transformer_sr_forward.12} parent=63 // pred_check
        %p394 = pneg %p53
      $region66: #{transformer_sr_forward.12} parent=63 // pred_check_branch
        %396 = sbr.rel (%p394) target = $region68
      $region67: #{transformer_sr_forward.12} parent=63 // pred_region
        %s397 = smul.u32 8, %s27
        %p398 = scmp.lt.s32.totalorder %s26, 1
        %s399 = scalar_select %p398, %s26, 1
        %p400 = scmp.lt.s32.totalorder %s397, 7
        %s401 = scalar_select %p400, %s397, 7
        %s402 = smul.addr %s399, 8
        %s403 = sadd.s32 %s401, %s402
        %s404 = smul.addr %s403, 8
        %s405 = scalar_lea.vmem %s0, %s404
        %s406 = smul.u32 8, %s27
      $region68: #{transformer_sr_forward.12} parent=63 // pred_fallthru
        _
    $region64: #{transformer_sr_forward.12} parent=5 // pred_fallthru
      _
    %p407 = scmp.le.s32.totalorder 1, %s19
    %p408 = scmp.lt.s32.totalorder %s19, 3
    %p409 = pnand %p407, %p408
    %p410 = pneg %p409
    // Predicated region
    $region69: #{transformer_sr_forward.12} parent=5 // pred_check
      _
    $region70: #{transformer_sr_forward.12} parent=5 // pred_check_branch
      %412 = sbr.rel (%p409) target = $region72
    $region71: #{transformer_sr_forward.12} parent=5 // pred_region
      %s413 = ssub.s32 %s19, 1
      %s414 = smul.u32 8, %s29
      %p415 = scmp.lt.s32.totalorder %s28, 1
      %s416 = scalar_select %p415, %s28, 1
      %p417 = scmp.lt.s32.totalorder %s414, 7
      %s418 = scalar_select %p417, %s414, 7
      %s419 = smul.addr %s416, 8
      %s420 = sadd.s32 %s418, %s419
      %s421 = smul.addr %s420, 8
      %s422 = scalar_lea.vmem %s0, %s421
      %p423 = pneg %p59
      %p424 = pneg %p56
      %p425 = pneg %p80
      %p426 = pneg %p77
      %p427 = pneg %p101
      %p428 = pneg %p98
      %p429 = pneg %p122
      %p430 = pneg %p119
      %p431 = pneg %p143
      %p432 = pneg %p140
      %p433 = pneg %p164
      %p434 = pneg %p161
      %p435 = pneg %p185
      %p436 = pneg %p182
      %p437 = pneg %p206
      %p438 = pneg %p203
      %p439 = pneg %p227
      %p440 = pneg %p224
      %p441 = pneg %p248
      %p442 = pneg %p245
      %p443 = pneg %p269
      %p444 = pneg %p266
      %p445 = pneg %p290
      %p446 = pneg %p287
      %p447 = pneg %p311
      %p448 = pneg %p308
      %p449 = pneg %p339
      %p450 = pneg %p336
      %s451 = smul.u32 8, %s29
      %p452 = scmp.lt.s32.totalorder %s28, 1
      %s453 = scalar_select %p452, %s28, 1
      %p454 = scmp.lt.s32.totalorder %s451, 7
      %s455 = scalar_select %p454, %s451, 7
      %s456 = smul.addr %s453, 8
      %s457 = sadd.s32 %s455, %s456
      %s458 = smul.addr %s457, 8
      %s459 = scalar_lea.vmem %s13, %s458
      %s460 = smul.u32 8, %s29
      %p461 = scmp.lt.s32.totalorder %s28, 1
      %s462 = scalar_select %p461, %s28, 1
      %p463 = scmp.lt.s32.totalorder %s460, 7
      %s464 = scalar_select %p463, %s460, 7
      %s465 = smul.addr %s462, 8
      %s466 = sadd.s32 %s464, %s465
      %s467 = smul.addr %s466, 8
      %s468 = scalar_lea.vmem %s0, %s467
      %s469 = smul.u32 8, %s29
      %s470 = smul.u32 8, %s29
      %p471 = scmp.lt.s32.totalorder %s28, 1
      %s472 = scalar_select %p471, %s28, 1
      %p473 = scmp.lt.s32.totalorder %s470, 7
      %s474 = scalar_select %p473, %s470, 7
      %s475 = smul.addr %s472, 8
      %s476 = sadd.s32 %s474, %s475
      %s477 = smul.addr %s476, 8
      %s478 = scalar_lea.vmem %s13, %s477
      %s479 = smul.u32 8, %s29
      %v480 = vld [vmem:[%s468] sm:$0xff]
      %v481 = vld [vmem:[%s468 + $0x8] sm:$0xff]
      %v482 = vld [vmem:[%s468 + $0x10] sm:$0xff]
      %v483 = vld [vmem:[%s468 + $0x18] sm:$0xff]
      %v484 = vld [vmem:[%s468 + $0x20] sm:$0xff]
      %v485 = vld [vmem:[%s468 + $0x28] sm:$0xff]
      %v486 = vld [vmem:[%s468 + $0x30] sm:$0xff]
      %v487 = vld [vmem:[%s468 + $0x38] sm:$0xff]
      %v488 = vld [vmem:[%s1] sm:$0x1]
      %v489 = vld [vmem:[%s2] sm:$0x1]
      %vm490 = vcmask 523264
      %v491 = vsel %vm490, %v480, 0.0
      %492 = vadd.xlane.f32.xlu0 %v491
      %v493 = vpop.xlane.xlu0 %492
      %v494 = vsel %vm490, %v481, 0.0
      %495 = vadd.xlane.f32.xlu0 %v494
      %v496 = vpop.xlane.xlu0 %495
      %v497 = vsel %vm490, %v482, 0.0
      %498 = vadd.xlane.f32.xlu0 %v497
      %v499 = vpop.xlane.xlu0 %498
      %v500 = vsel %vm490, %v483, 0.0
      %501 = vadd.xlane.f32.xlu0 %v500
      %v502 = vpop.xlane.xlu0 %501
      %v503 = vsel %vm490, %v484, 0.0
      %504 = vadd.xlane.f32.xlu0 %v503
      %v505 = vpop.xlane.xlu0 %504
      %v506 = vsel %vm490, %v485, 0.0
      %507 = vadd.xlane.f32.xlu0 %v506
      %v508 = vpop.xlane.xlu0 %507
      %v509 = vsel %vm490, %v486, 0.0
      %510 = vadd.xlane.f32.xlu0 %v509
      %v511 = vpop.xlane.xlu0 %510
      %v512 = vsel %vm490, %v487, 0.0
      %513 = vadd.xlane.f32.xlu0 %v512
      %v514 = vpop.xlane.xlu0 %513
      %v515 = vrcp.pop 64.0
      %v516 = vmul.f32 %v493, %v515
      %v517 = vmul.f32 %v496, %v515
      %v518 = vmul.f32 %v499, %v515
      %v519 = vmul.f32 %v502, %v515
      %v520 = vmul.f32 %v505, %v515
      %v521 = vmul.f32 %v508, %v515
      %v522 = vmul.f32 %v511, %v515
      %v523 = vmul.f32 %v514, %v515
      %v524 = vsub.f32 %v480, %v516
      %v525 = vsub.f32 %v481, %v517
      %v526 = vsub.f32 %v482, %v518
      %v527 = vsub.f32 %v483, %v519
      %v528 = vsub.f32 %v484, %v520
      %v529 = vsub.f32 %v485, %v521
      %v530 = vsub.f32 %v486, %v522
      %v531 = vsub.f32 %v487, %v523
      %v532 = vmul.f32 %v524, %v524
      %v533 = vmul.f32 %v525, %v525
      %v534 = vmul.f32 %v526, %v526
      %v535 = vmul.f32 %v527, %v527
      %v536 = vmul.f32 %v528, %v528
      %v537 = vmul.f32 %v529, %v529
      %v538 = vmul.f32 %v530, %v530
      %v539 = vmul.f32 %v531, %v531
      %v540 = vsel %vm490, %v532, 0.0
      %541 = vadd.xlane.f32.xlu0 %v540
      %v542 = vpop.xlane.xlu0 %541
      %v543 = vsel %vm490, %v533, 0.0
      %544 = vadd.xlane.f32.xlu0 %v543
      %v545 = vpop.xlane.xlu0 %544
      %v546 = vsel %vm490, %v534, 0.0
      %547 = vadd.xlane.f32.xlu0 %v546
      %v548 = vpop.xlane.xlu0 %547
      %v549 = vsel %vm490, %v535, 0.0
      %550 = vadd.xlane.f32.xlu0 %v549
      %v551 = vpop.xlane.xlu0 %550
      %v552 = vsel %vm490, %v536, 0.0
      %553 = vadd.xlane.f32.xlu0 %v552
      %v554 = vpop.xlane.xlu0 %553
      %v555 = vsel %vm490, %v537, 0.0
      %556 = vadd.xlane.f32.xlu0 %v555
      %v557 = vpop.xlane.xlu0 %556
      %v558 = vsel %vm490, %v538, 0.0
      %559 = vadd.xlane.f32.xlu0 %v558
      %v560 = vpop.xlane.xlu0 %559
      %v561 = vsel %vm490, %v539, 0.0
      %562 = vadd.xlane.f32.xlu0 %v561
      %v563 = vpop.xlane.xlu0 %562
      %v564 = vmul.f32 %v542, %v515
      %v565 = vmul.f32 %v545, %v515
      %v566 = vmul.f32 %v548, %v515
      %v567 = vmul.f32 %v551, %v515
      %v568 = vmul.f32 %v554, %v515
      %v569 = vmul.f32 %v557, %v515
      %v570 = vmul.f32 %v560, %v515
      %v571 = vmul.f32 %v563, %v515
      %v572 = vadd.f32 %v564, 1e-05
      %v573 = vadd.f32 %v565, 1e-05
      %v574 = vadd.f32 %v566, 1e-05
      %v575 = vadd.f32 %v567, 1e-05
      %v576 = vadd.f32 %v568, 1e-05
      %v577 = vadd.f32 %v569, 1e-05
      %v578 = vadd.f32 %v570, 1e-05
      %v579 = vadd.f32 %v571, 1e-05
      %v580 = vrsqrt.pop %v572
      %v581 = vrsqrt.pop %v573
      %v582 = vrsqrt.pop %v574
      %v583 = vrsqrt.pop %v575
      %v584 = vrsqrt.pop %v576
      %v585 = vrsqrt.pop %v577
      %v586 = vrsqrt.pop %v578
      %v587 = vrsqrt.pop %v579
      %v588 = vmul.f32 %v524, %v580
      %v589 = vmul.f32 %v525, %v581
      %v590 = vmul.f32 %v526, %v582
      %v591 = vmul.f32 %v527, %v583
      %v592 = vmul.f32 %v528, %v584
      %v593 = vmul.f32 %v529, %v585
      %v594 = vmul.f32 %v530, %v586
      %v595 = vmul.f32 %v531, %v587
      %v597 = vlaneseq
      %v598 = vshrl.u32 %v597, 7
      %v599 = vsub.s32 0, %v598
      %v600 = vrot.slane %v488, %v599
      %v602 = vmul.f32 %v588, %v600
      %v603 = vmul.f32 %v589, %v600
      %v604 = vmul.f32 %v590, %v600
      %v605 = vmul.f32 %v591, %v600
      %v606 = vmul.f32 %v592, %v600
      %v607 = vmul.f32 %v593, %v600
      %v608 = vmul.f32 %v594, %v600
      %v609 = vmul.f32 %v595, %v600
      %v611 = vlaneseq
      %v612 = vshrl.u32 %v611, 7
      %v613 = vsub.s32 0, %v612
      %v614 = vrot.slane %v489, %v613
      %v616 = vadd.f32 %v602, %v614
      %v617 = vadd.f32 %v603, %v614
      %v618 = vadd.f32 %v604, %v614
      %v619 = vadd.f32 %v605, %v614
      %v620 = vadd.f32 %v606, %v614
      %v621 = vadd.f32 %v607, %v614
      %v622 = vadd.f32 %v608, %v614
      %v623 = vadd.f32 %v609, %v614
      %v624 = vld [vmem:[%s3] sm:$0xff]
      %v625 = vld [vmem:[%s3 + $0x8] sm:$0xff]
      %v626 = vld [vmem:[%s3 + $0x10] sm:$0xff]
      %v627 = vld [vmem:[%s3 + $0x18] sm:$0xff]
      %v628 = vld [vmem:[%s3 + $0x20] sm:$0xff]
      %v629 = vld [vmem:[%s3 + $0x28] sm:$0xff]
      %v630 = vld [vmem:[%s3 + $0x30] sm:$0xff]
      %v631 = vld [vmem:[%s3 + $0x38] sm:$0xff]
      %v632 = vld [vmem:[%s3 + $0x40] sm:$0xff]
      %v633 = vld [vmem:[%s3 + $0x48] sm:$0xff]
      %v634 = vld [vmem:[%s3 + $0x50] sm:$0xff]
      %v635 = vld [vmem:[%s3 + $0x58] sm:$0xff]
      %v636 = vld [vmem:[%s3 + $0x60] sm:$0xff]
      %v637 = vld [vmem:[%s3 + $0x68] sm:$0xff]
      %v638 = vld [vmem:[%s3 + $0x70] sm:$0xff]
      %v639 = vld [vmem:[%s3 + $0x78] sm:$0xff]
      %v640 = vld [vmem:[%s4] sm:$0x3]
      %v642 = vlaneseq
      %v643 = vshrl.u32 %v642, 7
      %v644 = vsub.s32 0, %v643
      %v645 = vrot.slane %v640, %v644
      %v646 = vlaneseq
      %v647 = vshrl.u32 %v646, 7
      %v648 = vsub.s32 1, %v647
      %v649 = vrot.slane %v640, %v648
      %v653 = vsel %vm490, %v616, 0
      %v656 = vsel %vm490, %v617, 0
      %v659 = vsel %vm490, %v618, 0
      %v662 = vsel %vm490, %v619, 0
      %v665 = vsel %vm490, %v620, 0
      %v668 = vsel %vm490, %v621, 0
      %v671 = vsel %vm490, %v622, 0
      %v674 = vsel %vm490, %v623, 0
      %676 = vmatprep.subr.mxu0 %v625
      %677 = vmatpush1.msra.mxu0 %v624
      %678 = vmatprep.subr.mxu0 %v627
      %679 = vmatpush1.msra.mxu0 %v626
      %680 = vmatprep.subr.mxu0 %v629
      %681 = vmatpush1.msra.mxu0 %v628
      %682 = vmatprep.subr.mxu0 %v631
      %683 = vmatpush1.msra.mxu0 %v630
      %684 = vmatprep.subr.mxu0 %v633
      %685 = vmatpush1.msra.mxu0 %v632
      %686 = vmatprep.subr.mxu0 %v635
      %687 = vmatpush1.msra.mxu0 %v634
      %688 = vmatprep.subr.mxu0 %v637
      %689 = vmatpush1.msra.mxu0 %v636
      %690 = vmatprep.subr.mxu0 %v639
      %691 = vmatpush1.msra.mxu0 %v638
      %692 = vmatprep.subr.mxu0 0.0
      %693 = vmatpush1.msra.mxu0 0.0
      %694 = vmatprep.subr.mxu0 0.0
      %695 = vmatpush1.msra.mxu0 0.0
      %696 = vmatprep.subr.mxu0 0.0
      %697 = vmatpush1.msra.mxu0 0.0
      %698 = vmatprep.subr.mxu0 0.0
      %699 = vmatpush1.msra.mxu0 0.0
      %700 = vmatprep.subr.mxu0 0.0
      %701 = vmatpush1.msra.mxu0 0.0
      %702 = vmatprep.subr.mxu0 0.0
      %703 = vmatpush1.msra.mxu0 0.0
      %704 = vmatprep.subr.mxu0 0.0
      %705 = vmatpush1.msra.mxu0 0.0
      %706 = vmatprep.subr.mxu0 0.0
      %707 = vmatpush1.msra.mxu0 0.0
      %708 = vmatprep.subr.mxu0 0.0
      %709 = vmatpush1.msra.mxu0 0.0
      %710 = vmatprep.subr.mxu0 0.0
      %711 = vmatpush1.msra.mxu0 0.0
      %712 = vmatprep.subr.mxu0 0.0
      %713 = vmatpush1.msra.mxu0 0.0
      %714 = vmatprep.subr.mxu0 0.0
      %715 = vmatpush1.msra.mxu0 0.0
      %716 = vmatprep.subr.mxu0 0.0
      %717 = vmatpush1.msra.mxu0 0.0
      %718 = vmatprep.subr.mxu0 0.0
      %719 = vmatpush1.msra.mxu0 0.0
      %720 = vmatprep.subr.mxu0 0.0
      %721 = vmatpush1.msra.mxu0 0.0
      %722 = vmatprep.subr.mxu0 0.0
      %723 = vmatpush1.msra.mxu0 0.0
      %724 = vmatprep.subr.mxu0 0.0
      %725 = vmatpush1.msra.mxu0 0.0
      %726 = vmatprep.subr.mxu0 0.0
      %727 = vmatpush1.msra.mxu0 0.0
      %728 = vmatprep.subr.mxu0 0.0
      %729 = vmatpush1.msra.mxu0 0.0
      %730 = vmatprep.subr.mxu0 0.0
      %731 = vmatpush1.msra.mxu0 0.0
      %732 = vmatprep.subr.mxu0 0.0
      %733 = vmatpush1.msra.mxu0 0.0
      %734 = vmatprep.subr.mxu0 0.0
      %735 = vmatpush1.msra.mxu0 0.0
      %736 = vmatprep.subr.mxu0 0.0
      %737 = vmatpush1.msra.mxu0 0.0
      %738 = vmatprep.subr.mxu0 0.0
      %739 = vmatpush1.msra.mxu0 0.0
      %740 = vmatprep.mubr.f32.mxu0 0.0
      %741 = vmatmul.mubr.f32.gmra.mrb[0].mxu0 %v653
      %v742 = vpop.f32.mrb[0].mxu0
      %v743 = vadd.f32 %v645, %v742
      %v744 = vpop.f32.mrb[0].mxu0
      %v745 = vadd.f32 %v649, %v744
      %746 = vmatprep.mubr.f32.mxu0 0.0
      %747 = vmatmul.mubr.f32.gmra.mrb[0].mxu0 %v656
      %v748 = vpop.f32.mrb[0].mxu0
      %v749 = vadd.f32 %v645, %v748
      %v750 = vpop.f32.mrb[0].mxu0
      %v751 = vadd.f32 %v649, %v750
      %752 = vmatprep.mubr.f32.mxu0 0.0
      %753 = vmatmul.mubr.f32.gmra.mrb[0].mxu0 %v659
      %v754 = vpop.f32.mrb[0].mxu0
      %v755 = vadd.f32 %v645, %v754
      %v756 = vpop.f32.mrb[0].mxu0
      %v757 = vadd.f32 %v649, %v756
      %758 = vmatprep.mubr.f32.mxu0 0.0
      %759 = vmatmul.mubr.f32.gmra.mrb[0].mxu0 %v662
      %v760 = vpop.f32.mrb[0].mxu0
      %v761 = vadd.f32 %v645, %v760
      %v762 = vpop.f32.mrb[0].mxu0
      %v763 = vadd.f32 %v649, %v762
      %764 = vmatprep.mubr.f32.mxu0 0.0
      %765 = vmatmul.mubr.f32.gmra.mrb[0].mxu0 %v665
      %v766 = vpop.f32.mrb[0].mxu0
      %v767 = vadd.f32 %v645, %v766
      %v768 = vpop.f32.mrb[0].mxu0
      %v769 = vadd.f32 %v649, %v768
      %770 = vmatprep.mubr.f32.mxu0 0.0
      %771 = vmatmul.mubr.f32.gmra.mrb[0].mxu0 %v668
      %v772 = vpop.f32.mrb[0].mxu0
      %v773 = vadd.f32 %v645, %v772
      %v774 = vpop.f32.mrb[0].mxu0
      %v775 = vadd.f32 %v649, %v774
      %776 = vmatprep.mubr.f32.mxu0 0.0
      %777 = vmatmul.mubr.f32.gmra.mrb[0].mxu0 %v671
      %v778 = vpop.f32.mrb[0].mxu0
      %v779 = vadd.f32 %v645, %v778
      %v780 = vpop.f32.mrb[0].mxu0
      %v781 = vadd.f32 %v649, %v780
      %782 = vmatprep.mubr.f32.mxu0 0.0
      %783 = vmatmul.mubr.f32.gmra.mrb[0].mxu0 %v674
      %v784 = vpop.f32.mrb[0].mxu0
      %v785 = vadd.f32 %v645, %v784
      %v786 = vpop.f32.mrb[0].mxu0
      %v787 = vadd.f32 %v649, %v786
      %788 = vdwg.mxu0
      %797 = vrot.lane.b32.xlu0 %v743, 112
      %v798 = vpop.permute.xlu0 %797
      %799 = vrot.lane.b32.xlu0 %v749, 112
      %v800 = vpop.permute.xlu0 %799
      %801 = vrot.lane.b32.xlu0 %v755, 112
      %v802 = vpop.permute.xlu0 %801
      %803 = vrot.lane.b32.xlu0 %v761, 112
      %v804 = vpop.permute.xlu0 %803
      %805 = vrot.lane.b32.xlu0 %v767, 112
      %v806 = vpop.permute.xlu0 %805
      %807 = vrot.lane.b32.xlu0 %v773, 112
      %v808 = vpop.permute.xlu0 %807
      %809 = vrot.lane.b32.xlu0 %v779, 112
      %v810 = vpop.permute.xlu0 %809
      %811 = vrot.lane.b32.xlu0 %v785, 112
      %v812 = vpop.permute.xlu0 %811
      %821 = vrot.lane.b32.xlu0 %v743, 96
      %v822 = vpop.permute.xlu0 %821
      %823 = vrot.lane.b32.xlu0 %v749, 96
      %v824 = vpop.permute.xlu0 %823
      %825 = vrot.lane.b32.xlu0 %v755, 96
      %v826 = vpop.permute.xlu0 %825
      %827 = vrot.lane.b32.xlu0 %v761, 96
      %v828 = vpop.permute.xlu0 %827
      %829 = vrot.lane.b32.xlu0 %v767, 96
      %v830 = vpop.permute.xlu0 %829
      %831 = vrot.lane.b32.xlu0 %v773, 96
      %v832 = vpop.permute.xlu0 %831
      %833 = vrot.lane.b32.xlu0 %v779, 96
      %v834 = vpop.permute.xlu0 %833
      %835 = vrot.lane.b32.xlu0 %v785, 96
      %v836 = vpop.permute.xlu0 %835
      %845 = vrot.lane.b32.xlu0 %v743, 80
      %v846 = vpop.permute.xlu0 %845
      %847 = vrot.lane.b32.xlu0 %v749, 80
      %v848 = vpop.permute.xlu0 %847
      %849 = vrot.lane.b32.xlu0 %v755, 80
      %v850 = vpop.permute.xlu0 %849
      %851 = vrot.lane.b32.xlu0 %v761, 80
      %v852 = vpop.permute.xlu0 %851
      %853 = vrot.lane.b32.xlu0 %v767, 80
      %v854 = vpop.permute.xlu0 %853
      %855 = vrot.lane.b32.xlu0 %v773, 80
      %v856 = vpop.permute.xlu0 %855
      %857 = vrot.lane.b32.xlu0 %v779, 80
      %v858 = vpop.permute.xlu0 %857
      %859 = vrot.lane.b32.xlu0 %v785, 80
      %v860 = vpop.permute.xlu0 %859
      %v869 = vmul.f32 %v743, 0.25
      %v870 = vmul.f32 %v749, 0.25
      %v871 = vmul.f32 %v755, 0.25
      %v872 = vmul.f32 %v761, 0.25
      %v873 = vmul.f32 %v767, 0.25
      %v874 = vmul.f32 %v773, 0.25
      %v875 = vmul.f32 %v779, 0.25
      %v876 = vmul.f32 %v785, 0.25
      %v877 = vmul.f32 %v798, 0.25
      %v878 = vmul.f32 %v800, 0.25
      %v879 = vmul.f32 %v802, 0.25
      %v880 = vmul.f32 %v804, 0.25
      %v881 = vmul.f32 %v806, 0.25
      %v882 = vmul.f32 %v808, 0.25
      %v883 = vmul.f32 %v810, 0.25
      %v884 = vmul.f32 %v812, 0.25
      %v885 = vmul.f32 %v822, 0.25
      %v886 = vmul.f32 %v824, 0.25
      %v887 = vmul.f32 %v826, 0.25
      %v888 = vmul.f32 %v828, 0.25
      %v889 = vmul.f32 %v830, 0.25
      %v890 = vmul.f32 %v832, 0.25
      %v891 = vmul.f32 %v834, 0.25
      %v892 = vmul.f32 %v836, 0.25
      %v893 = vmul.f32 %v846, 0.25
      %v894 = vmul.f32 %v848, 0.25
      %v895 = vmul.f32 %v850, 0.25
      %v896 = vmul.f32 %v852, 0.25
      %v897 = vmul.f32 %v854, 0.25
      %v898 = vmul.f32 %v856, 0.25
      %v899 = vmul.f32 %v858, 0.25
      %v900 = vmul.f32 %v860, 0.25
      %909 = vrot.lane.b32.xlu0 %v745, 112
      %v910 = vpop.permute.xlu0 %909
      %911 = vrot.lane.b32.xlu0 %v751, 112
      %v912 = vpop.permute.xlu0 %911
      %913 = vrot.lane.b32.xlu0 %v757, 112
      %v914 = vpop.permute.xlu0 %913
      %915 = vrot.lane.b32.xlu0 %v763, 112
      %v916 = vpop.permute.xlu0 %915
      %917 = vrot.lane.b32.xlu0 %v769, 112
      %v918 = vpop.permute.xlu0 %917
      %919 = vrot.lane.b32.xlu0 %v775, 112
      %v920 = vpop.permute.xlu0 %919
      %921 = vrot.lane.b32.xlu0 %v781, 112
      %v922 = vpop.permute.xlu0 %921
      %923 = vrot.lane.b32.xlu0 %v787, 112
      %v924 = vpop.permute.xlu0 %923
      %933 = vrot.lane.b32.xlu0 %v745, 96
      %v934 = vpop.permute.xlu0 %933
      %935 = vrot.lane.b32.xlu0 %v751, 96
      %v936 = vpop.permute.xlu0 %935
      %937 = vrot.lane.b32.xlu0 %v757, 96
      %v938 = vpop.permute.xlu0 %937
      %939 = vrot.lane.b32.xlu0 %v763, 96
      %v940 = vpop.permute.xlu0 %939
      %941 = vrot.lane.b32.xlu0 %v769, 96
      %v942 = vpop.permute.xlu0 %941
      %943 = vrot.lane.b32.xlu0 %v775, 96
      %v944 = vpop.permute.xlu0 %943
      %945 = vrot.lane.b32.xlu0 %v781, 96
      %v946 = vpop.permute.xlu0 %945
      %947 = vrot.lane.b32.xlu0 %v787, 96
      %v948 = vpop.permute.xlu0 %947
      %957 = vrot.lane.b32.xlu0 %v745, 80
      %v958 = vpop.permute.xlu0 %957
      %959 = vrot.lane.b32.xlu0 %v751, 80
      %v960 = vpop.permute.xlu0 %959
      %961 = vrot.lane.b32.xlu0 %v757, 80
      %v962 = vpop.permute.xlu0 %961
      %963 = vrot.lane.b32.xlu0 %v763, 80
      %v964 = vpop.permute.xlu0 %963
      %965 = vrot.lane.b32.xlu0 %v769, 80
      %v966 = vpop.permute.xlu0 %965
      %967 = vrot.lane.b32.xlu0 %v775, 80
      %v968 = vpop.permute.xlu0 %967
      %969 = vrot.lane.b32.xlu0 %v781, 80
      %v970 = vpop.permute.xlu0 %969
      %971 = vrot.lane.b32.xlu0 %v787, 80
      %v972 = vpop.permute.xlu0 %971
      %981 = vrot.lane.b32.xlu0 %v743, 64
      %v982 = vpop.permute.xlu0 %981
      %983 = vrot.lane.b32.xlu0 %v749, 64
      %v984 = vpop.permute.xlu0 %983
      %985 = vrot.lane.b32.xlu0 %v755, 64
      %v986 = vpop.permute.xlu0 %985
      %987 = vrot.lane.b32.xlu0 %v761, 64
      %v988 = vpop.permute.xlu0 %987
      %989 = vrot.lane.b32.xlu0 %v767, 64
      %v990 = vpop.permute.xlu0 %989
      %991 = vrot.lane.b32.xlu0 %v773, 64
      %v992 = vpop.permute.xlu0 %991
      %993 = vrot.lane.b32.xlu0 %v779, 64
      %v994 = vpop.permute.xlu0 %993
      %995 = vrot.lane.b32.xlu0 %v785, 64
      %v996 = vpop.permute.xlu0 %995
      %vm997 = vcmask 130048
      %v999 = vsel %vm997, %v869, 0
      %v1002 = vsel %vm997, %v870, 0
      %v1005 = vsel %vm997, %v871, 0
      %v1008 = vsel %vm997, %v872, 0
      %v1011 = vsel %vm997, %v873, 0
      %v1014 = vsel %vm997, %v874, 0
      %v1017 = vsel %vm997, %v875, 0
      %v1020 = vsel %vm997, %v876, 0
      %v1022 = vsel %vm997, %v982, 0
      %v1024 = vsel %vm997, %v984, 0
      %v1026 = vsel %vm997, %v986, 0
      %v1028 = vsel %vm997, %v988, 0
      %v1030 = vsel %vm997, %v990, 0
      %v1032 = vsel %vm997, %v992, 0
      %v1034 = vsel %vm997, %v994, 0
      %v1036 = vsel %vm997, %v996, 0
      %1038 = vmatprep.subr.mxu0 0.0
      %1039 = vmatpush1.xpose.msra.mxu0 %v1022
      %1040 = vmatprep.subr.mxu0 0.0
      %1041 = vmatpush1.xpose.msra.mxu0 %v1024
      %1042 = vmatprep.subr.mxu0 0.0
      %1043 = vmatpush1.xpose.msra.mxu0 %v1026
      %1044 = vmatprep.subr.mxu0 0.0
      %1045 = vmatpush1.xpose.msra.mxu0 %v1028
      %1046 = vmatprep.subr.mxu0 0.0
      %1047 = vmatpush1.xpose.msra.mxu0 %v1030
      %1048 = vmatprep.subr.mxu0 0.0
      %1049 = vmatpush1.xpose.msra.mxu0 %v1032
      %1050 = vmatprep.subr.mxu0 0.0
      %1051 = vmatpush1.xpose.msra.mxu0 %v1034
      %1052 = vmatprep.subr.mxu0 0.0
      %1053 = vmatpush1.xpose.msra.mxu0 %v1036
      %1054 = vmatprep.subr.mxu0 0.0
      %1055 = vmatpush1.xpose.msra.mxu0 0.0
      %1056 = vmatprep.subr.mxu0 0.0
      %1057 = vmatpush1.xpose.msra.mxu0 0.0
      %1058 = vmatprep.subr.mxu0 0.0
      %1059 = vmatpush1.xpose.msra.mxu0 0.0
      %1060 = vmatprep.subr.mxu0 0.0
      %1061 = vmatpush1.xpose.msra.mxu0 0.0
      %1062 = vmatprep.subr.mxu0 0.0
      %1063 = vmatpush1.xpose.msra.mxu0 0.0
      %1064 = vmatprep.subr.mxu0 0.0
      %1065 = vmatpush1.xpose.msra.mxu0 0.0
      %1066 = vmatprep.subr.mxu0 0.0
      %1067 = vmatpush1.xpose.msra.mxu0 0.0
      %1068 = vmatprep.subr.mxu0 0.0
      %1069 = vmatpush1.xpose.msra.mxu0 0.0
      %1070 = vmatprep.subr.mxu0 0.0
      %1071 = vmatpush1.xpose.msra.mxu0 0.0
      %1072 = vmatprep.subr.mxu0 0.0
      %1073 = vmatpush1.xpose.msra.mxu0 0.0
      %1074 = vmatprep.subr.mxu0 0.0
      %1075 = vmatpush1.xpose.msra.mxu0 0.0
      %1076 = vmatprep.subr.mxu0 0.0
      %1077 = vmatpush1.xpose.msra.mxu0 0.0
      %1078 = vmatprep.subr.mxu0 0.0
      %1079 = vmatpush1.xpose.msra.mxu0 0.0
      %1080 = vmatprep.subr.mxu0 0.0
      %1081 = vmatpush1.xpose.msra.mxu0 0.0
      %1082 = vmatprep.subr.mxu0 0.0
      %1083 = vmatpush1.xpose.msra.mxu0 0.0
      %1084 = vmatprep.subr.mxu0 0.0
      %1085 = vmatpush1.xpose.msra.mxu0 0.0
      %1086 = vmatprep.subr.mxu0 0.0
      %1087 = vmatpush1.xpose.msra.mxu0 0.0
      %1088 = vmatprep.subr.mxu0 0.0
      %1089 = vmatpush1.xpose.msra.mxu0 0.0
      %1090 = vmatprep.subr.mxu0 0.0
      %1091 = vmatpush1.xpose.msra.mxu0 0.0
      %1092 = vmatprep.subr.mxu0 0.0
      %1093 = vmatpush1.xpose.msra.mxu0 0.0
      %1094 = vmatprep.subr.mxu0 0.0
      %1095 = vmatpush1.xpose.msra.mxu0 0.0
      %1096 = vmatprep.subr.mxu0 0.0
      %1097 = vmatpush1.xpose.msra.mxu0 0.0
      %1098 = vmatprep.subr.mxu0 0.0
      %1099 = vmatpush1.xpose.msra.mxu0 0.0
      %1100 = vmatprep.subr.mxu0 0.0
      %1101 = vmatpush1.xpose.msra.mxu0 0.0
      %1102 = vmatprep.mubr.f32.mxu0 0.0
      %1103 = vmatmul.mubr.f32.gmra.mrb[0].mxu0 %v999
      %v1104 = vpop.f32.mrb[0].mxu0
      %v1105 = vadd.f32 0.0, %v1104
      %v1106 = vpop.f32.mrb[0].mxu0
      %1107 = vmatprep.mubr.f32.mxu0 0.0
      %1108 = vmatmul.mubr.f32.gmra.mrb[0].mxu0 %v1002
      %v1109 = vpop.f32.mrb[0].mxu0
      %v1110 = vadd.f32 0.0, %v1109
      %v1111 = vpop.f32.mrb[0].mxu0
      %1112 = vmatprep.mubr.f32.mxu0 0.0
      %1113 = vmatmul.mubr.f32.gmra.mrb[0].mxu0 %v1005
      %v1114 = vpop.f32.mrb[0].mxu0
      %v1115 = vadd.f32 0.0, %v1114
      %v1116 = vpop.f32.mrb[0].mxu0
      %1117 = vmatprep.mubr.f32.mxu0 0.0
      %1118 = vmatmul.mubr.f32.gmra.mrb[0].mxu0 %v1008
      %v1119 = vpop.f32.mrb[0].mxu0
      %v1120 = vadd.f32 0.0, %v1119
      %v1121 = vpop.f32.mrb[0].mxu0
      %1122 = vmatprep.mubr.f32.mxu0 0.0
      %1123 = vmatmul.mubr.f32.gmra.mrb[0].mxu0 %v1011
      %v1124 = vpop.f32.mrb[0].mxu0
      %v1125 = vadd.f32 0.0, %v1124
      %v1126 = vpop.f32.mrb[0].mxu0
      %1127 = vmatprep.mubr.f32.mxu0 0.0
      %1128 = vmatmul.mubr.f32.gmra.mrb[0].mxu0 %v1014
      %v1129 = vpop.f32.mrb[0].mxu0
      %v1130 = vadd.f32 0.0, %v1129
      %v1131 = vpop.f32.mrb[0].mxu0
      %1132 = vmatprep.mubr.f32.mxu0 0.0
      %1133 = vmatmul.mubr.f32.gmra.mrb[0].mxu0 %v1017
      %v1134 = vpop.f32.mrb[0].mxu0
      %v1135 = vadd.f32 0.0, %v1134
      %v1136 = vpop.f32.mrb[0].mxu0
      %1137 = vmatprep.mubr.f32.mxu0 0.0
      %1138 = vmatmul.mubr.f32.gmra.mrb[0].mxu0 %v1020
      %v1139 = vpop.f32.mrb[0].mxu0
      %v1140 = vadd.f32 0.0, %v1139
      %v1141 = vpop.f32.mrb[0].mxu0
      %1142 = vdwg.mxu0
      %1143 = vrot.lane.b32.xlu0 %v798, 64
      %v1144 = vpop.permute.xlu0 %1143
      %1145 = vrot.lane.b32.xlu0 %v800, 64
      %v1146 = vpop.permute.xlu0 %1145
      %1147 = vrot.lane.b32.xlu0 %v802, 64
      %v1148 = vpop.permute.xlu0 %1147
      %1149 = vrot.lane.b32.xlu0 %v804, 64
      %v1150 = vpop.permute.xlu0 %1149
      %1151 = vrot.lane.b32.xlu0 %v806, 64
      %v1152 = vpop.permute.xlu0 %1151
      %1153 = vrot.lane.b32.xlu0 %v808, 64
      %v1154 = vpop.permute.xlu0 %1153
      %1155 = vrot.lane.b32.xlu0 %v810, 64
      %v1156 = vpop.permute.xlu0 %1155
      %1157 = vrot.lane.b32.xlu0 %v812, 64
      %v1158 = vpop.permute.xlu0 %1157
      %v1160 = vsel %vm997, %v877, 0
      %v1163 = vsel %vm997, %v878, 0
      %v1166 = vsel %vm997, %v879, 0
      %v1169 = vsel %vm997, %v880, 0
      %v1172 = vsel %vm997, %v881, 0
      %v1175 = vsel %vm997, %v882, 0
      %v1178 = vsel %vm997, %v883, 0
      %v1181 = vsel %vm997, %v884, 0
      %v1183 = vsel %vm997, %v1144, 0
      %v1185 = vsel %vm997, %v1146, 0
      %v1187 = vsel %vm997, %v1148, 0
      %v1189 = vsel %vm997, %v1150, 0
      %v1191 = vsel %vm997, %v1152, 0
      %v1193 = vsel %vm997, %v1154, 0
      %v1195 = vsel %vm997, %v1156, 0
      %v1197 = vsel %vm997, %v1158, 0
      %1199 = vmatprep.subr.mxu0 0.0
      %1200 = vmatpush1.xpose.msra.mxu0 %v1183
      %1201 = vmatprep.subr.mxu0 0.0
      %1202 = vmatpush1.xpose.msra.mxu0 %v1185
      %1203 = vmatprep.subr.mxu0 0.0
      %1204 = vmatpush1.xpose.msra.mxu0 %v1187
      %1205 = vmatprep.subr.mxu0 0.0
      %1206 = vmatpush1.xpose.msra.mxu0 %v1189
      %1207 = vmatprep.subr.mxu0 0.0
      %1208 = vmatpush1.xpose.msra.mxu0 %v1191
      %1209 = vmatprep.subr.mxu0 0.0
      %1210 = vmatpush1.xpose.msra.mxu0 %v1193
      %1211 = vmatprep.subr.mxu0 0.0
      %1212 = vmatpush1.xpose.msra.mxu0 %v1195
      %1213 = vmatprep.subr.mxu0 0.0
      %1214 = vmatpush1.xpose.msra.mxu0 %v1197
      %1215 = vmatprep.subr.mxu0 0.0
      %1216 = vmatpush1.xpose.msra.mxu0 0.0
      %1217 = vmatprep.subr.mxu0 0.0
      %1218 = vmatpush1.xpose.msra.mxu0 0.0
      %1219 = vmatprep.subr.mxu0 0.0
      %1220 = vmatpush1.xpose.msra.mxu0 0.0
      %1221 = vmatprep.subr.mxu0 0.0
      %1222 = vmatpush1.xpose.msra.mxu0 0.0
      %1223 = vmatprep.subr.mxu0 0.0
      %1224 = vmatpush1.xpose.msra.mxu0 0.0
      %1225 = vmatprep.subr.mxu0 0.0
      %1226 = vmatpush1.xpose.msra.mxu0 0.0
      %1227 = vmatprep.subr.mxu0 0.0
      %1228 = vmatpush1.xpose.msra.mxu0 0.0
      %1229 = vmatprep.subr.mxu0 0.0
      %1230 = vmatpush1.xpose.msra.mxu0 0.0
      %1231 = vmatprep.subr.mxu0 0.0
      %1232 = vmatpush1.xpose.msra.mxu0 0.0
      %1233 = vmatprep.subr.mxu0 0.0
      %1234 = vmatpush1.xpose.msra.mxu0 0.0
      %1235 = vmatprep.subr.mxu0 0.0
      %1236 = vmatpush1.xpose.msra.mxu0 0.0
      %1237 = vmatprep.subr.mxu0 0.0
      %1238 = vmatpush1.xpose.msra.mxu0 0.0
      %1239 = vmatprep.subr.mxu0 0.0
      %1240 = vmatpush1.xpose.msra.mxu0 0.0
      %1241 = vmatprep.subr.mxu0 0.0
      %1242 = vmatpush1.xpose.msra.mxu0 0.0
      %1243 = vmatprep.subr.mxu0 0.0
      %1244 = vmatpush1.xpose.msra.mxu0 0.0
      %1245 = vmatprep.subr.mxu0 0.0
      %1246 = vmatpush1.xpose.msra.mxu0 0.0
      %1247 = vmatprep.subr.mxu0 0.0
      %1248 = vmatpush1.xpose.msra.mxu0 0.0
      %1249 = vmatprep.subr.mxu0 0.0
      %1250 = vmatpush1.xpose.msra.mxu0 0.0
      %1251 = vmatprep.subr.mxu0 0.0
      %1252 = vmatpush1.xpose.msra.mxu0 0.0
      %1253 = vmatprep.subr.mxu0 0.0
      %1254 = vmatpush1.xpose.msra.mxu0 0.0
      %1255 = vmatprep.subr.mxu0 0.0
      %1256 = vmatpush1.xpose.msra.mxu0 0.0
      %1257 = vmatprep.subr.mxu0 0.0
      %1258 = vmatpush1.xpose.msra.mxu0 0.0
      %1259 = vmatprep.subr.mxu0 0.0
      %1260 = vmatpush1.xpose.msra.mxu0 0.0
      %1261 = vmatprep.subr.mxu0 0.0
      %1262 = vmatpush1.xpose.msra.mxu0 0.0
      %1263 = vmatprep.mubr.f32.mxu0 0.0
      %1264 = vmatmul.mubr.f32.gmra.mrb[0].mxu0 %v1160
      %v1265 = vpop.f32.mrb[0].mxu0
      %v1266 = vadd.f32 0.0, %v1265
      %v1267 = vpop.f32.mrb[0].mxu0
      %1268 = vmatprep.mubr.f32.mxu0 0.0
      %1269 = vmatmul.mubr.f32.gmra.mrb[0].mxu0 %v1163
      %v1270 = vpop.f32.mrb[0].mxu0
      %v1271 = vadd.f32 0.0, %v1270
      %v1272 = vpop.f32.mrb[0].mxu0
      %1273 = vmatprep.mubr.f32.mxu0 0.0
      %1274 = vmatmul.mubr.f32.gmra.mrb[0].mxu0 %v1166
      %v1275 = vpop.f32.mrb[0].mxu0
      %v1276 = vadd.f32 0.0, %v1275
      %v1277 = vpop.f32.mrb[0].mxu0
      %1278 = vmatprep.mubr.f32.mxu0 0.0
      %1279 = vmatmul.mubr.f32.gmra.mrb[0].mxu0 %v1169
      %v1280 = vpop.f32.mrb[0].mxu0
      %v1281 = vadd.f32 0.0, %v1280
      %v1282 = vpop.f32.mrb[0].mxu0
      %1283 = vmatprep.mubr.f32.mxu0 0.0
      %1284 = vmatmul.mubr.f32.gmra.mrb[0].mxu0 %v1172
      %v1285 = vpop.f32.mrb[0].mxu0
      %v1286 = vadd.f32 0.0, %v1285
      %v1287 = vpop.f32.mrb[0].mxu0
      %1288 = vmatprep.mubr.f32.mxu0 0.0
      %1289 = vmatmul.mubr.f32.gmra.mrb[0].mxu0 %v1175
      %v1290 = vpop.f32.mrb[0].mxu0
      %v1291 = vadd.f32 0.0, %v1290
      %v1292 = vpop.f32.mrb[0].mxu0
      %1293 = vmatprep.mubr.f32.mxu0 0.0
      %1294 = vmatmul.mubr.f32.gmra.mrb[0].mxu0 %v1178
      %v1295 = vpop.f32.mrb[0].mxu0
      %v1296 = vadd.f32 0.0, %v1295
      %v1297 = vpop.f32.mrb[0].mxu0
      %1298 = vmatprep.mubr.f32.mxu0 0.0
      %1299 = vmatmul.mubr.f32.gmra.mrb[0].mxu0 %v1181
      %v1300 = vpop.f32.mrb[0].mxu0
      %v1301 = vadd.f32 0.0, %v1300
      %v1302 = vpop.f32.mrb[0].mxu0
      %1303 = vdwg.mxu0
      %1304 = vrot.lane.b32.xlu0 %v822, 64
      %v1305 = vpop.permute.xlu0 %1304
      %1306 = vrot.lane.b32.xlu0 %v824, 64
      %v1307 = vpop.permute.xlu0 %1306
      %1308 = vrot.lane.b32.xlu0 %v826, 64
      %v1309 = vpop.permute.xlu0 %1308
      %1310 = vrot.lane.b32.xlu0 %v828, 64
      %v1311 = vpop.permute.xlu0 %1310
      %1312 = vrot.lane.b32.xlu0 %v830, 64
      %v1313 = vpop.permute.xlu0 %1312
      %1314 = vrot.lane.b32.xlu0 %v832, 64
      %v1315 = vpop.permute.xlu0 %1314
      %1316 = vrot.lane.b32.xlu0 %v834, 64
      %v1317 = vpop.permute.xlu0 %1316
      %1318 = vrot.lane.b32.xlu0 %v836, 64
      %v1319 = vpop.permute.xlu0 %1318
      %v1321 = vsel %vm997, %v885, 0
      %v1324 = vsel %vm997, %v886, 0
      %v1327 = vsel %vm997, %v887, 0
      %v1330 = vsel %vm997, %v888, 0
      %v1333 = vsel %vm997, %v889, 0
      %v1336 = vsel %vm997, %v890, 0
      %v1339 = vsel %vm997, %v891, 0
      %v1342 = vsel %vm997, %v892, 0
      %v1344 = vsel %vm997, %v1305, 0
      %v1346 = vsel %vm997, %v1307, 0
      %v1348 = vsel %vm997, %v1309, 0
      %v1350 = vsel %vm997, %v1311, 0
      %v1352 = vsel %vm997, %v1313, 0
      %v1354 = vsel %vm997, %v1315, 0
      %v1356 = vsel %vm997, %v1317, 0
      %v1358 = vsel %vm997, %v1319, 0
      %1360 = vmatprep.subr.mxu0 0.0
      %1361 = vmatpush1.xpose.msra.mxu0 %v1344
      %1362 = vmatprep.subr.mxu0 0.0
      %1363 = vmatpush1.xpose.msra.mxu0 %v1346
      %1364 = vmatprep.subr.mxu0 0.0
      %1365 = vmatpush1.xpose.msra.mxu0 %v1348
      %1366 = vmatprep.subr.mxu0 0.0
      %1367 = vmatpush1.xpose.msra.mxu0 %v1350
      %1368 = vmatprep.subr.mxu0 0.0
      %1369 = vmatpush1.xpose.msra.mxu0 %v1352
      %1370 = vmatprep.subr.mxu0 0.0
      %1371 = vmatpush1.xpose.msra.mxu0 %v1354
      %1372 = vmatprep.subr.mxu0 0.0
      %1373 = vmatpush1.xpose.msra.mxu0 %v1356
      %1374 = vmatprep.subr.mxu0 0.0
      %1375 = vmatpush1.xpose.msra.mxu0 %v1358
      %1376 = vmatprep.subr.mxu0 0.0
      %1377 = vmatpush1.xpose.msra.mxu0 0.0
      %1378 = vmatprep.subr.mxu0 0.0
      %1379 = vmatpush1.xpose.msra.mxu0 0.0
      %1380 = vmatprep.subr.mxu0 0.0
      %1381 = vmatpush1.xpose.msra.mxu0 0.0
      %1382 = vmatprep.subr.mxu0 0.0
      %1383 = vmatpush1.xpose.msra.mxu0 0.0
      %1384 = vmatprep.subr.mxu0 0.0
      %1385 = vmatpush1.xpose.msra.mxu0 0.0
      %1386 = vmatprep.subr.mxu0 0.0
      %1387 = vmatpush1.xpose.msra.mxu0 0.0
      %1388 = vmatprep.subr.mxu0 0.0
      %1389 = vmatpush1.xpose.msra.mxu0 0.0
      %1390 = vmatprep.subr.mxu0 0.0
      %1391 = vmatpush1.xpose.msra.mxu0 0.0
      %1392 = vmatprep.subr.mxu0 0.0
      %1393 = vmatpush1.xpose.msra.mxu0 0.0
      %1394 = vmatprep.subr.mxu0 0.0
      %1395 = vmatpush1.xpose.msra.mxu0 0.0
      %1396 = vmatprep.subr.mxu0 0.0
      %1397 = vmatpush1.xpose.msra.mxu0 0.0
      %1398 = vmatprep.subr.mxu0 0.0
      %1399 = vmatpush1.xpose.msra.mxu0 0.0
      %1400 = vmatprep.subr.mxu0 0.0
      %1401 = vmatpush1.xpose.msra.mxu0 0.0
      %1402 = vmatprep.subr.mxu0 0.0
      %1403 = vmatpush1.xpose.msra.mxu0 0.0
      %1404 = vmatprep.subr.mxu0 0.0
      %1405 = vmatpush1.xpose.msra.mxu0 0.0
      %1406 = vmatprep.subr.mxu0 0.0
      %1407 = vmatpush1.xpose.msra.mxu0 0.0
      %1408 = vmatprep.subr.mxu0 0.0
      %1409 = vmatpush1.xpose.msra.mxu0 0.0
      %1410 = vmatprep.subr.mxu0 0.0
      %1411 = vmatpush1.xpose.msra.mxu0 0.0
      %1412 = vmatprep.subr.mxu0 0.0
      %1413 = vmatpush1.xpose.msra.mxu0 0.0
      %1414 = vmatprep.subr.mxu0 0.0
      %1415 = vmatpush1.xpose.msra.mxu0 0.0
      %1416 = vmatprep.subr.mxu0 0.0
      %1417 = vmatpush1.xpose.msra.mxu0 0.0
      %1418 = vmatprep.subr.mxu0 0.0
      %1419 = vmatpush1.xpose.msra.mxu0 0.0
      %1420 = vmatprep.subr.mxu0 0.0
      %1421 = vmatpush1.xpose.msra.mxu0 0.0
      %1422 = vmatprep.subr.mxu0 0.0
      %1423 = vmatpush1.xpose.msra.mxu0 0.0
      %1424 = vmatprep.mubr.f32.mxu0 0.0
      %1425 = vmatmul.mubr.f32.gmra.mrb[0].mxu0 %v1321
      %v1426 = vpop.f32.mrb[0].mxu0
      %v1427 = vadd.f32 0.0, %v1426
      %v1428 = vpop.f32.mrb[0].mxu0
      %1429 = vmatprep.mubr.f32.mxu0 0.0
      %1430 = vmatmul.mubr.f32.gmra.mrb[0].mxu0 %v1324
      %v1431 = vpop.f32.mrb[0].mxu0
      %v1432 = vadd.f32 0.0, %v1431
      %v1433 = vpop.f32.mrb[0].mxu0
      %1434 = vmatprep.mubr.f32.mxu0 0.0
      %1435 = vmatmul.mubr.f32.gmra.mrb[0].mxu0 %v1327
      %v1436 = vpop.f32.mrb[0].mxu0
      %v1437 = vadd.f32 0.0, %v1436
      %v1438 = vpop.f32.mrb[0].mxu0
      %1439 = vmatprep.mubr.f32.mxu0 0.0
      %1440 = vmatmul.mubr.f32.gmra.mrb[0].mxu0 %v1330
      %v1441 = vpop.f32.mrb[0].mxu0
      %v1442 = vadd.f32 0.0, %v1441
      %v1443 = vpop.f32.mrb[0].mxu0
      %1444 = vmatprep.mubr.f32.mxu0 0.0
      %1445 = vmatmul.mubr.f32.gmra.mrb[0].mxu0 %v1333
      %v1446 = vpop.f32.mrb[0].mxu0
      %v1447 = vadd.f32 0.0, %v1446
      %v1448 = vpop.f32.mrb[0].mxu0
      %1449 = vmatprep.mubr.f32.mxu0 0.0
      %1450 = vmatmul.mubr.f32.gmra.mrb[0].mxu0 %v1336
      %v1451 = vpop.f32.mrb[0].mxu0
      %v1452 = vadd.f32 0.0, %v1451
      %v1453 = vpop.f32.mrb[0].mxu0
      %1454 = vmatprep.mubr.f32.mxu0 0.0
      %1455 = vmatmul.mubr.f32.gmra.mrb[0].mxu0 %v1339
      %v1456 = vpop.f32.mrb[0].mxu0
      %v1457 = vadd.f32 0.0, %v1456
      %v1458 = vpop.f32.mrb[0].mxu0
      %1459 = vmatprep.mubr.f32.mxu0 0.0
      %1460 = vmatmul.mubr.f32.gmra.mrb[0].mxu0 %v1342
      %v1461 = vpop.f32.mrb[0].mxu0
      %v1462 = vadd.f32 0.0, %v1461
      %v1463 = vpop.f32.mrb[0].mxu0
      %1464 = vdwg.mxu0
      %1465 = vrot.lane.b32.xlu0 %v846, 64
      %v1466 = vpop.permute.xlu0 %1465
      %1467 = vrot.lane.b32.xlu0 %v848, 64
      %v1468 = vpop.permute.xlu0 %1467
      %1469 = vrot.lane.b32.xlu0 %v850, 64
      %v1470 = vpop.permute.xlu0 %1469
      %1471 = vrot.lane.b32.xlu0 %v852, 64
      %v1472 = vpop.permute.xlu0 %1471
      %1473 = vrot.lane.b32.xlu0 %v854, 64
      %v1474 = vpop.permute.xlu0 %1473
      %1475 = vrot.lane.b32.xlu0 %v856, 64
      %v1476 = vpop.permute.xlu0 %1475
      %1477 = vrot.lane.b32.xlu0 %v858, 64
      %v1478 = vpop.permute.xlu0 %1477
      %1479 = vrot.lane.b32.xlu0 %v860, 64
      %v1480 = vpop.permute.xlu0 %1479
      %v1482 = vsel %vm997, %v893, 0
      %v1485 = vsel %vm997, %v894, 0
      %v1488 = vsel %vm997, %v895, 0
      %v1491 = vsel %vm997, %v896, 0
      %v1494 = vsel %vm997, %v897, 0
      %v1497 = vsel %vm997, %v898, 0
      %v1500 = vsel %vm997, %v899, 0
      %v1503 = vsel %vm997, %v900, 0
      %v1505 = vsel %vm997, %v1466, 0
      %v1507 = vsel %vm997, %v1468, 0
      %v1509 = vsel %vm997, %v1470, 0
      %v1511 = vsel %vm997, %v1472, 0
      %v1513 = vsel %vm997, %v1474, 0
      %v1515 = vsel %vm997, %v1476, 0
      %v1517 = vsel %vm997, %v1478, 0
      %v1519 = vsel %vm997, %v1480, 0
      %1521 = vmatprep.subr.mxu0 0.0
      %1522 = vmatpush1.xpose.msra.mxu0 %v1505
      %1523 = vmatprep.subr.mxu0 0.0
      %1524 = vmatpush1.xpose.msra.mxu0 %v1507
      %1525 = vmatprep.subr.mxu0 0.0
      %1526 = vmatpush1.xpose.msra.mxu0 %v1509
      %1527 = vmatprep.subr.mxu0 0.0
      %1528 = vmatpush1.xpose.msra.mxu0 %v1511
      %1529 = vmatprep.subr.mxu0 0.0
      %1530 = vmatpush1.xpose.msra.mxu0 %v1513
      %1531 = vmatprep.subr.mxu0 0.0
      %1532 = vmatpush1.xpose.msra.mxu0 %v1515
      %1533 = vmatprep.subr.mxu0 0.0
      %1534 = vmatpush1.xpose.msra.mxu0 %v1517
      %1535 = vmatprep.subr.mxu0 0.0
      %1536 = vmatpush1.xpose.msra.mxu0 %v1519
      %1537 = vmatprep.subr.mxu0 0.0
      %1538 = vmatpush1.xpose.msra.mxu0 0.0
      %1539 = vmatprep.subr.mxu0 0.0
      %1540 = vmatpush1.xpose.msra.mxu0 0.0
      %1541 = vmatprep.subr.mxu0 0.0
      %1542 = vmatpush1.xpose.msra.mxu0 0.0
      %1543 = vmatprep.subr.mxu0 0.0
      %1544 = vmatpush1.xpose.msra.mxu0 0.0
      %1545 = vmatprep.subr.mxu0 0.0
      %1546 = vmatpush1.xpose.msra.mxu0 0.0
      %1547 = vmatprep.subr.mxu0 0.0
      %1548 = vmatpush1.xpose.msra.mxu0 0.0
      %1549 = vmatprep.subr.mxu0 0.0
      %1550 = vmatpush1.xpose.msra.mxu0 0.0
      %1551 = vmatprep.subr.mxu0 0.0
      %1552 = vmatpush1.xpose.msra.mxu0 0.0
      %1553 = vmatprep.subr.mxu0 0.0
      %1554 = vmatpush1.xpose.msra.mxu0 0.0
      %1555 = vmatprep.subr.mxu0 0.0
      %1556 = vmatpush1.xpose.msra.mxu0 0.0
      %1557 = vmatprep.subr.mxu0 0.0
      %1558 = vmatpush1.xpose.msra.mxu0 0.0
      %1559 = vmatprep.subr.mxu0 0.0
      %1560 = vmatpush1.xpose.msra.mxu0 0.0
      %1561 = vmatprep.subr.mxu0 0.0
      %1562 = vmatpush1.xpose.msra.mxu0 0.0
      %1563 = vmatprep.subr.mxu0 0.0
      %1564 = vmatpush1.xpose.msra.mxu0 0.0
      %1565 = vmatprep.subr.mxu0 0.0
      %1566 = vmatpush1.xpose.msra.mxu0 0.0
      %1567 = vmatprep.subr.mxu0 0.0
      %1568 = vmatpush1.xpose.msra.mxu0 0.0
      %1569 = vmatprep.subr.mxu0 0.0
      %1570 = vmatpush1.xpose.msra.mxu0 0.0
      %1571 = vmatprep.subr.mxu0 0.0
      %1572 = vmatpush1.xpose.msra.mxu0 0.0
      %1573 = vmatprep.subr.mxu0 0.0
      %1574 = vmatpush1.xpose.msra.mxu0 0.0
      %1575 = vmatprep.subr.mxu0 0.0
      %1576 = vmatpush1.xpose.msra.mxu0 0.0
      %1577 = vmatprep.subr.mxu0 0.0
      %1578 = vmatpush1.xpose.msra.mxu0 0.0
      %1579 = vmatprep.subr.mxu0 0.0
      %1580 = vmatpush1.xpose.msra.mxu0 0.0
      %1581 = vmatprep.subr.mxu0 0.0
      %1582 = vmatpush1.xpose.msra.mxu0 0.0
      %1583 = vmatprep.subr.mxu0 0.0
      %1584 = vmatpush1.xpose.msra.mxu0 0.0
      %1585 = vmatprep.mubr.f32.mxu0 0.0
      %1586 = vmatmul.mubr.f32.gmra.mrb[0].mxu0 %v1482
      %v1587 = vpop.f32.mrb[0].mxu0
      %v1588 = vadd.f32 0.0, %v1587
      %v1589 = vpop.f32.mrb[0].mxu0
      %1590 = vmatprep.mubr.f32.mxu0 0.0
      %1591 = vmatmul.mubr.f32.gmra.mrb[0].mxu0 %v1485
      %v1592 = vpop.f32.mrb[0].mxu0
      %v1593 = vadd.f32 0.0, %v1592
      %v1594 = vpop.f32.mrb[0].mxu0
      %1595 = vmatprep.mubr.f32.mxu0 0.0
      %1596 = vmatmul.mubr.f32.gmra.mrb[0].mxu0 %v1488
      %v1597 = vpop.f32.mrb[0].mxu0
      %v1598 = vadd.f32 0.0, %v1597
      %v1599 = vpop.f32.mrb[0].mxu0
      %1600 = vmatprep.mubr.f32.mxu0 0.0
      %1601 = vmatmul.mubr.f32.gmra.mrb[0].mxu0 %v1491
      %v1602 = vpop.f32.mrb[0].mxu0
      %v1603 = vadd.f32 0.0, %v1602
      %v1604 = vpop.f32.mrb[0].mxu0
      %1605 = vmatprep.mubr.f32.mxu0 0.0
      %1606 = vmatmul.mubr.f32.gmra.mrb[0].mxu0 %v1494
      %v1607 = vpop.f32.mrb[0].mxu0
      %v1608 = vadd.f32 0.0, %v1607
      %v1609 = vpop.f32.mrb[0].mxu0
      %1610 = vmatprep.mubr.f32.mxu0 0.0
      %1611 = vmatmul.mubr.f32.gmra.mrb[0].mxu0 %v1497
      %v1612 = vpop.f32.mrb[0].mxu0
      %v1613 = vadd.f32 0.0, %v1612
      %v1614 = vpop.f32.mrb[0].mxu0
      %1615 = vmatprep.mubr.f32.mxu0 0.0
      %1616 = vmatmul.mubr.f32.gmra.mrb[0].mxu0 %v1500
      %v1617 = vpop.f32.mrb[0].mxu0
      %v1618 = vadd.f32 0.0, %v1617
      %v1619 = vpop.f32.mrb[0].mxu0
      %1620 = vmatprep.mubr.f32.mxu0 0.0
      %1621 = vmatmul.mubr.f32.gmra.mrb[0].mxu0 %v1503
      %v1622 = vpop.f32.mrb[0].mxu0
      %v1623 = vadd.f32 0.0, %v1622
      %v1624 = vpop.f32.mrb[0].mxu0
      %1625 = vdwg.mxu0
      %v1626 = vsel %vm490, %v1105, -inf
      %1627 = vmax.xlane.f32.xlu0 %v1626
      %v1628 = vpop.xlane.xlu0 %1627
      %v1629 = vsel %vm490, %v1110, -inf
      %1630 = vmax.xlane.f32.xlu0 %v1629
      %v1631 = vpop.xlane.xlu0 %1630
      %v1632 = vsel %vm490, %v1115, -inf
      %1633 = vmax.xlane.f32.xlu0 %v1632
      %v1634 = vpop.xlane.xlu0 %1633
      %v1635 = vsel %vm490, %v1120, -inf
      %1636 = vmax.xlane.f32.xlu0 %v1635
      %v1637 = vpop.xlane.xlu0 %1636
      %v1638 = vsel %vm490, %v1125, -inf
      %1639 = vmax.xlane.f32.xlu0 %v1638
      %v1640 = vpop.xlane.xlu0 %1639
      %v1641 = vsel %vm490, %v1130, -inf
      %1642 = vmax.xlane.f32.xlu0 %v1641
      %v1643 = vpop.xlane.xlu0 %1642
      %v1644 = vsel %vm490, %v1135, -inf
      %1645 = vmax.xlane.f32.xlu0 %v1644
      %v1646 = vpop.xlane.xlu0 %1645
      %v1647 = vsel %vm490, %v1140, -inf
      %1648 = vmax.xlane.f32.xlu0 %v1647
      %v1649 = vpop.xlane.xlu0 %1648
      %v1650 = vsel %vm490, %v1266, -inf
      %1651 = vmax.xlane.f32.xlu0 %v1650
      %v1652 = vpop.xlane.xlu0 %1651
      %v1653 = vsel %vm490, %v1271, -inf
      %1654 = vmax.xlane.f32.xlu0 %v1653
      %v1655 = vpop.xlane.xlu0 %1654
      %v1656 = vsel %vm490, %v1276, -inf
      %1657 = vmax.xlane.f32.xlu0 %v1656
      %v1658 = vpop.xlane.xlu0 %1657
      %v1659 = vsel %vm490, %v1281, -inf
      %1660 = vmax.xlane.f32.xlu0 %v1659
      %v1661 = vpop.xlane.xlu0 %1660
      %v1662 = vsel %vm490, %v1286, -inf
      %1663 = vmax.xlane.f32.xlu0 %v1662
      %v1664 = vpop.xlane.xlu0 %1663
      %v1665 = vsel %vm490, %v1291, -inf
      %1666 = vmax.xlane.f32.xlu0 %v1665
      %v1667 = vpop.xlane.xlu0 %1666
      %v1668 = vsel %vm490, %v1296, -inf
      %1669 = vmax.xlane.f32.xlu0 %v1668
      %v1670 = vpop.xlane.xlu0 %1669
      %v1671 = vsel %vm490, %v1301, -inf
      %1672 = vmax.xlane.f32.xlu0 %v1671
      %v1673 = vpop.xlane.xlu0 %1672
      %v1674 = vsel %vm490, %v1427, -inf
      %1675 = vmax.xlane.f32.xlu0 %v1674
      %v1676 = vpop.xlane.xlu0 %1675
      %v1677 = vsel %vm490, %v1432, -inf
      %1678 = vmax.xlane.f32.xlu0 %v1677
      %v1679 = vpop.xlane.xlu0 %1678
      %v1680 = vsel %vm490, %v1437, -inf
      %1681 = vmax.xlane.f32.xlu0 %v1680
      %v1682 = vpop.xlane.xlu0 %1681
      %v1683 = vsel %vm490, %v1442, -inf
      %1684 = vmax.xlane.f32.xlu0 %v1683
      %v1685 = vpop.xlane.xlu0 %1684
      %v1686 = vsel %vm490, %v1447, -inf
      %1687 = vmax.xlane.f32.xlu0 %v1686
      %v1688 = vpop.xlane.xlu0 %1687
      %v1689 = vsel %vm490, %v1452, -inf
      %1690 = vmax.xlane.f32.xlu0 %v1689
      %v1691 = vpop.xlane.xlu0 %1690
      %v1692 = vsel %vm490, %v1457, -inf
      %1693 = vmax.xlane.f32.xlu0 %v1692
      %v1694 = vpop.xlane.xlu0 %1693
      %v1695 = vsel %vm490, %v1462, -inf
      %1696 = vmax.xlane.f32.xlu0 %v1695
      %v1697 = vpop.xlane.xlu0 %1696
      %v1698 = vsel %vm490, %v1588, -inf
      %1699 = vmax.xlane.f32.xlu0 %v1698
      %v1700 = vpop.xlane.xlu0 %1699
      %v1701 = vsel %vm490, %v1593, -inf
      %1702 = vmax.xlane.f32.xlu0 %v1701
      %v1703 = vpop.xlane.xlu0 %1702
      %v1704 = vsel %vm490, %v1598, -inf
      %1705 = vmax.xlane.f32.xlu0 %v1704
      %v1706 = vpop.xlane.xlu0 %1705
      %v1707 = vsel %vm490, %v1603, -inf
      %1708 = vmax.xlane.f32.xlu0 %v1707
      %v1709 = vpop.xlane.xlu0 %1708
      %v1710 = vsel %vm490, %v1608, -inf
      %1711 = vmax.xlane.f32.xlu0 %v1710
      %v1712 = vpop.xlane.xlu0 %1711
      %v1713 = vsel %vm490, %v1613, -inf
      %1714 = vmax.xlane.f32.xlu0 %v1713
      %v1715 = vpop.xlane.xlu0 %1714
      %v1716 = vsel %vm490, %v1618, -inf
      %1717 = vmax.xlane.f32.xlu0 %v1716
      %v1718 = vpop.xlane.xlu0 %1717
      %v1719 = vsel %vm490, %v1623, -inf
      %1720 = vmax.xlane.f32.xlu0 %v1719
      %v1721 = vpop.xlane.xlu0 %1720
      %v1722 = vsub.f32 %v1105, %v1628
      %v1723 = vsub.f32 %v1110, %v1631
      %v1724 = vsub.f32 %v1115, %v1634
      %v1725 = vsub.f32 %v1120, %v1637
      %v1726 = vsub.f32 %v1125, %v1640
      %v1727 = vsub.f32 %v1130, %v1643
      %v1728 = vsub.f32 %v1135, %v1646
      %v1729 = vsub.f32 %v1140, %v1649
      %v1730 = vsub.f32 %v1266, %v1652
      %v1731 = vsub.f32 %v1271, %v1655
      %v1732 = vsub.f32 %v1276, %v1658
      %v1733 = vsub.f32 %v1281, %v1661
      %v1734 = vsub.f32 %v1286, %v1664
      %v1735 = vsub.f32 %v1291, %v1667
      %v1736 = vsub.f32 %v1296, %v1670
      %v1737 = vsub.f32 %v1301, %v1673
      %v1738 = vsub.f32 %v1427, %v1676
      %v1739 = vsub.f32 %v1432, %v1679
      %v1740 = vsub.f32 %v1437, %v1682
      %v1741 = vsub.f32 %v1442, %v1685
      %v1742 = vsub.f32 %v1447, %v1688
      %v1743 = vsub.f32 %v1452, %v1691
      %v1744 = vsub.f32 %v1457, %v1694
      %v1745 = vsub.f32 %v1462, %v1697
      %v1746 = vsub.f32 %v1588, %v1700
      %v1747 = vsub.f32 %v1593, %v1703
      %v1748 = vsub.f32 %v1598, %v1706
      %v1749 = vsub.f32 %v1603, %v1709
      %v1750 = vsub.f32 %v1608, %v1712
      %v1751 = vsub.f32 %v1613, %v1715
      %v1752 = vsub.f32 %v1618, %v1718
      %v1753 = vsub.f32 %v1623, %v1721
      %v1754 = vmul.f32 %v1722, 1.442695
      %v1755 = vpow.pop %v1754
      %v1756 = vmul.f32 %v1723, 1.442695
      %v1757 = vpow.pop %v1756
      %v1758 = vmul.f32 %v1724, 1.442695
      %v1759 = vpow.pop %v1758
      %v1760 = vmul.f32 %v1725, 1.442695
      %v1761 = vpow.pop %v1760
      %v1762 = vmul.f32 %v1726, 1.442695
      %v1763 = vpow.pop %v1762
      %v1764 = vmul.f32 %v1727, 1.442695
      %v1765 = vpow.pop %v1764
      %v1766 = vmul.f32 %v1728, 1.442695
      %v1767 = vpow.pop %v1766
      %v1768 = vmul.f32 %v1729, 1.442695
      %v1769 = vpow.pop %v1768
      %v1770 = vmul.f32 %v1730, 1.442695
      %v1771 = vpow.pop %v1770
      %v1772 = vmul.f32 %v1731, 1.442695
      %v1773 = vpow.pop %v1772
      %v1774 = vmul.f32 %v1732, 1.442695
      %v1775 = vpow.pop %v1774
      %v1776 = vmul.f32 %v1733, 1.442695
      %v1777 = vpow.pop %v1776
      %v1778 = vmul.f32 %v1734, 1.442695
      %v1779 = vpow.pop %v1778
      %v1780 = vmul.f32 %v1735, 1.442695
      %v1781 = vpow.pop %v1780
      %v1782 = vmul.f32 %v1736, 1.442695
      %v1783 = vpow.pop %v1782
      %v1784 = vmul.f32 %v1737, 1.442695
      %v1785 = vpow.pop %v1784
      %v1786 = vmul.f32 %v1738, 1.442695
      %v1787 = vpow.pop %v1786
      %v1788 = vmul.f32 %v1739, 1.442695
      %v1789 = vpow.pop %v1788
      %v1790 = vmul.f32 %v1740, 1.442695
      %v1791 = vpow.pop %v1790
      %v1792 = vmul.f32 %v1741, 1.442695
      %v1793 = vpow.pop %v1792
      %v1794 = vmul.f32 %v1742, 1.442695
      %v1795 = vpow.pop %v1794
      %v1796 = vmul.f32 %v1743, 1.442695
      %v1797 = vpow.pop %v1796
      %v1798 = vmul.f32 %v1744, 1.442695
      %v1799 = vpow.pop %v1798
      %v1800 = vmul.f32 %v1745, 1.442695
      %v1801 = vpow.pop %v1800
      %v1802 = vmul.f32 %v1746, 1.442695
      %v1803 = vpow.pop %v1802
      %v1804 = vmul.f32 %v1747, 1.442695
      %v1805 = vpow.pop %v1804
      %v1806 = vmul.f32 %v1748, 1.442695
      %v1807 = vpow.pop %v1806
      %v1808 = vmul.f32 %v1749, 1.442695
      %v1809 = vpow.pop %v1808
      %v1810 = vmul.f32 %v1750, 1.442695
      %v1811 = vpow.pop %v1810
      %v1812 = vmul.f32 %v1751, 1.442695
      %v1813 = vpow.pop %v1812
      %v1814 = vmul.f32 %v1752, 1.442695
      %v1815 = vpow.pop %v1814
      %v1816 = vmul.f32 %v1753, 1.442695
      %v1817 = vpow.pop %v1816
      %v1818 = vsel %vm490, %v1755, 0.0
      %1819 = vadd.xlane.f32.xlu0 %v1818
      %v1820 = vpop.xlane.xlu0 %1819
      %v1821 = vsel %vm490, %v1757, 0.0
      %1822 = vadd.xlane.f32.xlu0 %v1821
      %v1823 = vpop.xlane.xlu0 %1822
      %v1824 = vsel %vm490, %v1759, 0.0
      %1825 = vadd.xlane.f32.xlu0 %v1824
      %v1826 = vpop.xlane.xlu0 %1825
      %v1827 = vsel %vm490, %v1761, 0.0
      %1828 = vadd.xlane.f32.xlu0 %v1827
      %v1829 = vpop.xlane.xlu0 %1828
      %v1830 = vsel %vm490, %v1763, 0.0
      %1831 = vadd.xlane.f32.xlu0 %v1830
      %v1832 = vpop.xlane.xlu0 %1831
      %v1833 = vsel %vm490, %v1765, 0.0
      %1834 = vadd.xlane.f32.xlu0 %v1833
      %v1835 = vpop.xlane.xlu0 %1834
      %v1836 = vsel %vm490, %v1767, 0.0
      %1837 = vadd.xlane.f32.xlu0 %v1836
      %v1838 = vpop.xlane.xlu0 %1837
      %v1839 = vsel %vm490, %v1769, 0.0
      %1840 = vadd.xlane.f32.xlu0 %v1839
      %v1841 = vpop.xlane.xlu0 %1840
      %v1842 = vsel %vm490, %v1771, 0.0
      %1843 = vadd.xlane.f32.xlu0 %v1842
      %v1844 = vpop.xlane.xlu0 %1843
      %v1845 = vsel %vm490, %v1773, 0.0
      %1846 = vadd.xlane.f32.xlu0 %v1845
      %v1847 = vpop.xlane.xlu0 %1846
      %v1848 = vsel %vm490, %v1775, 0.0
      %1849 = vadd.xlane.f32.xlu0 %v1848
      %v1850 = vpop.xlane.xlu0 %1849
      %v1851 = vsel %vm490, %v1777, 0.0
      %1852 = vadd.xlane.f32.xlu0 %v1851
      %v1853 = vpop.xlane.xlu0 %1852
      %v1854 = vsel %vm490, %v1779, 0.0
      %1855 = vadd.xlane.f32.xlu0 %v1854
      %v1856 = vpop.xlane.xlu0 %1855
      %v1857 = vsel %vm490, %v1781, 0.0
      %1858 = vadd.xlane.f32.xlu0 %v1857
      %v1859 = vpop.xlane.xlu0 %1858
      %v1860 = vsel %vm490, %v1783, 0.0
      %1861 = vadd.xlane.f32.xlu0 %v1860
      %v1862 = vpop.xlane.xlu0 %1861
      %v1863 = vsel %vm490, %v1785, 0.0
      %1864 = vadd.xlane.f32.xlu0 %v1863
      %v1865 = vpop.xlane.xlu0 %1864
      %v1866 = vsel %vm490, %v1787, 0.0
      %1867 = vadd.xlane.f32.xlu0 %v1866
      %v1868 = vpop.xlane.xlu0 %1867
      %v1869 = vsel %vm490, %v1789, 0.0
      %1870 = vadd.xlane.f32.xlu0 %v1869
      %v1871 = vpop.xlane.xlu0 %1870
      %v1872 = vsel %vm490, %v1791, 0.0
      %1873 = vadd.xlane.f32.xlu0 %v1872
      %v1874 = vpop.xlane.xlu0 %1873
      %v1875 = vsel %vm490, %v1793, 0.0
      %1876 = vadd.xlane.f32.xlu0 %v1875
      %v1877 = vpop.xlane.xlu0 %1876
      %v1878 = vsel %vm490, %v1795, 0.0
      %1879 = vadd.xlane.f32.xlu0 %v1878
      %v1880 = vpop.xlane.xlu0 %1879
      %v1881 = vsel %vm490, %v1797, 0.0
      %1882 = vadd.xlane.f32.xlu0 %v1881
      %v1883 = vpop.xlane.xlu0 %1882
      %v1884 = vsel %vm490, %v1799, 0.0
      %1885 = vadd.xlane.f32.xlu0 %v1884
      %v1886 = vpop.xlane.xlu0 %1885
      %v1887 = vsel %vm490, %v1801, 0.0
      %1888 = vadd.xlane.f32.xlu0 %v1887
      %v1889 = vpop.xlane.xlu0 %1888
      %v1890 = vsel %vm490, %v1803, 0.0
      %1891 = vadd.xlane.f32.xlu0 %v1890
      %v1892 = vpop.xlane.xlu0 %1891
      %v1893 = vsel %vm490, %v1805, 0.0
      %1894 = vadd.xlane.f32.xlu0 %v1893
      %v1895 = vpop.xlane.xlu0 %1894
      %v1896 = vsel %vm490, %v1807, 0.0
      %1897 = vadd.xlane.f32.xlu0 %v1896
      %v1898 = vpop.xlane.xlu0 %1897
      %v1899 = vsel %vm490, %v1809, 0.0
      %1900 = vadd.xlane.f32.xlu0 %v1899
      %v1901 = vpop.xlane.xlu0 %1900
      %v1902 = vsel %vm490, %v1811, 0.0
      %1903 = vadd.xlane.f32.xlu0 %v1902
      %v1904 = vpop.xlane.xlu0 %1903
      %v1905 = vsel %vm490, %v1813, 0.0
      %1906 = vadd.xlane.f32.xlu0 %v1905
      %v1907 = vpop.xlane.xlu0 %1906
      %v1908 = vsel %vm490, %v1815, 0.0
      %1909 = vadd.xlane.f32.xlu0 %v1908
      %v1910 = vpop.xlane.xlu0 %1909
      %v1911 = vsel %vm490, %v1817, 0.0
      %1912 = vadd.xlane.f32.xlu0 %v1911
      %v1913 = vpop.xlane.xlu0 %1912
      %v1914 = vrcp.pop %v1820
      %v1915 = vrcp.pop %v1823
      %v1916 = vrcp.pop %v1826
      %v1917 = vrcp.pop %v1829
      %v1918 = vrcp.pop %v1832
      %v1919 = vrcp.pop %v1835
      %v1920 = vrcp.pop %v1838
      %v1921 = vrcp.pop %v1841
      %v1922 = vrcp.pop %v1844
      %v1923 = vrcp.pop %v1847
      %v1924 = vrcp.pop %v1850
      %v1925 = vrcp.pop %v1853
      %v1926 = vrcp.pop %v1856
      %v1927 = vrcp.pop %v1859
      %v1928 = vrcp.pop %v1862
      %v1929 = vrcp.pop %v1865
      %v1930 = vrcp.pop %v1868
      %v1931 = vrcp.pop %v1871
      %v1932 = vrcp.pop %v1874
      %v1933 = vrcp.pop %v1877
      %v1934 = vrcp.pop %v1880
      %v1935 = vrcp.pop %v1883
      %v1936 = vrcp.pop %v1886
      %v1937 = vrcp.pop %v1889
      %v1938 = vrcp.pop %v1892
      %v1939 = vrcp.pop %v1895
      %v1940 = vrcp.pop %v1898
      %v1941 = vrcp.pop %v1901
      %v1942 = vrcp.pop %v1904
      %v1943 = vrcp.pop %v1907
      %v1944 = vrcp.pop %v1910
      %v1945 = vrcp.pop %v1913
      %v1946 = vmul.f32 %v1755, %v1914
      %v1947 = vmul.f32 %v1757, %v1915
      %v1948 = vmul.f32 %v1759, %v1916
      %v1949 = vmul.f32 %v1761, %v1917
      %v1950 = vmul.f32 %v1763, %v1918
      %v1951 = vmul.f32 %v1765, %v1919
      %v1952 = vmul.f32 %v1767, %v1920
      %v1953 = vmul.f32 %v1769, %v1921
      %v1954 = vmul.f32 %v1771, %v1922
      %v1955 = vmul.f32 %v1773, %v1923
      %v1956 = vmul.f32 %v1775, %v1924
      %v1957 = vmul.f32 %v1777, %v1925
      %v1958 = vmul.f32 %v1779, %v1926
      %v1959 = vmul.f32 %v1781, %v1927
      %v1960 = vmul.f32 %v1783, %v1928
      %v1961 = vmul.f32 %v1785, %v1929
      %v1962 = vmul.f32 %v1787, %v1930
      %v1963 = vmul.f32 %v1789, %v1931
      %v1964 = vmul.f32 %v1791, %v1932
      %v1965 = vmul.f32 %v1793, %v1933
      %v1966 = vmul.f32 %v1795, %v1934
      %v1967 = vmul.f32 %v1797, %v1935
      %v1968 = vmul.f32 %v1799, %v1936
      %v1969 = vmul.f32 %v1801, %v1937
      %v1970 = vmul.f32 %v1803, %v1938
      %v1971 = vmul.f32 %v1805, %v1939
      %v1972 = vmul.f32 %v1807, %v1940
      %v1973 = vmul.f32 %v1809, %v1941
      %v1974 = vmul.f32 %v1811, %v1942
      %v1975 = vmul.f32 %v1813, %v1943
      %v1976 = vmul.f32 %v1815, %v1944
      %v1977 = vmul.f32 %v1817, %v1945
      %v1979 = vsel %vm490, %v1946, 0
      %v1982 = vsel %vm490, %v1947, 0
      %v1985 = vsel %vm490, %v1948, 0
      %v1988 = vsel %vm490, %v1949, 0
      %v1991 = vsel %vm490, %v1950, 0
      %v1994 = vsel %vm490, %v1951, 0
      %v1997 = vsel %vm490, %v1952, 0
      %v2000 = vsel %vm490, %v1953, 0
      %2002 = vmatprep.subr.mxu0 0.0
      %2003 = vmatpush1.msra.mxu0 %v745
      %2004 = vmatprep.subr.mxu0 0.0
      %2005 = vmatpush1.msra.mxu0 %v751
      %2006 = vmatprep.subr.mxu0 0.0
      %2007 = vmatpush1.msra.mxu0 %v757
      %2008 = vmatprep.subr.mxu0 0.0
      %2009 = vmatpush1.msra.mxu0 %v763
      %2010 = vmatprep.subr.mxu0 0.0
      %2011 = vmatpush1.msra.mxu0 %v769
      %2012 = vmatprep.subr.mxu0 0.0
      %2013 = vmatpush1.msra.mxu0 %v775
      %2014 = vmatprep.subr.mxu0 0.0
      %2015 = vmatpush1.msra.mxu0 %v781
      %2016 = vmatprep.subr.mxu0 0.0
      %2017 = vmatpush1.msra.mxu0 %v787
      %2018 = vmatprep.subr.mxu0 0.0
      %2019 = vmatpush1.msra.mxu0 0.0
      %2020 = vmatprep.subr.mxu0 0.0
      %2021 = vmatpush1.msra.mxu0 0.0
      %2022 = vmatprep.subr.mxu0 0.0
      %2023 = vmatpush1.msra.mxu0 0.0
      %2024 = vmatprep.subr.mxu0 0.0
      %2025 = vmatpush1.msra.mxu0 0.0
      %2026 = vmatprep.subr.mxu0 0.0
      %2027 = vmatpush1.msra.mxu0 0.0
      %2028 = vmatprep.subr.mxu0 0.0
      %2029 = vmatpush1.msra.mxu0 0.0
      %2030 = vmatprep.subr.mxu0 0.0
      %2031 = vmatpush1.msra.mxu0 0.0
      %2032 = vmatprep.subr.mxu0 0.0
      %2033 = vmatpush1.msra.mxu0 0.0
      %2034 = vmatprep.subr.mxu0 0.0
      %2035 = vmatpush1.msra.mxu0 0.0
      %2036 = vmatprep.subr.mxu0 0.0
      %2037 = vmatpush1.msra.mxu0 0.0
      %2038 = vmatprep.subr.mxu0 0.0
      %2039 = vmatpush1.msra.mxu0 0.0
      %2040 = vmatprep.subr.mxu0 0.0
      %2041 = vmatpush1.msra.mxu0 0.0
      %2042 = vmatprep.subr.mxu0 0.0
      %2043 = vmatpush1.msra.mxu0 0.0
      %2044 = vmatprep.subr.mxu0 0.0
      %2045 = vmatpush1.msra.mxu0 0.0
      %2046 = vmatprep.subr.mxu0 0.0
      %2047 = vmatpush1.msra.mxu0 0.0
      %2048 = vmatprep.subr.mxu0 0.0
      %2049 = vmatpush1.msra.mxu0 0.0
      %2050 = vmatprep.subr.mxu0 0.0
      %2051 = vmatpush1.msra.mxu0 0.0
      %2052 = vmatprep.subr.mxu0 0.0
      %2053 = vmatpush1.msra.mxu0 0.0
      %2054 = vmatprep.subr.mxu0 0.0
      %2055 = vmatpush1.msra.mxu0 0.0
      %2056 = vmatprep.subr.mxu0 0.0
      %2057 = vmatpush1.msra.mxu0 0.0
      %2058 = vmatprep.subr.mxu0 0.0
      %2059 = vmatpush1.msra.mxu0 0.0
      %2060 = vmatprep.subr.mxu0 0.0
      %2061 = vmatpush1.msra.mxu0 0.0
      %2062 = vmatprep.subr.mxu0 0.0
      %2063 = vmatpush1.msra.mxu0 0.0
      %2064 = vmatprep.subr.mxu0 0.0
      %2065 = vmatpush1.msra.mxu0 0.0
      %2066 = vmatprep.mubr.f32.mxu0 0.0
      %2067 = vmatmul.mubr.f32.gmra.mrb[0].mxu0 %v1979
      %v2068 = vpop.f32.mrb[0].mxu0
      %v2069 = vadd.f32 0.0, %v2068
      %v2070 = vpop.f32.mrb[0].mxu0
      %2071 = vmatprep.mubr.f32.mxu0 0.0
      %2072 = vmatmul.mubr.f32.gmra.mrb[0].mxu0 %v1982
      %v2073 = vpop.f32.mrb[0].mxu0
      %v2074 = vadd.f32 0.0, %v2073
      %v2075 = vpop.f32.mrb[0].mxu0
      %2076 = vmatprep.mubr.f32.mxu0 0.0
      %2077 = vmatmul.mubr.f32.gmra.mrb[0].mxu0 %v1985
      %v2078 = vpop.f32.mrb[0].mxu0
      %v2079 = vadd.f32 0.0, %v2078
      %v2080 = vpop.f32.mrb[0].mxu0
      %2081 = vmatprep.mubr.f32.mxu0 0.0
      %2082 = vmatmul.mubr.f32.gmra.mrb[0].mxu0 %v1988
      %v2083 = vpop.f32.mrb[0].mxu0
      %v2084 = vadd.f32 0.0, %v2083
      %v2085 = vpop.f32.mrb[0].mxu0
      %2086 = vmatprep.mubr.f32.mxu0 0.0
      %2087 = vmatmul.mubr.f32.gmra.mrb[0].mxu0 %v1991
      %v2088 = vpop.f32.mrb[0].mxu0
      %v2089 = vadd.f32 0.0, %v2088
      %v2090 = vpop.f32.mrb[0].mxu0
      %2091 = vmatprep.mubr.f32.mxu0 0.0
      %2092 = vmatmul.mubr.f32.gmra.mrb[0].mxu0 %v1994
      %v2093 = vpop.f32.mrb[0].mxu0
      %v2094 = vadd.f32 0.0, %v2093
      %v2095 = vpop.f32.mrb[0].mxu0
      %2096 = vmatprep.mubr.f32.mxu0 0.0
      %2097 = vmatmul.mubr.f32.gmra.mrb[0].mxu0 %v1997
      %v2098 = vpop.f32.mrb[0].mxu0
      %v2099 = vadd.f32 0.0, %v2098
      %v2100 = vpop.f32.mrb[0].mxu0
      %2101 = vmatprep.mubr.f32.mxu0 0.0
      %2102 = vmatmul.mubr.f32.gmra.mrb[0].mxu0 %v2000
      %v2103 = vpop.f32.mrb[0].mxu0
      %v2104 = vadd.f32 0.0, %v2103
      %v2105 = vpop.f32.mrb[0].mxu0
      %2106 = vdwg.mxu0
      %v2108 = vsel %vm490, %v1954, 0
      %v2111 = vsel %vm490, %v1955, 0
      %v2114 = vsel %vm490, %v1956, 0
      %v2117 = vsel %vm490, %v1957, 0
      %v2120 = vsel %vm490, %v1958, 0
      %v2123 = vsel %vm490, %v1959, 0
      %v2126 = vsel %vm490, %v1960, 0
      %v2129 = vsel %vm490, %v1961, 0
      %2131 = vmatprep.subr.mxu0 0.0
      %2132 = vmatpush1.msra.mxu0 %v910
      %2133 = vmatprep.subr.mxu0 0.0
      %2134 = vmatpush1.msra.mxu0 %v912
      %2135 = vmatprep.subr.mxu0 0.0
      %2136 = vmatpush1.msra.mxu0 %v914
      %2137 = vmatprep.subr.mxu0 0.0
      %2138 = vmatpush1.msra.mxu0 %v916
      %2139 = vmatprep.subr.mxu0 0.0
      %2140 = vmatpush1.msra.mxu0 %v918
      %2141 = vmatprep.subr.mxu0 0.0
      %2142 = vmatpush1.msra.mxu0 %v920
      %2143 = vmatprep.subr.mxu0 0.0
      %2144 = vmatpush1.msra.mxu0 %v922
      %2145 = vmatprep.subr.mxu0 0.0
      %2146 = vmatpush1.msra.mxu0 %v924
      %2147 = vmatprep.subr.mxu0 0.0
      %2148 = vmatpush1.msra.mxu0 0.0
      %2149 = vmatprep.subr.mxu0 0.0
      %2150 = vmatpush1.msra.mxu0 0.0
      %2151 = vmatprep.subr.mxu0 0.0
      %2152 = vmatpush1.msra.mxu0 0.0
      %2153 = vmatprep.subr.mxu0 0.0
      %2154 = vmatpush1.msra.mxu0 0.0
      %2155 = vmatprep.subr.mxu0 0.0
      %2156 = vmatpush1.msra.mxu0 0.0
      %2157 = vmatprep.subr.mxu0 0.0
      %2158 = vmatpush1.msra.mxu0 0.0
      %2159 = vmatprep.subr.mxu0 0.0
      %2160 = vmatpush1.msra.mxu0 0.0
      %2161 = vmatprep.subr.mxu0 0.0
      %2162 = vmatpush1.msra.mxu0 0.0
      %2163 = vmatprep.subr.mxu0 0.0
      %2164 = vmatpush1.msra.mxu0 0.0
      %2165 = vmatprep.subr.mxu0 0.0
      %2166 = vmatpush1.msra.mxu0 0.0
      %2167 = vmatprep.subr.mxu0 0.0
      %2168 = vmatpush1.msra.mxu0 0.0
      %2169 = vmatprep.subr.mxu0 0.0
      %2170 = vmatpush1.msra.mxu0 0.0
      %2171 = vmatprep.subr.mxu0 0.0
      %2172 = vmatpush1.msra.mxu0 0.0
      %2173 = vmatprep.subr.mxu0 0.0
      %2174 = vmatpush1.msra.mxu0 0.0
      %2175 = vmatprep.subr.mxu0 0.0
      %2176 = vmatpush1.msra.mxu0 0.0
      %2177 = vmatprep.subr.mxu0 0.0
      %2178 = vmatpush1.msra.mxu0 0.0
      %2179 = vmatprep.subr.mxu0 0.0
      %2180 = vmatpush1.msra.mxu0 0.0
      %2181 = vmatprep.subr.mxu0 0.0
      %2182 = vmatpush1.msra.mxu0 0.0
      %2183 = vmatprep.subr.mxu0 0.0
      %2184 = vmatpush1.msra.mxu0 0.0
      %2185 = vmatprep.subr.mxu0 0.0
      %2186 = vmatpush1.msra.mxu0 0.0
      %2187 = vmatprep.subr.mxu0 0.0
      %2188 = vmatpush1.msra.mxu0 0.0
      %2189 = vmatprep.subr.mxu0 0.0
      %2190 = vmatpush1.msra.mxu0 0.0
      %2191 = vmatprep.subr.mxu0 0.0
      %2192 = vmatpush1.msra.mxu0 0.0
      %2193 = vmatprep.subr.mxu0 0.0
      %2194 = vmatpush1.msra.mxu0 0.0
      %2195 = vmatprep.mubr.f32.mxu0 0.0
      %2196 = vmatmul.mubr.f32.gmra.mrb[0].mxu0 %v2108
      %v2197 = vpop.f32.mrb[0].mxu0
      %v2198 = vadd.f32 0.0, %v2197
      %v2199 = vpop.f32.mrb[0].mxu0
      %2200 = vmatprep.mubr.f32.mxu0 0.0
      %2201 = vmatmul.mubr.f32.gmra.mrb[0].mxu0 %v2111
      %v2202 = vpop.f32.mrb[0].mxu0
      %v2203 = vadd.f32 0.0, %v2202
      %v2204 = vpop.f32.mrb[0].mxu0
      %2205 = vmatprep.mubr.f32.mxu0 0.0
      %2206 = vmatmul.mubr.f32.gmra.mrb[0].mxu0 %v2114
      %v2207 = vpop.f32.mrb[0].mxu0
      %v2208 = vadd.f32 0.0, %v2207
      %v2209 = vpop.f32.mrb[0].mxu0
      %2210 = vmatprep.mubr.f32.mxu0 0.0
      %2211 = vmatmul.mubr.f32.gmra.mrb[0].mxu0 %v2117
      %v2212 = vpop.f32.mrb[0].mxu0
      %v2213 = vadd.f32 0.0, %v2212
      %v2214 = vpop.f32.mrb[0].mxu0
      %2215 = vmatprep.mubr.f32.mxu0 0.0
      %2216 = vmatmul.mubr.f32.gmra.mrb[0].mxu0 %v2120
      %v2217 = vpop.f32.mrb[0].mxu0
      %v2218 = vadd.f32 0.0, %v2217
      %v2219 = vpop.f32.mrb[0].mxu0
      %2220 = vmatprep.mubr.f32.mxu0 0.0
      %2221 = vmatmul.mubr.f32.gmra.mrb[0].mxu0 %v2123
      %v2222 = vpop.f32.mrb[0].mxu0
      %v2223 = vadd.f32 0.0, %v2222
      %v2224 = vpop.f32.mrb[0].mxu0
      %2225 = vmatprep.mubr.f32.mxu0 0.0
      %2226 = vmatmul.mubr.f32.gmra.mrb[0].mxu0 %v2126
      %v2227 = vpop.f32.mrb[0].mxu0
      %v2228 = vadd.f32 0.0, %v2227
      %v2229 = vpop.f32.mrb[0].mxu0
      %2230 = vmatprep.mubr.f32.mxu0 0.0
      %2231 = vmatmul.mubr.f32.gmra.mrb[0].mxu0 %v2129
      %v2232 = vpop.f32.mrb[0].mxu0
      %v2233 = vadd.f32 0.0, %v2232
      %v2234 = vpop.f32.mrb[0].mxu0
      %2235 = vdwg.mxu0
      %v2237 = vsel %vm490, %v1962, 0
      %v2240 = vsel %vm490, %v1963, 0
      %v2243 = vsel %vm490, %v1964, 0
      %v2246 = vsel %vm490, %v1965, 0
      %v2249 = vsel %vm490, %v1966, 0
      %v2252 = vsel %vm490, %v1967, 0
      %v2255 = vsel %vm490, %v1968, 0
      %v2258 = vsel %vm490, %v1969, 0
      %2260 = vmatprep.subr.mxu0 0.0
      %2261 = vmatpush1.msra.mxu0 %v934
      %2262 = vmatprep.subr.mxu0 0.0
      %2263 = vmatpush1.msra.mxu0 %v936
      %2264 = vmatprep.subr.mxu0 0.0
      %2265 = vmatpush1.msra.mxu0 %v938
      %2266 = vmatprep.subr.mxu0 0.0
      %2267 = vmatpush1.msra.mxu0 %v940
      %2268 = vmatprep.subr.mxu0 0.0
      %2269 = vmatpush1.msra.mxu0 %v942
      %2270 = vmatprep.subr.mxu0 0.0
      %2271 = vmatpush1.msra.mxu0 %v944
      %2272 = vmatprep.subr.mxu0 0.0
      %2273 = vmatpush1.msra.mxu0 %v946
      %2274 = vmatprep.subr.mxu0 0.0
      %2275 = vmatpush1.msra.mxu0 %v948
      %2276 = vmatprep.subr.mxu0 0.0
      %2277 = vmatpush1.msra.mxu0 0.0
      %2278 = vmatprep.subr.mxu0 0.0
      %2279 = vmatpush1.msra.mxu0 0.0
      %2280 = vmatprep.subr.mxu0 0.0
      %2281 = vmatpush1.msra.mxu0 0.0
      %2282 = vmatprep.subr.mxu0 0.0
      %2283 = vmatpush1.msra.mxu0 0.0
      %2284 = vmatprep.subr.mxu0 0.0
      %2285 = vmatpush1.msra.mxu0 0.0
      %2286 = vmatprep.subr.mxu0 0.0
      %2287 = vmatpush1.msra.mxu0 0.0
      %2288 = vmatprep.subr.mxu0 0.0
      %2289 = vmatpush1.msra.mxu0 0.0
      %2290 = vmatprep.subr.mxu0 0.0
      %2291 = vmatpush1.msra.mxu0 0.0
      %2292 = vmatprep.subr.mxu0 0.0
      %2293 = vmatpush1.msra.mxu0 0.0
      %2294 = vmatprep.subr.mxu0 0.0
      %2295 = vmatpush1.msra.mxu0 0.0
      %2296 = vmatprep.subr.mxu0 0.0
      %2297 = vmatpush1.msra.mxu0 0.0
      %2298 = vmatprep.subr.mxu0 0.0
      %2299 = vmatpush1.msra.mxu0 0.0
      %2300 = vmatprep.subr.mxu0 0.0
      %2301 = vmatpush1.msra.mxu0 0.0
      %2302 = vmatprep.subr.mxu0 0.0
      %2303 = vmatpush1.msra.mxu0 0.0
      %2304 = vmatprep.subr.mxu0 0.0
      %2305 = vmatpush1.msra.mxu0 0.0
      %2306 = vmatprep.subr.mxu0 0.0
      %2307 = vmatpush1.msra.mxu0 0.0
      %2308 = vmatprep.subr.mxu0 0.0
      %2309 = vmatpush1.msra.mxu0 0.0
      %2310 = vmatprep.subr.mxu0 0.0
      %2311 = vmatpush1.msra.mxu0 0.0
      %2312 = vmatprep.subr.mxu0 0.0
      %2313 = vmatpush1.msra.mxu0 0.0
      %2314 = vmatprep.subr.mxu0 0.0
      %2315 = vmatpush1.msra.mxu0 0.0
      %2316 = vmatprep.subr.mxu0 0.0
      %2317 = vmatpush1.msra.mxu0 0.0
      %2318 = vmatprep.subr.mxu0 0.0
      %2319 = vmatpush1.msra.mxu0 0.0
      %2320 = vmatprep.subr.mxu0 0.0
      %2321 = vmatpush1.msra.mxu0 0.0
      %2322 = vmatprep.subr.mxu0 0.0
      %2323 = vmatpush1.msra.mxu0 0.0
      %2324 = vmatprep.mubr.f32.mxu0 0.0
      %2325 = vmatmul.mubr.f32.gmra.mrb[0].mxu0 %v2237
      %v2326 = vpop.f32.mrb[0].mxu0
      %v2327 = vadd.f32 0.0, %v2326
      %v2328 = vpop.f32.mrb[0].mxu0
      %2329 = vmatprep.mubr.f32.mxu0 0.0
      %2330 = vmatmul.mubr.f32.gmra.mrb[0].mxu0 %v2240
      %v2331 = vpop.f32.mrb[0].mxu0
      %v2332 = vadd.f32 0.0, %v2331
      %v2333 = vpop.f32.mrb[0].mxu0
      %2334 = vmatprep.mubr.f32.mxu0 0.0
      %2335 = vmatmul.mubr.f32.gmra.mrb[0].mxu0 %v2243
      %v2336 = vpop.f32.mrb[0].mxu0
      %v2337 = vadd.f32 0.0, %v2336
      %v2338 = vpop.f32.mrb[0].mxu0
      %2339 = vmatprep.mubr.f32.mxu0 0.0
      %2340 = vmatmul.mubr.f32.gmra.mrb[0].mxu0 %v2246
      %v2341 = vpop.f32.mrb[0].mxu0
      %v2342 = vadd.f32 0.0, %v2341
      %v2343 = vpop.f32.mrb[0].mxu0
      %2344 = vmatprep.mubr.f32.mxu0 0.0
      %2345 = vmatmul.mubr.f32.gmra.mrb[0].mxu0 %v2249
      %v2346 = vpop.f32.mrb[0].mxu0
      %v2347 = vadd.f32 0.0, %v2346
      %v2348 = vpop.f32.mrb[0].mxu0
      %2349 = vmatprep.mubr.f32.mxu0 0.0
      %2350 = vmatmul.mubr.f32.gmra.mrb[0].mxu0 %v2252
      %v2351 = vpop.f32.mrb[0].mxu0
      %v2352 = vadd.f32 0.0, %v2351
      %v2353 = vpop.f32.mrb[0].mxu0
      %2354 = vmatprep.mubr.f32.mxu0 0.0
      %2355 = vmatmul.mubr.f32.gmra.mrb[0].mxu0 %v2255
      %v2356 = vpop.f32.mrb[0].mxu0
      %v2357 = vadd.f32 0.0, %v2356
      %v2358 = vpop.f32.mrb[0].mxu0
      %2359 = vmatprep.mubr.f32.mxu0 0.0
      %2360 = vmatmul.mubr.f32.gmra.mrb[0].mxu0 %v2258
      %v2361 = vpop.f32.mrb[0].mxu0
      %v2362 = vadd.f32 0.0, %v2361
      %v2363 = vpop.f32.mrb[0].mxu0
      %2364 = vdwg.mxu0
      %v2366 = vsel %vm490, %v1970, 0
      %v2369 = vsel %vm490, %v1971, 0
      %v2372 = vsel %vm490, %v1972, 0
      %v2375 = vsel %vm490, %v1973, 0
      %v2378 = vsel %vm490, %v1974, 0
      %v2381 = vsel %vm490, %v1975, 0
      %v2384 = vsel %vm490, %v1976, 0
      %v2387 = vsel %vm490, %v1977, 0
      %2389 = vmatprep.subr.mxu0 0.0
      %2390 = vmatpush1.msra.mxu0 %v958
      %2391 = vmatprep.subr.mxu0 0.0
      %2392 = vmatpush1.msra.mxu0 %v960
      %2393 = vmatprep.subr.mxu0 0.0
      %2394 = vmatpush1.msra.mxu0 %v962
      %2395 = vmatprep.subr.mxu0 0.0
      %2396 = vmatpush1.msra.mxu0 %v964
      %2397 = vmatprep.subr.mxu0 0.0
      %2398 = vmatpush1.msra.mxu0 %v966
      %2399 = vmatprep.subr.mxu0 0.0
      %2400 = vmatpush1.msra.mxu0 %v968
      %2401 = vmatprep.subr.mxu0 0.0
      %2402 = vmatpush1.msra.mxu0 %v970
      %2403 = vmatprep.subr.mxu0 0.0
      %2404 = vmatpush1.msra.mxu0 %v972
      %2405 = vmatprep.subr.mxu0 0.0
      %2406 = vmatpush1.msra.mxu0 0.0
      %2407 = vmatprep.subr.mxu0 0.0
      %2408 = vmatpush1.msra.mxu0 0.0
      %2409 = vmatprep.subr.mxu0 0.0
      %2410 = vmatpush1.msra.mxu0 0.0
      %2411 = vmatprep.subr.mxu0 0.0
      %2412 = vmatpush1.msra.mxu0 0.0
      %2413 = vmatprep.subr.mxu0 0.0
      %2414 = vmatpush1.msra.mxu0 0.0
      %2415 = vmatprep.subr.mxu0 0.0
      %2416 = vmatpush1.msra.mxu0 0.0
      %2417 = vmatprep.subr.mxu0 0.0
      %2418 = vmatpush1.msra.mxu0 0.0
      %2419 = vmatprep.subr.mxu0 0.0
      %2420 = vmatpush1.msra.mxu0 0.0
      %2421 = vmatprep.subr.mxu0 0.0
      %2422 = vmatpush1.msra.mxu0 0.0
      %2423 = vmatprep.subr.mxu0 0.0
      %2424 = vmatpush1.msra.mxu0 0.0
      %2425 = vmatprep.subr.mxu0 0.0
      %2426 = vmatpush1.msra.mxu0 0.0
      %2427 = vmatprep.subr.mxu0 0.0
      %2428 = vmatpush1.msra.mxu0 0.0
      %2429 = vmatprep.subr.mxu0 0.0
      %2430 = vmatpush1.msra.mxu0 0.0
      %2431 = vmatprep.subr.mxu0 0.0
      %2432 = vmatpush1.msra.mxu0 0.0
      %2433 = vmatprep.subr.mxu0 0.0
      %2434 = vmatpush1.msra.mxu0 0.0
      %2435 = vmatprep.subr.mxu0 0.0
      %2436 = vmatpush1.msra.mxu0 0.0
      %2437 = vmatprep.subr.mxu0 0.0
      %2438 = vmatpush1.msra.mxu0 0.0
      %2439 = vmatprep.subr.mxu0 0.0
      %2440 = vmatpush1.msra.mxu0 0.0
      %2441 = vmatprep.subr.mxu0 0.0
      %2442 = vmatpush1.msra.mxu0 0.0
      %2443 = vmatprep.subr.mxu0 0.0
      %2444 = vmatpush1.msra.mxu0 0.0
      %2445 = vmatprep.subr.mxu0 0.0
      %2446 = vmatpush1.msra.mxu0 0.0
      %2447 = vmatprep.subr.mxu0 0.0
      %2448 = vmatpush1.msra.mxu0 0.0
      %2449 = vmatprep.subr.mxu0 0.0
      %2450 = vmatpush1.msra.mxu0 0.0
      %2451 = vmatprep.subr.mxu0 0.0
      %2452 = vmatpush1.msra.mxu0 0.0
      %2453 = vmatprep.mubr.f32.mxu0 0.0
      %2454 = vmatmul.mubr.f32.gmra.mrb[0].mxu0 %v2366
      %v2455 = vpop.f32.mrb[0].mxu0
      %v2456 = vadd.f32 0.0, %v2455
      %v2457 = vpop.f32.mrb[0].mxu0
      %2458 = vmatprep.mubr.f32.mxu0 0.0
      %2459 = vmatmul.mubr.f32.gmra.mrb[0].mxu0 %v2369
      %v2460 = vpop.f32.mrb[0].mxu0
      %v2461 = vadd.f32 0.0, %v2460
      %v2462 = vpop.f32.mrb[0].mxu0
      %2463 = vmatprep.mubr.f32.mxu0 0.0
      %2464 = vmatmul.mubr.f32.gmra.mrb[0].mxu0 %v2372
      %v2465 = vpop.f32.mrb[0].mxu0
      %v2466 = vadd.f32 0.0, %v2465
      %v2467 = vpop.f32.mrb[0].mxu0
      %2468 = vmatprep.mubr.f32.mxu0 0.0
      %2469 = vmatmul.mubr.f32.gmra.mrb[0].mxu0 %v2375
      %v2470 = vpop.f32.mrb[0].mxu0
      %v2471 = vadd.f32 0.0, %v2470
      %v2472 = vpop.f32.mrb[0].mxu0
      %2473 = vmatprep.mubr.f32.mxu0 0.0
      %2474 = vmatmul.mubr.f32.gmra.mrb[0].mxu0 %v2378
      %v2475 = vpop.f32.mrb[0].mxu0
      %v2476 = vadd.f32 0.0, %v2475
      %v2477 = vpop.f32.mrb[0].mxu0
      %2478 = vmatprep.mubr.f32.mxu0 0.0
      %2479 = vmatmul.mubr.f32.gmra.mrb[0].mxu0 %v2381
      %v2480 = vpop.f32.mrb[0].mxu0
      %v2481 = vadd.f32 0.0, %v2480
      %v2482 = vpop.f32.mrb[0].mxu0
      %2483 = vmatprep.mubr.f32.mxu0 0.0
      %2484 = vmatmul.mubr.f32.gmra.mrb[0].mxu0 %v2384
      %v2485 = vpop.f32.mrb[0].mxu0
      %v2486 = vadd.f32 0.0, %v2485
      %v2487 = vpop.f32.mrb[0].mxu0
      %2488 = vmatprep.mubr.f32.mxu0 0.0
      %2489 = vmatmul.mubr.f32.gmra.mrb[0].mxu0 %v2387
      %v2490 = vpop.f32.mrb[0].mxu0
      %v2491 = vadd.f32 0.0, %v2490
      %v2492 = vpop.f32.mrb[0].mxu0
      %2493 = vdwg.mxu0
      %2502 = vrot.lane.b32.xlu0 %v2198, 16
      %v2503 = vpop.permute.xlu0 %2502
      %2504 = vrot.lane.b32.xlu0 %v2203, 16
      %v2505 = vpop.permute.xlu0 %2504
      %2506 = vrot.lane.b32.xlu0 %v2208, 16
      %v2507 = vpop.permute.xlu0 %2506
      %2508 = vrot.lane.b32.xlu0 %v2213, 16
      %v2509 = vpop.permute.xlu0 %2508
      %2510 = vrot.lane.b32.xlu0 %v2218, 16
      %v2511 = vpop.permute.xlu0 %2510
      %2512 = vrot.lane.b32.xlu0 %v2223, 16
      %v2513 = vpop.permute.xlu0 %2512
      %2514 = vrot.lane.b32.xlu0 %v2228, 16
      %v2515 = vpop.permute.xlu0 %2514
      %2516 = vrot.lane.b32.xlu0 %v2233, 16
      %v2517 = vpop.permute.xlu0 %2516
      %2534 = vrot.lane.b32.xlu0 %v2327, 32
      %v2535 = vpop.permute.xlu0 %2534
      %2536 = vrot.lane.b32.xlu0 %v2332, 32
      %v2537 = vpop.permute.xlu0 %2536
      %2538 = vrot.lane.b32.xlu0 %v2337, 32
      %v2539 = vpop.permute.xlu0 %2538
      %2540 = vrot.lane.b32.xlu0 %v2342, 32
      %v2541 = vpop.permute.xlu0 %2540
      %2542 = vrot.lane.b32.xlu0 %v2347, 32
      %v2543 = vpop.permute.xlu0 %2542
      %2544 = vrot.lane.b32.xlu0 %v2352, 32
      %v2545 = vpop.permute.xlu0 %2544
      %2546 = vrot.lane.b32.xlu0 %v2357, 32
      %v2547 = vpop.permute.xlu0 %2546
      %2548 = vrot.lane.b32.xlu0 %v2362, 32
      %v2549 = vpop.permute.xlu0 %2548
      %2566 = vrot.lane.b32.xlu0 %v2456, 48
      %v2567 = vpop.permute.xlu0 %2566
      %2568 = vrot.lane.b32.xlu0 %v2461, 48
      %v2569 = vpop.permute.xlu0 %2568
      %2570 = vrot.lane.b32.xlu0 %v2466, 48
      %v2571 = vpop.permute.xlu0 %2570
      %2572 = vrot.lane.b32.xlu0 %v2471, 48
      %v2573 = vpop.permute.xlu0 %2572
      %2574 = vrot.lane.b32.xlu0 %v2476, 48
      %v2575 = vpop.permute.xlu0 %2574
      %2576 = vrot.lane.b32.xlu0 %v2481, 48
      %v2577 = vpop.permute.xlu0 %2576
      %2578 = vrot.lane.b32.xlu0 %v2486, 48
      %v2579 = vpop.permute.xlu0 %2578
      %2580 = vrot.lane.b32.xlu0 %v2491, 48
      %v2581 = vpop.permute.xlu0 %2580
      %v2590 = vsel %vm997, %v2069, %v2503
      %v2591 = vsel %vm997, %v2074, %v2505
      %v2592 = vsel %vm997, %v2079, %v2507
      %v2593 = vsel %vm997, %v2084, %v2509
      %v2594 = vsel %vm997, %v2089, %v2511
      %v2595 = vsel %vm997, %v2094, %v2513
      %v2596 = vsel %vm997, %v2099, %v2515
      %v2597 = vsel %vm997, %v2104, %v2517
      %vm2598 = vcmask 261120
      %v2599 = vsel %vm2598, %v2590, %v2535
      %v2600 = vsel %vm2598, %v2591, %v2537
      %v2601 = vsel %vm2598, %v2592, %v2539
      %v2602 = vsel %vm2598, %v2593, %v2541
      %v2603 = vsel %vm2598, %v2594, %v2543
      %v2604 = vsel %vm2598, %v2595, %v2545
      %v2605 = vsel %vm2598, %v2596, %v2547
      %v2606 = vsel %vm2598, %v2597, %v2549
      %vm2607 = vcmask 392192
      %v2608 = vsel %vm2607, %v2599, %v2567
      %v2609 = vsel %vm2607, %v2600, %v2569
      %v2610 = vsel %vm2607, %v2601, %v2571
      %v2611 = vsel %vm2607, %v2602, %v2573
      %v2612 = vsel %vm2607, %v2603, %v2575
      %v2613 = vsel %vm2607, %v2604, %v2577
      %v2614 = vsel %vm2607, %v2605, %v2579
      %v2615 = vsel %vm2607, %v2606, %v2581
      %v2616 = vld [vmem:[%s5] sm:$0xff]
      %v2617 = vld [vmem:[%s5 + $0x8] sm:$0xff]
      %v2618 = vld [vmem:[%s5 + $0x10] sm:$0xff]
      %v2619 = vld [vmem:[%s5 + $0x18] sm:$0xff]
      %v2620 = vld [vmem:[%s5 + $0x20] sm:$0xff]
      %v2621 = vld [vmem:[%s5 + $0x28] sm:$0xff]
      %v2622 = vld [vmem:[%s5 + $0x30] sm:$0xff]
      %v2623 = vld [vmem:[%s5 + $0x38] sm:$0xff]
      %v2624 = vld [vmem:[%s6] sm:$0x1]
      %v2626 = vlaneseq
      %v2627 = vshrl.u32 %v2626, 7
      %v2628 = vsub.s32 0, %v2627
      %v2629 = vrot.slane %v2624, %v2628
      %v2632 = vsel %vm490, %v2608, 0
      %v2635 = vsel %vm490, %v2609, 0
      %v2638 = vsel %vm490, %v2610, 0
      %v2641 = vsel %vm490, %v2611, 0
      %v2644 = vsel %vm490, %v2612, 0
      %v2647 = vsel %vm490, %v2613, 0
      %v2650 = vsel %vm490, %v2614, 0
      %v2653 = vsel %vm490, %v2615, 0
      %2655 = vmatprep.subr.mxu0 0.0
      %2656 = vmatpush1.msra.mxu0 %v2616
      %2657 = vmatprep.subr.mxu0 0.0
      %2658 = vmatpush1.msra.mxu0 %v2617
      %2659 = vmatprep.subr.mxu0 0.0
      %2660 = vmatpush1.msra.mxu0 %v2618
      %2661 = vmatprep.subr.mxu0 0.0
      %2662 = vmatpush1.msra.mxu0 %v2619
      %2663 = vmatprep.subr.mxu0 0.0
      %2664 = vmatpush1.msra.mxu0 %v2620
      %2665 = vmatprep.subr.mxu0 0.0
      %2666 = vmatpush1.msra.mxu0 %v2621
      %2667 = vmatprep.subr.mxu0 0.0
      %2668 = vmatpush1.msra.mxu0 %v2622
      %2669 = vmatprep.subr.mxu0 0.0
      %2670 = vmatpush1.msra.mxu0 %v2623
      %2671 = vmatprep.subr.mxu0 0.0
      %2672 = vmatpush1.msra.mxu0 0.0
      %2673 = vmatprep.subr.mxu0 0.0
      %2674 = vmatpush1.msra.mxu0 0.0
      %2675 = vmatprep.subr.mxu0 0.0
      %2676 = vmatpush1.msra.mxu0 0.0
      %2677 = vmatprep.subr.mxu0 0.0
      %2678 = vmatpush1.msra.mxu0 0.0
      %2679 = vmatprep.subr.mxu0 0.0
      %2680 = vmatpush1.msra.mxu0 0.0
      %2681 = vmatprep.subr.mxu0 0.0
      %2682 = vmatpush1.msra.mxu0 0.0
      %2683 = vmatprep.subr.mxu0 0.0
      %2684 = vmatpush1.msra.mxu0 0.0
      %2685 = vmatprep.subr.mxu0 0.0
      %2686 = vmatpush1.msra.mxu0 0.0
      %2687 = vmatprep.subr.mxu0 0.0
      %2688 = vmatpush1.msra.mxu0 0.0
      %2689 = vmatprep.subr.mxu0 0.0
      %2690 = vmatpush1.msra.mxu0 0.0
      %2691 = vmatprep.subr.mxu0 0.0
      %2692 = vmatpush1.msra.mxu0 0.0
      %2693 = vmatprep.subr.mxu0 0.0
      %2694 = vmatpush1.msra.mxu0 0.0
      %2695 = vmatprep.subr.mxu0 0.0
      %2696 = vmatpush1.msra.mxu0 0.0
      %2697 = vmatprep.subr.mxu0 0.0
      %2698 = vmatpush1.msra.mxu0 0.0
      %2699 = vmatprep.subr.mxu0 0.0
      %2700 = vmatpush1.msra.mxu0 0.0
      %2701 = vmatprep.subr.mxu0 0.0
      %2702 = vmatpush1.msra.mxu0 0.0
      %2703 = vmatprep.subr.mxu0 0.0
      %2704 = vmatpush1.msra.mxu0 0.0
      %2705 = vmatprep.subr.mxu0 0.0
      %2706 = vmatpush1.msra.mxu0 0.0
      %2707 = vmatprep.subr.mxu0 0.0
      %2708 = vmatpush1.msra.mxu0 0.0
      %2709 = vmatprep.subr.mxu0 0.0
      %2710 = vmatpush1.msra.mxu0 0.0
      %2711 = vmatprep.subr.mxu0 0.0
      %2712 = vmatpush1.msra.mxu0 0.0
      %2713 = vmatprep.subr.mxu0 0.0
      %2714 = vmatpush1.msra.mxu0 0.0
      %2715 = vmatprep.subr.mxu0 0.0
      %2716 = vmatpush1.msra.mxu0 0.0
      %2717 = vmatprep.subr.mxu0 0.0
      %2718 = vmatpush1.msra.mxu0 0.0
      %2719 = vmatprep.mubr.f32.mxu0 0.0
      %2720 = vmatmul.mubr.f32.gmra.mrb[0].mxu0 %v2632
      %v2721 = vpop.f32.mrb[0].mxu0
      %v2722 = vadd.f32 %v2629, %v2721
      %v2723 = vpop.f32.mrb[0].mxu0
      %2724 = vmatprep.mubr.f32.mxu0 0.0
      %2725 = vmatmul.mubr.f32.gmra.mrb[0].mxu0 %v2635
      %v2726 = vpop.f32.mrb[0].mxu0
      %v2727 = vadd.f32 %v2629, %v2726
      %v2728 = vpop.f32.mrb[0].mxu0
      %2729 = vmatprep.mubr.f32.mxu0 0.0
      %2730 = vmatmul.mubr.f32.gmra.mrb[0].mxu0 %v2638
      %v2731 = vpop.f32.mrb[0].mxu0
      %v2732 = vadd.f32 %v2629, %v2731
      %v2733 = vpop.f32.mrb[0].mxu0
      %2734 = vmatprep.mubr.f32.mxu0 0.0
      %2735 = vmatmul.mubr.f32.gmra.mrb[0].mxu0 %v2641
      %v2736 = vpop.f32.mrb[0].mxu0
      %v2737 = vadd.f32 %v2629, %v2736
      %v2738 = vpop.f32.mrb[0].mxu0
      %2739 = vmatprep.mubr.f32.mxu0 0.0
      %2740 = vmatmul.mubr.f32.gmra.mrb[0].mxu0 %v2644
      %v2741 = vpop.f32.mrb[0].mxu0
      %v2742 = vadd.f32 %v2629, %v2741
      %v2743 = vpop.f32.mrb[0].mxu0
      %2744 = vmatprep.mubr.f32.mxu0 0.0
      %2745 = vmatmul.mubr.f32.gmra.mrb[0].mxu0 %v2647
      %v2746 = vpop.f32.mrb[0].mxu0
      %v2747 = vadd.f32 %v2629, %v2746
      %v2748 = vpop.f32.mrb[0].mxu0
      %2749 = vmatprep.mubr.f32.mxu0 0.0
      %2750 = vmatmul.mubr.f32.gmra.mrb[0].mxu0 %v2650
      %v2751 = vpop.f32.mrb[0].mxu0
      %v2752 = vadd.f32 %v2629, %v2751
      %v2753 = vpop.f32.mrb[0].mxu0
      %2754 = vmatprep.mubr.f32.mxu0 0.0
      %2755 = vmatmul.mubr.f32.gmra.mrb[0].mxu0 %v2653
      %v2756 = vpop.f32.mrb[0].mxu0
      %v2757 = vadd.f32 %v2629, %v2756
      %v2758 = vpop.f32.mrb[0].mxu0
      %2759 = vdwg.mxu0
      %v2760 = vadd.f32 %v480, %v2722
      %v2761 = vadd.f32 %v481, %v2727
      %v2762 = vadd.f32 %v482, %v2732
      %v2763 = vadd.f32 %v483, %v2737
      %v2764 = vadd.f32 %v484, %v2742
      %v2765 = vadd.f32 %v485, %v2747
      %v2766 = vadd.f32 %v486, %v2752
      %v2767 = vadd.f32 %v487, %v2757
      %v2768 = vld [vmem:[%s7] sm:$0x1]
      %v2769 = vld [vmem:[%s8] sm:$0x1]
      %v2770 = vsel %vm490, %v2760, 0.0
      %2771 = vadd.xlane.f32.xlu0 %v2770
      %v2772 = vpop.xlane.xlu0 %2771
      %v2773 = vsel %vm490, %v2761, 0.0
      %2774 = vadd.xlane.f32.xlu0 %v2773
      %v2775 = vpop.xlane.xlu0 %2774
      %v2776 = vsel %vm490, %v2762, 0.0
      %2777 = vadd.xlane.f32.xlu0 %v2776
      %v2778 = vpop.xlane.xlu0 %2777
      %v2779 = vsel %vm490, %v2763, 0.0
      %2780 = vadd.xlane.f32.xlu0 %v2779
      %v2781 = vpop.xlane.xlu0 %2780
      %v2782 = vsel %vm490, %v2764, 0.0
      %2783 = vadd.xlane.f32.xlu0 %v2782
      %v2784 = vpop.xlane.xlu0 %2783
      %v2785 = vsel %vm490, %v2765, 0.0
      %2786 = vadd.xlane.f32.xlu0 %v2785
      %v2787 = vpop.xlane.xlu0 %2786
      %v2788 = vsel %vm490, %v2766, 0.0
      %2789 = vadd.xlane.f32.xlu0 %v2788
      %v2790 = vpop.xlane.xlu0 %2789
      %v2791 = vsel %vm490, %v2767, 0.0
      %2792 = vadd.xlane.f32.xlu0 %v2791
      %v2793 = vpop.xlane.xlu0 %2792
      %v2794 = vmul.f32 %v2772, %v515
      %v2795 = vmul.f32 %v2775, %v515
      %v2796 = vmul.f32 %v2778, %v515
      %v2797 = vmul.f32 %v2781, %v515
      %v2798 = vmul.f32 %v2784, %v515
      %v2799 = vmul.f32 %v2787, %v515
      %v2800 = vmul.f32 %v2790, %v515
      %v2801 = vmul.f32 %v2793, %v515
      %v2802 = vsub.f32 %v2760, %v2794
      %v2803 = vsub.f32 %v2761, %v2795
      %v2804 = vsub.f32 %v2762, %v2796
      %v2805 = vsub.f32 %v2763, %v2797
      %v2806 = vsub.f32 %v2764, %v2798
      %v2807 = vsub.f32 %v2765, %v2799
      %v2808 = vsub.f32 %v2766, %v2800
      %v2809 = vsub.f32 %v2767, %v2801
      %v2810 = vmul.f32 %v2802, %v2802
      %v2811 = vmul.f32 %v2803, %v2803
      %v2812 = vmul.f32 %v2804, %v2804
      %v2813 = vmul.f32 %v2805, %v2805
      %v2814 = vmul.f32 %v2806, %v2806
      %v2815 = vmul.f32 %v2807, %v2807
      %v2816 = vmul.f32 %v2808, %v2808
      %v2817 = vmul.f32 %v2809, %v2809
      %v2818 = vsel %vm490, %v2810, 0.0
      %2819 = vadd.xlane.f32.xlu0 %v2818
      %v2820 = vpop.xlane.xlu0 %2819
      %v2821 = vsel %vm490, %v2811, 0.0
      %2822 = vadd.xlane.f32.xlu0 %v2821
      %v2823 = vpop.xlane.xlu0 %2822
      %v2824 = vsel %vm490, %v2812, 0.0
      %2825 = vadd.xlane.f32.xlu0 %v2824
      %v2826 = vpop.xlane.xlu0 %2825
      %v2827 = vsel %vm490, %v2813, 0.0
      %2828 = vadd.xlane.f32.xlu0 %v2827
      %v2829 = vpop.xlane.xlu0 %2828
      %v2830 = vsel %vm490, %v2814, 0.0
      %2831 = vadd.xlane.f32.xlu0 %v2830
      %v2832 = vpop.xlane.xlu0 %2831
      %v2833 = vsel %vm490, %v2815, 0.0
      %2834 = vadd.xlane.f32.xlu0 %v2833
      %v2835 = vpop.xlane.xlu0 %2834
      %v2836 = vsel %vm490, %v2816, 0.0
      %2837 = vadd.xlane.f32.xlu0 %v2836
      %v2838 = vpop.xlane.xlu0 %2837
      %v2839 = vsel %vm490, %v2817, 0.0
      %2840 = vadd.xlane.f32.xlu0 %v2839
      %v2841 = vpop.xlane.xlu0 %2840
      %v2842 = vmul.f32 %v2820, %v515
      %v2843 = vmul.f32 %v2823, %v515
      %v2844 = vmul.f32 %v2826, %v515
      %v2845 = vmul.f32 %v2829, %v515
      %v2846 = vmul.f32 %v2832, %v515
      %v2847 = vmul.f32 %v2835, %v515
      %v2848 = vmul.f32 %v2838, %v515
      %v2849 = vmul.f32 %v2841, %v515
      %v2850 = vadd.f32 %v2842, 1e-05
      %v2851 = vadd.f32 %v2843, 1e-05
      %v2852 = vadd.f32 %v2844, 1e-05
      %v2853 = vadd.f32 %v2845, 1e-05
      %v2854 = vadd.f32 %v2846, 1e-05
      %v2855 = vadd.f32 %v2847, 1e-05
      %v2856 = vadd.f32 %v2848, 1e-05
      %v2857 = vadd.f32 %v2849, 1e-05
      %v2858 = vrsqrt.pop %v2850
      %v2859 = vrsqrt.pop %v2851
      %v2860 = vrsqrt.pop %v2852
      %v2861 = vrsqrt.pop %v2853
      %v2862 = vrsqrt.pop %v2854
      %v2863 = vrsqrt.pop %v2855
      %v2864 = vrsqrt.pop %v2856
      %v2865 = vrsqrt.pop %v2857
      %v2866 = vmul.f32 %v2802, %v2858
      %v2867 = vmul.f32 %v2803, %v2859
      %v2868 = vmul.f32 %v2804, %v2860
      %v2869 = vmul.f32 %v2805, %v2861
      %v2870 = vmul.f32 %v2806, %v2862
      %v2871 = vmul.f32 %v2807, %v2863
      %v2872 = vmul.f32 %v2808, %v2864
      %v2873 = vmul.f32 %v2809, %v2865
      %v2875 = vlaneseq
      %v2876 = vshrl.u32 %v2875, 7
      %v2877 = vsub.s32 0, %v2876
      %v2878 = vrot.slane %v2768, %v2877
      %v2880 = vmul.f32 %v2866, %v2878
      %v2881 = vmul.f32 %v2867, %v2878
      %v2882 = vmul.f32 %v2868, %v2878
      %v2883 = vmul.f32 %v2869, %v2878
      %v2884 = vmul.f32 %v2870, %v2878
      %v2885 = vmul.f32 %v2871, %v2878
      %v2886 = vmul.f32 %v2872, %v2878
      %v2887 = vmul.f32 %v2873, %v2878
      %v2889 = vlaneseq
      %v2890 = vshrl.u32 %v2889, 7
      %v2891 = vsub.s32 0, %v2890
      %v2892 = vrot.slane %v2769, %v2891
      %v2894 = vadd.f32 %v2880, %v2892
      %v2895 = vadd.f32 %v2881, %v2892
      %v2896 = vadd.f32 %v2882, %v2892
      %v2897 = vadd.f32 %v2883, %v2892
      %v2898 = vadd.f32 %v2884, %v2892
      %v2899 = vadd.f32 %v2885, %v2892
      %v2900 = vadd.f32 %v2886, %v2892
      %v2901 = vadd.f32 %v2887, %v2892
      %v2902 = vld [vmem:[%s9] sm:$0xff]
      %v2903 = vld [vmem:[%s9 + $0x8] sm:$0xff]
      %v2904 = vld [vmem:[%s9 + $0x10] sm:$0xff]
      %v2905 = vld [vmem:[%s9 + $0x18] sm:$0xff]
      %v2906 = vld [vmem:[%s9 + $0x20] sm:$0xff]
      %v2907 = vld [vmem:[%s9 + $0x28] sm:$0xff]
      %v2908 = vld [vmem:[%s9 + $0x30] sm:$0xff]
      %v2909 = vld [vmem:[%s9 + $0x38] sm:$0xff]
      %v2910 = vld [vmem:[%s9 + $0x40] sm:$0xff]
      %v2911 = vld [vmem:[%s9 + $0x48] sm:$0xff]
      %v2912 = vld [vmem:[%s9 + $0x50] sm:$0xff]
      %v2913 = vld [vmem:[%s9 + $0x58] sm:$0xff]
      %v2914 = vld [vmem:[%s9 + $0x60] sm:$0xff]
      %v2915 = vld [vmem:[%s9 + $0x68] sm:$0xff]
      %v2916 = vld [vmem:[%s9 + $0x70] sm:$0xff]
      %v2917 = vld [vmem:[%s9 + $0x78] sm:$0xff]
      %v2918 = vld [vmem:[%s10] sm:$0x3]
      %v2920 = vlaneseq
      %v2921 = vshrl.u32 %v2920, 7
      %v2922 = vsub.s32 0, %v2921
      %v2923 = vrot.slane %v2918, %v2922
      %v2924 = vlaneseq
      %v2925 = vshrl.u32 %v2924, 7
      %v2926 = vsub.s32 1, %v2925
      %v2927 = vrot.slane %v2918, %v2926
      %v2931 = vsel %vm490, %v2894, 0
      %v2934 = vsel %vm490, %v2895, 0
      %v2937 = vsel %vm490, %v2896, 0
      %v2940 = vsel %vm490, %v2897, 0
      %v2943 = vsel %vm490, %v2898, 0
      %v2946 = vsel %vm490, %v2899, 0
      %v2949 = vsel %vm490, %v2900, 0
      %v2952 = vsel %vm490, %v2901, 0
      %2954 = vmatprep.subr.mxu0 %v2903
      %2955 = vmatpush1.msra.mxu0 %v2902
      %2956 = vmatprep.subr.mxu0 %v2905
      %2957 = vmatpush1.msra.mxu0 %v2904
      %2958 = vmatprep.subr.mxu0 %v2907
      %2959 = vmatpush1.msra.mxu0 %v2906
      %2960 = vmatprep.subr.mxu0 %v2909
      %2961 = vmatpush1.msra.mxu0 %v2908
      %2962 = vmatprep.subr.mxu0 %v2911
      %2963 = vmatpush1.msra.mxu0 %v2910
      %2964 = vmatprep.subr.mxu0 %v2913
      %2965 = vmatpush1.msra.mxu0 %v2912
      %2966 = vmatprep.subr.mxu0 %v2915
      %2967 = vmatpush1.msra.mxu0 %v2914
      %2968 = vmatprep.subr.mxu0 %v2917
      %2969 = vmatpush1.msra.mxu0 %v2916
      %2970 = vmatprep.subr.mxu0 0.0
      %2971 = vmatpush1.msra.mxu0 0.0
      %2972 = vmatprep.subr.mxu0 0.0
      %2973 = vmatpush1.msra.mxu0 0.0
      %2974 = vmatprep.subr.mxu0 0.0
      %2975 = vmatpush1.msra.mxu0 0.0
      %2976 = vmatprep.subr.mxu0 0.0
      %2977 = vmatpush1.msra.mxu0 0.0
      %2978 = vmatprep.subr.mxu0 0.0
      %2979 = vmatpush1.msra.mxu0 0.0
      %2980 = vmatprep.subr.mxu0 0.0
      %2981 = vmatpush1.msra.mxu0 0.0
      %2982 = vmatprep.subr.mxu0 0.0
      %2983 = vmatpush1.msra.mxu0 0.0
      %2984 = vmatprep.subr.mxu0 0.0
      %2985 = vmatpush1.msra.mxu0 0.0
      %2986 = vmatprep.subr.mxu0 0.0
      %2987 = vmatpush1.msra.mxu0 0.0
      %2988 = vmatprep.subr.mxu0 0.0
      %2989 = vmatpush1.msra.mxu0 0.0
      %2990 = vmatprep.subr.mxu0 0.0
      %2991 = vmatpush1.msra.mxu0 0.0
      %2992 = vmatprep.subr.mxu0 0.0
      %2993 = vmatpush1.msra.mxu0 0.0
      %2994 = vmatprep.subr.mxu0 0.0
      %2995 = vmatpush1.msra.mxu0 0.0
      %2996 = vmatprep.subr.mxu0 0.0
      %2997 = vmatpush1.msra.mxu0 0.0
      %2998 = vmatprep.subr.mxu0 0.0
      %2999 = vmatpush1.msra.mxu0 0.0
      %3000 = vmatprep.subr.mxu0 0.0
      %3001 = vmatpush1.msra.mxu0 0.0
      %3002 = vmatprep.subr.mxu0 0.0
      %3003 = vmatpush1.msra.mxu0 0.0
      %3004 = vmatprep.subr.mxu0 0.0
      %3005 = vmatpush1.msra.mxu0 0.0
      %3006 = vmatprep.subr.mxu0 0.0
      %3007 = vmatpush1.msra.mxu0 0.0
      %3008 = vmatprep.subr.mxu0 0.0
      %3009 = vmatpush1.msra.mxu0 0.0
      %3010 = vmatprep.subr.mxu0 0.0
      %3011 = vmatpush1.msra.mxu0 0.0
      %3012 = vmatprep.subr.mxu0 0.0
      %3013 = vmatpush1.msra.mxu0 0.0
      %3014 = vmatprep.subr.mxu0 0.0
      %3015 = vmatpush1.msra.mxu0 0.0
      %3016 = vmatprep.subr.mxu0 0.0
      %3017 = vmatpush1.msra.mxu0 0.0
      %3018 = vmatprep.mubr.f32.mxu0 0.0
      %3019 = vmatmul.mubr.f32.gmra.mrb[0].mxu0 %v2931
      %v3020 = vpop.f32.mrb[0].mxu0
      %v3021 = vadd.f32 %v2923, %v3020
      %v3022 = vpop.f32.mrb[0].mxu0
      %v3023 = vadd.f32 %v2927, %v3022
      %3024 = vmatprep.mubr.f32.mxu0 0.0
      %3025 = vmatmul.mubr.f32.gmra.mrb[0].mxu0 %v2934
      %v3026 = vpop.f32.mrb[0].mxu0
      %v3027 = vadd.f32 %v2923, %v3026
      %v3028 = vpop.f32.mrb[0].mxu0
      %v3029 = vadd.f32 %v2927, %v3028
      %3030 = vmatprep.mubr.f32.mxu0 0.0
      %3031 = vmatmul.mubr.f32.gmra.mrb[0].mxu0 %v2937
      %v3032 = vpop.f32.mrb[0].mxu0
      %v3033 = vadd.f32 %v2923, %v3032
      %v3034 = vpop.f32.mrb[0].mxu0
      %v3035 = vadd.f32 %v2927, %v3034
      %3036 = vmatprep.mubr.f32.mxu0 0.0
      %3037 = vmatmul.mubr.f32.gmra.mrb[0].mxu0 %v2940
      %v3038 = vpop.f32.mrb[0].mxu0
      %v3039 = vadd.f32 %v2923, %v3038
      %v3040 = vpop.f32.mrb[0].mxu0
      %v3041 = vadd.f32 %v2927, %v3040
      %3042 = vmatprep.mubr.f32.mxu0 0.0
      %3043 = vmatmul.mubr.f32.gmra.mrb[0].mxu0 %v2943
      %v3044 = vpop.f32.mrb[0].mxu0
      %v3045 = vadd.f32 %v2923, %v3044
      %v3046 = vpop.f32.mrb[0].mxu0
      %v3047 = vadd.f32 %v2927, %v3046
      %3048 = vmatprep.mubr.f32.mxu0 0.0
      %3049 = vmatmul.mubr.f32.gmra.mrb[0].mxu0 %v2946
      %v3050 = vpop.f32.mrb[0].mxu0
      %v3051 = vadd.f32 %v2923, %v3050
      %v3052 = vpop.f32.mrb[0].mxu0
      %v3053 = vadd.f32 %v2927, %v3052
      %3054 = vmatprep.mubr.f32.mxu0 0.0
      %3055 = vmatmul.mubr.f32.gmra.mrb[0].mxu0 %v2949
      %v3056 = vpop.f32.mrb[0].mxu0
      %v3057 = vadd.f32 %v2923, %v3056
      %v3058 = vpop.f32.mrb[0].mxu0
      %v3059 = vadd.f32 %v2927, %v3058
      %3060 = vmatprep.mubr.f32.mxu0 0.0
      %3061 = vmatmul.mubr.f32.gmra.mrb[0].mxu0 %v2952
      %v3062 = vpop.f32.mrb[0].mxu0
      %v3063 = vadd.f32 %v2923, %v3062
      %v3064 = vpop.f32.mrb[0].mxu0
      %v3065 = vadd.f32 %v2927, %v3064
      %3066 = vdwg.mxu0
      %v3067 = vmul.f32 %v3021, 0.5
      %v3068 = vmul.f32 %v3023, 0.5
      %v3069 = vmul.f32 %v3027, 0.5
      %v3070 = vmul.f32 %v3029, 0.5
      %v3071 = vmul.f32 %v3033, 0.5
      %v3072 = vmul.f32 %v3035, 0.5
      %v3073 = vmul.f32 %v3039, 0.5
      %v3074 = vmul.f32 %v3041, 0.5
      %v3075 = vmul.f32 %v3045, 0.5
      %v3076 = vmul.f32 %v3047, 0.5
      %v3077 = vmul.f32 %v3051, 0.5
      %v3078 = vmul.f32 %v3053, 0.5
      %v3079 = vmul.f32 %v3057, 0.5
      %v3080 = vmul.f32 %v3059, 0.5
      %v3081 = vmul.f32 %v3063, 0.5
      %v3082 = vmul.f32 %v3065, 0.5
      %v3083 = vmul.f32 %v3021, 0.70710677
      %v3084 = vmul.f32 %v3023, 0.70710677
      %v3085 = vmul.f32 %v3027, 0.70710677
      %v3086 = vmul.f32 %v3029, 0.70710677
      %v3087 = vmul.f32 %v3033, 0.70710677
      %v3088 = vmul.f32 %v3035, 0.70710677
      %v3089 = vmul.f32 %v3039, 0.70710677
      %v3090 = vmul.f32 %v3041, 0.70710677
      %v3091 = vmul.f32 %v3045, 0.70710677
      %v3092 = vmul.f32 %v3047, 0.70710677
      %v3093 = vmul.f32 %v3051, 0.70710677
      %v3094 = vmul.f32 %v3053, 0.70710677
      %v3095 = vmul.f32 %v3057, 0.70710677
      %v3096 = vmul.f32 %v3059, 0.70710677
      %v3097 = vmul.f32 %v3063, 0.70710677
      %v3098 = vmul.f32 %v3065, 0.70710677
      %v3099 = verf.f32.pop %v3083
      %v3100 = verf.f32.pop %v3084
      %v3101 = verf.f32.pop %v3085
      %v3102 = verf.f32.pop %v3086
      %v3103 = verf.f32.pop %v3087
      %v3104 = verf.f32.pop %v3088
      %v3105 = verf.f32.pop %v3089
      %v3106 = verf.f32.pop %v3090
      %v3107 = verf.f32.pop %v3091
      %v3108 = verf.f32.pop %v3092
      %v3109 = verf.f32.pop %v3093
      %v3110 = verf.f32.pop %v3094
      %v3111 = verf.f32.pop %v3095
      %v3112 = verf.f32.pop %v3096
      %v3113 = verf.f32.pop %v3097
      %v3114 = verf.f32.pop %v3098
      %v3115 = vadd.f32 %v3099, 1.0
      %v3116 = vadd.f32 %v3100, 1.0
      %v3117 = vadd.f32 %v3101, 1.0
      %v3118 = vadd.f32 %v3102, 1.0
      %v3119 = vadd.f32 %v3103, 1.0
      %v3120 = vadd.f32 %v3104, 1.0
      %v3121 = vadd.f32 %v3105, 1.0
      %v3122 = vadd.f32 %v3106, 1.0
      %v3123 = vadd.f32 %v3107, 1.0
      %v3124 = vadd.f32 %v3108, 1.0
      %v3125 = vadd.f32 %v3109, 1.0
      %v3126 = vadd.f32 %v3110, 1.0
      %v3127 = vadd.f32 %v3111, 1.0
      %v3128 = vadd.f32 %v3112, 1.0
      %v3129 = vadd.f32 %v3113, 1.0
      %v3130 = vadd.f32 %v3114, 1.0
      %v3131 = vmul.f32 %v3067, %v3115
      %v3132 = vmul.f32 %v3068, %v3116
      %v3133 = vmul.f32 %v3069, %v3117
      %v3134 = vmul.f32 %v3070, %v3118
      %v3135 = vmul.f32 %v3071, %v3119
      %v3136 = vmul.f32 %v3072, %v3120
      %v3137 = vmul.f32 %v3073, %v3121
      %v3138 = vmul.f32 %v3074, %v3122
      %v3139 = vmul.f32 %v3075, %v3123
      %v3140 = vmul.f32 %v3076, %v3124
      %v3141 = vmul.f32 %v3077, %v3125
      %v3142 = vmul.f32 %v3078, %v3126
      %v3143 = vmul.f32 %v3079, %v3127
      %v3144 = vmul.f32 %v3080, %v3128
      %v3145 = vmul.f32 %v3081, %v3129
      %v3146 = vmul.f32 %v3082, %v3130
      %v3147 = vld [vmem:[%s11] sm:$0xff]
      %v3148 = vld [vmem:[%s11 + $0x8] sm:$0xff]
      %v3149 = vld [vmem:[%s11 + $0x10] sm:$0xff]
      %v3150 = vld [vmem:[%s11 + $0x18] sm:$0xff]
      %v3151 = vld [vmem:[%s11 + $0x20] sm:$0xff]
      %v3152 = vld [vmem:[%s11 + $0x28] sm:$0xff]
      %v3153 = vld [vmem:[%s11 + $0x30] sm:$0xff]
      %v3154 = vld [vmem:[%s11 + $0x38] sm:$0xff]
      %v3155 = vld [vmem:[%s11 + $0x40] sm:$0xff]
      %v3156 = vld [vmem:[%s11 + $0x48] sm:$0xff]
      %v3157 = vld [vmem:[%s11 + $0x50] sm:$0xff]
      %v3158 = vld [vmem:[%s11 + $0x58] sm:$0xff]
      %v3159 = vld [vmem:[%s11 + $0x60] sm:$0xff]
      %v3160 = vld [vmem:[%s11 + $0x68] sm:$0xff]
      %v3161 = vld [vmem:[%s11 + $0x70] sm:$0xff]
      %v3162 = vld [vmem:[%s11 + $0x78] sm:$0xff]
      %v3163 = vld [vmem:[%s11 + $0x80] sm:$0xff]
      %v3164 = vld [vmem:[%s11 + $0x88] sm:$0xff]
      %v3165 = vld [vmem:[%s11 + $0x90] sm:$0xff]
      %v3166 = vld [vmem:[%s11 + $0x98] sm:$0xff]
      %v3167 = vld [vmem:[%s11 + $0xa0] sm:$0xff]
      %v3168 = vld [vmem:[%s11 + $0xa8] sm:$0xff]
      %v3169 = vld [vmem:[%s11 + $0xb0] sm:$0xff]
      %v3170 = vld [vmem:[%s11 + $0xb8] sm:$0xff]
      %v3171 = vld [vmem:[%s11 + $0xc0] sm:$0xff]
      %v3172 = vld [vmem:[%s11 + $0xc8] sm:$0xff]
      %v3173 = vld [vmem:[%s11 + $0xd0] sm:$0xff]
      %v3174 = vld [vmem:[%s11 + $0xd8] sm:$0xff]
      %v3175 = vld [vmem:[%s11 + $0xe0] sm:$0xff]
      %v3176 = vld [vmem:[%s11 + $0xe8] sm:$0xff]
      %v3177 = vld [vmem:[%s11 + $0xf0] sm:$0xff]
      %v3178 = vld [vmem:[%s11 + $0xf8] sm:$0xff]
      %v3179 = vld [vmem:[%s12] sm:$0x1]
      %v3181 = vlaneseq
      %v3182 = vshrl.u32 %v3181, 7
      %v3183 = vsub.s32 0, %v3182
      %v3184 = vrot.slane %v3179, %v3183
      %3186 = vmatprep.subr.mxu0 0.0
      %3187 = vmatpush1.msra.mxu0 %v3147
      %3188 = vmatprep.subr.mxu0 0.0
      %3189 = vmatpush1.msra.mxu0 %v3148
      %3190 = vmatprep.subr.mxu0 0.0
      %3191 = vmatpush1.msra.mxu0 %v3149
      %3192 = vmatprep.subr.mxu0 0.0
      %3193 = vmatpush1.msra.mxu0 %v3150
      %3194 = vmatprep.subr.mxu0 0.0
      %3195 = vmatpush1.msra.mxu0 %v3151
      %3196 = vmatprep.subr.mxu0 0.0
      %3197 = vmatpush1.msra.mxu0 %v3152
      %3198 = vmatprep.subr.mxu0 0.0
      %3199 = vmatpush1.msra.mxu0 %v3153
      %3200 = vmatprep.subr.mxu0 0.0
      %3201 = vmatpush1.msra.mxu0 %v3154
      %3202 = vmatprep.subr.mxu0 0.0
      %3203 = vmatpush1.msra.mxu0 %v3155
      %3204 = vmatprep.subr.mxu0 0.0
      %3205 = vmatpush1.msra.mxu0 %v3156
      %3206 = vmatprep.subr.mxu0 0.0
      %3207 = vmatpush1.msra.mxu0 %v3157
      %3208 = vmatprep.subr.mxu0 0.0
      %3209 = vmatpush1.msra.mxu0 %v3158
      %3210 = vmatprep.subr.mxu0 0.0
      %3211 = vmatpush1.msra.mxu0 %v3159
      %3212 = vmatprep.subr.mxu0 0.0
      %3213 = vmatpush1.msra.mxu0 %v3160
      %3214 = vmatprep.subr.mxu0 0.0
      %3215 = vmatpush1.msra.mxu0 %v3161
      %3216 = vmatprep.subr.mxu0 0.0
      %3217 = vmatpush1.msra.mxu0 %v3162
      %3218 = vmatprep.subr.mxu0 0.0
      %3219 = vmatpush1.msra.mxu0 %v3163
      %3220 = vmatprep.subr.mxu0 0.0
      %3221 = vmatpush1.msra.mxu0 %v3164
      %3222 = vmatprep.subr.mxu0 0.0
      %3223 = vmatpush1.msra.mxu0 %v3165
      %3224 = vmatprep.subr.mxu0 0.0
      %3225 = vmatpush1.msra.mxu0 %v3166
      %3226 = vmatprep.subr.mxu0 0.0
      %3227 = vmatpush1.msra.mxu0 %v3167
      %3228 = vmatprep.subr.mxu0 0.0
      %3229 = vmatpush1.msra.mxu0 %v3168
      %3230 = vmatprep.subr.mxu0 0.0
      %3231 = vmatpush1.msra.mxu0 %v3169
      %3232 = vmatprep.subr.mxu0 0.0
      %3233 = vmatpush1.msra.mxu0 %v3170
      %3234 = vmatprep.subr.mxu0 0.0
      %3235 = vmatpush1.msra.mxu0 %v3171
      %3236 = vmatprep.subr.mxu0 0.0
      %3237 = vmatpush1.msra.mxu0 %v3172
      %3238 = vmatprep.subr.mxu0 0.0
      %3239 = vmatpush1.msra.mxu0 %v3173
      %3240 = vmatprep.subr.mxu0 0.0
      %3241 = vmatpush1.msra.mxu0 %v3174
      %3242 = vmatprep.subr.mxu0 0.0
      %3243 = vmatpush1.msra.mxu0 %v3175
      %3244 = vmatprep.subr.mxu0 0.0
      %3245 = vmatpush1.msra.mxu0 %v3176
      %3246 = vmatprep.subr.mxu0 0.0
      %3247 = vmatpush1.msra.mxu0 %v3177
      %3248 = vmatprep.subr.mxu0 0.0
      %3249 = vmatpush1.msra.mxu0 %v3178
      %3250 = vmatprep.mubr.f32.mxu0 %v3132
      %3251 = vmatmul.mubr.f32.gmra.mrb[0].mxu0 %v3131
      %v3252 = vpop.f32.mrb[0].mxu0
      %v3253 = vadd.f32 %v3184, %v3252
      %v3254 = vpop.f32.mrb[0].mxu0
      %3255 = vmatprep.mubr.f32.mxu0 %v3134
      %3256 = vmatmul.mubr.f32.gmra.mrb[0].mxu0 %v3133
      %v3257 = vpop.f32.mrb[0].mxu0
      %v3258 = vadd.f32 %v3184, %v3257
      %v3259 = vpop.f32.mrb[0].mxu0
      %3260 = vmatprep.mubr.f32.mxu0 %v3136
      %3261 = vmatmul.mubr.f32.gmra.mrb[0].mxu0 %v3135
      %v3262 = vpop.f32.mrb[0].mxu0
      %v3263 = vadd.f32 %v3184, %v3262
      %v3264 = vpop.f32.mrb[0].mxu0
      %3265 = vmatprep.mubr.f32.mxu0 %v3138
      %3266 = vmatmul.mubr.f32.gmra.mrb[0].mxu0 %v3137
      %v3267 = vpop.f32.mrb[0].mxu0
      %v3268 = vadd.f32 %v3184, %v3267
      %v3269 = vpop.f32.mrb[0].mxu0
      %3270 = vmatprep.mubr.f32.mxu0 %v3140
      %3271 = vmatmul.mubr.f32.gmra.mrb[0].mxu0 %v3139
      %v3272 = vpop.f32.mrb[0].mxu0
      %v3273 = vadd.f32 %v3184, %v3272
      %v3274 = vpop.f32.mrb[0].mxu0
      %3275 = vmatprep.mubr.f32.mxu0 %v3142
      %3276 = vmatmul.mubr.f32.gmra.mrb[0].mxu0 %v3141
      %v3277 = vpop.f32.mrb[0].mxu0
      %v3278 = vadd.f32 %v3184, %v3277
      %v3279 = vpop.f32.mrb[0].mxu0
      %3280 = vmatprep.mubr.f32.mxu0 %v3144
      %3281 = vmatmul.mubr.f32.gmra.mrb[0].mxu0 %v3143
      %v3282 = vpop.f32.mrb[0].mxu0
      %v3283 = vadd.f32 %v3184, %v3282
      %v3284 = vpop.f32.mrb[0].mxu0
      %3285 = vmatprep.mubr.f32.mxu0 %v3146
      %3286 = vmatmul.mubr.f32.gmra.mrb[0].mxu0 %v3145
      %v3287 = vpop.f32.mrb[0].mxu0
      %v3288 = vadd.f32 %v3184, %v3287
      %v3289 = vpop.f32.mrb[0].mxu0
      %3290 = vdwg.mxu0
      %v3291 = vadd.f32 %v2760, %v3253
      %v3292 = vadd.f32 %v2761, %v3258
      %v3293 = vadd.f32 %v2762, %v3263
      %v3294 = vadd.f32 %v2763, %v3268
      %v3295 = vadd.f32 %v2764, %v3273
      %v3296 = vadd.f32 %v2765, %v3278
      %v3297 = vadd.f32 %v2766, %v3283
      %v3298 = vadd.f32 %v2767, %v3288
      %3299 = vst.msk [vmem:[%s478] sm:$0xff] %vm490, %v3291
      %3300 = vst.msk [vmem:[%s478 + $0x8] sm:$0xff] %vm490, %v3292
      %3301 = vst.msk [vmem:[%s478 + $0x10] sm:$0xff] %vm490, %v3293
      %3302 = vst.msk [vmem:[%s478 + $0x18] sm:$0xff] %vm490, %v3294
      %3303 = vst.msk [vmem:[%s478 + $0x20] sm:$0xff] %vm490, %v3295
      %3304 = vst.msk [vmem:[%s478 + $0x28] sm:$0xff] %vm490, %v3296
      %3305 = vst.msk [vmem:[%s478 + $0x30] sm:$0xff] %vm490, %v3297
      %3306 = vst.msk [vmem:[%s478 + $0x38] sm:$0xff] %vm490, %v3298
      %s3307 = smul.u32 8, %s29
      %p3308 = scmp.lt.s32.totalorder %s28, 1
      %s3309 = scalar_select %p3308, %s28, 1
      %p3310 = scmp.lt.s32.totalorder %s3307, 7
      %s3311 = scalar_select %p3310, %s3307, 7
      %s3312 = smul.addr %s3309, 8
      %s3313 = sadd.s32 %s3311, %s3312
      %s3314 = smul.addr %s3313, 8
      %s3315 = scalar_lea.vmem %s13, %s3314
      // Predicated region
      $region73: #{transformer_sr_forward.12} parent=71 // pred_check
        %p3316 = pneg %p336
      $region74: #{transformer_sr_forward.12} parent=71 // pred_check_branch
        %3318 = sbr.rel (%p3316) target = $region76
      $region75: #{transformer_sr_forward.12} parent=71 // pred_region
        %s3319 = smul.u32 8, %s29
      $region76: #{transformer_sr_forward.12} parent=71 // pred_fallthru
        _
    $region72: #{transformer_sr_forward.12} parent=5 // pred_fallthru
      _
    %p3320 = scmp.le.s32.totalorder 2, %s19
    // Predicated region
    $region77: #{transformer_sr_forward.12} parent=5 // pred_check
      %p3321 = pneg %p3320
    $region78: #{transformer_sr_forward.12} parent=5 // pred_check_branch
      %3323 = sbr.rel (%p3321) target = $region80
    $region79: #{transformer_sr_forward.12} parent=5 // pred_region
      %s3324 = ssub.s32 %s19, 2
      // Predicated region
      $region81: #{transformer_sr_forward.12} parent=79 // pred_check
        %p3325 = pneg %p342
      $region82: #{transformer_sr_forward.12} parent=79 // pred_check_branch
        %3327 = sbr.rel (%p3325) target = $region84
      $region83: #{transformer_sr_forward.12} parent=79 // pred_region
        %s3328 = smul.u32 8, %s31
        %p3329 = scmp.lt.s32.totalorder %s30, 1
        %s3330 = scalar_select %p3329, %s30, 1
        %p3331 = scmp.lt.s32.totalorder %s3328, 7
        %s3332 = scalar_select %p3331, %s3328, 7
        %s3333 = smul.addr %s3330, 8
        %s3334 = sadd.s32 %s3332, %s3333
        %s3335 = smul.addr %s3334, 8
        %s3336 = scalar_lea.vmem %s13, %s3335
      $region84: #{transformer_sr_forward.12} parent=79 // pred_fallthru
        _
    $region80: #{transformer_sr_forward.12} parent=5 // pred_fallthru
      _
  $region6: #{transformer_sr_forward.12} parent=0 // loop_footer
    %s23 = sadd.s32 1, %s19
  $region7: #{transformer_sr_forward.12} parent=0 // loop_footer_branch
    %18 = sbr.rel target = $region3
  $region8: #{transformer_sr_forward.12} parent=0 // loop_exit
    _

// kernel: transformer_sr_forward.21
$region0: #{transformer_sr_forward.21}
  #allocation0 [shape = 'u32[]', space=smem, size = 0x4, offset = 0x4, fixed_abs, tag = 'smem constant byte address 0x4 - core index']
  #allocation1 [shape = 'u32[144,128]{1,0:T(1,128)}', space=vmem, size = 0x12000, scoped, tag = 'internal scratch']
  %s0 = inlined_call_operand.vmem [shape: f32[32,64], index: 0, kind: input, shape index: {}]
  %s1 = inlined_call_operand.vmem [shape: f32[64,768], index: 1, kind: input, shape index: {}]
  %s2 = inlined_call_operand.vmem [shape: f32[1,768], index: 2, kind: input, shape index: {}]
  %s3 = inlined_call_operand.vmem [shape: f32[32,768], index: 3, kind: output, shape index: {}]
  %s4 = sld [smem:[#allocation0]]
  $region22: #{transformer_sr_forward.21} parent=0
    _
  %s6 = ssub.s32 1, %s4
  %s7 = scalar_select 0, %s6, %s4
  // Predicated region
  $region2: #{transformer_sr_forward.21} parent=0 // pred_check
    _
  $region3: #{transformer_sr_forward.21} parent=0 // pred_check_branch
    %9 = sbr.rel (0) target = $region5
  $region4: #{transformer_sr_forward.21} parent=0 // pred_region
    _
  $region5: #{transformer_sr_forward.21} parent=0 // pred_fallthru
    _
  // Predicated region
  $region6: #{transformer_sr_forward.21} parent=0 // pred_check
    _
  $region7: #{transformer_sr_forward.21} parent=0 // pred_check_branch
    %11 = sbr.rel (0) target = $region9
  $region8: #{transformer_sr_forward.21} parent=0 // pred_region
    _
  $region9: #{transformer_sr_forward.21} parent=0 // pred_fallthru
    _
  // Predicated region
  $region10: #{transformer_sr_forward.21} parent=0 // pred_check
    _
  $region11: #{transformer_sr_forward.21} parent=0 // pred_check_branch
    %13 = sbr.rel (0) target = $region13
  $region12: #{transformer_sr_forward.21} parent=0 // pred_region
    _
  $region13: #{transformer_sr_forward.21} parent=0 // pred_fallthru
    _
  %v14 = vld [vmem:[%s0] sm:$0xff]
  %v15 = vld [vmem:[%s0 + $0x8] sm:$0xff]
  %v16 = vld [vmem:[%s0 + $0x10] sm:$0xff]
  %v17 = vld [vmem:[%s0 + $0x18] sm:$0xff]
  %v18 = vld [vmem:[%s1] sm:$0xff]
  %v19 = vld [vmem:[%s1 + $0x8] sm:$0xff]
  %v20 = vld [vmem:[%s1 + $0x10] sm:$0xff]
  %v21 = vld [vmem:[%s1 + $0x18] sm:$0xff]
  %v22 = vld [vmem:[%s1 + $0x20] sm:$0xff]
  %v23 = vld [vmem:[%s1 + $0x28] sm:$0xff]
  %v24 = vld [vmem:[%s1 + $0x30] sm:$0xff]
  %v25 = vld [vmem:[%s1 + $0x38] sm:$0xff]
  %v26 = vld [vmem:[%s1 + $0x40] sm:$0xff]
  %v27 = vld [vmem:[%s1 + $0x48] sm:$0xff]
  %v28 = vld [vmem:[%s1 + $0x50] sm:$0xff]
  %v29 = vld [vmem:[%s1 + $0x58] sm:$0xff]
  %v30 = vld [vmem:[%s1 + $0x60] sm:$0xff]
  %v31 = vld [vmem:[%s1 + $0x68] sm:$0xff]
  %v32 = vld [vmem:[%s1 + $0x70] sm:$0xff]
  %v33 = vld [vmem:[%s1 + $0x78] sm:$0xff]
  %v34 = vld [vmem:[%s1 + $0x80] sm:$0xff]
  %v35 = vld [vmem:[%s1 + $0x88] sm:$0xff]
  %v36 = vld [vmem:[%s1 + $0x90] sm:$0xff]
  %v37 = vld [vmem:[%s1 + $0x98] sm:$0xff]
  %v38 = vld [vmem:[%s1 + $0xa0] sm:$0xff]
  %v39 = vld [vmem:[%s1 + $0xa8] sm:$0xff]
  %v40 = vld [vmem:[%s1 + $0xb0] sm:$0xff]
  %v41 = vld [vmem:[%s1 + $0xb8] sm:$0xff]
  %v42 = vld [vmem:[%s1 + $0xc0] sm:$0xff]
  %v43 = vld [vmem:[%s1 + $0xc8] sm:$0xff]
  %v44 = vld [vmem:[%s1 + $0xd0] sm:$0xff]
  %v45 = vld [vmem:[%s1 + $0xd8] sm:$0xff]
  %v46 = vld [vmem:[%s1 + $0xe0] sm:$0xff]
  %v47 = vld [vmem:[%s1 + $0xe8] sm:$0xff]
  %v48 = vld [vmem:[%s1 + $0xf0] sm:$0xff]
  %v49 = vld [vmem:[%s1 + $0xf8] sm:$0xff]
  %v50 = vld [vmem:[%s1 + $0x100] sm:$0xff]
  %v51 = vld [vmem:[%s1 + $0x108] sm:$0xff]
  %v52 = vld [vmem:[%s1 + $0x110] sm:$0xff]
  %v53 = vld [vmem:[%s1 + $0x118] sm:$0xff]
  %v54 = vld [vmem:[%s1 + $0x120] sm:$0xff]
  %v55 = vld [vmem:[%s1 + $0x128] sm:$0xff]
  %v56 = vld [vmem:[%s1 + $0x130] sm:$0xff]
  %v57 = vld [vmem:[%s1 + $0x138] sm:$0xff]
  %v58 = vld [vmem:[%s1 + $0x140] sm:$0xff]
  %v59 = vld [vmem:[%s1 + $0x148] sm:$0xff]
  %v60 = vld [vmem:[%s1 + $0x150] sm:$0xff]
  %v61 = vld [vmem:[%s1 + $0x158] sm:$0xff]
  %v62 = vld [vmem:[%s1 + $0x160] sm:$0xff]
  %v63 = vld [vmem:[%s1 + $0x168] sm:$0xff]
  %v64 = vld [vmem:[%s1 + $0x170] sm:$0xff]
  %v65 = vld [vmem:[%s1 + $0x178] sm:$0xff]
  %v66 = vld [vmem:[%s2] sm:$0x3f]
  %v68 = vlaneseq
  %v69 = vshrl.u32 %v68, 7
  %v70 = vsub.s32 0, %v69
  %v71 = vrot.slane %v66, %v70
  %v72 = vlaneseq
  %v73 = vshrl.u32 %v72, 7
  %v74 = vsub.s32 1, %v73
  %v75 = vrot.slane %v66, %v74
  %v76 = vlaneseq
  %v77 = vshrl.u32 %v76, 7
  %v78 = vsub.s32 2, %v77
  %v79 = vrot.slane %v66, %v78
  %v80 = vlaneseq
  %v81 = vshrl.u32 %v80, 7
  %v82 = vsub.s32 3, %v81
  %v83 = vrot.slane %v66, %v82
  %v84 = vlaneseq
  %v85 = vshrl.u32 %v84, 7
  %v86 = vsub.s32 4, %v85
  %v87 = vrot.slane %v66, %v86
  %v88 = vlaneseq
  %v89 = vshrl.u32 %v88, 7
  %v90 = vsub.s32 5, %v89
  %v91 = vrot.slane %v66, %v90
  %vm98 = vcmask 523264
  %v100 = vsel %vm98, %v14, 0
  %v103 = vsel %vm98, %v15, 0
  %v106 = vsel %vm98, %v16, 0
  %v109 = vsel %vm98, %v17, 0
  %111 = vmatprep.subr.mxu0 %v19
  %112 = vmatpush1.msra.mxu0 %v18
  %113 = vmatprep.subr.mxu0 %v25
  %114 = vmatpush1.msra.mxu0 %v24
  %115 = vmatprep.subr.mxu0 %v31
  %116 = vmatpush1.msra.mxu0 %v30
  %117 = vmatprep.subr.mxu0 %v37
  %118 = vmatpush1.msra.mxu0 %v36
  %119 = vmatprep.subr.mxu0 %v43
  %120 = vmatpush1.msra.mxu0 %v42
  %121 = vmatprep.subr.mxu0 %v49
  %122 = vmatpush1.msra.mxu0 %v48
  %123 = vmatprep.subr.mxu0 %v55
  %124 = vmatpush1.msra.mxu0 %v54
  %125 = vmatprep.subr.mxu0 %v61
  %126 = vmatpush1.msra.mxu0 %v60
  %127 = vmatprep.subr.mxu0 0.0
  %128 = vmatpush1.msra.mxu0 0.0
  %129 = vmatprep.subr.mxu0 0.0
  %130 = vmatpush1.msra.mxu0 0.0
  %131 = vmatprep.subr.mxu0 0.0
  %132 = vmatpush1.msra.mxu0 0.0
  %133 = vmatprep.subr.mxu0 0.0
  %134 = vmatpush1.msra.mxu0 0.0
  %135 = vmatprep.subr.mxu0 0.0
  %136 = vmatpush1.msra.mxu0 0.0
  %137 = vmatprep.subr.mxu0 0.0
  %138 = vmatpush1.msra.mxu0 0.0
  %139 = vmatprep.subr.mxu0 0.0
  %140 = vmatpush1.msra.mxu0 0.0
  %141 = vmatprep.subr.mxu0 0.0
  %142 = vmatpush1.msra.mxu0 0.0
  %143 = vmatprep.subr.mxu0 0.0
  %144 = vmatpush1.msra.mxu0 0.0
  %145 = vmatprep.subr.mxu0 0.0
  %146 = vmatpush1.msra.mxu0 0.0
  %147 = vmatprep.subr.mxu0 0.0
  %148 = vmatpush1.msra.mxu0 0.0
  %149 = vmatprep.subr.mxu0 0.0
  %150 = vmatpush1.msra.mxu0 0.0
  %151 = vmatprep.subr.mxu0 0.0
  %152 = vmatpush1.msra.mxu0 0.0
  %153 = vmatprep.subr.mxu0 0.0
  %154 = vmatpush1.msra.mxu0 0.0
  %155 = vmatprep.subr.mxu0 0.0
  %156 = vmatpush1.msra.mxu0 0.0
  %157 = vmatprep.subr.mxu0 0.0
  %158 = vmatpush1.msra.mxu0 0.0
  %159 = vmatprep.subr.mxu0 0.0
  %160 = vmatpush1.msra.mxu0 0.0
  %161 = vmatprep.subr.mxu0 0.0
  %162 = vmatpush1.msra.mxu0 0.0
  %163 = vmatprep.subr.mxu0 0.0
  %164 = vmatpush1.msra.mxu0 0.0
  %165 = vmatprep.subr.mxu0 0.0
  %166 = vmatpush1.msra.mxu0 0.0
  %167 = vmatprep.subr.mxu0 0.0
  %168 = vmatpush1.msra.mxu0 0.0
  %169 = vmatprep.subr.mxu0 0.0
  %170 = vmatpush1.msra.mxu0 0.0
  %171 = vmatprep.subr.mxu0 0.0
  %172 = vmatpush1.msra.mxu0 0.0
  %173 = vmatprep.subr.mxu0 0.0
  %174 = vmatpush1.msra.mxu0 0.0
  %175 = vmatprep.mubr.f32.mxu0 0.0
  %176 = vmatmul.mubr.f32.gmra.mrb[0].mxu0 %v100
  %v177 = vpop.f32.mrb[0].mxu0
  %v178 = vadd.f32 %v71, %v177
  %v179 = vpop.f32.mrb[0].mxu0
  %v180 = vadd.f32 %v75, %v179
  %181 = vmatprep.mubr.f32.mxu0 0.0
  %182 = vmatmul.mubr.f32.gmra.mrb[0].mxu0 %v103
  %v183 = vpop.f32.mrb[0].mxu0
  %v184 = vadd.f32 %v71, %v183
  %v185 = vpop.f32.mrb[0].mxu0
  %v186 = vadd.f32 %v75, %v185
  %187 = vmatprep.mubr.f32.mxu0 0.0
  %188 = vmatmul.mubr.f32.gmra.mrb[0].mxu0 %v106
  %v189 = vpop.f32.mrb[0].mxu0
  %v190 = vadd.f32 %v71, %v189
  %v191 = vpop.f32.mrb[0].mxu0
  %v192 = vadd.f32 %v75, %v191
  %193 = vmatprep.mubr.f32.mxu0 0.0
  %194 = vmatmul.mubr.f32.gmra.mrb[0].mxu0 %v109
  %v195 = vpop.f32.mrb[0].mxu0
  %v196 = vadd.f32 %v71, %v195
  %v197 = vpop.f32.mrb[0].mxu0
  %v198 = vadd.f32 %v75, %v197
  %199 = vdwg.mxu0
  %200 = vmatprep.subr.mxu0 %v21
  %201 = vmatpush1.msra.mxu0 %v20
  %202 = vmatprep.subr.mxu0 %v27
  %203 = vmatpush1.msra.mxu0 %v26
  %204 = vmatprep.subr.mxu0 %v33
  %205 = vmatpush1.msra.mxu0 %v32
  %206 = vmatprep.subr.mxu0 %v39
  %207 = vmatpush1.msra.mxu0 %v38
  %208 = vmatprep.subr.mxu0 %v45
  %209 = vmatpush1.msra.mxu0 %v44
  %210 = vmatprep.subr.mxu0 %v51
  %211 = vmatpush1.msra.mxu0 %v50
  %212 = vmatprep.subr.mxu0 %v57
  %213 = vmatpush1.msra.mxu0 %v56
  %214 = vmatprep.subr.mxu0 %v63
  %215 = vmatpush1.msra.mxu0 %v62
  %216 = vmatprep.subr.mxu0 0.0
  %217 = vmatpush1.msra.mxu0 0.0
  %218 = vmatprep.subr.mxu0 0.0
  %219 = vmatpush1.msra.mxu0 0.0
  %220 = vmatprep.subr.mxu0 0.0
  %221 = vmatpush1.msra.mxu0 0.0
  %222 = vmatprep.subr.mxu0 0.0
  %223 = vmatpush1.msra.mxu0 0.0
  %224 = vmatprep.subr.mxu0 0.0
  %225 = vmatpush1.msra.mxu0 0.0
  %226 = vmatprep.subr.mxu0 0.0
  %227 = vmatpush1.msra.mxu0 0.0
  %228 = vmatprep.subr.mxu0 0.0
  %229 = vmatpush1.msra.mxu0 0.0
  %230 = vmatprep.subr.mxu0 0.0
  %231 = vmatpush1.msra.mxu0 0.0
  %232 = vmatprep.subr.mxu0 0.0
  %233 = vmatpush1.msra.mxu0 0.0
  %234 = vmatprep.subr.mxu0 0.0
  %235 = vmatpush1.msra.mxu0 0.0
  %236 = vmatprep.subr.mxu0 0.0
  %237 = vmatpush1.msra.mxu0 0.0
  %238 = vmatprep.subr.mxu0 0.0
  %239 = vmatpush1.msra.mxu0 0.0
  %240 = vmatprep.subr.mxu0 0.0
  %241 = vmatpush1.msra.mxu0 0.0
  %242 = vmatprep.subr.mxu0 0.0
  %243 = vmatpush1.msra.mxu0 0.0
  %244 = vmatprep.subr.mxu0 0.0
  %245 = vmatpush1.msra.mxu0 0.0
  %246 = vmatprep.subr.mxu0 0.0
  %247 = vmatpush1.msra.mxu0 0.0
  %248 = vmatprep.subr.mxu0 0.0
  %249 = vmatpush1.msra.mxu0 0.0
  %250 = vmatprep.subr.mxu0 0.0
  %251 = vmatpush1.msra.mxu0 0.0
  %252 = vmatprep.subr.mxu0 0.0
  %253 = vmatpush1.msra.mxu0 0.0
  %254 = vmatprep.subr.mxu0 0.0
  %255 = vmatpush1.msra.mxu0 0.0
  %256 = vmatprep.subr.mxu0 0.0
  %257 = vmatpush1.msra.mxu0 0.0
  %258 = vmatprep.subr.mxu0 0.0
  %259 = vmatpush1.msra.mxu0 0.0
  %260 = vmatprep.subr.mxu0 0.0
  %261 = vmatpush1.msra.mxu0 0.0
  %262 = vmatprep.subr.mxu0 0.0
  %263 = vmatpush1.msra.mxu0 0.0
  %264 = vmatprep.mubr.f32.mxu0 0.0
  %265 = vmatmul.mubr.f32.gmra.mrb[0].mxu0 %v100
  %v266 = vpop.f32.mrb[0].mxu0
  %v267 = vadd.f32 %v79, %v266
  %v268 = vpop.f32.mrb[0].mxu0
  %v269 = vadd.f32 %v83, %v268
  %270 = vmatprep.mubr.f32.mxu0 0.0
  %271 = vmatmul.mubr.f32.gmra.mrb[0].mxu0 %v103
  %v272 = vpop.f32.mrb[0].mxu0
  %v273 = vadd.f32 %v79, %v272
  %v274 = vpop.f32.mrb[0].mxu0
  %v275 = vadd.f32 %v83, %v274
  %276 = vmatprep.mubr.f32.mxu0 0.0
  %277 = vmatmul.mubr.f32.gmra.mrb[0].mxu0 %v106
  %v278 = vpop.f32.mrb[0].mxu0
  %v279 = vadd.f32 %v79, %v278
  %v280 = vpop.f32.mrb[0].mxu0
  %v281 = vadd.f32 %v83, %v280
  %282 = vmatprep.mubr.f32.mxu0 0.0
  %283 = vmatmul.mubr.f32.gmra.mrb[0].mxu0 %v109
  %v284 = vpop.f32.mrb[0].mxu0
  %v285 = vadd.f32 %v79, %v284
  %v286 = vpop.f32.mrb[0].mxu0
  %v287 = vadd.f32 %v83, %v286
  %288 = vdwg.mxu0
  %289 = vmatprep.subr.mxu0 %v23
  %290 = vmatpush1.msra.mxu0 %v22
  %291 = vmatprep.subr.mxu0 %v29
  %292 = vmatpush1.msra.mxu0 %v28
  %293 = vmatprep.subr.mxu0 %v35
  %294 = vmatpush1.msra.mxu0 %v34
  %295 = vmatprep.subr.mxu0 %v41
  %296 = vmatpush1.msra.mxu0 %v40
  %297 = vmatprep.subr.mxu0 %v47
  %298 = vmatpush1.msra.mxu0 %v46
  %299 = vmatprep.subr.mxu0 %v53
  %300 = vmatpush1.msra.mxu0 %v52
  %301 = vmatprep.subr.mxu0 %v59
  %302 = vmatpush1.msra.mxu0 %v58
  %303 = vmatprep.subr.mxu0 %v65
  %304 = vmatpush1.msra.mxu0 %v64
  %305 = vmatprep.subr.mxu0 0.0
  %306 = vmatpush1.msra.mxu0 0.0
  %307 = vmatprep.subr.mxu0 0.0
  %308 = vmatpush1.msra.mxu0 0.0
  %309 = vmatprep.subr.mxu0 0.0
  %310 = vmatpush1.msra.mxu0 0.0
  %311 = vmatprep.subr.mxu0 0.0
  %312 = vmatpush1.msra.mxu0 0.0
  %313 = vmatprep.subr.mxu0 0.0
  %314 = vmatpush1.msra.mxu0 0.0
  %315 = vmatprep.subr.mxu0 0.0
  %316 = vmatpush1.msra.mxu0 0.0
  %317 = vmatprep.subr.mxu0 0.0
  %318 = vmatpush1.msra.mxu0 0.0
  %319 = vmatprep.subr.mxu0 0.0
  %320 = vmatpush1.msra.mxu0 0.0
  %321 = vmatprep.subr.mxu0 0.0
  %322 = vmatpush1.msra.mxu0 0.0
  %323 = vmatprep.subr.mxu0 0.0
  %324 = vmatpush1.msra.mxu0 0.0
  %325 = vmatprep.subr.mxu0 0.0
  %326 = vmatpush1.msra.mxu0 0.0
  %327 = vmatprep.subr.mxu0 0.0
  %328 = vmatpush1.msra.mxu0 0.0
  %329 = vmatprep.subr.mxu0 0.0
  %330 = vmatpush1.msra.mxu0 0.0
  %331 = vmatprep.subr.mxu0 0.0
  %332 = vmatpush1.msra.mxu0 0.0
  %333 = vmatprep.subr.mxu0 0.0
  %334 = vmatpush1.msra.mxu0 0.0
  %335 = vmatprep.subr.mxu0 0.0
  %336 = vmatpush1.msra.mxu0 0.0
  %337 = vmatprep.subr.mxu0 0.0
  %338 = vmatpush1.msra.mxu0 0.0
  %339 = vmatprep.subr.mxu0 0.0
  %340 = vmatpush1.msra.mxu0 0.0
  %341 = vmatprep.subr.mxu0 0.0
  %342 = vmatpush1.msra.mxu0 0.0
  %343 = vmatprep.subr.mxu0 0.0
  %344 = vmatpush1.msra.mxu0 0.0
  %345 = vmatprep.subr.mxu0 0.0
  %346 = vmatpush1.msra.mxu0 0.0
  %347 = vmatprep.subr.mxu0 0.0
  %348 = vmatpush1.msra.mxu0 0.0
  %349 = vmatprep.subr.mxu0 0.0
  %350 = vmatpush1.msra.mxu0 0.0
  %351 = vmatprep.subr.mxu0 0.0
  %352 = vmatpush1.msra.mxu0 0.0
  %353 = vmatprep.mubr.f32.mxu0 0.0
  %354 = vmatmul.mubr.f32.gmra.mrb[0].mxu0 %v100
  %v355 = vpop.f32.mrb[0].mxu0
  %v356 = vadd.f32 %v87, %v355
  %v357 = vpop.f32.mrb[0].mxu0
  %v358 = vadd.f32 %v91, %v357
  %359 = vmatprep.mubr.f32.mxu0 0.0
  %360 = vmatmul.mubr.f32.gmra.mrb[0].mxu0 %v103
  %v361 = vpop.f32.mrb[0].mxu0
  %v362 = vadd.f32 %v87, %v361
  %v363 = vpop.f32.mrb[0].mxu0
  %v364 = vadd.f32 %v91, %v363
  %365 = vmatprep.mubr.f32.mxu0 0.0
  %366 = vmatmul.mubr.f32.gmra.mrb[0].mxu0 %v106
  %v367 = vpop.f32.mrb[0].mxu0
  %v368 = vadd.f32 %v87, %v367
  %v369 = vpop.f32.mrb[0].mxu0
  %v370 = vadd.f32 %v91, %v369
  %371 = vmatprep.mubr.f32.mxu0 0.0
  %372 = vmatmul.mubr.f32.gmra.mrb[0].mxu0 %v109
  %v373 = vpop.f32.mrb[0].mxu0
  %v374 = vadd.f32 %v87, %v373
  %v375 = vpop.f32.mrb[0].mxu0
  %v376 = vadd.f32 %v91, %v375
  %377 = vdwg.mxu0
  %378 = vst [vmem:[%s3] sm:$0xff] %v178
  %379 = vst [vmem:[%s3 + $0x8] sm:$0xff] %v180
  %380 = vst [vmem:[%s3 + $0x10] sm:$0xff] %v267
  %381 = vst [vmem:[%s3 + $0x18] sm:$0xff] %v269
  %382 = vst [vmem:[%s3 + $0x20] sm:$0xff] %v356
  %383 = vst [vmem:[%s3 + $0x28] sm:$0xff] %v358
  %384 = vst [vmem:[%s3 + $0x30] sm:$0xff] %v184
  %385 = vst [vmem:[%s3 + $0x38] sm:$0xff] %v186
  %386 = vst [vmem:[%s3 + $0x40] sm:$0xff] %v273
  %387 = vst [vmem:[%s3 + $0x48] sm:$0xff] %v275
  %388 = vst [vmem:[%s3 + $0x50] sm:$0xff] %v362
  %389 = vst [vmem:[%s3 + $0x58] sm:$0xff] %v364
  %390 = vst [vmem:[%s3 + $0x60] sm:$0xff] %v190
  %391 = vst [vmem:[%s3 + $0x68] sm:$0xff] %v192
  %392 = vst [vmem:[%s3 + $0x70] sm:$0xff] %v279
  %393 = vst [vmem:[%s3 + $0x78] sm:$0xff] %v281
  %394 = vst [vmem:[%s3 + $0x80] sm:$0xff] %v368
  %395 = vst [vmem:[%s3 + $0x88] sm:$0xff] %v370
  %396 = vst [vmem:[%s3 + $0x90] sm:$0xff] %v196
  %397 = vst [vmem:[%s3 + $0x98] sm:$0xff] %v198
  %398 = vst [vmem:[%s3 + $0xa0] sm:$0xff] %v285
  %399 = vst [vmem:[%s3 + $0xa8] sm:$0xff] %v287
  %400 = vst [vmem:[%s3 + $0xb0] sm:$0xff] %v374
  %401 = vst [vmem:[%s3 + $0xb8] sm:$0xff] %v376
  // Predicated region
  $region14: #{transformer_sr_forward.21} parent=0 // pred_check
    _
  $region15: #{transformer_sr_forward.21} parent=0 // pred_check_branch
    %403 = sbr.rel (0) target = $region17
  $region16: #{transformer_sr_forward.21} parent=0 // pred_region
    _
  $region17: #{transformer_sr_forward.21} parent=0 // pred_fallthru
    _
  // Predicated region
  $region18: #{transformer_sr_forward.21} parent=0 // pred_check
    _
  $region19: #{transformer_sr_forward.21} parent=0 // pred_check_branch
    %405 = sbr.rel (0) target = $region21
  $region20: #{transformer_sr_forward.21} parent=0 // pred_region
    _
  $region21: #{transformer_sr_forward.21} parent=0 // pred_fallthru
    _

// kernel: transformer_sr_forward.17
$region0: #{transformer_sr_forward.17}
  #allocation0 [shape = 'u32[]', space=smem, size = 0x4, offset = 0x4, fixed_abs, tag = 'smem constant byte address 0x4 - core index']
  #allocation1 [shape = 'u32[144,128]{1,0:T(1,128)}', space=vmem, size = 0x12000, scoped, tag = 'internal scratch']
  %s0 = inlined_call_operand.vmem [shape: f32[2,8,8,128], index: 0, kind: input, shape index: {}]
  %s1 = inlined_call_operand.vmem [shape: f32[1,128], index: 1, kind: input, shape index: {}]
  %s2 = inlined_call_operand.vmem [shape: f32[1,128], index: 2, kind: input, shape index: {}]
  %s3 = inlined_call_operand.vmem [shape: f32[128,384], index: 3, kind: input, shape index: {}]
  %s4 = inlined_call_operand.vmem [shape: f32[1,384], index: 4, kind: input, shape index: {}]
  %s5 = inlined_call_operand.vmem [shape: f32[128,128], index: 5, kind: input, shape index: {}]
  %s6 = inlined_call_operand.vmem [shape: f32[1,128], index: 6, kind: input, shape index: {}]
  %s7 = inlined_call_operand.vmem [shape: f32[1,128], index: 7, kind: input, shape index: {}]
  %s8 = inlined_call_operand.vmem [shape: f32[1,128], index: 8, kind: input, shape index: {}]
  %s9 = inlined_call_operand.vmem [shape: f32[128,512], index: 9, kind: input, shape index: {}]
  %s10 = inlined_call_operand.vmem [shape: f32[1,512], index: 10, kind: input, shape index: {}]
  %s11 = inlined_call_operand.vmem [shape: f32[512,128], index: 11, kind: input, shape index: {}]
  %s12 = inlined_call_operand.vmem [shape: f32[1,128], index: 12, kind: input, shape index: {}]
  %s13 = inlined_call_operand.vmem [shape: f32[2,8,8,128], index: 13, kind: output, shape index: {}]
  %s14 = sld [smem:[#allocation0]]
  $region85: #{transformer_sr_forward.17} parent=0
    _
  %s16 = ssub.s32 1, %s14
  %s17 = scalar_select 0, %s16, %s14
  loop: start=0, step=1, limit=4
  $region2: #{transformer_sr_forward.17} parent=0 // loop_pre_header
    _
  $region3: #{transformer_sr_forward.17} parent=0 // loop_header
    %s19 = sphi 0, %s23
    %p20 = scmp.ge.s32.totalorder %s19, 4
    %s26 = sphi 0, %s38
    %s27 = sphi 0, %s34
    %s28 = sphi 0, %s26
    %s29 = sphi 0, %s27
    %s30 = sphi 0, %s28
    %s31 = sphi 0, %s29
    %s43 = sphi 0, %s45
    %s46 = sphi 0, %s43
    %s47 = sphi 0, %s46
    %s63 = sphi 0, %s47
    %s67 = sphi 0, %s67
    %s69 = sphi 0, %s67
    %s70 = sphi 0, %s69
    %s84 = sphi 0, %s70
    %s88 = sphi 0, %s88
    %s90 = sphi 0, %s88
    %s91 = sphi 0, %s90
    %s105 = sphi 0, %s91
    %s109 = sphi 0, %s109
    %s111 = sphi 0, %s109
    %s112 = sphi 0, %s111
    %s126 = sphi 0, %s112
    %s130 = sphi 0, %s130
    %s132 = sphi 0, %s130
    %s133 = sphi 0, %s132
    %s147 = sphi 0, %s133
    %s151 = sphi 0, %s151
    %s153 = sphi 0, %s151
    %s154 = sphi 0, %s153
    %s168 = sphi 0, %s154
    %s172 = sphi 0, %s172
    %s174 = sphi 0, %s172
    %s175 = sphi 0, %s174
    %s189 = sphi 0, %s175
    %s193 = sphi 0, %s193
    %s195 = sphi 0, %s193
    %s196 = sphi 0, %s195
    %s210 = sphi 0, %s196
    %s214 = sphi 0, %s214
    %s216 = sphi 0, %s214
    %s217 = sphi 0, %s216
    %s231 = sphi 0, %s217
    %s235 = sphi 0, %s235
    %s237 = sphi 0, %s235
    %s238 = sphi 0, %s237
    %s252 = sphi 0, %s238
    %s256 = sphi 0, %s256
    %s258 = sphi 0, %s256
    %s259 = sphi 0, %s258
    %s273 = sphi 0, %s259
    %s277 = sphi 0, %s277
    %s279 = sphi 0, %s277
    %s280 = sphi 0, %s279
    %s294 = sphi 0, %s280
    %s298 = sphi 0, %s298
    %s300 = sphi 0, %s298
    %s301 = sphi 0, %s300
    %s315 = sphi 0, %s301
    %s323 = sphi 0, %s325
    %s326 = sphi 0, %s323
    %s327 = sphi 0, %s326
    %s343 = sphi 0, %s327
  $region4: #{transformer_sr_forward.17} parent=0 // loop_header_branch
    %22 = sbr.rel (%p20) target = $region8
  $region5: #{transformer_sr_forward.17} parent=0 // loop_body
    %s24 = ssub.s32 %s19, 1
    %s25 = ssub.s32 %s19, 2
    %s32 = sadd.s32 1, %s27
    %p33 = scmp.ge.s32.totalorder %s32, 1
    %s34 = scalar_select %p33, 0, %s32
    %s35 = sadd.s32 1, %s26
    %s36 = scalar_select %p33, %s35, %s26
    %p37 = scmp.ge.s32.totalorder %s36, 2
    %s38 = scalar_select %p37, 0, %s36
    %s39 = ssub.s32 %s26, %s38
    %s40 = ssub.s32 %s27, %s34
    %s41 = sor.u32 %s39, %s40
    %p42 = scmp.eq.s32.totalorder %s41, 0
    %s44 = sadd.s32 %s43, 1
    %s45 = scalar_select %p42, %s43, %s44
    %p48 = pneg %p42
    %p49 = scmp.eq.s32.totalorder %s19, 1
    %p50 = por %p48, %p49
    %p51 = scmp.ne.s32.totalorder %s43, %s46
    %p52 = scmp.eq.s32.totalorder %s19, 0
    %p53 = por %p51, %p52
    %p54 = scmp.ne.s32.totalorder %s43, %s46
    %p55 = scmp.eq.s32.totalorder %s24, 1
    %p56 = por %p54, %p55
    %p57 = scmp.ne.s32.totalorder %s46, %s47
    %p58 = scmp.eq.s32.totalorder %s24, 0
    %p59 = por %p57, %p58
    %p60 = scmp.ne.s32.totalorder %s46, %s47
    %p61 = scmp.eq.s32.totalorder %s25, 1
    %p62 = por %p60, %p61
    %p64 = scmp.ne.s32.totalorder %s47, %s63
    %p65 = scmp.eq.s32.totalorder %s25, 0
    %p66 = por %p64, %p65
    %s68 = sadd.s32 %s67, 1
    %p71 = scmp.eq.s32.totalorder %s19, 1
    %p72 = scmp.ne.s32.totalorder %s67, %s69
    %p73 = scmp.eq.s32.totalorder %s19, 0
    %p74 = por %p72, %p73
    %p75 = scmp.ne.s32.totalorder %s67, %s69
    %p76 = scmp.eq.s32.totalorder %s24, 1
    %p77 = por %p75, %p76
    %p78 = scmp.ne.s32.totalorder %s69, %s70
    %p79 = scmp.eq.s32.totalorder %s24, 0
    %p80 = por %p78, %p79
    %p81 = scmp.ne.s32.totalorder %s69, %s70
    %p82 = scmp.eq.s32.totalorder %s25, 1
    %p83 = por %p81, %p82
    %p85 = scmp.ne.s32.totalorder %s70, %s84
    %p86 = scmp.eq.s32.totalorder %s25, 0
    %p87 = por %p85, %p86
    %s89 = sadd.s32 %s88, 1
    %p92 = scmp.eq.s32.totalorder %s19, 1
    %p93 = scmp.ne.s32.totalorder %s88, %s90
    %p94 = scmp.eq.s32.totalorder %s19, 0
    %p95 = por %p93, %p94
    %p96 = scmp.ne.s32.totalorder %s88, %s90
    %p97 = scmp.eq.s32.totalorder %s24, 1
    %p98 = por %p96, %p97
    %p99 = scmp.ne.s32.totalorder %s90, %s91
    %p100 = scmp.eq.s32.totalorder %s24, 0
    %p101 = por %p99, %p100
    %p102 = scmp.ne.s32.totalorder %s90, %s91
    %p103 = scmp.eq.s32.totalorder %s25, 1
    %p104 = por %p102, %p103
    %p106 = scmp.ne.s32.totalorder %s91, %s105
    %p107 = scmp.eq.s32.totalorder %s25, 0
    %p108 = por %p106, %p107
    %s110 = sadd.s32 %s109, 1
    %p113 = scmp.eq.s32.totalorder %s19, 1
    %p114 = scmp.ne.s32.totalorder %s109, %s111
    %p115 = scmp.eq.s32.totalorder %s19, 0
    %p116 = por %p114, %p115
    %p117 = scmp.ne.s32.totalorder %s109, %s111
    %p118 = scmp.eq.s32.totalorder %s24, 1
    %p119 = por %p117, %p118
    %p120 = scmp.ne.s32.totalorder %s111, %s112
    %p121 = scmp.eq.s32.totalorder %s24, 0
    %p122 = por %p120, %p121
    %p123 = scmp.ne.s32.totalorder %s111, %s112
    %p124 = scmp.eq.s32.totalorder %s25, 1
    %p125 = por %p123, %p124
    %p127 = scmp.ne.s32.totalorder %s112, %s126
    %p128 = scmp.eq.s32.totalorder %s25, 0
    %p129 = por %p127, %p128
    %s131 = sadd.s32 %s130, 1
    %p134 = scmp.eq.s32.totalorder %s19, 1
    %p135 = scmp.ne.s32.totalorder %s130, %s132
    %p136 = scmp.eq.s32.totalorder %s19, 0
    %p137 = por %p135, %p136
    %p138 = scmp.ne.s32.totalorder %s130, %s132
    %p139 = scmp.eq.s32.totalorder %s24, 1
    %p140 = por %p138, %p139
    %p141 = scmp.ne.s32.totalorder %s132, %s133
    %p142 = scmp.eq.s32.totalorder %s24, 0
    %p143 = por %p141, %p142
    %p144 = scmp.ne.s32.totalorder %s132, %s133
    %p145 = scmp.eq.s32.totalorder %s25, 1
    %p146 = por %p144, %p145
    %p148 = scmp.ne.s32.totalorder %s133, %s147
    %p149 = scmp.eq.s32.totalorder %s25, 0
    %p150 = por %p148, %p149
    %s152 = sadd.s32 %s151, 1
    %p155 = scmp.eq.s32.totalorder %s19, 1
    %p156 = scmp.ne.s32.totalorder %s151, %s153
    %p157 = scmp.eq.s32.totalorder %s19, 0
    %p158 = por %p156, %p157
    %p159 = scmp.ne.s32.totalorder %s151, %s153
    %p160 = scmp.eq.s32.totalorder %s24, 1
    %p161 = por %p159, %p160
    %p162 = scmp.ne.s32.totalorder %s153, %s154
    %p163 = scmp.eq.s32.totalorder %s24, 0
    %p164 = por %p162, %p163
    %p165 = scmp.ne.s32.totalorder %s153, %s154
    %p166 = scmp.eq.s32.totalorder %s25, 1
    %p167 = por %p165, %p166
    %p169 = scmp.ne.s32.totalorder %s154, %s168
    %p170 = scmp.eq.s32.totalorder %s25, 0
    %p171 = por %p169, %p170
    %s173 = sadd.s32 %s172, 1
    %p176 = scmp.eq.s32.totalorder %s19, 1
    %p177 = scmp.ne.s32.totalorder %s172, %s174
    %p178 = scmp.eq.s32.totalorder %s19, 0
    %p179 = por %p177, %p178
    %p180 = scmp.ne.s32.totalorder %s172, %s174
    %p181 = scmp.eq.s32.totalorder %s24, 1
    %p182 = por %p180, %p181
    %p183 = scmp.ne.s32.totalorder %s174, %s175
    %p184 = scmp.eq.s32.totalorder %s24, 0
    %p185 = por %p183, %p184
    %p186 = scmp.ne.s32.totalorder %s174, %s175
    %p187 = scmp.eq.s32.totalorder %s25, 1
    %p188 = por %p186, %p187
    %p190 = scmp.ne.s32.totalorder %s175, %s189
    %p191 = scmp.eq.s32.totalorder %s25, 0
    %p192 = por %p190, %p191
    %s194 = sadd.s32 %s193, 1
    %p197 = scmp.eq.s32.totalorder %s19, 1
    %p198 = scmp.ne.s32.totalorder %s193, %s195
    %p199 = scmp.eq.s32.totalorder %s19, 0
    %p200 = por %p198, %p199
    %p201 = scmp.ne.s32.totalorder %s193, %s195
    %p202 = scmp.eq.s32.totalorder %s24, 1
    %p203 = por %p201, %p202
    %p204 = scmp.ne.s32.totalorder %s195, %s196
    %p205 = scmp.eq.s32.totalorder %s24, 0
    %p206 = por %p204, %p205
    %p207 = scmp.ne.s32.totalorder %s195, %s196
    %p208 = scmp.eq.s32.totalorder %s25, 1
    %p209 = por %p207, %p208
    %p211 = scmp.ne.s32.totalorder %s196, %s210
    %p212 = scmp.eq.s32.totalorder %s25, 0
    %p213 = por %p211, %p212
    %s215 = sadd.s32 %s214, 1
    %p218 = scmp.eq.s32.totalorder %s19, 1
    %p219 = scmp.ne.s32.totalorder %s214, %s216
    %p220 = scmp.eq.s32.totalorder %s19, 0
    %p221 = por %p219, %p220
    %p222 = scmp.ne.s32.totalorder %s214, %s216
    %p223 = scmp.eq.s32.totalorder %s24, 1
    %p224 = por %p222, %p223
    %p225 = scmp.ne.s32.totalorder %s216, %s217
    %p226 = scmp.eq.s32.totalorder %s24, 0
    %p227 = por %p225, %p226
    %p228 = scmp.ne.s32.totalorder %s216, %s217
    %p229 = scmp.eq.s32.totalorder %s25, 1
    %p230 = por %p228, %p229
    %p232 = scmp.ne.s32.totalorder %s217, %s231
    %p233 = scmp.eq.s32.totalorder %s25, 0
    %p234 = por %p232, %p233
    %s236 = sadd.s32 %s235, 1
    %p239 = scmp.eq.s32.totalorder %s19, 1
    %p240 = scmp.ne.s32.totalorder %s235, %s237
    %p241 = scmp.eq.s32.totalorder %s19, 0
    %p242 = por %p240, %p241
    %p243 = scmp.ne.s32.totalorder %s235, %s237
    %p244 = scmp.eq.s32.totalorder %s24, 1
    %p245 = por %p243, %p244
    %p246 = scmp.ne.s32.totalorder %s237, %s238
    %p247 = scmp.eq.s32.totalorder %s24, 0
    %p248 = por %p246, %p247
    %p249 = scmp.ne.s32.totalorder %s237, %s238
    %p250 = scmp.eq.s32.totalorder %s25, 1
    %p251 = por %p249, %p250
    %p253 = scmp.ne.s32.totalorder %s238, %s252
    %p254 = scmp.eq.s32.totalorder %s25, 0
    %p255 = por %p253, %p254
    %s257 = sadd.s32 %s256, 1
    %p260 = scmp.eq.s32.totalorder %s19, 1
    %p261 = scmp.ne.s32.totalorder %s256, %s258
    %p262 = scmp.eq.s32.totalorder %s19, 0
    %p263 = por %p261, %p262
    %p264 = scmp.ne.s32.totalorder %s256, %s258
    %p265 = scmp.eq.s32.totalorder %s24, 1
    %p266 = por %p264, %p265
    %p267 = scmp.ne.s32.totalorder %s258, %s259
    %p268 = scmp.eq.s32.totalorder %s24, 0
    %p269 = por %p267, %p268
    %p270 = scmp.ne.s32.totalorder %s258, %s259
    %p271 = scmp.eq.s32.totalorder %s25, 1
    %p272 = por %p270, %p271
    %p274 = scmp.ne.s32.totalorder %s259, %s273
    %p275 = scmp.eq.s32.totalorder %s25, 0
    %p276 = por %p274, %p275
    %s278 = sadd.s32 %s277, 1
    %p281 = scmp.eq.s32.totalorder %s19, 1
    %p282 = scmp.ne.s32.totalorder %s277, %s279
    %p283 = scmp.eq.s32.totalorder %s19, 0
    %p284 = por %p282, %p283
    %p285 = scmp.ne.s32.totalorder %s277, %s279
    %p286 = scmp.eq.s32.totalorder %s24, 1
    %p287 = por %p285, %p286
    %p288 = scmp.ne.s32.totalorder %s279, %s280
    %p289 = scmp.eq.s32.totalorder %s24, 0
    %p290 = por %p288, %p289
    %p291 = scmp.ne.s32.totalorder %s279, %s280
    %p292 = scmp.eq.s32.totalorder %s25, 1
    %p293 = por %p291, %p292
    %p295 = scmp.ne.s32.totalorder %s280, %s294
    %p296 = scmp.eq.s32.totalorder %s25, 0
    %p297 = por %p295, %p296
    %s299 = sadd.s32 %s298, 1
    %p302 = scmp.eq.s32.totalorder %s19, 1
    %p303 = scmp.ne.s32.totalorder %s298, %s300
    %p304 = scmp.eq.s32.totalorder %s19, 0
    %p305 = por %p303, %p304
    %p306 = scmp.ne.s32.totalorder %s298, %s300
    %p307 = scmp.eq.s32.totalorder %s24, 1
    %p308 = por %p306, %p307
    %p309 = scmp.ne.s32.totalorder %s300, %s301
    %p310 = scmp.eq.s32.totalorder %s24, 0
    %p311 = por %p309, %p310
    %p312 = scmp.ne.s32.totalorder %s300, %s301
    %p313 = scmp.eq.s32.totalorder %s25, 1
    %p314 = por %p312, %p313
    %p316 = scmp.ne.s32.totalorder %s301, %s315
    %p317 = scmp.eq.s32.totalorder %s25, 0
    %p318 = por %p316, %p317
    %s319 = ssub.s32 %s26, %s38
    %s320 = ssub.s32 %s27, %s34
    %s321 = sor.u32 %s319, %s320
    %p322 = scmp.eq.s32.totalorder %s321, 0
    %s324 = sadd.s32 %s323, 1
    %s325 = scalar_select %p322, %s323, %s324
    %p328 = pneg %p322
    %p329 = scmp.eq.s32.totalorder %s19, 1
    %p330 = por %p328, %p329
    %p331 = scmp.ne.s32.totalorder %s323, %s326
    %p332 = scmp.eq.s32.totalorder %s19, 0
    %p333 = por %p331, %p332
    %p334 = scmp.ne.s32.totalorder %s323, %s326
    %p335 = scmp.eq.s32.totalorder %s24, 1
    %p336 = por %p334, %p335
    %p337 = scmp.ne.s32.totalorder %s326, %s327
    %p338 = scmp.eq.s32.totalorder %s24, 0
    %p339 = por %p337, %p338
    %p340 = scmp.ne.s32.totalorder %s326, %s327
    %p341 = scmp.eq.s32.totalorder %s25, 1
    %p342 = por %p340, %p341
    %p344 = scmp.ne.s32.totalorder %s327, %s343
    %p345 = scmp.eq.s32.totalorder %s25, 0
    %p346 = por %p344, %p345
    %p347 = scmp.le.s32.totalorder 1, %s19
    %p348 = scmp.lt.s32.totalorder %s19, 3
    %p349 = pnand %p347, %p348
    %p350 = pneg %p349
    // Predicated region
    $region9: #{transformer_sr_forward.17} parent=5 // pred_check
      _
    $region10: #{transformer_sr_forward.17} parent=5 // pred_check_branch
      %352 = sbr.rel (%p349) target = $region12
    $region11: #{transformer_sr_forward.17} parent=5 // pred_region
      %s353 = ssub.s32 %s19, 1
      // Predicated region
      $region13: #{transformer_sr_forward.17} parent=11 // pred_check
        %p354 = pneg %p80
      $region14: #{transformer_sr_forward.17} parent=11 // pred_check_branch
        %356 = sbr.rel (%p354) target = $region16
      $region15: #{transformer_sr_forward.17} parent=11 // pred_region
        _
      $region16: #{transformer_sr_forward.17} parent=11 // pred_fallthru
        _
      // Predicated region
      $region17: #{transformer_sr_forward.17} parent=11 // pred_check
        %p357 = pneg %p101
      $region18: #{transformer_sr_forward.17} parent=11 // pred_check_branch
        %359 = sbr.rel (%p357) target = $region20
      $region19: #{transformer_sr_forward.17} parent=11 // pred_region
        _
      $region20: #{transformer_sr_forward.17} parent=11 // pred_fallthru
        _
      // Predicated region
      $region21: #{transformer_sr_forward.17} parent=11 // pred_check
        %p360 = pneg %p122
      $region22: #{transformer_sr_forward.17} parent=11 // pred_check_branch
        %362 = sbr.rel (%p360) target = $region24
      $region23: #{transformer_sr_forward.17} parent=11 // pred_region
        _
      $region24: #{transformer_sr_forward.17} parent=11 // pred_fallthru
        _
      // Predicated region
      $region25: #{transformer_sr_forward.17} parent=11 // pred_check
        %p363 = pneg %p143
      $region26: #{transformer_sr_forward.17} parent=11 // pred_check_branch
        %365 = sbr.rel (%p363) target = $region28
      $region27: #{transformer_sr_forward.17} parent=11 // pred_region
        _
      $region28: #{transformer_sr_forward.17} parent=11 // pred_fallthru
        _
      // Predicated region
      $region29: #{transformer_sr_forward.17} parent=11 // pred_check
        %p366 = pneg %p164
      $region30: #{transformer_sr_forward.17} parent=11 // pred_check_branch
        %368 = sbr.rel (%p366) target = $region32
      $region31: #{transformer_sr_forward.17} parent=11 // pred_region
        _
      $region32: #{transformer_sr_forward.17} parent=11 // pred_fallthru
        _
      // Predicated region
      $region33: #{transformer_sr_forward.17} parent=11 // pred_check
        %p369 = pneg %p185
      $region34: #{transformer_sr_forward.17} parent=11 // pred_check_branch
        %371 = sbr.rel (%p369) target = $region36
      $region35: #{transformer_sr_forward.17} parent=11 // pred_region
        _
      $region36: #{transformer_sr_forward.17} parent=11 // pred_fallthru
        _
      // Predicated region
      $region37: #{transformer_sr_forward.17} parent=11 // pred_check
        %p372 = pneg %p206
      $region38: #{transformer_sr_forward.17} parent=11 // pred_check_branch
        %374 = sbr.rel (%p372) target = $region40
      $region39: #{transformer_sr_forward.17} parent=11 // pred_region
        _
      $region40: #{transformer_sr_forward.17} parent=11 // pred_fallthru
        _
      // Predicated region
      $region41: #{transformer_sr_forward.17} parent=11 // pred_check
        %p375 = pneg %p227
      $region42: #{transformer_sr_forward.17} parent=11 // pred_check_branch
        %377 = sbr.rel (%p375) target = $region44
      $region43: #{transformer_sr_forward.17} parent=11 // pred_region
        _
      $region44: #{transformer_sr_forward.17} parent=11 // pred_fallthru
        _
      // Predicated region
      $region45: #{transformer_sr_forward.17} parent=11 // pred_check
        %p378 = pneg %p248
      $region46: #{transformer_sr_forward.17} parent=11 // pred_check_branch
        %380 = sbr.rel (%p378) target = $region48
      $region47: #{transformer_sr_forward.17} parent=11 // pred_region
        _
      $region48: #{transformer_sr_forward.17} parent=11 // pred_fallthru
        _
      // Predicated region
      $region49: #{transformer_sr_forward.17} parent=11 // pred_check
        %p381 = pneg %p269
      $region50: #{transformer_sr_forward.17} parent=11 // pred_check_branch
        %383 = sbr.rel (%p381) target = $region52
      $region51: #{transformer_sr_forward.17} parent=11 // pred_region
        _
      $region52: #{transformer_sr_forward.17} parent=11 // pred_fallthru
        _
      // Predicated region
      $region53: #{transformer_sr_forward.17} parent=11 // pred_check
        %p384 = pneg %p290
      $region54: #{transformer_sr_forward.17} parent=11 // pred_check_branch
        %386 = sbr.rel (%p384) target = $region56
      $region55: #{transformer_sr_forward.17} parent=11 // pred_region
        _
      $region56: #{transformer_sr_forward.17} parent=11 // pred_fallthru
        _
      // Predicated region
      $region57: #{transformer_sr_forward.17} parent=11 // pred_check
        %p387 = pneg %p311
      $region58: #{transformer_sr_forward.17} parent=11 // pred_check_branch
        %389 = sbr.rel (%p387) target = $region60
      $region59: #{transformer_sr_forward.17} parent=11 // pred_region
        _
      $region60: #{transformer_sr_forward.17} parent=11 // pred_fallthru
        _
    $region12: #{transformer_sr_forward.17} parent=5 // pred_fallthru
      _
    %p390 = scmp.lt.s32.totalorder %s19, 2
    // Predicated region
    $region61: #{transformer_sr_forward.17} parent=5 // pred_check
      %p391 = pneg %p390
    $region62: #{transformer_sr_forward.17} parent=5 // pred_check_branch
      %393 = sbr.rel (%p391) target = $region64
    $region63: #{transformer_sr_forward.17} parent=5 // pred_region
      // Predicated region
      $region65: #{transformer_sr_forward.17} parent=63 // pred_check
        %p394 = pneg %p53
      $region66: #{transformer_sr_forward.17} parent=63 // pred_check_branch
        %396 = sbr.rel (%p394) target = $region68
      $region67: #{transformer_sr_forward.17} parent=63 // pred_region
        %s397 = smul.u32 8, %s27
        %p398 = scmp.lt.s32.totalorder %s26, 1
        %s399 = scalar_select %p398, %s26, 1
        %p400 = scmp.lt.s32.totalorder %s397, 7
        %s401 = scalar_select %p400, %s397, 7
        %s402 = smul.addr %s399, 8
        %s403 = sadd.s32 %s401, %s402
        %s404 = smul.addr %s403, 8
        %s405 = scalar_lea.vmem %s0, %s404
        %s406 = smul.u32 8, %s27
      $region68: #{transformer_sr_forward.17} parent=63 // pred_fallthru
        _
    $region64: #{transformer_sr_forward.17} parent=5 // pred_fallthru
      _
    %p407 = scmp.le.s32.totalorder 1, %s19
    %p408 = scmp.lt.s32.totalorder %s19, 3
    %p409 = pnand %p407, %p408
    %p410 = pneg %p409
    // Predicated region
    $region69: #{transformer_sr_forward.17} parent=5 // pred_check
      _
    $region70: #{transformer_sr_forward.17} parent=5 // pred_check_branch
      %412 = sbr.rel (%p409) target = $region72
    $region71: #{transformer_sr_forward.17} parent=5 // pred_region
      %s413 = ssub.s32 %s19, 1
      %s414 = smul.u32 8, %s29
      %p415 = scmp.lt.s32.totalorder %s28, 1
      %s416 = scalar_select %p415, %s28, 1
      %p417 = scmp.lt.s32.totalorder %s414, 7
      %s418 = scalar_select %p417, %s414, 7
      %s419 = smul.addr %s416, 8
      %s420 = sadd.s32 %s418, %s419
      %s421 = smul.addr %s420, 8
      %s422 = scalar_lea.vmem %s0, %s421
      %p423 = pneg %p59
      %p424 = pneg %p56
      %p425 = pneg %p80
      %p426 = pneg %p77
      %p427 = pneg %p101
      %p428 = pneg %p98
      %p429 = pneg %p122
      %p430 = pneg %p119
      %p431 = pneg %p143
      %p432 = pneg %p140
      %p433 = pneg %p164
      %p434 = pneg %p161
      %p435 = pneg %p185
      %p436 = pneg %p182
      %p437 = pneg %p206
      %p438 = pneg %p203
      %p439 = pneg %p227
      %p440 = pneg %p224
      %p441 = pneg %p248
      %p442 = pneg %p245
      %p443 = pneg %p269
      %p444 = pneg %p266
      %p445 = pneg %p290
      %p446 = pneg %p287
      %p447 = pneg %p311
      %p448 = pneg %p308
      %p449 = pneg %p339
      %p450 = pneg %p336
      %s451 = smul.u32 8, %s29
      %p452 = scmp.lt.s32.totalorder %s28, 1
      %s453 = scalar_select %p452, %s28, 1
      %p454 = scmp.lt.s32.totalorder %s451, 7
      %s455 = scalar_select %p454, %s451, 7
      %s456 = smul.addr %s453, 8
      %s457 = sadd.s32 %s455, %s456
      %s458 = smul.addr %s457, 8
      %s459 = scalar_lea.vmem %s13, %s458
      %s460 = smul.u32 8, %s29
      %p461 = scmp.lt.s32.totalorder %s28, 1
      %s462 = scalar_select %p461, %s28, 1
      %p463 = scmp.lt.s32.totalorder %s460, 7
      %s464 = scalar_select %p463, %s460, 7
      %s465 = smul.addr %s462, 8
      %s466 = sadd.s32 %s464, %s465
      %s467 = smul.addr %s466, 8
      %s468 = scalar_lea.vmem %s0, %s467
      %s469 = smul.u32 8, %s29
      %s470 = smul.u32 8, %s29
      %p471 = scmp.lt.s32.totalorder %s28, 1
      %s472 = scalar_select %p471, %s28, 1
      %p473 = scmp.lt.s32.totalorder %s470, 7
      %s474 = scalar_select %p473, %s470, 7
      %s475 = smul.addr %s472, 8
      %s476 = sadd.s32 %s474, %s475
      %s477 = smul.addr %s476, 8
      %s478 = scalar_lea.vmem %s13, %s477
      %s479 = smul.u32 8, %s29
      %v480 = vld [vmem:[%s468] sm:$0xff]
      %v481 = vld [vmem:[%s468 + $0x8] sm:$0xff]
      %v482 = vld [vmem:[%s468 + $0x10] sm:$0xff]
      %v483 = vld [vmem:[%s468 + $0x18] sm:$0xff]
      %v484 = vld [vmem:[%s468 + $0x20] sm:$0xff]
      %v485 = vld [vmem:[%s468 + $0x28] sm:$0xff]
      %v486 = vld [vmem:[%s468 + $0x30] sm:$0xff]
      %v487 = vld [vmem:[%s468 + $0x38] sm:$0xff]
      %v488 = vld [vmem:[%s1] sm:$0x1]
      %v489 = vld [vmem:[%s2] sm:$0x1]
      %490 = vadd.xlane.f32.xlu0 %v480
      %v491 = vpop.xlane.xlu0 %490
      %492 = vadd.xlane.f32.xlu0 %v481
      %v493 = vpop.xlane.xlu0 %492
      %494 = vadd.xlane.f32.xlu0 %v482
      %v495 = vpop.xlane.xlu0 %494
      %496 = vadd.xlane.f32.xlu0 %v483
      %v497 = vpop.xlane.xlu0 %496
      %498 = vadd.xlane.f32.xlu0 %v484
      %v499 = vpop.xlane.xlu0 %498
      %500 = vadd.xlane.f32.xlu0 %v485
      %v501 = vpop.xlane.xlu0 %500
      %502 = vadd.xlane.f32.xlu0 %v486
      %v503 = vpop.xlane.xlu0 %502
      %504 = vadd.xlane.f32.xlu0 %v487
      %v505 = vpop.xlane.xlu0 %504
      %v506 = vrcp.pop 128.0
      %v507 = vmul.f32 %v491, %v506
      %v508 = vmul.f32 %v493, %v506
      %v509 = vmul.f32 %v495, %v506
      %v510 = vmul.f32 %v497, %v506
      %v511 = vmul.f32 %v499, %v506
      %v512 = vmul.f32 %v501, %v506
      %v513 = vmul.f32 %v503, %v506
      %v514 = vmul.f32 %v505, %v506
      %v515 = vsub.f32 %v480, %v507
      %v516 = vsub.f32 %v481, %v508
      %v517 = vsub.f32 %v482, %v509
      %v518 = vsub.f32 %v483, %v510
      %v519 = vsub.f32 %v484, %v511
      %v520 = vsub.f32 %v485, %v512
      %v521 = vsub.f32 %v486, %v513
      %v522 = vsub.f32 %v487, %v514
      %v523 = vmul.f32 %v515, %v515
      %v524 = vmul.f32 %v516, %v516
      %v525 = vmul.f32 %v517, %v517
      %v526 = vmul.f32 %v518, %v518
      %v527 = vmul.f32 %v519, %v519
      %v528 = vmul.f32 %v520, %v520
      %v529 = vmul.f32 %v521, %v521
      %v530 = vmul.f32 %v522, %v522
      %531 = vadd.xlane.f32.xlu0 %v523
      %v532 = vpop.xlane.xlu0 %531
      %533 = vadd.xlane.f32.xlu0 %v524
      %v534 = vpop.xlane.xlu0 %533
      %535 = vadd.xlane.f32.xlu0 %v525
      %v536 = vpop.xlane.xlu0 %535
      %537 = vadd.xlane.f32.xlu0 %v526
      %v538 = vpop.xlane.xlu0 %537
      %539 = vadd.xlane.f32.xlu0 %v527
      %v540 = vpop.xlane.xlu0 %539
      %541 = vadd.xlane.f32.xlu0 %v528
      %v542 = vpop.xlane.xlu0 %541
      %543 = vadd.xlane.f32.xlu0 %v529
      %v544 = vpop.xlane.xlu0 %543
      %545 = vadd.xlane.f32.xlu0 %v530
      %v546 = vpop.xlane.xlu0 %545
      %v547 = vmul.f32 %v532, %v506
      %v548 = vmul.f32 %v534, %v506
      %v549 = vmul.f32 %v536, %v506
      %v550 = vmul.f32 %v538, %v506
      %v551 = vmul.f32 %v540, %v506
      %v552 = vmul.f32 %v542, %v506
      %v553 = vmul.f32 %v544, %v506
      %v554 = vmul.f32 %v546, %v506
      %v555 = vadd.f32 %v547, 1e-05
      %v556 = vadd.f32 %v548, 1e-05
      %v557 = vadd.f32 %v549, 1e-05
      %v558 = vadd.f32 %v550, 1e-05
      %v559 = vadd.f32 %v551, 1e-05
      %v560 = vadd.f32 %v552, 1e-05
      %v561 = vadd.f32 %v553, 1e-05
      %v562 = vadd.f32 %v554, 1e-05
      %v563 = vrsqrt.pop %v555
      %v564 = vrsqrt.pop %v556
      %v565 = vrsqrt.pop %v557
      %v566 = vrsqrt.pop %v558
      %v567 = vrsqrt.pop %v559
      %v568 = vrsqrt.pop %v560
      %v569 = vrsqrt.pop %v561
      %v570 = vrsqrt.pop %v562
      %v571 = vmul.f32 %v515, %v563
      %v572 = vmul.f32 %v516, %v564
      %v573 = vmul.f32 %v517, %v565
      %v574 = vmul.f32 %v518, %v566
      %v575 = vmul.f32 %v519, %v567
      %v576 = vmul.f32 %v520, %v568
      %v577 = vmul.f32 %v521, %v569
      %v578 = vmul.f32 %v522, %v570
      %v580 = vlaneseq
      %v581 = vshrl.u32 %v580, 7
      %v582 = vsub.s32 0, %v581
      %v583 = vrot.slane %v488, %v582
      %v585 = vmul.f32 %v571, %v583
      %v586 = vmul.f32 %v572, %v583
      %v587 = vmul.f32 %v573, %v583
      %v588 = vmul.f32 %v574, %v583
      %v589 = vmul.f32 %v575, %v583
      %v590 = vmul.f32 %v576, %v583
      %v591 = vmul.f32 %v577, %v583
      %v592 = vmul.f32 %v578, %v583
      %v594 = vlaneseq
      %v595 = vshrl.u32 %v594, 7
      %v596 = vsub.s32 0, %v595
      %v597 = vrot.slane %v489, %v596
      %v599 = vadd.f32 %v585, %v597
      %v600 = vadd.f32 %v586, %v597
      %v601 = vadd.f32 %v587, %v597
      %v602 = vadd.f32 %v588, %v597
      %v603 = vadd.f32 %v589, %v597
      %v604 = vadd.f32 %v590, %v597
      %v605 = vadd.f32 %v591, %v597
      %v606 = vadd.f32 %v592, %v597
      %v607 = vld [vmem:[%s3] sm:$0xff]
      %v608 = vld [vmem:[%s3 + $0x8] sm:$0xff]
      %v609 = vld [vmem:[%s3 + $0x10] sm:$0xff]
      %v610 = vld [vmem:[%s3 + $0x18] sm:$0xff]
      %v611 = vld [vmem:[%s3 + $0x20] sm:$0xff]
      %v612 = vld [vmem:[%s3 + $0x28] sm:$0xff]
      %v613 = vld [vmem:[%s3 + $0x30] sm:$0xff]
      %v614 = vld [vmem:[%s3 + $0x38] sm:$0xff]
      %v615 = vld [vmem:[%s3 + $0x40] sm:$0xff]
      %v616 = vld [vmem:[%s3 + $0x48] sm:$0xff]
      %v617 = vld [vmem:[%s3 + $0x50] sm:$0xff]
      %v618 = vld [vmem:[%s3 + $0x58] sm:$0xff]
      %v619 = vld [vmem:[%s3 + $0x60] sm:$0xff]
      %v620 = vld [vmem:[%s3 + $0x68] sm:$0xff]
      %v621 = vld [vmem:[%s3 + $0x70] sm:$0xff]
      %v622 = vld [vmem:[%s3 + $0x78] sm:$0xff]
      %v623 = vld [vmem:[%s3 + $0x80] sm:$0xff]
      %v624 = vld [vmem:[%s3 + $0x88] sm:$0xff]
      %v625 = vld [vmem:[%s3 + $0x90] sm:$0xff]
      %v626 = vld [vmem:[%s3 + $0x98] sm:$0xff]
      %v627 = vld [vmem:[%s3 + $0xa0] sm:$0xff]
      %v628 = vld [vmem:[%s3 + $0xa8] sm:$0xff]
      %v629 = vld [vmem:[%s3 + $0xb0] sm:$0xff]
      %v630 = vld [vmem:[%s3 + $0xb8] sm:$0xff]
      %v631 = vld [vmem:[%s3 + $0xc0] sm:$0xff]
      %v632 = vld [vmem:[%s3 + $0xc8] sm:$0xff]
      %v633 = vld [vmem:[%s3 + $0xd0] sm:$0xff]
      %v634 = vld [vmem:[%s3 + $0xd8] sm:$0xff]
      %v635 = vld [vmem:[%s3 + $0xe0] sm:$0xff]
      %v636 = vld [vmem:[%s3 + $0xe8] sm:$0xff]
      %v637 = vld [vmem:[%s3 + $0xf0] sm:$0xff]
      %v638 = vld [vmem:[%s3 + $0xf8] sm:$0xff]
      %v639 = vld [vmem:[%s3 + $0x100] sm:$0xff]
      %v640 = vld [vmem:[%s3 + $0x108] sm:$0xff]
      %v641 = vld [vmem:[%s3 + $0x110] sm:$0xff]
      %v642 = vld [vmem:[%s3 + $0x118] sm:$0xff]
      %v643 = vld [vmem:[%s3 + $0x120] sm:$0xff]
      %v644 = vld [vmem:[%s3 + $0x128] sm:$0xff]
      %v645 = vld [vmem:[%s3 + $0x130] sm:$0xff]
      %v646 = vld [vmem:[%s3 + $0x138] sm:$0xff]
      %v647 = vld [vmem:[%s3 + $0x140] sm:$0xff]
      %v648 = vld [vmem:[%s3 + $0x148] sm:$0xff]
      %v649 = vld [vmem:[%s3 + $0x150] sm:$0xff]
      %v650 = vld [vmem:[%s3 + $0x158] sm:$0xff]
      %v651 = vld [vmem:[%s3 + $0x160] sm:$0xff]
      %v652 = vld [vmem:[%s3 + $0x168] sm:$0xff]
      %v653 = vld [vmem:[%s3 + $0x170] sm:$0xff]
      %v654 = vld [vmem:[%s3 + $0x178] sm:$0xff]
      %v655 = vld [vmem:[%s4] sm:$0x7]
      %v657 = vlaneseq
      %v658 = vshrl.u32 %v657, 7
      %v659 = vsub.s32 0, %v658
      %v660 = vrot.slane %v655, %v659
      %v661 = vlaneseq
      %v662 = vshrl.u32 %v661, 7
      %v663 = vsub.s32 1, %v662
      %v664 = vrot.slane %v655, %v663
      %v665 = vlaneseq
      %v666 = vshrl.u32 %v665, 7
      %v667 = vsub.s32 2, %v666
      %v668 = vrot.slane %v655, %v667
      %672 = vmatprep.subr.mxu0 %v608
      %673 = vmatpush1.msra.mxu0 %v607
      %674 = vmatprep.subr.mxu0 %v611
      %675 = vmatpush1.msra.mxu0 %v610
      %676 = vmatprep.subr.mxu0 %v614
      %677 = vmatpush1.msra.mxu0 %v613
      %678 = vmatprep.subr.mxu0 %v617
      %679 = vmatpush1.msra.mxu0 %v616
      %680 = vmatprep.subr.mxu0 %v620
      %681 = vmatpush1.msra.mxu0 %v619
      %682 = vmatprep.subr.mxu0 %v623
      %683 = vmatpush1.msra.mxu0 %v622
      %684 = vmatprep.subr.mxu0 %v626
      %685 = vmatpush1.msra.mxu0 %v625
      %686 = vmatprep.subr.mxu0 %v629
      %687 = vmatpush1.msra.mxu0 %v628
      %688 = vmatprep.subr.mxu0 %v632
      %689 = vmatpush1.msra.mxu0 %v631
      %690 = vmatprep.subr.mxu0 %v635
      %691 = vmatpush1.msra.mxu0 %v634
      %692 = vmatprep.subr.mxu0 %v638
      %693 = vmatpush1.msra.mxu0 %v637
      %694 = vmatprep.subr.mxu0 %v641
      %695 = vmatpush1.msra.mxu0 %v640
      %696 = vmatprep.subr.mxu0 %v644
      %697 = vmatpush1.msra.mxu0 %v643
      %698 = vmatprep.subr.mxu0 %v647
      %699 = vmatpush1.msra.mxu0 %v646
      %700 = vmatprep.subr.mxu0 %v650
      %701 = vmatpush1.msra.mxu0 %v649
      %702 = vmatprep.subr.mxu0 %v653
      %703 = vmatpush1.msra.mxu0 %v652
      %704 = vmatprep.subr.mxu0 0.0
      %705 = vmatpush1.msra.mxu0 0.0
      %706 = vmatprep.subr.mxu0 0.0
      %707 = vmatpush1.msra.mxu0 0.0
      %708 = vmatprep.subr.mxu0 0.0
      %709 = vmatpush1.msra.mxu0 0.0
      %710 = vmatprep.subr.mxu0 0.0
      %711 = vmatpush1.msra.mxu0 0.0
      %712 = vmatprep.subr.mxu0 0.0
      %713 = vmatpush1.msra.mxu0 0.0
      %714 = vmatprep.subr.mxu0 0.0
      %715 = vmatpush1.msra.mxu0 0.0
      %716 = vmatprep.subr.mxu0 0.0
      %717 = vmatpush1.msra.mxu0 0.0
      %718 = vmatprep.subr.mxu0 0.0
      %719 = vmatpush1.msra.mxu0 0.0
      %720 = vmatprep.subr.mxu0 0.0
      %721 = vmatpush1.msra.mxu0 0.0
      %722 = vmatprep.subr.mxu0 0.0
      %723 = vmatpush1.msra.mxu0 0.0
      %724 = vmatprep.subr.mxu0 0.0
      %725 = vmatpush1.msra.mxu0 0.0
      %726 = vmatprep.subr.mxu0 0.0
      %727 = vmatpush1.msra.mxu0 0.0
      %728 = vmatprep.subr.mxu0 0.0
      %729 = vmatpush1.msra.mxu0 0.0
      %730 = vmatprep.subr.mxu0 0.0
      %731 = vmatpush1.msra.mxu0 0.0
      %732 = vmatprep.subr.mxu0 0.0
      %733 = vmatpush1.msra.mxu0 0.0
      %734 = vmatprep.subr.mxu0 0.0
      %735 = vmatpush1.msra.mxu0 0.0
      %736 = vmatprep.mubr.f32.mxu0 0.0
      %737 = vmatmul.mubr.f32.gmra.mrb[0].mxu0 %v599
      %v738 = vpop.f32.mrb[0].mxu0
      %v739 = vadd.f32 %v660, %v738
      %v740 = vpop.f32.mrb[0].mxu0
      %v741 = vadd.f32 %v664, %v740
      %742 = vmatprep.mubr.f32.mxu0 0.0
      %743 = vmatmul.mubr.f32.gmra.mrb[0].mxu0 %v600
      %v744 = vpop.f32.mrb[0].mxu0
      %v745 = vadd.f32 %v660, %v744
      %v746 = vpop.f32.mrb[0].mxu0
      %v747 = vadd.f32 %v664, %v746
      %748 = vmatprep.mubr.f32.mxu0 0.0
      %749 = vmatmul.mubr.f32.gmra.mrb[0].mxu0 %v601
      %v750 = vpop.f32.mrb[0].mxu0
      %v751 = vadd.f32 %v660, %v750
      %v752 = vpop.f32.mrb[0].mxu0
      %v753 = vadd.f32 %v664, %v752
      %754 = vmatprep.mubr.f32.mxu0 0.0
      %755 = vmatmul.mubr.f32.gmra.mrb[0].mxu0 %v602
      %v756 = vpop.f32.mrb[0].mxu0
      %v757 = vadd.f32 %v660, %v756
      %v758 = vpop.f32.mrb[0].mxu0
      %v759 = vadd.f32 %v664, %v758
      %760 = vmatprep.mubr.f32.mxu0 0.0
      %761 = vmatmul.mubr.f32.gmra.mrb[0].mxu0 %v603
      %v762 = vpop.f32.mrb[0].mxu0
      %v763 = vadd.f32 %v660, %v762
      %v764 = vpop.f32.mrb[0].mxu0
      %v765 = vadd.f32 %v664, %v764
      %766 = vmatprep.mubr.f32.mxu0 0.0
      %767 = vmatmul.mubr.f32.gmra.mrb[0].mxu0 %v604
      %v768 = vpop.f32.mrb[0].mxu0
      %v769 = vadd.f32 %v660, %v768
      %v770 = vpop.f32.mrb[0].mxu0
      %v771 = vadd.f32 %v664, %v770
      %772 = vmatprep.mubr.f32.mxu0 0.0
      %773 = vmatmul.mubr.f32.gmra.mrb[0].mxu0 %v605
      %v774 = vpop.f32.mrb[0].mxu0
      %v775 = vadd.f32 %v660, %v774
      %v776 = vpop.f32.mrb[0].mxu0
      %v777 = vadd.f32 %v664, %v776
      %778 = vmatprep.mubr.f32.mxu0 0.0
      %779 = vmatmul.mubr.f32.gmra.mrb[0].mxu0 %v606
      %v780 = vpop.f32.mrb[0].mxu0
      %v781 = vadd.f32 %v660, %v780
      %v782 = vpop.f32.mrb[0].mxu0
      %v783 = vadd.f32 %v664, %v782
      %784 = vdwg.mxu0
      %785 = vmatprep.subr.mxu0 0.0
      %786 = vmatpush1.msra.mxu0 %v609
      %787 = vmatprep.subr.mxu0 0.0
      %788 = vmatpush1.msra.mxu0 %v612
      %789 = vmatprep.subr.mxu0 0.0
      %790 = vmatpush1.msra.mxu0 %v615
      %791 = vmatprep.subr.mxu0 0.0
      %792 = vmatpush1.msra.mxu0 %v618
      %793 = vmatprep.subr.mxu0 0.0
      %794 = vmatpush1.msra.mxu0 %v621
      %795 = vmatprep.subr.mxu0 0.0
      %796 = vmatpush1.msra.mxu0 %v624
      %797 = vmatprep.subr.mxu0 0.0
      %798 = vmatpush1.msra.mxu0 %v627
      %799 = vmatprep.subr.mxu0 0.0
      %800 = vmatpush1.msra.mxu0 %v630
      %801 = vmatprep.subr.mxu0 0.0
      %802 = vmatpush1.msra.mxu0 %v633
      %803 = vmatprep.subr.mxu0 0.0
      %804 = vmatpush1.msra.mxu0 %v636
      %805 = vmatprep.subr.mxu0 0.0
      %806 = vmatpush1.msra.mxu0 %v639
      %807 = vmatprep.subr.mxu0 0.0
      %808 = vmatpush1.msra.mxu0 %v642
      %809 = vmatprep.subr.mxu0 0.0
      %810 = vmatpush1.msra.mxu0 %v645
      %811 = vmatprep.subr.mxu0 0.0
      %812 = vmatpush1.msra.mxu0 %v648
      %813 = vmatprep.subr.mxu0 0.0
      %814 = vmatpush1.msra.mxu0 %v651
      %815 = vmatprep.subr.mxu0 0.0
      %816 = vmatpush1.msra.mxu0 %v654
      %817 = vmatprep.subr.mxu0 0.0
      %818 = vmatpush1.msra.mxu0 0.0
      %819 = vmatprep.subr.mxu0 0.0
      %820 = vmatpush1.msra.mxu0 0.0
      %821 = vmatprep.subr.mxu0 0.0
      %822 = vmatpush1.msra.mxu0 0.0
      %823 = vmatprep.subr.mxu0 0.0
      %824 = vmatpush1.msra.mxu0 0.0
      %825 = vmatprep.subr.mxu0 0.0
      %826 = vmatpush1.msra.mxu0 0.0
      %827 = vmatprep.subr.mxu0 0.0
      %828 = vmatpush1.msra.mxu0 0.0
      %829 = vmatprep.subr.mxu0 0.0
      %830 = vmatpush1.msra.mxu0 0.0
      %831 = vmatprep.subr.mxu0 0.0
      %832 = vmatpush1.msra.mxu0 0.0
      %833 = vmatprep.subr.mxu0 0.0
      %834 = vmatpush1.msra.mxu0 0.0
      %835 = vmatprep.subr.mxu0 0.0
      %836 = vmatpush1.msra.mxu0 0.0
      %837 = vmatprep.subr.mxu0 0.0
      %838 = vmatpush1.msra.mxu0 0.0
      %839 = vmatprep.subr.mxu0 0.0
      %840 = vmatpush1.msra.mxu0 0.0
      %841 = vmatprep.subr.mxu0 0.0
      %842 = vmatpush1.msra.mxu0 0.0
      %843 = vmatprep.subr.mxu0 0.0
      %844 = vmatpush1.msra.mxu0 0.0
      %845 = vmatprep.subr.mxu0 0.0
      %846 = vmatpush1.msra.mxu0 0.0
      %847 = vmatprep.subr.mxu0 0.0
      %848 = vmatpush1.msra.mxu0 0.0
      %849 = vmatprep.mubr.f32.mxu0 0.0
      %850 = vmatmul.mubr.f32.gmra.mrb[0].mxu0 %v599
      %v851 = vpop.f32.mrb[0].mxu0
      %v852 = vadd.f32 %v668, %v851
      %v853 = vpop.f32.mrb[0].mxu0
      %854 = vmatprep.mubr.f32.mxu0 0.0
      %855 = vmatmul.mubr.f32.gmra.mrb[0].mxu0 %v600
      %v856 = vpop.f32.mrb[0].mxu0
      %v857 = vadd.f32 %v668, %v856
      %v858 = vpop.f32.mrb[0].mxu0
      %859 = vmatprep.mubr.f32.mxu0 0.0
      %860 = vmatmul.mubr.f32.gmra.mrb[0].mxu0 %v601
      %v861 = vpop.f32.mrb[0].mxu0
      %v862 = vadd.f32 %v668, %v861
      %v863 = vpop.f32.mrb[0].mxu0
      %864 = vmatprep.mubr.f32.mxu0 0.0
      %865 = vmatmul.mubr.f32.gmra.mrb[0].mxu0 %v602
      %v866 = vpop.f32.mrb[0].mxu0
      %v867 = vadd.f32 %v668, %v866
      %v868 = vpop.f32.mrb[0].mxu0
      %869 = vmatprep.mubr.f32.mxu0 0.0
      %870 = vmatmul.mubr.f32.gmra.mrb[0].mxu0 %v603
      %v871 = vpop.f32.mrb[0].mxu0
      %v872 = vadd.f32 %v668, %v871
      %v873 = vpop.f32.mrb[0].mxu0
      %874 = vmatprep.mubr.f32.mxu0 0.0
      %875 = vmatmul.mubr.f32.gmra.mrb[0].mxu0 %v604
      %v876 = vpop.f32.mrb[0].mxu0
      %v877 = vadd.f32 %v668, %v876
      %v878 = vpop.f32.mrb[0].mxu0
      %879 = vmatprep.mubr.f32.mxu0 0.0
      %880 = vmatmul.mubr.f32.gmra.mrb[0].mxu0 %v605
      %v881 = vpop.f32.mrb[0].mxu0
      %v882 = vadd.f32 %v668, %v881
      %v883 = vpop.f32.mrb[0].mxu0
      %884 = vmatprep.mubr.f32.mxu0 0.0
      %885 = vmatmul.mubr.f32.gmra.mrb[0].mxu0 %v606
      %v886 = vpop.f32.mrb[0].mxu0
      %v887 = vadd.f32 %v668, %v886
      %v888 = vpop.f32.mrb[0].mxu0
      %889 = vdwg.mxu0
      %898 = vrot.lane.b32.xlu0 %v739, 96
      %v899 = vpop.permute.xlu0 %898
      %900 = vrot.lane.b32.xlu0 %v745, 96
      %v901 = vpop.permute.xlu0 %900
      %902 = vrot.lane.b32.xlu0 %v751, 96
      %v903 = vpop.permute.xlu0 %902
      %904 = vrot.lane.b32.xlu0 %v757, 96
      %v905 = vpop.permute.xlu0 %904
      %906 = vrot.lane.b32.xlu0 %v763, 96
      %v907 = vpop.permute.xlu0 %906
      %908 = vrot.lane.b32.xlu0 %v769, 96
      %v909 = vpop.permute.xlu0 %908
      %910 = vrot.lane.b32.xlu0 %v775, 96
      %v911 = vpop.permute.xlu0 %910
      %912 = vrot.lane.b32.xlu0 %v781, 96
      %v913 = vpop.permute.xlu0 %912
      %922 = vrot.lane.b32.xlu0 %v739, 64
      %v923 = vpop.permute.xlu0 %922
      %924 = vrot.lane.b32.xlu0 %v745, 64
      %v925 = vpop.permute.xlu0 %924
      %926 = vrot.lane.b32.xlu0 %v751, 64
      %v927 = vpop.permute.xlu0 %926
      %928 = vrot.lane.b32.xlu0 %v757, 64
      %v929 = vpop.permute.xlu0 %928
      %930 = vrot.lane.b32.xlu0 %v763, 64
      %v931 = vpop.permute.xlu0 %930
      %932 = vrot.lane.b32.xlu0 %v769, 64
      %v933 = vpop.permute.xlu0 %932
      %934 = vrot.lane.b32.xlu0 %v775, 64
      %v935 = vpop.permute.xlu0 %934
      %936 = vrot.lane.b32.xlu0 %v781, 64
      %v937 = vpop.permute.xlu0 %936
      %946 = vrot.lane.b32.xlu0 %v739, 32
      %v947 = vpop.permute.xlu0 %946
      %948 = vrot.lane.b32.xlu0 %v745, 32
      %v949 = vpop.permute.xlu0 %948
      %950 = vrot.lane.b32.xlu0 %v751, 32
      %v951 = vpop.permute.xlu0 %950
      %952 = vrot.lane.b32.xlu0 %v757, 32
      %v953 = vpop.permute.xlu0 %952
      %954 = vrot.lane.b32.xlu0 %v763, 32
      %v955 = vpop.permute.xlu0 %954
      %956 = vrot.lane.b32.xlu0 %v769, 32
      %v957 = vpop.permute.xlu0 %956
      %958 = vrot.lane.b32.xlu0 %v775, 32
      %v959 = vpop.permute.xlu0 %958
      %960 = vrot.lane.b32.xlu0 %v781, 32
      %v961 = vpop.permute.xlu0 %960
      %v970 = vmul.f32 %v739, 0.17677669
      %v971 = vmul.f32 %v745, 0.17677669
      %v972 = vmul.f32 %v751, 0.17677669
      %v973 = vmul.f32 %v757, 0.17677669
      %v974 = vmul.f32 %v763, 0.17677669
      %v975 = vmul.f32 %v769, 0.17677669
      %v976 = vmul.f32 %v775, 0.17677669
      %v977 = vmul.f32 %v781, 0.17677669
      %v978 = vmul.f32 %v899, 0.17677669
      %v979 = vmul.f32 %v901, 0.17677669
      %v980 = vmul.f32 %v903, 0.17677669
      %v981 = vmul.f32 %v905, 0.17677669
      %v982 = vmul.f32 %v907, 0.17677669
      %v983 = vmul.f32 %v909, 0.17677669
      %v984 = vmul.f32 %v911, 0.17677669
      %v985 = vmul.f32 %v913, 0.17677669
      %v986 = vmul.f32 %v923, 0.17677669
      %v987 = vmul.f32 %v925, 0.17677669
      %v988 = vmul.f32 %v927, 0.17677669
      %v989 = vmul.f32 %v929, 0.17677669
      %v990 = vmul.f32 %v931, 0.17677669
      %v991 = vmul.f32 %v933, 0.17677669
      %v992 = vmul.f32 %v935, 0.17677669
      %v993 = vmul.f32 %v937, 0.17677669
      %v994 = vmul.f32 %v947, 0.17677669
      %v995 = vmul.f32 %v949, 0.17677669
      %v996 = vmul.f32 %v951, 0.17677669
      %v997 = vmul.f32 %v953, 0.17677669
      %v998 = vmul.f32 %v955, 0.17677669
      %v999 = vmul.f32 %v957, 0.17677669
      %v1000 = vmul.f32 %v959, 0.17677669
      %v1001 = vmul.f32 %v961, 0.17677669
      %1010 = vrot.lane.b32.xlu0 %v741, 96
      %v1011 = vpop.permute.xlu0 %1010
      %1012 = vrot.lane.b32.xlu0 %v747, 96
      %v1013 = vpop.permute.xlu0 %1012
      %1014 = vrot.lane.b32.xlu0 %v753, 96
      %v1015 = vpop.permute.xlu0 %1014
      %1016 = vrot.lane.b32.xlu0 %v759, 96
      %v1017 = vpop.permute.xlu0 %1016
      %1018 = vrot.lane.b32.xlu0 %v765, 96
      %v1019 = vpop.permute.xlu0 %1018
      %1020 = vrot.lane.b32.xlu0 %v771, 96
      %v1021 = vpop.permute.xlu0 %1020
      %1022 = vrot.lane.b32.xlu0 %v777, 96
      %v1023 = vpop.permute.xlu0 %1022
      %1024 = vrot.lane.b32.xlu0 %v783, 96
      %v1025 = vpop.permute.xlu0 %1024
      %1026 = vrot.lane.b32.xlu0 %v741, 64
      %v1027 = vpop.permute.xlu0 %1026
      %1028 = vrot.lane.b32.xlu0 %v747, 64
      %v1029 = vpop.permute.xlu0 %1028
      %1030 = vrot.lane.b32.xlu0 %v753, 64
      %v1031 = vpop.permute.xlu0 %1030
      %1032 = vrot.lane.b32.xlu0 %v759, 64
      %v1033 = vpop.permute.xlu0 %1032
      %1034 = vrot.lane.b32.xlu0 %v765, 64
      %v1035 = vpop.permute.xlu0 %1034
      %1036 = vrot.lane.b32.xlu0 %v771, 64
      %v1037 = vpop.permute.xlu0 %1036
      %1038 = vrot.lane.b32.xlu0 %v777, 64
      %v1039 = vpop.permute.xlu0 %1038
      %1040 = vrot.lane.b32.xlu0 %v783, 64
      %v1041 = vpop.permute.xlu0 %1040
      %1042 = vrot.lane.b32.xlu0 %v741, 32
      %v1043 = vpop.permute.xlu0 %1042
      %1044 = vrot.lane.b32.xlu0 %v747, 32
      %v1045 = vpop.permute.xlu0 %1044
      %1046 = vrot.lane.b32.xlu0 %v753, 32
      %v1047 = vpop.permute.xlu0 %1046
      %1048 = vrot.lane.b32.xlu0 %v759, 32
      %v1049 = vpop.permute.xlu0 %1048
      %1050 = vrot.lane.b32.xlu0 %v765, 32
      %v1051 = vpop.permute.xlu0 %1050
      %1052 = vrot.lane.b32.xlu0 %v771, 32
      %v1053 = vpop.permute.xlu0 %1052
      %1054 = vrot.lane.b32.xlu0 %v777, 32
      %v1055 = vpop.permute.xlu0 %1054
      %1056 = vrot.lane.b32.xlu0 %v783, 32
      %v1057 = vpop.permute.xlu0 %1056
      %1066 = vrot.lane.b32.xlu0 %v852, 96
      %v1067 = vpop.permute.xlu0 %1066
      %1068 = vrot.lane.b32.xlu0 %v857, 96
      %v1069 = vpop.permute.xlu0 %1068
      %1070 = vrot.lane.b32.xlu0 %v862, 96
      %v1071 = vpop.permute.xlu0 %1070
      %1072 = vrot.lane.b32.xlu0 %v867, 96
      %v1073 = vpop.permute.xlu0 %1072
      %1074 = vrot.lane.b32.xlu0 %v872, 96
      %v1075 = vpop.permute.xlu0 %1074
      %1076 = vrot.lane.b32.xlu0 %v877, 96
      %v1077 = vpop.permute.xlu0 %1076
      %1078 = vrot.lane.b32.xlu0 %v882, 96
      %v1079 = vpop.permute.xlu0 %1078
      %1080 = vrot.lane.b32.xlu0 %v887, 96
      %v1081 = vpop.permute.xlu0 %1080
      %1090 = vrot.lane.b32.xlu0 %v852, 64
      %v1091 = vpop.permute.xlu0 %1090
      %1092 = vrot.lane.b32.xlu0 %v857, 64
      %v1093 = vpop.permute.xlu0 %1092
      %1094 = vrot.lane.b32.xlu0 %v862, 64
      %v1095 = vpop.permute.xlu0 %1094
      %1096 = vrot.lane.b32.xlu0 %v867, 64
      %v1097 = vpop.permute.xlu0 %1096
      %1098 = vrot.lane.b32.xlu0 %v872, 64
      %v1099 = vpop.permute.xlu0 %1098
      %1100 = vrot.lane.b32.xlu0 %v877, 64
      %v1101 = vpop.permute.xlu0 %1100
      %1102 = vrot.lane.b32.xlu0 %v882, 64
      %v1103 = vpop.permute.xlu0 %1102
      %1104 = vrot.lane.b32.xlu0 %v887, 64
      %v1105 = vpop.permute.xlu0 %1104
      %1114 = vrot.lane.b32.xlu0 %v852, 32
      %v1115 = vpop.permute.xlu0 %1114
      %1116 = vrot.lane.b32.xlu0 %v857, 32
      %v1117 = vpop.permute.xlu0 %1116
      %1118 = vrot.lane.b32.xlu0 %v862, 32
      %v1119 = vpop.permute.xlu0 %1118
      %1120 = vrot.lane.b32.xlu0 %v867, 32
      %v1121 = vpop.permute.xlu0 %1120
      %1122 = vrot.lane.b32.xlu0 %v872, 32
      %v1123 = vpop.permute.xlu0 %1122
      %1124 = vrot.lane.b32.xlu0 %v877, 32
      %v1125 = vpop.permute.xlu0 %1124
      %1126 = vrot.lane.b32.xlu0 %v882, 32
      %v1127 = vpop.permute.xlu0 %1126
      %1128 = vrot.lane.b32.xlu0 %v887, 32
      %v1129 = vpop.permute.xlu0 %1128
      %vm1138 = vcmask 261120
      %v1140 = vsel %vm1138, %v970, 0
      %v1143 = vsel %vm1138, %v971, 0
      %v1146 = vsel %vm1138, %v972, 0
      %v1149 = vsel %vm1138, %v973, 0
      %v1152 = vsel %vm1138, %v974, 0
      %v1155 = vsel %vm1138, %v975, 0
      %v1158 = vsel %vm1138, %v976, 0
      %v1161 = vsel %vm1138, %v977, 0
      %v1163 = vsel %vm1138, %v741, 0
      %v1165 = vsel %vm1138, %v747, 0
      %v1167 = vsel %vm1138, %v753, 0
      %v1169 = vsel %vm1138, %v759, 0
      %v1171 = vsel %vm1138, %v765, 0
      %v1173 = vsel %vm1138, %v771, 0
      %v1175 = vsel %vm1138, %v777, 0
      %v1177 = vsel %vm1138, %v783, 0
      %1179 = vmatprep.subr.mxu0 0.0
      %1180 = vmatpush1.xpose.msra.mxu0 %v1163
      %1181 = vmatprep.subr.mxu0 0.0
      %1182 = vmatpush1.xpose.msra.mxu0 %v1165
      %1183 = vmatprep.subr.mxu0 0.0
      %1184 = vmatpush1.xpose.msra.mxu0 %v1167
      %1185 = vmatprep.subr.mxu0 0.0
      %1186 = vmatpush1.xpose.msra.mxu0 %v1169
      %1187 = vmatprep.subr.mxu0 0.0
      %1188 = vmatpush1.xpose.msra.mxu0 %v1171
      %1189 = vmatprep.subr.mxu0 0.0
      %1190 = vmatpush1.xpose.msra.mxu0 %v1173
      %1191 = vmatprep.subr.mxu0 0.0
      %1192 = vmatpush1.xpose.msra.mxu0 %v1175
      %1193 = vmatprep.subr.mxu0 0.0
      %1194 = vmatpush1.xpose.msra.mxu0 %v1177
      %1195 = vmatprep.subr.mxu0 0.0
      %1196 = vmatpush1.xpose.msra.mxu0 0.0
      %1197 = vmatprep.subr.mxu0 0.0
      %1198 = vmatpush1.xpose.msra.mxu0 0.0
      %1199 = vmatprep.subr.mxu0 0.0
      %1200 = vmatpush1.xpose.msra.mxu0 0.0
      %1201 = vmatprep.subr.mxu0 0.0
      %1202 = vmatpush1.xpose.msra.mxu0 0.0
      %1203 = vmatprep.subr.mxu0 0.0
      %1204 = vmatpush1.xpose.msra.mxu0 0.0
      %1205 = vmatprep.subr.mxu0 0.0
      %1206 = vmatpush1.xpose.msra.mxu0 0.0
      %1207 = vmatprep.subr.mxu0 0.0
      %1208 = vmatpush1.xpose.msra.mxu0 0.0
      %1209 = vmatprep.subr.mxu0 0.0
      %1210 = vmatpush1.xpose.msra.mxu0 0.0
      %1211 = vmatprep.subr.mxu0 0.0
      %1212 = vmatpush1.xpose.msra.mxu0 0.0
      %1213 = vmatprep.subr.mxu0 0.0
      %1214 = vmatpush1.xpose.msra.mxu0 0.0
      %1215 = vmatprep.subr.mxu0 0.0
      %1216 = vmatpush1.xpose.msra.mxu0 0.0
      %1217 = vmatprep.subr.mxu0 0.0
      %1218 = vmatpush1.xpose.msra.mxu0 0.0
      %1219 = vmatprep.subr.mxu0 0.0
      %1220 = vmatpush1.xpose.msra.mxu0 0.0
      %1221 = vmatprep.subr.mxu0 0.0
      %1222 = vmatpush1.xpose.msra.mxu0 0.0
      %1223 = vmatprep.subr.mxu0 0.0
      %1224 = vmatpush1.xpose.msra.mxu0 0.0
      %1225 = vmatprep.subr.mxu0 0.0
      %1226 = vmatpush1.xpose.msra.mxu0 0.0
      %1227 = vmatprep.subr.mxu0 0.0
      %1228 = vmatpush1.xpose.msra.mxu0 0.0
      %1229 = vmatprep.subr.mxu0 0.0
      %1230 = vmatpush1.xpose.msra.mxu0 0.0
      %1231 = vmatprep.subr.mxu0 0.0
      %1232 = vmatpush1.xpose.msra.mxu0 0.0
      %1233 = vmatprep.subr.mxu0 0.0
      %1234 = vmatpush1.xpose.msra.mxu0 0.0
      %1235 = vmatprep.subr.mxu0 0.0
      %1236 = vmatpush1.xpose.msra.mxu0 0.0
      %1237 = vmatprep.subr.mxu0 0.0
      %1238 = vmatpush1.xpose.msra.mxu0 0.0
      %1239 = vmatprep.subr.mxu0 0.0
      %1240 = vmatpush1.xpose.msra.mxu0 0.0
      %1241 = vmatprep.subr.mxu0 0.0
      %1242 = vmatpush1.xpose.msra.mxu0 0.0
      %1243 = vmatprep.mubr.f32.mxu0 0.0
      %1244 = vmatmul.mubr.f32.gmra.mrb[0].mxu0 %v1140
      %v1245 = vpop.f32.mrb[0].mxu0
      %v1246 = vadd.f32 0.0, %v1245
      %v1247 = vpop.f32.mrb[0].mxu0
      %1248 = vmatprep.mubr.f32.mxu0 0.0
      %1249 = vmatmul.mubr.f32.gmra.mrb[0].mxu0 %v1143
      %v1250 = vpop.f32.mrb[0].mxu0
      %v1251 = vadd.f32 0.0, %v1250
      %v1252 = vpop.f32.mrb[0].mxu0
      %1253 = vmatprep.mubr.f32.mxu0 0.0
      %1254 = vmatmul.mubr.f32.gmra.mrb[0].mxu0 %v1146
      %v1255 = vpop.f32.mrb[0].mxu0
      %v1256 = vadd.f32 0.0, %v1255
      %v1257 = vpop.f32.mrb[0].mxu0
      %1258 = vmatprep.mubr.f32.mxu0 0.0
      %1259 = vmatmul.mubr.f32.gmra.mrb[0].mxu0 %v1149
      %v1260 = vpop.f32.mrb[0].mxu0
      %v1261 = vadd.f32 0.0, %v1260
      %v1262 = vpop.f32.mrb[0].mxu0
      %1263 = vmatprep.mubr.f32.mxu0 0.0
      %1264 = vmatmul.mubr.f32.gmra.mrb[0].mxu0 %v1152
      %v1265 = vpop.f32.mrb[0].mxu0
      %v1266 = vadd.f32 0.0, %v1265
      %v1267 = vpop.f32.mrb[0].mxu0
      %1268 = vmatprep.mubr.f32.mxu0 0.0
      %1269 = vmatmul.mubr.f32.gmra.mrb[0].mxu0 %v1155
      %v1270 = vpop.f32.mrb[0].mxu0
      %v1271 = vadd.f32 0.0, %v1270
      %v1272 = vpop.f32.mrb[0].mxu0
      %1273 = vmatprep.mubr.f32.mxu0 0.0
      %1274 = vmatmul.mubr.f32.gmra.mrb[0].mxu0 %v1158
      %v1275 = vpop.f32.mrb[0].mxu0
      %v1276 = vadd.f32 0.0, %v1275
      %v1277 = vpop.f32.mrb[0].mxu0
      %1278 = vmatprep.mubr.f32.mxu0 0.0
      %1279 = vmatmul.mubr.f32.gmra.mrb[0].mxu0 %v1161
      %v1280 = vpop.f32.mrb[0].mxu0
      %v1281 = vadd.f32 0.0, %v1280
      %v1282 = vpop.f32.mrb[0].mxu0
      %1283 = vdwg.mxu0
      %v1285 = vsel %vm1138, %v978, 0
      %v1288 = vsel %vm1138, %v979, 0
      %v1291 = vsel %vm1138, %v980, 0
      %v1294 = vsel %vm1138, %v981, 0
      %v1297 = vsel %vm1138, %v982, 0
      %v1300 = vsel %vm1138, %v983, 0
      %v1303 = vsel %vm1138, %v984, 0
      %v1306 = vsel %vm1138, %v985, 0
      %v1308 = vsel %vm1138, %v1011, 0
      %v1310 = vsel %vm1138, %v1013, 0
      %v1312 = vsel %vm1138, %v1015, 0
      %v1314 = vsel %vm1138, %v1017, 0
      %v1316 = vsel %vm1138, %v1019, 0
      %v1318 = vsel %vm1138, %v1021, 0
      %v1320 = vsel %vm1138, %v1023, 0
      %v1322 = vsel %vm1138, %v1025, 0
      %1324 = vmatprep.subr.mxu0 0.0
      %1325 = vmatpush1.xpose.msra.mxu0 %v1308
      %1326 = vmatprep.subr.mxu0 0.0
      %1327 = vmatpush1.xpose.msra.mxu0 %v1310
      %1328 = vmatprep.subr.mxu0 0.0
      %1329 = vmatpush1.xpose.msra.mxu0 %v1312
      %1330 = vmatprep.subr.mxu0 0.0
      %1331 = vmatpush1.xpose.msra.mxu0 %v1314
      %1332 = vmatprep.subr.mxu0 0.0
      %1333 = vmatpush1.xpose.msra.mxu0 %v1316
      %1334 = vmatprep.subr.mxu0 0.0
      %1335 = vmatpush1.xpose.msra.mxu0 %v1318
      %1336 = vmatprep.subr.mxu0 0.0
      %1337 = vmatpush1.xpose.msra.mxu0 %v1320
      %1338 = vmatprep.subr.mxu0 0.0
      %1339 = vmatpush1.xpose.msra.mxu0 %v1322
      %1340 = vmatprep.subr.mxu0 0.0
      %1341 = vmatpush1.xpose.msra.mxu0 0.0
      %1342 = vmatprep.subr.mxu0 0.0
      %1343 = vmatpush1.xpose.msra.mxu0 0.0
      %1344 = vmatprep.subr.mxu0 0.0
      %1345 = vmatpush1.xpose.msra.mxu0 0.0
      %1346 = vmatprep.subr.mxu0 0.0
      %1347 = vmatpush1.xpose.msra.mxu0 0.0
      %1348 = vmatprep.subr.mxu0 0.0
      %1349 = vmatpush1.xpose.msra.mxu0 0.0
      %1350 = vmatprep.subr.mxu0 0.0
      %1351 = vmatpush1.xpose.msra.mxu0 0.0
      %1352 = vmatprep.subr.mxu0 0.0
      %1353 = vmatpush1.xpose.msra.mxu0 0.0
      %1354 = vmatprep.subr.mxu0 0.0
      %1355 = vmatpush1.xpose.msra.mxu0 0.0
      %1356 = vmatprep.subr.mxu0 0.0
      %1357 = vmatpush1.xpose.msra.mxu0 0.0
      %1358 = vmatprep.subr.mxu0 0.0
      %1359 = vmatpush1.xpose.msra.mxu0 0.0
      %1360 = vmatprep.subr.mxu0 0.0
      %1361 = vmatpush1.xpose.msra.mxu0 0.0
      %1362 = vmatprep.subr.mxu0 0.0
      %1363 = vmatpush1.xpose.msra.mxu0 0.0
      %1364 = vmatprep.subr.mxu0 0.0
      %1365 = vmatpush1.xpose.msra.mxu0 0.0
      %1366 = vmatprep.subr.mxu0 0.0
      %1367 = vmatpush1.xpose.msra.mxu0 0.0
      %1368 = vmatprep.subr.mxu0 0.0
      %1369 = vmatpush1.xpose.msra.mxu0 0.0
      %1370 = vmatprep.subr.mxu0 0.0
      %1371 = vmatpush1.xpose.msra.mxu0 0.0
      %1372 = vmatprep.subr.mxu0 0.0
      %1373 = vmatpush1.xpose.msra.mxu0 0.0
      %1374 = vmatprep.subr.mxu0 0.0
      %1375 = vmatpush1.xpose.msra.mxu0 0.0
      %1376 = vmatprep.subr.mxu0 0.0
      %1377 = vmatpush1.xpose.msra.mxu0 0.0
      %1378 = vmatprep.subr.mxu0 0.0
      %1379 = vmatpush1.xpose.msra.mxu0 0.0
      %1380 = vmatprep.subr.mxu0 0.0
      %1381 = vmatpush1.xpose.msra.mxu0 0.0
      %1382 = vmatprep.subr.mxu0 0.0
      %1383 = vmatpush1.xpose.msra.mxu0 0.0
      %1384 = vmatprep.subr.mxu0 0.0
      %1385 = vmatpush1.xpose.msra.mxu0 0.0
      %1386 = vmatprep.subr.mxu0 0.0
      %1387 = vmatpush1.xpose.msra.mxu0 0.0
      %1388 = vmatprep.mubr.f32.mxu0 0.0
      %1389 = vmatmul.mubr.f32.gmra.mrb[0].mxu0 %v1285
      %v1390 = vpop.f32.mrb[0].mxu0
      %v1391 = vadd.f32 0.0, %v1390
      %v1392 = vpop.f32.mrb[0].mxu0
      %1393 = vmatprep.mubr.f32.mxu0 0.0
      %1394 = vmatmul.mubr.f32.gmra.mrb[0].mxu0 %v1288
      %v1395 = vpop.f32.mrb[0].mxu0
      %v1396 = vadd.f32 0.0, %v1395
      %v1397 = vpop.f32.mrb[0].mxu0
      %1398 = vmatprep.mubr.f32.mxu0 0.0
      %1399 = vmatmul.mubr.f32.gmra.mrb[0].mxu0 %v1291
      %v1400 = vpop.f32.mrb[0].mxu0
      %v1401 = vadd.f32 0.0, %v1400
      %v1402 = vpop.f32.mrb[0].mxu0
      %1403 = vmatprep.mubr.f32.mxu0 0.0
      %1404 = vmatmul.mubr.f32.gmra.mrb[0].mxu0 %v1294
      %v1405 = vpop.f32.mrb[0].mxu0
      %v1406 = vadd.f32 0.0, %v1405
      %v1407 = vpop.f32.mrb[0].mxu0
      %1408 = vmatprep.mubr.f32.mxu0 0.0
      %1409 = vmatmul.mubr.f32.gmra.mrb[0].mxu0 %v1297
      %v1410 = vpop.f32.mrb[0].mxu0
      %v1411 = vadd.f32 0.0, %v1410
      %v1412 = vpop.f32.mrb[0].mxu0
      %1413 = vmatprep.mubr.f32.mxu0 0.0
      %1414 = vmatmul.mubr.f32.gmra.mrb[0].mxu0 %v1300
      %v1415 = vpop.f32.mrb[0].mxu0
      %v1416 = vadd.f32 0.0, %v1415
      %v1417 = vpop.f32.mrb[0].mxu0
      %1418 = vmatprep.mubr.f32.mxu0 0.0
      %1419 = vmatmul.mubr.f32.gmra.mrb[0].mxu0 %v1303
      %v1420 = vpop.f32.mrb[0].mxu0
      %v1421 = vadd.f32 0.0, %v1420
      %v1422 = vpop.f32.mrb[0].mxu0
      %1423 = vmatprep.mubr.f32.mxu0 0.0
      %1424 = vmatmul.mubr.f32.gmra.mrb[0].mxu0 %v1306
      %v1425 = vpop.f32.mrb[0].mxu0
      %v1426 = vadd.f32 0.0, %v1425
      %v1427 = vpop.f32.mrb[0].mxu0
      %1428 = vdwg.mxu0
      %v1430 = vsel %vm1138, %v986, 0
      %v1433 = vsel %vm1138, %v987, 0
      %v1436 = vsel %vm1138, %v988, 0
      %v1439 = vsel %vm1138, %v989, 0
      %v1442 = vsel %vm1138, %v990, 0
      %v1445 = vsel %vm1138, %v991, 0
      %v1448 = vsel %vm1138, %v992, 0
      %v1451 = vsel %vm1138, %v993, 0
      %v1453 = vsel %vm1138, %v1027, 0
      %v1455 = vsel %vm1138, %v1029, 0
      %v1457 = vsel %vm1138, %v1031, 0
      %v1459 = vsel %vm1138, %v1033, 0
      %v1461 = vsel %vm1138, %v1035, 0
      %v1463 = vsel %vm1138, %v1037, 0
      %v1465 = vsel %vm1138, %v1039, 0
      %v1467 = vsel %vm1138, %v1041, 0
      %1469 = vmatprep.subr.mxu0 0.0
      %1470 = vmatpush1.xpose.msra.mxu0 %v1453
      %1471 = vmatprep.subr.mxu0 0.0
      %1472 = vmatpush1.xpose.msra.mxu0 %v1455
      %1473 = vmatprep.subr.mxu0 0.0
      %1474 = vmatpush1.xpose.msra.mxu0 %v1457
      %1475 = vmatprep.subr.mxu0 0.0
      %1476 = vmatpush1.xpose.msra.mxu0 %v1459
      %1477 = vmatprep.subr.mxu0 0.0
      %1478 = vmatpush1.xpose.msra.mxu0 %v1461
      %1479 = vmatprep.subr.mxu0 0.0
      %1480 = vmatpush1.xpose.msra.mxu0 %v1463
      %1481 = vmatprep.subr.mxu0 0.0
      %1482 = vmatpush1.xpose.msra.mxu0 %v1465
      %1483 = vmatprep.subr.mxu0 0.0
      %1484 = vmatpush1.xpose.msra.mxu0 %v1467
      %1485 = vmatprep.subr.mxu0 0.0
      %1486 = vmatpush1.xpose.msra.mxu0 0.0
      %1487 = vmatprep.subr.mxu0 0.0
      %1488 = vmatpush1.xpose.msra.mxu0 0.0
      %1489 = vmatprep.subr.mxu0 0.0
      %1490 = vmatpush1.xpose.msra.mxu0 0.0
      %1491 = vmatprep.subr.mxu0 0.0
      %1492 = vmatpush1.xpose.msra.mxu0 0.0
      %1493 = vmatprep.subr.mxu0 0.0
      %1494 = vmatpush1.xpose.msra.mxu0 0.0
      %1495 = vmatprep.subr.mxu0 0.0
      %1496 = vmatpush1.xpose.msra.mxu0 0.0
      %1497 = vmatprep.subr.mxu0 0.0
      %1498 = vmatpush1.xpose.msra.mxu0 0.0
      %1499 = vmatprep.subr.mxu0 0.0
      %1500 = vmatpush1.xpose.msra.mxu0 0.0
      %1501 = vmatprep.subr.mxu0 0.0
      %1502 = vmatpush1.xpose.msra.mxu0 0.0
      %1503 = vmatprep.subr.mxu0 0.0
      %1504 = vmatpush1.xpose.msra.mxu0 0.0
      %1505 = vmatprep.subr.mxu0 0.0
      %1506 = vmatpush1.xpose.msra.mxu0 0.0
      %1507 = vmatprep.subr.mxu0 0.0
      %1508 = vmatpush1.xpose.msra.mxu0 0.0
      %1509 = vmatprep.subr.mxu0 0.0
      %1510 = vmatpush1.xpose.msra.mxu0 0.0
      %1511 = vmatprep.subr.mxu0 0.0
      %1512 = vmatpush1.xpose.msra.mxu0 0.0
      %1513 = vmatprep.subr.mxu0 0.0
      %1514 = vmatpush1.xpose.msra.mxu0 0.0
      %1515 = vmatprep.subr.mxu0 0.0
      %1516 = vmatpush1.xpose.msra.mxu0 0.0
      %1517 = vmatprep.subr.mxu0 0.0
      %1518 = vmatpush1.xpose.msra.mxu0 0.0
      %1519 = vmatprep.subr.mxu0 0.0
      %1520 = vmatpush1.xpose.msra.mxu0 0.0
      %1521 = vmatprep.subr.mxu0 0.0
      %1522 = vmatpush1.xpose.msra.mxu0 0.0
      %1523 = vmatprep.subr.mxu0 0.0
      %1524 = vmatpush1.xpose.msra.mxu0 0.0
      %1525 = vmatprep.subr.mxu0 0.0
      %1526 = vmatpush1.xpose.msra.mxu0 0.0
      %1527 = vmatprep.subr.mxu0 0.0
      %1528 = vmatpush1.xpose.msra.mxu0 0.0
      %1529 = vmatprep.subr.mxu0 0.0
      %1530 = vmatpush1.xpose.msra.mxu0 0.0
      %1531 = vmatprep.subr.mxu0 0.0
      %1532 = vmatpush1.xpose.msra.mxu0 0.0
      %1533 = vmatprep.mubr.f32.mxu0 0.0
      %1534 = vmatmul.mubr.f32.gmra.mrb[0].mxu0 %v1430
      %v1535 = vpop.f32.mrb[0].mxu0
      %v1536 = vadd.f32 0.0, %v1535
      %v1537 = vpop.f32.mrb[0].mxu0
      %1538 = vmatprep.mubr.f32.mxu0 0.0
      %1539 = vmatmul.mubr.f32.gmra.mrb[0].mxu0 %v1433
      %v1540 = vpop.f32.mrb[0].mxu0
      %v1541 = vadd.f32 0.0, %v1540
      %v1542 = vpop.f32.mrb[0].mxu0
      %1543 = vmatprep.mubr.f32.mxu0 0.0
      %1544 = vmatmul.mubr.f32.gmra.mrb[0].mxu0 %v1436
      %v1545 = vpop.f32.mrb[0].mxu0
      %v1546 = vadd.f32 0.0, %v1545
      %v1547 = vpop.f32.mrb[0].mxu0
      %1548 = vmatprep.mubr.f32.mxu0 0.0
      %1549 = vmatmul.mubr.f32.gmra.mrb[0].mxu0 %v1439
      %v1550 = vpop.f32.mrb[0].mxu0
      %v1551 = vadd.f32 0.0, %v1550
      %v1552 = vpop.f32.mrb[0].mxu0
      %1553 = vmatprep.mubr.f32.mxu0 0.0
      %1554 = vmatmul.mubr.f32.gmra.mrb[0].mxu0 %v1442
      %v1555 = vpop.f32.mrb[0].mxu0
      %v1556 = vadd.f32 0.0, %v1555
      %v1557 = vpop.f32.mrb[0].mxu0
      %1558 = vmatprep.mubr.f32.mxu0 0.0
      %1559 = vmatmul.mubr.f32.gmra.mrb[0].mxu0 %v1445
      %v1560 = vpop.f32.mrb[0].mxu0
      %v1561 = vadd.f32 0.0, %v1560
      %v1562 = vpop.f32.mrb[0].mxu0
      %1563 = vmatprep.mubr.f32.mxu0 0.0
      %1564 = vmatmul.mubr.f32.gmra.mrb[0].mxu0 %v1448
      %v1565 = vpop.f32.mrb[0].mxu0
      %v1566 = vadd.f32 0.0, %v1565
      %v1567 = vpop.f32.mrb[0].mxu0
      %1568 = vmatprep.mubr.f32.mxu0 0.0
      %1569 = vmatmul.mubr.f32.gmra.mrb[0].mxu0 %v1451
      %v1570 = vpop.f32.mrb[0].mxu0
      %v1571 = vadd.f32 0.0, %v1570
      %v1572 = vpop.f32.mrb[0].mxu0
      %1573 = vdwg.mxu0
      %v1575 = vsel %vm1138, %v994, 0
      %v1578 = vsel %vm1138, %v995, 0
      %v1581 = vsel %vm1138, %v996, 0
      %v1584 = vsel %vm1138, %v997, 0
      %v1587 = vsel %vm1138, %v998, 0
      %v1590 = vsel %vm1138, %v999, 0
      %v1593 = vsel %vm1138, %v1000, 0
      %v1596 = vsel %vm1138, %v1001, 0
      %v1598 = vsel %vm1138, %v1043, 0
      %v1600 = vsel %vm1138, %v1045, 0
      %v1602 = vsel %vm1138, %v1047, 0
      %v1604 = vsel %vm1138, %v1049, 0
      %v1606 = vsel %vm1138, %v1051, 0
      %v1608 = vsel %vm1138, %v1053, 0
      %v1610 = vsel %vm1138, %v1055, 0
      %v1612 = vsel %vm1138, %v1057, 0
      %1614 = vmatprep.subr.mxu0 0.0
      %1615 = vmatpush1.xpose.msra.mxu0 %v1598
      %1616 = vmatprep.subr.mxu0 0.0
      %1617 = vmatpush1.xpose.msra.mxu0 %v1600
      %1618 = vmatprep.subr.mxu0 0.0
      %1619 = vmatpush1.xpose.msra.mxu0 %v1602
      %1620 = vmatprep.subr.mxu0 0.0
      %1621 = vmatpush1.xpose.msra.mxu0 %v1604
      %1622 = vmatprep.subr.mxu0 0.0
      %1623 = vmatpush1.xpose.msra.mxu0 %v1606
      %1624 = vmatprep.subr.mxu0 0.0
      %1625 = vmatpush1.xpose.msra.mxu0 %v1608
      %1626 = vmatprep.subr.mxu0 0.0
      %1627 = vmatpush1.xpose.msra.mxu0 %v1610
      %1628 = vmatprep.subr.mxu0 0.0
      %1629 = vmatpush1.xpose.msra.mxu0 %v1612
      %1630 = vmatprep.subr.mxu0 0.0
      %1631 = vmatpush1.xpose.msra.mxu0 0.0
      %1632 = vmatprep.subr.mxu0 0.0
      %1633 = vmatpush1.xpose.msra.mxu0 0.0
      %1634 = vmatprep.subr.mxu0 0.0
      %1635 = vmatpush1.xpose.msra.mxu0 0.0
      %1636 = vmatprep.subr.mxu0 0.0
      %1637 = vmatpush1.xpose.msra.mxu0 0.0
      %1638 = vmatprep.subr.mxu0 0.0
      %1639 = vmatpush1.xpose.msra.mxu0 0.0
      %1640 = vmatprep.subr.mxu0 0.0
      %1641 = vmatpush1.xpose.msra.mxu0 0.0
      %1642 = vmatprep.subr.mxu0 0.0
      %1643 = vmatpush1.xpose.msra.mxu0 0.0
      %1644 = vmatprep.subr.mxu0 0.0
      %1645 = vmatpush1.xpose.msra.mxu0 0.0
      %1646 = vmatprep.subr.mxu0 0.0
      %1647 = vmatpush1.xpose.msra.mxu0 0.0
      %1648 = vmatprep.subr.mxu0 0.0
      %1649 = vmatpush1.xpose.msra.mxu0 0.0
      %1650 = vmatprep.subr.mxu0 0.0
      %1651 = vmatpush1.xpose.msra.mxu0 0.0
      %1652 = vmatprep.subr.mxu0 0.0
      %1653 = vmatpush1.xpose.msra.mxu0 0.0
      %1654 = vmatprep.subr.mxu0 0.0
      %1655 = vmatpush1.xpose.msra.mxu0 0.0
      %1656 = vmatprep.subr.mxu0 0.0
      %1657 = vmatpush1.xpose.msra.mxu0 0.0
      %1658 = vmatprep.subr.mxu0 0.0
      %1659 = vmatpush1.xpose.msra.mxu0 0.0
      %1660 = vmatprep.subr.mxu0 0.0
      %1661 = vmatpush1.xpose.msra.mxu0 0.0
      %1662 = vmatprep.subr.mxu0 0.0
      %1663 = vmatpush1.xpose.msra.mxu0 0.0
      %1664 = vmatprep.subr.mxu0 0.0
      %1665 = vmatpush1.xpose.msra.mxu0 0.0
      %1666 = vmatprep.subr.mxu0 0.0
      %1667 = vmatpush1.xpose.msra.mxu0 0.0
      %1668 = vmatprep.subr.mxu0 0.0
      %1669 = vmatpush1.xpose.msra.mxu0 0.0
      %1670 = vmatprep.subr.mxu0 0.0
      %1671 = vmatpush1.xpose.msra.mxu0 0.0
      %1672 = vmatprep.subr.mxu0 0.0
      %1673 = vmatpush1.xpose.msra.mxu0 0.0
      %1674 = vmatprep.subr.mxu0 0.0
      %1675 = vmatpush1.xpose.msra.mxu0 0.0
      %1676 = vmatprep.subr.mxu0 0.0
      %1677 = vmatpush1.xpose.msra.mxu0 0.0
      %1678 = vmatprep.mubr.f32.mxu0 0.0
      %1679 = vmatmul.mubr.f32.gmra.mrb[0].mxu0 %v1575
      %v1680 = vpop.f32.mrb[0].mxu0
      %v1681 = vadd.f32 0.0, %v1680
      %v1682 = vpop.f32.mrb[0].mxu0
      %1683 = vmatprep.mubr.f32.mxu0 0.0
      %1684 = vmatmul.mubr.f32.gmra.mrb[0].mxu0 %v1578
      %v1685 = vpop.f32.mrb[0].mxu0
      %v1686 = vadd.f32 0.0, %v1685
      %v1687 = vpop.f32.mrb[0].mxu0
      %1688 = vmatprep.mubr.f32.mxu0 0.0
      %1689 = vmatmul.mubr.f32.gmra.mrb[0].mxu0 %v1581
      %v1690 = vpop.f32.mrb[0].mxu0
      %v1691 = vadd.f32 0.0, %v1690
      %v1692 = vpop.f32.mrb[0].mxu0
      %1693 = vmatprep.mubr.f32.mxu0 0.0
      %1694 = vmatmul.mubr.f32.gmra.mrb[0].mxu0 %v1584
      %v1695 = vpop.f32.mrb[0].mxu0
      %v1696 = vadd.f32 0.0, %v1695
      %v1697 = vpop.f32.mrb[0].mxu0
      %1698 = vmatprep.mubr.f32.mxu0 0.0
      %1699 = vmatmul.mubr.f32.gmra.mrb[0].mxu0 %v1587
      %v1700 = vpop.f32.mrb[0].mxu0
      %v1701 = vadd.f32 0.0, %v1700
      %v1702 = vpop.f32.mrb[0].mxu0
      %1703 = vmatprep.mubr.f32.mxu0 0.0
      %1704 = vmatmul.mubr.f32.gmra.mrb[0].mxu0 %v1590
      %v1705 = vpop.f32.mrb[0].mxu0
      %v1706 = vadd.f32 0.0, %v1705
      %v1707 = vpop.f32.mrb[0].mxu0
      %1708 = vmatprep.mubr.f32.mxu0 0.0
      %1709 = vmatmul.mubr.f32.gmra.mrb[0].mxu0 %v1593
      %v1710 = vpop.f32.mrb[0].mxu0
      %v1711 = vadd.f32 0.0, %v1710
      %v1712 = vpop.f32.mrb[0].mxu0
      %1713 = vmatprep.mubr.f32.mxu0 0.0
      %1714 = vmatmul.mubr.f32.gmra.mrb[0].mxu0 %v1596
      %v1715 = vpop.f32.mrb[0].mxu0
      %v1716 = vadd.f32 0.0, %v1715
      %v1717 = vpop.f32.mrb[0].mxu0
      %1718 = vdwg.mxu0
      %vm1719 = vcmask 523264
      %v1720 = vsel %vm1719, %v1246, -inf
      %1721 = vmax.xlane.f32.xlu0 %v1720
      %v1722 = vpop.xlane.xlu0 %1721
      %v1723 = vsel %vm1719, %v1251, -inf
      %1724 = vmax.xlane.f32.xlu0 %v1723
      %v1725 = vpop.xlane.xlu0 %1724
      %v1726 = vsel %vm1719, %v1256, -inf
      %1727 = vmax.xlane.f32.xlu0 %v1726
      %v1728 = vpop.xlane.xlu0 %1727
      %v1729 = vsel %vm1719, %v1261, -inf
      %1730 = vmax.xlane.f32.xlu0 %v1729
      %v1731 = vpop.xlane.xlu0 %1730
      %v1732 = vsel %vm1719, %v1266, -inf
      %1733 = vmax.xlane.f32.xlu0 %v1732
      %v1734 = vpop.xlane.xlu0 %1733
      %v1735 = vsel %vm1719, %v1271, -inf
      %1736 = vmax.xlane.f32.xlu0 %v1735
      %v1737 = vpop.xlane.xlu0 %1736
      %v1738 = vsel %vm1719, %v1276, -inf
      %1739 = vmax.xlane.f32.xlu0 %v1738
      %v1740 = vpop.xlane.xlu0 %1739
      %v1741 = vsel %vm1719, %v1281, -inf
      %1742 = vmax.xlane.f32.xlu0 %v1741
      %v1743 = vpop.xlane.xlu0 %1742
      %v1744 = vsel %vm1719, %v1391, -inf
      %1745 = vmax.xlane.f32.xlu0 %v1744
      %v1746 = vpop.xlane.xlu0 %1745
      %v1747 = vsel %vm1719, %v1396, -inf
      %1748 = vmax.xlane.f32.xlu0 %v1747
      %v1749 = vpop.xlane.xlu0 %1748
      %v1750 = vsel %vm1719, %v1401, -inf
      %1751 = vmax.xlane.f32.xlu0 %v1750
      %v1752 = vpop.xlane.xlu0 %1751
      %v1753 = vsel %vm1719, %v1406, -inf
      %1754 = vmax.xlane.f32.xlu0 %v1753
      %v1755 = vpop.xlane.xlu0 %1754
      %v1756 = vsel %vm1719, %v1411, -inf
      %1757 = vmax.xlane.f32.xlu0 %v1756
      %v1758 = vpop.xlane.xlu0 %1757
      %v1759 = vsel %vm1719, %v1416, -inf
      %1760 = vmax.xlane.f32.xlu0 %v1759
      %v1761 = vpop.xlane.xlu0 %1760
      %v1762 = vsel %vm1719, %v1421, -inf
      %1763 = vmax.xlane.f32.xlu0 %v1762
      %v1764 = vpop.xlane.xlu0 %1763
      %v1765 = vsel %vm1719, %v1426, -inf
      %1766 = vmax.xlane.f32.xlu0 %v1765
      %v1767 = vpop.xlane.xlu0 %1766
      %v1768 = vsel %vm1719, %v1536, -inf
      %1769 = vmax.xlane.f32.xlu0 %v1768
      %v1770 = vpop.xlane.xlu0 %1769
      %v1771 = vsel %vm1719, %v1541, -inf
      %1772 = vmax.xlane.f32.xlu0 %v1771
      %v1773 = vpop.xlane.xlu0 %1772
      %v1774 = vsel %vm1719, %v1546, -inf
      %1775 = vmax.xlane.f32.xlu0 %v1774
      %v1776 = vpop.xlane.xlu0 %1775
      %v1777 = vsel %vm1719, %v1551, -inf
      %1778 = vmax.xlane.f32.xlu0 %v1777
      %v1779 = vpop.xlane.xlu0 %1778
      %v1780 = vsel %vm1719, %v1556, -inf
      %1781 = vmax.xlane.f32.xlu0 %v1780
      %v1782 = vpop.xlane.xlu0 %1781
      %v1783 = vsel %vm1719, %v1561, -inf
      %1784 = vmax.xlane.f32.xlu0 %v1783
      %v1785 = vpop.xlane.xlu0 %1784
      %v1786 = vsel %vm1719, %v1566, -inf
      %1787 = vmax.xlane.f32.xlu0 %v1786
      %v1788 = vpop.xlane.xlu0 %1787
      %v1789 = vsel %vm1719, %v1571, -inf
      %1790 = vmax.xlane.f32.xlu0 %v1789
      %v1791 = vpop.xlane.xlu0 %1790
      %v1792 = vsel %vm1719, %v1681, -inf
      %1793 = vmax.xlane.f32.xlu0 %v1792
      %v1794 = vpop.xlane.xlu0 %1793
      %v1795 = vsel %vm1719, %v1686, -inf
      %1796 = vmax.xlane.f32.xlu0 %v1795
      %v1797 = vpop.xlane.xlu0 %1796
      %v1798 = vsel %vm1719, %v1691, -inf
      %1799 = vmax.xlane.f32.xlu0 %v1798
      %v1800 = vpop.xlane.xlu0 %1799
      %v1801 = vsel %vm1719, %v1696, -inf
      %1802 = vmax.xlane.f32.xlu0 %v1801
      %v1803 = vpop.xlane.xlu0 %1802
      %v1804 = vsel %vm1719, %v1701, -inf
      %1805 = vmax.xlane.f32.xlu0 %v1804
      %v1806 = vpop.xlane.xlu0 %1805
      %v1807 = vsel %vm1719, %v1706, -inf
      %1808 = vmax.xlane.f32.xlu0 %v1807
      %v1809 = vpop.xlane.xlu0 %1808
      %v1810 = vsel %vm1719, %v1711, -inf
      %1811 = vmax.xlane.f32.xlu0 %v1810
      %v1812 = vpop.xlane.xlu0 %1811
      %v1813 = vsel %vm1719, %v1716, -inf
      %1814 = vmax.xlane.f32.xlu0 %v1813
      %v1815 = vpop.xlane.xlu0 %1814
      %v1816 = vsub.f32 %v1246, %v1722
      %v1817 = vsub.f32 %v1251, %v1725
      %v1818 = vsub.f32 %v1256, %v1728
      %v1819 = vsub.f32 %v1261, %v1731
      %v1820 = vsub.f32 %v1266, %v1734
      %v1821 = vsub.f32 %v1271, %v1737
      %v1822 = vsub.f32 %v1276, %v1740
      %v1823 = vsub.f32 %v1281, %v1743
      %v1824 = vsub.f32 %v1391, %v1746
      %v1825 = vsub.f32 %v1396, %v1749
      %v1826 = vsub.f32 %v1401, %v1752
      %v1827 = vsub.f32 %v1406, %v1755
      %v1828 = vsub.f32 %v1411, %v1758
      %v1829 = vsub.f32 %v1416, %v1761
      %v1830 = vsub.f32 %v1421, %v1764
      %v1831 = vsub.f32 %v1426, %v1767
      %v1832 = vsub.f32 %v1536, %v1770
      %v1833 = vsub.f32 %v1541, %v1773
      %v1834 = vsub.f32 %v1546, %v1776
      %v1835 = vsub.f32 %v1551, %v1779
      %v1836 = vsub.f32 %v1556, %v1782
      %v1837 = vsub.f32 %v1561, %v1785
      %v1838 = vsub.f32 %v1566, %v1788
      %v1839 = vsub.f32 %v1571, %v1791
      %v1840 = vsub.f32 %v1681, %v1794
      %v1841 = vsub.f32 %v1686, %v1797
      %v1842 = vsub.f32 %v1691, %v1800
      %v1843 = vsub.f32 %v1696, %v1803
      %v1844 = vsub.f32 %v1701, %v1806
      %v1845 = vsub.f32 %v1706, %v1809
      %v1846 = vsub.f32 %v1711, %v1812
      %v1847 = vsub.f32 %v1716, %v1815
      %v1848 = vmul.f32 %v1816, 1.442695
      %v1849 = vpow.pop %v1848
      %v1850 = vmul.f32 %v1817, 1.442695
      %v1851 = vpow.pop %v1850
      %v1852 = vmul.f32 %v1818, 1.442695
      %v1853 = vpow.pop %v1852
      %v1854 = vmul.f32 %v1819, 1.442695
      %v1855 = vpow.pop %v1854
      %v1856 = vmul.f32 %v1820, 1.442695
      %v1857 = vpow.pop %v1856
      %v1858 = vmul.f32 %v1821, 1.442695
      %v1859 = vpow.pop %v1858
      %v1860 = vmul.f32 %v1822, 1.442695
      %v1861 = vpow.pop %v1860
      %v1862 = vmul.f32 %v1823, 1.442695
      %v1863 = vpow.pop %v1862
      %v1864 = vmul.f32 %v1824, 1.442695
      %v1865 = vpow.pop %v1864
      %v1866 = vmul.f32 %v1825, 1.442695
      %v1867 = vpow.pop %v1866
      %v1868 = vmul.f32 %v1826, 1.442695
      %v1869 = vpow.pop %v1868
      %v1870 = vmul.f32 %v1827, 1.442695
      %v1871 = vpow.pop %v1870
      %v1872 = vmul.f32 %v1828, 1.442695
      %v1873 = vpow.pop %v1872
      %v1874 = vmul.f32 %v1829, 1.442695
      %v1875 = vpow.pop %v1874
      %v1876 = vmul.f32 %v1830, 1.442695
      %v1877 = vpow.pop %v1876
      %v1878 = vmul.f32 %v1831, 1.442695
      %v1879 = vpow.pop %v1878
      %v1880 = vmul.f32 %v1832, 1.442695
      %v1881 = vpow.pop %v1880
      %v1882 = vmul.f32 %v1833, 1.442695
      %v1883 = vpow.pop %v1882
      %v1884 = vmul.f32 %v1834, 1.442695
      %v1885 = vpow.pop %v1884
      %v1886 = vmul.f32 %v1835, 1.442695
      %v1887 = vpow.pop %v1886
      %v1888 = vmul.f32 %v1836, 1.442695
      %v1889 = vpow.pop %v1888
      %v1890 = vmul.f32 %v1837, 1.442695
      %v1891 = vpow.pop %v1890
      %v1892 = vmul.f32 %v1838, 1.442695
      %v1893 = vpow.pop %v1892
      %v1894 = vmul.f32 %v1839, 1.442695
      %v1895 = vpow.pop %v1894
      %v1896 = vmul.f32 %v1840, 1.442695
      %v1897 = vpow.pop %v1896
      %v1898 = vmul.f32 %v1841, 1.442695
      %v1899 = vpow.pop %v1898
      %v1900 = vmul.f32 %v1842, 1.442695
      %v1901 = vpow.pop %v1900
      %v1902 = vmul.f32 %v1843, 1.442695
      %v1903 = vpow.pop %v1902
      %v1904 = vmul.f32 %v1844, 1.442695
      %v1905 = vpow.pop %v1904
      %v1906 = vmul.f32 %v1845, 1.442695
      %v1907 = vpow.pop %v1906
      %v1908 = vmul.f32 %v1846, 1.442695
      %v1909 = vpow.pop %v1908
      %v1910 = vmul.f32 %v1847, 1.442695
      %v1911 = vpow.pop %v1910
      %v1912 = vsel %vm1719, %v1849, 0.0
      %1913 = vadd.xlane.f32.xlu0 %v1912
      %v1914 = vpop.xlane.xlu0 %1913
      %v1915 = vsel %vm1719, %v1851, 0.0
      %1916 = vadd.xlane.f32.xlu0 %v1915
      %v1917 = vpop.xlane.xlu0 %1916
      %v1918 = vsel %vm1719, %v1853, 0.0
      %1919 = vadd.xlane.f32.xlu0 %v1918
      %v1920 = vpop.xlane.xlu0 %1919
      %v1921 = vsel %vm1719, %v1855, 0.0
      %1922 = vadd.xlane.f32.xlu0 %v1921
      %v1923 = vpop.xlane.xlu0 %1922
      %v1924 = vsel %vm1719, %v1857, 0.0
      %1925 = vadd.xlane.f32.xlu0 %v1924
      %v1926 = vpop.xlane.xlu0 %1925
      %v1927 = vsel %vm1719, %v1859, 0.0
      %1928 = vadd.xlane.f32.xlu0 %v1927
      %v1929 = vpop.xlane.xlu0 %1928
      %v1930 = vsel %vm1719, %v1861, 0.0
      %1931 = vadd.xlane.f32.xlu0 %v1930
      %v1932 = vpop.xlane.xlu0 %1931
      %v1933 = vsel %vm1719, %v1863, 0.0
      %1934 = vadd.xlane.f32.xlu0 %v1933
      %v1935 = vpop.xlane.xlu0 %1934
      %v1936 = vsel %vm1719, %v1865, 0.0
      %1937 = vadd.xlane.f32.xlu0 %v1936
      %v1938 = vpop.xlane.xlu0 %1937
      %v1939 = vsel %vm1719, %v1867, 0.0
      %1940 = vadd.xlane.f32.xlu0 %v1939
      %v1941 = vpop.xlane.xlu0 %1940
      %v1942 = vsel %vm1719, %v1869, 0.0
      %1943 = vadd.xlane.f32.xlu0 %v1942
      %v1944 = vpop.xlane.xlu0 %1943
      %v1945 = vsel %vm1719, %v1871, 0.0
      %1946 = vadd.xlane.f32.xlu0 %v1945
      %v1947 = vpop.xlane.xlu0 %1946
      %v1948 = vsel %vm1719, %v1873, 0.0
      %1949 = vadd.xlane.f32.xlu0 %v1948
      %v1950 = vpop.xlane.xlu0 %1949
      %v1951 = vsel %vm1719, %v1875, 0.0
      %1952 = vadd.xlane.f32.xlu0 %v1951
      %v1953 = vpop.xlane.xlu0 %1952
      %v1954 = vsel %vm1719, %v1877, 0.0
      %1955 = vadd.xlane.f32.xlu0 %v1954
      %v1956 = vpop.xlane.xlu0 %1955
      %v1957 = vsel %vm1719, %v1879, 0.0
      %1958 = vadd.xlane.f32.xlu0 %v1957
      %v1959 = vpop.xlane.xlu0 %1958
      %v1960 = vsel %vm1719, %v1881, 0.0
      %1961 = vadd.xlane.f32.xlu0 %v1960
      %v1962 = vpop.xlane.xlu0 %1961
      %v1963 = vsel %vm1719, %v1883, 0.0
      %1964 = vadd.xlane.f32.xlu0 %v1963
      %v1965 = vpop.xlane.xlu0 %1964
      %v1966 = vsel %vm1719, %v1885, 0.0
      %1967 = vadd.xlane.f32.xlu0 %v1966
      %v1968 = vpop.xlane.xlu0 %1967
      %v1969 = vsel %vm1719, %v1887, 0.0
      %1970 = vadd.xlane.f32.xlu0 %v1969
      %v1971 = vpop.xlane.xlu0 %1970
      %v1972 = vsel %vm1719, %v1889, 0.0
      %1973 = vadd.xlane.f32.xlu0 %v1972
      %v1974 = vpop.xlane.xlu0 %1973
      %v1975 = vsel %vm1719, %v1891, 0.0
      %1976 = vadd.xlane.f32.xlu0 %v1975
      %v1977 = vpop.xlane.xlu0 %1976
      %v1978 = vsel %vm1719, %v1893, 0.0
      %1979 = vadd.xlane.f32.xlu0 %v1978
      %v1980 = vpop.xlane.xlu0 %1979
      %v1981 = vsel %vm1719, %v1895, 0.0
      %1982 = vadd.xlane.f32.xlu0 %v1981
      %v1983 = vpop.xlane.xlu0 %1982
      %v1984 = vsel %vm1719, %v1897, 0.0
      %1985 = vadd.xlane.f32.xlu0 %v1984
      %v1986 = vpop.xlane.xlu0 %1985
      %v1987 = vsel %vm1719, %v1899, 0.0
      %1988 = vadd.xlane.f32.xlu0 %v1987
      %v1989 = vpop.xlane.xlu0 %1988
      %v1990 = vsel %vm1719, %v1901, 0.0
      %1991 = vadd.xlane.f32.xlu0 %v1990
      %v1992 = vpop.xlane.xlu0 %1991
      %v1993 = vsel %vm1719, %v1903, 0.0
      %1994 = vadd.xlane.f32.xlu0 %v1993
      %v1995 = vpop.xlane.xlu0 %1994
      %v1996 = vsel %vm1719, %v1905, 0.0
      %1997 = vadd.xlane.f32.xlu0 %v1996
      %v1998 = vpop.xlane.xlu0 %1997
      %v1999 = vsel %vm1719, %v1907, 0.0
      %2000 = vadd.xlane.f32.xlu0 %v1999
      %v2001 = vpop.xlane.xlu0 %2000
      %v2002 = vsel %vm1719, %v1909, 0.0
      %2003 = vadd.xlane.f32.xlu0 %v2002
      %v2004 = vpop.xlane.xlu0 %2003
      %v2005 = vsel %vm1719, %v1911, 0.0
      %2006 = vadd.xlane.f32.xlu0 %v2005
      %v2007 = vpop.xlane.xlu0 %2006
      %v2008 = vrcp.pop %v1914
      %v2009 = vrcp.pop %v1917
      %v2010 = vrcp.pop %v1920
      %v2011 = vrcp.pop %v1923
      %v2012 = vrcp.pop %v1926
      %v2013 = vrcp.pop %v1929
      %v2014 = vrcp.pop %v1932
      %v2015 = vrcp.pop %v1935
      %v2016 = vrcp.pop %v1938
      %v2017 = vrcp.pop %v1941
      %v2018 = vrcp.pop %v1944
      %v2019 = vrcp.pop %v1947
      %v2020 = vrcp.pop %v1950
      %v2021 = vrcp.pop %v1953
      %v2022 = vrcp.pop %v1956
      %v2023 = vrcp.pop %v1959
      %v2024 = vrcp.pop %v1962
      %v2025 = vrcp.pop %v1965
      %v2026 = vrcp.pop %v1968
      %v2027 = vrcp.pop %v1971
      %v2028 = vrcp.pop %v1974
      %v2029 = vrcp.pop %v1977
      %v2030 = vrcp.pop %v1980
      %v2031 = vrcp.pop %v1983
      %v2032 = vrcp.pop %v1986
      %v2033 = vrcp.pop %v1989
      %v2034 = vrcp.pop %v1992
      %v2035 = vrcp.pop %v1995
      %v2036 = vrcp.pop %v1998
      %v2037 = vrcp.pop %v2001
      %v2038 = vrcp.pop %v2004
      %v2039 = vrcp.pop %v2007
      %v2040 = vmul.f32 %v1849, %v2008
      %v2041 = vmul.f32 %v1851, %v2009
      %v2042 = vmul.f32 %v1853, %v2010
      %v2043 = vmul.f32 %v1855, %v2011
      %v2044 = vmul.f32 %v1857, %v2012
      %v2045 = vmul.f32 %v1859, %v2013
      %v2046 = vmul.f32 %v1861, %v2014
      %v2047 = vmul.f32 %v1863, %v2015
      %v2048 = vmul.f32 %v1865, %v2016
      %v2049 = vmul.f32 %v1867, %v2017
      %v2050 = vmul.f32 %v1869, %v2018
      %v2051 = vmul.f32 %v1871, %v2019
      %v2052 = vmul.f32 %v1873, %v2020
      %v2053 = vmul.f32 %v1875, %v2021
      %v2054 = vmul.f32 %v1877, %v2022
      %v2055 = vmul.f32 %v1879, %v2023
      %v2056 = vmul.f32 %v1881, %v2024
      %v2057 = vmul.f32 %v1883, %v2025
      %v2058 = vmul.f32 %v1885, %v2026
      %v2059 = vmul.f32 %v1887, %v2027
      %v2060 = vmul.f32 %v1889, %v2028
      %v2061 = vmul.f32 %v1891, %v2029
      %v2062 = vmul.f32 %v1893, %v2030
      %v2063 = vmul.f32 %v1895, %v2031
      %v2064 = vmul.f32 %v1897, %v2032
      %v2065 = vmul.f32 %v1899, %v2033
      %v2066 = vmul.f32 %v1901, %v2034
      %v2067 = vmul.f32 %v1903, %v2035
      %v2068 = vmul.f32 %v1905, %v2036
      %v2069 = vmul.f32 %v1907, %v2037
      %v2070 = vmul.f32 %v1909, %v2038
      %v2071 = vmul.f32 %v1911, %v2039
      %v2073 = vsel %vm1719, %v2040, 0
      %v2076 = vsel %vm1719, %v2041, 0
      %v2079 = vsel %vm1719, %v2042, 0
      %v2082 = vsel %vm1719, %v2043, 0
      %v2085 = vsel %vm1719, %v2044, 0
      %v2088 = vsel %vm1719, %v2045, 0
      %v2091 = vsel %vm1719, %v2046, 0
      %v2094 = vsel %vm1719, %v2047, 0
      %2096 = vmatprep.subr.mxu0 0.0
      %2097 = vmatpush1.msra.mxu0 %v852
      %2098 = vmatprep.subr.mxu0 0.0
      %2099 = vmatpush1.msra.mxu0 %v857
      %2100 = vmatprep.subr.mxu0 0.0
      %2101 = vmatpush1.msra.mxu0 %v862
      %2102 = vmatprep.subr.mxu0 0.0
      %2103 = vmatpush1.msra.mxu0 %v867
      %2104 = vmatprep.subr.mxu0 0.0
      %2105 = vmatpush1.msra.mxu0 %v872
      %2106 = vmatprep.subr.mxu0 0.0
      %2107 = vmatpush1.msra.mxu0 %v877
      %2108 = vmatprep.subr.mxu0 0.0
      %2109 = vmatpush1.msra.mxu0 %v882
      %2110 = vmatprep.subr.mxu0 0.0
      %2111 = vmatpush1.msra.mxu0 %v887
      %2112 = vmatprep.subr.mxu0 0.0
      %2113 = vmatpush1.msra.mxu0 0.0
      %2114 = vmatprep.subr.mxu0 0.0
      %2115 = vmatpush1.msra.mxu0 0.0
      %2116 = vmatprep.subr.mxu0 0.0
      %2117 = vmatpush1.msra.mxu0 0.0
      %2118 = vmatprep.subr.mxu0 0.0
      %2119 = vmatpush1.msra.mxu0 0.0
      %2120 = vmatprep.subr.mxu0 0.0
      %2121 = vmatpush1.msra.mxu0 0.0
      %2122 = vmatprep.subr.mxu0 0.0
      %2123 = vmatpush1.msra.mxu0 0.0
      %2124 = vmatprep.subr.mxu0 0.0
      %2125 = vmatpush1.msra.mxu0 0.0
      %2126 = vmatprep.subr.mxu0 0.0
      %2127 = vmatpush1.msra.mxu0 0.0
      %2128 = vmatprep.subr.mxu0 0.0
      %2129 = vmatpush1.msra.mxu0 0.0
      %2130 = vmatprep.subr.mxu0 0.0
      %2131 = vmatpush1.msra.mxu0 0.0
      %2132 = vmatprep.subr.mxu0 0.0
      %2133 = vmatpush1.msra.mxu0 0.0
      %2134 = vmatprep.subr.mxu0 0.0
      %2135 = vmatpush1.msra.mxu0 0.0
      %2136 = vmatprep.subr.mxu0 0.0
      %2137 = vmatpush1.msra.mxu0 0.0
      %2138 = vmatprep.subr.mxu0 0.0
      %2139 = vmatpush1.msra.mxu0 0.0
      %2140 = vmatprep.subr.mxu0 0.0
      %2141 = vmatpush1.msra.mxu0 0.0
      %2142 = vmatprep.subr.mxu0 0.0
      %2143 = vmatpush1.msra.mxu0 0.0
      %2144 = vmatprep.subr.mxu0 0.0
      %2145 = vmatpush1.msra.mxu0 0.0
      %2146 = vmatprep.subr.mxu0 0.0
      %2147 = vmatpush1.msra.mxu0 0.0
      %2148 = vmatprep.subr.mxu0 0.0
      %2149 = vmatpush1.msra.mxu0 0.0
      %2150 = vmatprep.subr.mxu0 0.0
      %2151 = vmatpush1.msra.mxu0 0.0
      %2152 = vmatprep.subr.mxu0 0.0
      %2153 = vmatpush1.msra.mxu0 0.0
      %2154 = vmatprep.subr.mxu0 0.0
      %2155 = vmatpush1.msra.mxu0 0.0
      %2156 = vmatprep.subr.mxu0 0.0
      %2157 = vmatpush1.msra.mxu0 0.0
      %2158 = vmatprep.subr.mxu0 0.0
      %2159 = vmatpush1.msra.mxu0 0.0
      %2160 = vmatprep.mubr.f32.mxu0 0.0
      %2161 = vmatmul.mubr.f32.gmra.mrb[0].mxu0 %v2073
      %v2162 = vpop.f32.mrb[0].mxu0
      %v2163 = vadd.f32 0.0, %v2162
      %v2164 = vpop.f32.mrb[0].mxu0
      %2165 = vmatprep.mubr.f32.mxu0 0.0
      %2166 = vmatmul.mubr.f32.gmra.mrb[0].mxu0 %v2076
      %v2167 = vpop.f32.mrb[0].mxu0
      %v2168 = vadd.f32 0.0, %v2167
      %v2169 = vpop.f32.mrb[0].mxu0
      %2170 = vmatprep.mubr.f32.mxu0 0.0
      %2171 = vmatmul.mubr.f32.gmra.mrb[0].mxu0 %v2079
      %v2172 = vpop.f32.mrb[0].mxu0
      %v2173 = vadd.f32 0.0, %v2172
      %v2174 = vpop.f32.mrb[0].mxu0
      %2175 = vmatprep.mubr.f32.mxu0 0.0
      %2176 = vmatmul.mubr.f32.gmra.mrb[0].mxu0 %v2082
      %v2177 = vpop.f32.mrb[0].mxu0
      %v2178 = vadd.f32 0.0, %v2177
      %v2179 = vpop.f32.mrb[0].mxu0
      %2180 = vmatprep.mubr.f32.mxu0 0.0
      %2181 = vmatmul.mubr.f32.gmra.mrb[0].mxu0 %v2085
      %v2182 = vpop.f32.mrb[0].mxu0
      %v2183 = vadd.f32 0.0, %v2182
      %v2184 = vpop.f32.mrb[0].mxu0
      %2185 = vmatprep.mubr.f32.mxu0 0.0
      %2186 = vmatmul.mubr.f32.gmra.mrb[0].mxu0 %v2088
      %v2187 = vpop.f32.mrb[0].mxu0
      %v2188 = vadd.f32 0.0, %v2187
      %v2189 = vpop.f32.mrb[0].mxu0
      %2190 = vmatprep.mubr.f32.mxu0 0.0
      %2191 = vmatmul.mubr.f32.gmra.mrb[0].mxu0 %v2091
      %v2192 = vpop.f32.mrb[0].mxu0
      %v2193 = vadd.f32 0.0, %v2192
      %v2194 = vpop.f32.mrb[0].mxu0
      %2195 = vmatprep.mubr.f32.mxu0 0.0
      %2196 = vmatmul.mubr.f32.gmra.mrb[0].mxu0 %v2094
      %v2197 = vpop.f32.mrb[0].mxu0
      %v2198 = vadd.f32 0.0, %v2197
      %v2199 = vpop.f32.mrb[0].mxu0
      %2200 = vdwg.mxu0
      %v2202 = vsel %vm1719, %v2048, 0
      %v2205 = vsel %vm1719, %v2049, 0
      %v2208 = vsel %vm1719, %v2050, 0
      %v2211 = vsel %vm1719, %v2051, 0
      %v2214 = vsel %vm1719, %v2052, 0
      %v2217 = vsel %vm1719, %v2053, 0
      %v2220 = vsel %vm1719, %v2054, 0
      %v2223 = vsel %vm1719, %v2055, 0
      %2225 = vmatprep.subr.mxu0 0.0
      %2226 = vmatpush1.msra.mxu0 %v1067
      %2227 = vmatprep.subr.mxu0 0.0
      %2228 = vmatpush1.msra.mxu0 %v1069
      %2229 = vmatprep.subr.mxu0 0.0
      %2230 = vmatpush1.msra.mxu0 %v1071
      %2231 = vmatprep.subr.mxu0 0.0
      %2232 = vmatpush1.msra.mxu0 %v1073
      %2233 = vmatprep.subr.mxu0 0.0
      %2234 = vmatpush1.msra.mxu0 %v1075
      %2235 = vmatprep.subr.mxu0 0.0
      %2236 = vmatpush1.msra.mxu0 %v1077
      %2237 = vmatprep.subr.mxu0 0.0
      %2238 = vmatpush1.msra.mxu0 %v1079
      %2239 = vmatprep.subr.mxu0 0.0
      %2240 = vmatpush1.msra.mxu0 %v1081
      %2241 = vmatprep.subr.mxu0 0.0
      %2242 = vmatpush1.msra.mxu0 0.0
      %2243 = vmatprep.subr.mxu0 0.0
      %2244 = vmatpush1.msra.mxu0 0.0
      %2245 = vmatprep.subr.mxu0 0.0
      %2246 = vmatpush1.msra.mxu0 0.0
      %2247 = vmatprep.subr.mxu0 0.0
      %2248 = vmatpush1.msra.mxu0 0.0
      %2249 = vmatprep.subr.mxu0 0.0
      %2250 = vmatpush1.msra.mxu0 0.0
      %2251 = vmatprep.subr.mxu0 0.0
      %2252 = vmatpush1.msra.mxu0 0.0
      %2253 = vmatprep.subr.mxu0 0.0
      %2254 = vmatpush1.msra.mxu0 0.0
      %2255 = vmatprep.subr.mxu0 0.0
      %2256 = vmatpush1.msra.mxu0 0.0
      %2257 = vmatprep.subr.mxu0 0.0
      %2258 = vmatpush1.msra.mxu0 0.0
      %2259 = vmatprep.subr.mxu0 0.0
      %2260 = vmatpush1.msra.mxu0 0.0
      %2261 = vmatprep.subr.mxu0 0.0
      %2262 = vmatpush1.msra.mxu0 0.0
      %2263 = vmatprep.subr.mxu0 0.0
      %2264 = vmatpush1.msra.mxu0 0.0
      %2265 = vmatprep.subr.mxu0 0.0
      %2266 = vmatpush1.msra.mxu0 0.0
      %2267 = vmatprep.subr.mxu0 0.0
      %2268 = vmatpush1.msra.mxu0 0.0
      %2269 = vmatprep.subr.mxu0 0.0
      %2270 = vmatpush1.msra.mxu0 0.0
      %2271 = vmatprep.subr.mxu0 0.0
      %2272 = vmatpush1.msra.mxu0 0.0
      %2273 = vmatprep.subr.mxu0 0.0
      %2274 = vmatpush1.msra.mxu0 0.0
      %2275 = vmatprep.subr.mxu0 0.0
      %2276 = vmatpush1.msra.mxu0 0.0
      %2277 = vmatprep.subr.mxu0 0.0
      %2278 = vmatpush1.msra.mxu0 0.0
      %2279 = vmatprep.subr.mxu0 0.0
      %2280 = vmatpush1.msra.mxu0 0.0
      %2281 = vmatprep.subr.mxu0 0.0
      %2282 = vmatpush1.msra.mxu0 0.0
      %2283 = vmatprep.subr.mxu0 0.0
      %2284 = vmatpush1.msra.mxu0 0.0
      %2285 = vmatprep.subr.mxu0 0.0
      %2286 = vmatpush1.msra.mxu0 0.0
      %2287 = vmatprep.subr.mxu0 0.0
      %2288 = vmatpush1.msra.mxu0 0.0
      %2289 = vmatprep.mubr.f32.mxu0 0.0
      %2290 = vmatmul.mubr.f32.gmra.mrb[0].mxu0 %v2202
      %v2291 = vpop.f32.mrb[0].mxu0
      %v2292 = vadd.f32 0.0, %v2291
      %v2293 = vpop.f32.mrb[0].mxu0
      %2294 = vmatprep.mubr.f32.mxu0 0.0
      %2295 = vmatmul.mubr.f32.gmra.mrb[0].mxu0 %v2205
      %v2296 = vpop.f32.mrb[0].mxu0
      %v2297 = vadd.f32 0.0, %v2296
      %v2298 = vpop.f32.mrb[0].mxu0
      %2299 = vmatprep.mubr.f32.mxu0 0.0
      %2300 = vmatmul.mubr.f32.gmra.mrb[0].mxu0 %v2208
      %v2301 = vpop.f32.mrb[0].mxu0
      %v2302 = vadd.f32 0.0, %v2301
      %v2303 = vpop.f32.mrb[0].mxu0
      %2304 = vmatprep.mubr.f32.mxu0 0.0
      %2305 = vmatmul.mubr.f32.gmra.mrb[0].mxu0 %v2211
      %v2306 = vpop.f32.mrb[0].mxu0
      %v2307 = vadd.f32 0.0, %v2306
      %v2308 = vpop.f32.mrb[0].mxu0
      %2309 = vmatprep.mubr.f32.mxu0 0.0
      %2310 = vmatmul.mubr.f32.gmra.mrb[0].mxu0 %v2214
      %v2311 = vpop.f32.mrb[0].mxu0
      %v2312 = vadd.f32 0.0, %v2311
      %v2313 = vpop.f32.mrb[0].mxu0
      %2314 = vmatprep.mubr.f32.mxu0 0.0
      %2315 = vmatmul.mubr.f32.gmra.mrb[0].mxu0 %v2217
      %v2316 = vpop.f32.mrb[0].mxu0
      %v2317 = vadd.f32 0.0, %v2316
      %v2318 = vpop.f32.mrb[0].mxu0
      %2319 = vmatprep.mubr.f32.mxu0 0.0
      %2320 = vmatmul.mubr.f32.gmra.mrb[0].mxu0 %v2220
      %v2321 = vpop.f32.mrb[0].mxu0
      %v2322 = vadd.f32 0.0, %v2321
      %v2323 = vpop.f32.mrb[0].mxu0
      %2324 = vmatprep.mubr.f32.mxu0 0.0
      %2325 = vmatmul.mubr.f32.gmra.mrb[0].mxu0 %v2223
      %v2326 = vpop.f32.mrb[0].mxu0
      %v2327 = vadd.f32 0.0, %v2326
      %v2328 = vpop.f32.mrb[0].mxu0
      %2329 = vdwg.mxu0
      %v2331 = vsel %vm1719, %v2056, 0
      %v2334 = vsel %vm1719, %v2057, 0
      %v2337 = vsel %vm1719, %v2058, 0
      %v2340 = vsel %vm1719, %v2059, 0
      %v2343 = vsel %vm1719, %v2060, 0
      %v2346 = vsel %vm1719, %v2061, 0
      %v2349 = vsel %vm1719, %v2062, 0
      %v2352 = vsel %vm1719, %v2063, 0
      %2354 = vmatprep.subr.mxu0 0.0
      %2355 = vmatpush1.msra.mxu0 %v1091
      %2356 = vmatprep.subr.mxu0 0.0
      %2357 = vmatpush1.msra.mxu0 %v1093
      %2358 = vmatprep.subr.mxu0 0.0
      %2359 = vmatpush1.msra.mxu0 %v1095
      %2360 = vmatprep.subr.mxu0 0.0
      %2361 = vmatpush1.msra.mxu0 %v1097
      %2362 = vmatprep.subr.mxu0 0.0
      %2363 = vmatpush1.msra.mxu0 %v1099
      %2364 = vmatprep.subr.mxu0 0.0
      %2365 = vmatpush1.msra.mxu0 %v1101
      %2366 = vmatprep.subr.mxu0 0.0
      %2367 = vmatpush1.msra.mxu0 %v1103
      %2368 = vmatprep.subr.mxu0 0.0
      %2369 = vmatpush1.msra.mxu0 %v1105
      %2370 = vmatprep.subr.mxu0 0.0
      %2371 = vmatpush1.msra.mxu0 0.0
      %2372 = vmatprep.subr.mxu0 0.0
      %2373 = vmatpush1.msra.mxu0 0.0
      %2374 = vmatprep.subr.mxu0 0.0
      %2375 = vmatpush1.msra.mxu0 0.0
      %2376 = vmatprep.subr.mxu0 0.0
      %2377 = vmatpush1.msra.mxu0 0.0
      %2378 = vmatprep.subr.mxu0 0.0
      %2379 = vmatpush1.msra.mxu0 0.0
      %2380 = vmatprep.subr.mxu0 0.0
      %2381 = vmatpush1.msra.mxu0 0.0
      %2382 = vmatprep.subr.mxu0 0.0
      %2383 = vmatpush1.msra.mxu0 0.0
      %2384 = vmatprep.subr.mxu0 0.0
      %2385 = vmatpush1.msra.mxu0 0.0
      %2386 = vmatprep.subr.mxu0 0.0
      %2387 = vmatpush1.msra.mxu0 0.0
      %2388 = vmatprep.subr.mxu0 0.0
      %2389 = vmatpush1.msra.mxu0 0.0
      %2390 = vmatprep.subr.mxu0 0.0
      %2391 = vmatpush1.msra.mxu0 0.0
      %2392 = vmatprep.subr.mxu0 0.0
      %2393 = vmatpush1.msra.mxu0 0.0
      %2394 = vmatprep.subr.mxu0 0.0
      %2395 = vmatpush1.msra.mxu0 0.0
      %2396 = vmatprep.subr.mxu0 0.0
      %2397 = vmatpush1.msra.mxu0 0.0
      %2398 = vmatprep.subr.mxu0 0.0
      %2399 = vmatpush1.msra.mxu0 0.0
      %2400 = vmatprep.subr.mxu0 0.0
      %2401 = vmatpush1.msra.mxu0 0.0
      %2402 = vmatprep.subr.mxu0 0.0
      %2403 = vmatpush1.msra.mxu0 0.0
      %2404 = vmatprep.subr.mxu0 0.0
      %2405 = vmatpush1.msra.mxu0 0.0
      %2406 = vmatprep.subr.mxu0 0.0
      %2407 = vmatpush1.msra.mxu0 0.0
      %2408 = vmatprep.subr.mxu0 0.0
      %2409 = vmatpush1.msra.mxu0 0.0
      %2410 = vmatprep.subr.mxu0 0.0
      %2411 = vmatpush1.msra.mxu0 0.0
      %2412 = vmatprep.subr.mxu0 0.0
      %2413 = vmatpush1.msra.mxu0 0.0
      %2414 = vmatprep.subr.mxu0 0.0
      %2415 = vmatpush1.msra.mxu0 0.0
      %2416 = vmatprep.subr.mxu0 0.0
      %2417 = vmatpush1.msra.mxu0 0.0
      %2418 = vmatprep.mubr.f32.mxu0 0.0
      %2419 = vmatmul.mubr.f32.gmra.mrb[0].mxu0 %v2331
      %v2420 = vpop.f32.mrb[0].mxu0
      %v2421 = vadd.f32 0.0, %v2420
      %v2422 = vpop.f32.mrb[0].mxu0
      %2423 = vmatprep.mubr.f32.mxu0 0.0
      %2424 = vmatmul.mubr.f32.gmra.mrb[0].mxu0 %v2334
      %v2425 = vpop.f32.mrb[0].mxu0
      %v2426 = vadd.f32 0.0, %v2425
      %v2427 = vpop.f32.mrb[0].mxu0
      %2428 = vmatprep.mubr.f32.mxu0 0.0
      %2429 = vmatmul.mubr.f32.gmra.mrb[0].mxu0 %v2337
      %v2430 = vpop.f32.mrb[0].mxu0
      %v2431 = vadd.f32 0.0, %v2430
      %v2432 = vpop.f32.mrb[0].mxu0
      %2433 = vmatprep.mubr.f32.mxu0 0.0
      %2434 = vmatmul.mubr.f32.gmra.mrb[0].mxu0 %v2340
      %v2435 = vpop.f32.mrb[0].mxu0
      %v2436 = vadd.f32 0.0, %v2435
      %v2437 = vpop.f32.mrb[0].mxu0
      %2438 = vmatprep.mubr.f32.mxu0 0.0
      %2439 = vmatmul.mubr.f32.gmra.mrb[0].mxu0 %v2343
      %v2440 = vpop.f32.mrb[0].mxu0
      %v2441 = vadd.f32 0.0, %v2440
      %v2442 = vpop.f32.mrb[0].mxu0
      %2443 = vmatprep.mubr.f32.mxu0 0.0
      %2444 = vmatmul.mubr.f32.gmra.mrb[0].mxu0 %v2346
      %v2445 = vpop.f32.mrb[0].mxu0
      %v2446 = vadd.f32 0.0, %v2445
      %v2447 = vpop.f32.mrb[0].mxu0
      %2448 = vmatprep.mubr.f32.mxu0 0.0
      %2449 = vmatmul.mubr.f32.gmra.mrb[0].mxu0 %v2349
      %v2450 = vpop.f32.mrb[0].mxu0
      %v2451 = vadd.f32 0.0, %v2450
      %v2452 = vpop.f32.mrb[0].mxu0
      %2453 = vmatprep.mubr.f32.mxu0 0.0
      %2454 = vmatmul.mubr.f32.gmra.mrb[0].mxu0 %v2352
      %v2455 = vpop.f32.mrb[0].mxu0
      %v2456 = vadd.f32 0.0, %v2455
      %v2457 = vpop.f32.mrb[0].mxu0
      %2458 = vdwg.mxu0
      %v2460 = vsel %vm1719, %v2064, 0
      %v2463 = vsel %vm1719, %v2065, 0
      %v2466 = vsel %vm1719, %v2066, 0
      %v2469 = vsel %vm1719, %v2067, 0
      %v2472 = vsel %vm1719, %v2068, 0
      %v2475 = vsel %vm1719, %v2069, 0
      %v2478 = vsel %vm1719, %v2070, 0
      %v2481 = vsel %vm1719, %v2071, 0
      %2483 = vmatprep.subr.mxu0 0.0
      %2484 = vmatpush1.msra.mxu0 %v1115
      %2485 = vmatprep.subr.mxu0 0.0
      %2486 = vmatpush1.msra.mxu0 %v1117
      %2487 = vmatprep.subr.mxu0 0.0
      %2488 = vmatpush1.msra.mxu0 %v1119
      %2489 = vmatprep.subr.mxu0 0.0
      %2490 = vmatpush1.msra.mxu0 %v1121
      %2491 = vmatprep.subr.mxu0 0.0
      %2492 = vmatpush1.msra.mxu0 %v1123
      %2493 = vmatprep.subr.mxu0 0.0
      %2494 = vmatpush1.msra.mxu0 %v1125
      %2495 = vmatprep.subr.mxu0 0.0
      %2496 = vmatpush1.msra.mxu0 %v1127
      %2497 = vmatprep.subr.mxu0 0.0
      %2498 = vmatpush1.msra.mxu0 %v1129
      %2499 = vmatprep.subr.mxu0 0.0
      %2500 = vmatpush1.msra.mxu0 0.0
      %2501 = vmatprep.subr.mxu0 0.0
      %2502 = vmatpush1.msra.mxu0 0.0
      %2503 = vmatprep.subr.mxu0 0.0
      %2504 = vmatpush1.msra.mxu0 0.0
      %2505 = vmatprep.subr.mxu0 0.0
      %2506 = vmatpush1.msra.mxu0 0.0
      %2507 = vmatprep.subr.mxu0 0.0
      %2508 = vmatpush1.msra.mxu0 0.0
      %2509 = vmatprep.subr.mxu0 0.0
      %2510 = vmatpush1.msra.mxu0 0.0
      %2511 = vmatprep.subr.mxu0 0.0
      %2512 = vmatpush1.msra.mxu0 0.0
      %2513 = vmatprep.subr.mxu0 0.0
      %2514 = vmatpush1.msra.mxu0 0.0
      %2515 = vmatprep.subr.mxu0 0.0
      %2516 = vmatpush1.msra.mxu0 0.0
      %2517 = vmatprep.subr.mxu0 0.0
      %2518 = vmatpush1.msra.mxu0 0.0
      %2519 = vmatprep.subr.mxu0 0.0
      %2520 = vmatpush1.msra.mxu0 0.0
      %2521 = vmatprep.subr.mxu0 0.0
      %2522 = vmatpush1.msra.mxu0 0.0
      %2523 = vmatprep.subr.mxu0 0.0
      %2524 = vmatpush1.msra.mxu0 0.0
      %2525 = vmatprep.subr.mxu0 0.0
      %2526 = vmatpush1.msra.mxu0 0.0
      %2527 = vmatprep.subr.mxu0 0.0
      %2528 = vmatpush1.msra.mxu0 0.0
      %2529 = vmatprep.subr.mxu0 0.0
      %2530 = vmatpush1.msra.mxu0 0.0
      %2531 = vmatprep.subr.mxu0 0.0
      %2532 = vmatpush1.msra.mxu0 0.0
      %2533 = vmatprep.subr.mxu0 0.0
      %2534 = vmatpush1.msra.mxu0 0.0
      %2535 = vmatprep.subr.mxu0 0.0
      %2536 = vmatpush1.msra.mxu0 0.0
      %2537 = vmatprep.subr.mxu0 0.0
      %2538 = vmatpush1.msra.mxu0 0.0
      %2539 = vmatprep.subr.mxu0 0.0
      %2540 = vmatpush1.msra.mxu0 0.0
      %2541 = vmatprep.subr.mxu0 0.0
      %2542 = vmatpush1.msra.mxu0 0.0
      %2543 = vmatprep.subr.mxu0 0.0
      %2544 = vmatpush1.msra.mxu0 0.0
      %2545 = vmatprep.subr.mxu0 0.0
      %2546 = vmatpush1.msra.mxu0 0.0
      %2547 = vmatprep.mubr.f32.mxu0 0.0
      %2548 = vmatmul.mubr.f32.gmra.mrb[0].mxu0 %v2460
      %v2549 = vpop.f32.mrb[0].mxu0
      %v2550 = vadd.f32 0.0, %v2549
      %v2551 = vpop.f32.mrb[0].mxu0
      %2552 = vmatprep.mubr.f32.mxu0 0.0
      %2553 = vmatmul.mubr.f32.gmra.mrb[0].mxu0 %v2463
      %v2554 = vpop.f32.mrb[0].mxu0
      %v2555 = vadd.f32 0.0, %v2554
      %v2556 = vpop.f32.mrb[0].mxu0
      %2557 = vmatprep.mubr.f32.mxu0 0.0
      %2558 = vmatmul.mubr.f32.gmra.mrb[0].mxu0 %v2466
      %v2559 = vpop.f32.mrb[0].mxu0
      %v2560 = vadd.f32 0.0, %v2559
      %v2561 = vpop.f32.mrb[0].mxu0
      %2562 = vmatprep.mubr.f32.mxu0 0.0
      %2563 = vmatmul.mubr.f32.gmra.mrb[0].mxu0 %v2469
      %v2564 = vpop.f32.mrb[0].mxu0
      %v2565 = vadd.f32 0.0, %v2564
      %v2566 = vpop.f32.mrb[0].mxu0
      %2567 = vmatprep.mubr.f32.mxu0 0.0
      %2568 = vmatmul.mubr.f32.gmra.mrb[0].mxu0 %v2472
      %v2569 = vpop.f32.mrb[0].mxu0
      %v2570 = vadd.f32 0.0, %v2569
      %v2571 = vpop.f32.mrb[0].mxu0
      %2572 = vmatprep.mubr.f32.mxu0 0.0
      %2573 = vmatmul.mubr.f32.gmra.mrb[0].mxu0 %v2475
      %v2574 = vpop.f32.mrb[0].mxu0
      %v2575 = vadd.f32 0.0, %v2574
      %v2576 = vpop.f32.mrb[0].mxu0
      %2577 = vmatprep.mubr.f32.mxu0 0.0
      %2578 = vmatmul.mubr.f32.gmra.mrb[0].mxu0 %v2478
      %v2579 = vpop.f32.mrb[0].mxu0
      %v2580 = vadd.f32 0.0, %v2579
      %v2581 = vpop.f32.mrb[0].mxu0
      %2582 = vmatprep.mubr.f32.mxu0 0.0
      %2583 = vmatmul.mubr.f32.gmra.mrb[0].mxu0 %v2481
      %v2584 = vpop.f32.mrb[0].mxu0
      %v2585 = vadd.f32 0.0, %v2584
      %v2586 = vpop.f32.mrb[0].mxu0
      %2587 = vdwg.mxu0
      %2596 = vrot.lane.b32.xlu0 %v2292, 32
      %v2597 = vpop.permute.xlu0 %2596
      %2598 = vrot.lane.b32.xlu0 %v2297, 32
      %v2599 = vpop.permute.xlu0 %2598
      %2600 = vrot.lane.b32.xlu0 %v2302, 32
      %v2601 = vpop.permute.xlu0 %2600
      %2602 = vrot.lane.b32.xlu0 %v2307, 32
      %v2603 = vpop.permute.xlu0 %2602
      %2604 = vrot.lane.b32.xlu0 %v2312, 32
      %v2605 = vpop.permute.xlu0 %2604
      %2606 = vrot.lane.b32.xlu0 %v2317, 32
      %v2607 = vpop.permute.xlu0 %2606
      %2608 = vrot.lane.b32.xlu0 %v2322, 32
      %v2609 = vpop.permute.xlu0 %2608
      %2610 = vrot.lane.b32.xlu0 %v2327, 32
      %v2611 = vpop.permute.xlu0 %2610
      %2628 = vrot.lane.b32.xlu0 %v2421, 64
      %v2629 = vpop.permute.xlu0 %2628
      %2630 = vrot.lane.b32.xlu0 %v2426, 64
      %v2631 = vpop.permute.xlu0 %2630
      %2632 = vrot.lane.b32.xlu0 %v2431, 64
      %v2633 = vpop.permute.xlu0 %2632
      %2634 = vrot.lane.b32.xlu0 %v2436, 64
      %v2635 = vpop.permute.xlu0 %2634
      %2636 = vrot.lane.b32.xlu0 %v2441, 64
      %v2637 = vpop.permute.xlu0 %2636
      %2638 = vrot.lane.b32.xlu0 %v2446, 64
      %v2639 = vpop.permute.xlu0 %2638
      %2640 = vrot.lane.b32.xlu0 %v2451, 64
      %v2641 = vpop.permute.xlu0 %2640
      %2642 = vrot.lane.b32.xlu0 %v2456, 64
      %v2643 = vpop.permute.xlu0 %2642
      %2660 = vrot.lane.b32.xlu0 %v2550, 96
      %v2661 = vpop.permute.xlu0 %2660
      %2662 = vrot.lane.b32.xlu0 %v2555, 96
      %v2663 = vpop.permute.xlu0 %2662
      %2664 = vrot.lane.b32.xlu0 %v2560, 96
      %v2665 = vpop.permute.xlu0 %2664
      %2666 = vrot.lane.b32.xlu0 %v2565, 96
      %v2667 = vpop.permute.xlu0 %2666
      %2668 = vrot.lane.b32.xlu0 %v2570, 96
      %v2669 = vpop.permute.xlu0 %2668
      %2670 = vrot.lane.b32.xlu0 %v2575, 96
      %v2671 = vpop.permute.xlu0 %2670
      %2672 = vrot.lane.b32.xlu0 %v2580, 96
      %v2673 = vpop.permute.xlu0 %2672
      %2674 = vrot.lane.b32.xlu0 %v2585, 96
      %v2675 = vpop.permute.xlu0 %2674
      %v2684 = vsel %vm1138, %v2163, %v2597
      %v2685 = vsel %vm1138, %v2168, %v2599
      %v2686 = vsel %vm1138, %v2173, %v2601
      %v2687 = vsel %vm1138, %v2178, %v2603
      %v2688 = vsel %vm1138, %v2183, %v2605
      %v2689 = vsel %vm1138, %v2188, %v2607
      %v2690 = vsel %vm1138, %v2193, %v2609
      %v2691 = vsel %vm1138, %v2198, %v2611
      %v2692 = vsel %vm1719, %v2684, %v2629
      %v2693 = vsel %vm1719, %v2685, %v2631
      %v2694 = vsel %vm1719, %v2686, %v2633
      %v2695 = vsel %vm1719, %v2687, %v2635
      %v2696 = vsel %vm1719, %v2688, %v2637
      %v2697 = vsel %vm1719, %v2689, %v2639
      %v2698 = vsel %vm1719, %v2690, %v2641
      %v2699 = vsel %vm1719, %v2691, %v2643
      %vm2700 = vcmask 785408
      %v2701 = vsel %vm2700, %v2692, %v2661
      %v2702 = vsel %vm2700, %v2693, %v2663
      %v2703 = vsel %vm2700, %v2694, %v2665
      %v2704 = vsel %vm2700, %v2695, %v2667
      %v2705 = vsel %vm2700, %v2696, %v2669
      %v2706 = vsel %vm2700, %v2697, %v2671
      %v2707 = vsel %vm2700, %v2698, %v2673
      %v2708 = vsel %vm2700, %v2699, %v2675
      %v2709 = vld [vmem:[%s5] sm:$0xff]
      %v2710 = vld [vmem:[%s5 + $0x8] sm:$0xff]
      %v2711 = vld [vmem:[%s5 + $0x10] sm:$0xff]
      %v2712 = vld [vmem:[%s5 + $0x18] sm:$0xff]
      %v2713 = vld [vmem:[%s5 + $0x20] sm:$0xff]
      %v2714 = vld [vmem:[%s5 + $0x28] sm:$0xff]
      %v2715 = vld [vmem:[%s5 + $0x30] sm:$0xff]
      %v2716 = vld [vmem:[%s5 + $0x38] sm:$0xff]
      %v2717 = vld [vmem:[%s5 + $0x40] sm:$0xff]
      %v2718 = vld [vmem:[%s5 + $0x48] sm:$0xff]
      %v2719 = vld [vmem:[%s5 + $0x50] sm:$0xff]
      %v2720 = vld [vmem:[%s5 + $0x58] sm:$0xff]
      %v2721 = vld [vmem:[%s5 + $0x60] sm:$0xff]
      %v2722 = vld [vmem:[%s5 + $0x68] sm:$0xff]
      %v2723 = vld [vmem:[%s5 + $0x70] sm:$0xff]
      %v2724 = vld [vmem:[%s5 + $0x78] sm:$0xff]
      %v2725 = vld [vmem:[%s6] sm:$0x1]
      %v2727 = vlaneseq
      %v2728 = vshrl.u32 %v2727, 7
      %v2729 = vsub.s32 0, %v2728
      %v2730 = vrot.slane %v2725, %v2729
      %2732 = vmatprep.subr.mxu0 0.0
      %2733 = vmatpush1.msra.mxu0 %v2709
      %2734 = vmatprep.subr.mxu0 0.0
      %2735 = vmatpush1.msra.mxu0 %v2710
      %2736 = vmatprep.subr.mxu0 0.0
      %2737 = vmatpush1.msra.mxu0 %v2711
      %2738 = vmatprep.subr.mxu0 0.0
      %2739 = vmatpush1.msra.mxu0 %v2712
      %2740 = vmatprep.subr.mxu0 0.0
      %2741 = vmatpush1.msra.mxu0 %v2713
      %2742 = vmatprep.subr.mxu0 0.0
      %2743 = vmatpush1.msra.mxu0 %v2714
      %2744 = vmatprep.subr.mxu0 0.0
      %2745 = vmatpush1.msra.mxu0 %v2715
      %2746 = vmatprep.subr.mxu0 0.0
      %2747 = vmatpush1.msra.mxu0 %v2716
      %2748 = vmatprep.subr.mxu0 0.0
      %2749 = vmatpush1.msra.mxu0 %v2717
      %2750 = vmatprep.subr.mxu0 0.0
      %2751 = vmatpush1.msra.mxu0 %v2718
      %2752 = vmatprep.subr.mxu0 0.0
      %2753 = vmatpush1.msra.mxu0 %v2719
      %2754 = vmatprep.subr.mxu0 0.0
      %2755 = vmatpush1.msra.mxu0 %v2720
      %2756 = vmatprep.subr.mxu0 0.0
      %2757 = vmatpush1.msra.mxu0 %v2721
      %2758 = vmatprep.subr.mxu0 0.0
      %2759 = vmatpush1.msra.mxu0 %v2722
      %2760 = vmatprep.subr.mxu0 0.0
      %2761 = vmatpush1.msra.mxu0 %v2723
      %2762 = vmatprep.subr.mxu0 0.0
      %2763 = vmatpush1.msra.mxu0 %v2724
      %2764 = vmatprep.subr.mxu0 0.0
      %2765 = vmatpush1.msra.mxu0 0.0
      %2766 = vmatprep.subr.mxu0 0.0
      %2767 = vmatpush1.msra.mxu0 0.0
      %2768 = vmatprep.subr.mxu0 0.0
      %2769 = vmatpush1.msra.mxu0 0.0
      %2770 = vmatprep.subr.mxu0 0.0
      %2771 = vmatpush1.msra.mxu0 0.0
      %2772 = vmatprep.subr.mxu0 0.0
      %2773 = vmatpush1.msra.mxu0 0.0
      %2774 = vmatprep.subr.mxu0 0.0
      %2775 = vmatpush1.msra.mxu0 0.0
      %2776 = vmatprep.subr.mxu0 0.0
      %2777 = vmatpush1.msra.mxu0 0.0
      %2778 = vmatprep.subr.mxu0 0.0
      %2779 = vmatpush1.msra.mxu0 0.0
      %2780 = vmatprep.subr.mxu0 0.0
      %2781 = vmatpush1.msra.mxu0 0.0
      %2782 = vmatprep.subr.mxu0 0.0
      %2783 = vmatpush1.msra.mxu0 0.0
      %2784 = vmatprep.subr.mxu0 0.0
      %2785 = vmatpush1.msra.mxu0 0.0
      %2786 = vmatprep.subr.mxu0 0.0
      %2787 = vmatpush1.msra.mxu0 0.0
      %2788 = vmatprep.subr.mxu0 0.0
      %2789 = vmatpush1.msra.mxu0 0.0
      %2790 = vmatprep.subr.mxu0 0.0
      %2791 = vmatpush1.msra.mxu0 0.0
      %2792 = vmatprep.subr.mxu0 0.0
      %2793 = vmatpush1.msra.mxu0 0.0
      %2794 = vmatprep.subr.mxu0 0.0
      %2795 = vmatpush1.msra.mxu0 0.0
      %2796 = vmatprep.mubr.f32.mxu0 0.0
      %2797 = vmatmul.mubr.f32.gmra.mrb[0].mxu0 %v2701
      %v2798 = vpop.f32.mrb[0].mxu0
      %v2799 = vadd.f32 %v2730, %v2798
      %v2800 = vpop.f32.mrb[0].mxu0
      %2801 = vmatprep.mubr.f32.mxu0 0.0
      %2802 = vmatmul.mubr.f32.gmra.mrb[0].mxu0 %v2702
      %v2803 = vpop.f32.mrb[0].mxu0
      %v2804 = vadd.f32 %v2730, %v2803
      %v2805 = vpop.f32.mrb[0].mxu0
      %2806 = vmatprep.mubr.f32.mxu0 0.0
      %2807 = vmatmul.mubr.f32.gmra.mrb[0].mxu0 %v2703
      %v2808 = vpop.f32.mrb[0].mxu0
      %v2809 = vadd.f32 %v2730, %v2808
      %v2810 = vpop.f32.mrb[0].mxu0
      %2811 = vmatprep.mubr.f32.mxu0 0.0
      %2812 = vmatmul.mubr.f32.gmra.mrb[0].mxu0 %v2704
      %v2813 = vpop.f32.mrb[0].mxu0
      %v2814 = vadd.f32 %v2730, %v2813
      %v2815 = vpop.f32.mrb[0].mxu0
      %2816 = vmatprep.mubr.f32.mxu0 0.0
      %2817 = vmatmul.mubr.f32.gmra.mrb[0].mxu0 %v2705
      %v2818 = vpop.f32.mrb[0].mxu0
      %v2819 = vadd.f32 %v2730, %v2818
      %v2820 = vpop.f32.mrb[0].mxu0
      %2821 = vmatprep.mubr.f32.mxu0 0.0
      %2822 = vmatmul.mubr.f32.gmra.mrb[0].mxu0 %v2706
      %v2823 = vpop.f32.mrb[0].mxu0
      %v2824 = vadd.f32 %v2730, %v2823
      %v2825 = vpop.f32.mrb[0].mxu0
      %2826 = vmatprep.mubr.f32.mxu0 0.0
      %2827 = vmatmul.mubr.f32.gmra.mrb[0].mxu0 %v2707
      %v2828 = vpop.f32.mrb[0].mxu0
      %v2829 = vadd.f32 %v2730, %v2828
      %v2830 = vpop.f32.mrb[0].mxu0
      %2831 = vmatprep.mubr.f32.mxu0 0.0
      %2832 = vmatmul.mubr.f32.gmra.mrb[0].mxu0 %v2708
      %v2833 = vpop.f32.mrb[0].mxu0
      %v2834 = vadd.f32 %v2730, %v2833
      %v2835 = vpop.f32.mrb[0].mxu0
      %2836 = vdwg.mxu0
      %v2837 = vadd.f32 %v480, %v2799
      %v2838 = vadd.f32 %v481, %v2804
      %v2839 = vadd.f32 %v482, %v2809
      %v2840 = vadd.f32 %v483, %v2814
      %v2841 = vadd.f32 %v484, %v2819
      %v2842 = vadd.f32 %v485, %v2824
      %v2843 = vadd.f32 %v486, %v2829
      %v2844 = vadd.f32 %v487, %v2834
      %v2845 = vld [vmem:[%s7] sm:$0x1]
      %v2846 = vld [vmem:[%s8] sm:$0x1]
      %2847 = vadd.xlane.f32.xlu0 %v2837
      %v2848 = vpop.xlane.xlu0 %2847
      %2849 = vadd.xlane.f32.xlu0 %v2838
      %v2850 = vpop.xlane.xlu0 %2849
      %2851 = vadd.xlane.f32.xlu0 %v2839
      %v2852 = vpop.xlane.xlu0 %2851
      %2853 = vadd.xlane.f32.xlu0 %v2840
      %v2854 = vpop.xlane.xlu0 %2853
      %2855 = vadd.xlane.f32.xlu0 %v2841
      %v2856 = vpop.xlane.xlu0 %2855
      %2857 = vadd.xlane.f32.xlu0 %v2842
      %v2858 = vpop.xlane.xlu0 %2857
      %2859 = vadd.xlane.f32.xlu0 %v2843
      %v2860 = vpop.xlane.xlu0 %2859
      %2861 = vadd.xlane.f32.xlu0 %v2844
      %v2862 = vpop.xlane.xlu0 %2861
      %v2863 = vmul.f32 %v2848, %v506
      %v2864 = vmul.f32 %v2850, %v506
      %v2865 = vmul.f32 %v2852, %v506
      %v2866 = vmul.f32 %v2854, %v506
      %v2867 = vmul.f32 %v2856, %v506
      %v2868 = vmul.f32 %v2858, %v506
      %v2869 = vmul.f32 %v2860, %v506
      %v2870 = vmul.f32 %v2862, %v506
      %v2871 = vsub.f32 %v2837, %v2863
      %v2872 = vsub.f32 %v2838, %v2864
      %v2873 = vsub.f32 %v2839, %v2865
      %v2874 = vsub.f32 %v2840, %v2866
      %v2875 = vsub.f32 %v2841, %v2867
      %v2876 = vsub.f32 %v2842, %v2868
      %v2877 = vsub.f32 %v2843, %v2869
      %v2878 = vsub.f32 %v2844, %v2870
      %v2879 = vmul.f32 %v2871, %v2871
      %v2880 = vmul.f32 %v2872, %v2872
      %v2881 = vmul.f32 %v2873, %v2873
      %v2882 = vmul.f32 %v2874, %v2874
      %v2883 = vmul.f32 %v2875, %v2875
      %v2884 = vmul.f32 %v2876, %v2876
      %v2885 = vmul.f32 %v2877, %v2877
      %v2886 = vmul.f32 %v2878, %v2878
      %2887 = vadd.xlane.f32.xlu0 %v2879
      %v2888 = vpop.xlane.xlu0 %2887
      %2889 = vadd.xlane.f32.xlu0 %v2880
      %v2890 = vpop.xlane.xlu0 %2889
      %2891 = vadd.xlane.f32.xlu0 %v2881
      %v2892 = vpop.xlane.xlu0 %2891
      %2893 = vadd.xlane.f32.xlu0 %v2882
      %v2894 = vpop.xlane.xlu0 %2893
      %2895 = vadd.xlane.f32.xlu0 %v2883
      %v2896 = vpop.xlane.xlu0 %2895
      %2897 = vadd.xlane.f32.xlu0 %v2884
      %v2898 = vpop.xlane.xlu0 %2897
      %2899 = vadd.xlane.f32.xlu0 %v2885
      %v2900 = vpop.xlane.xlu0 %2899
      %2901 = vadd.xlane.f32.xlu0 %v2886
      %v2902 = vpop.xlane.xlu0 %2901
      %v2903 = vmul.f32 %v2888, %v506
      %v2904 = vmul.f32 %v2890, %v506
      %v2905 = vmul.f32 %v2892, %v506
      %v2906 = vmul.f32 %v2894, %v506
      %v2907 = vmul.f32 %v2896, %v506
      %v2908 = vmul.f32 %v2898, %v506
      %v2909 = vmul.f32 %v2900, %v506
      %v2910 = vmul.f32 %v2902, %v506
      %v2911 = vadd.f32 %v2903, 1e-05
      %v2912 = vadd.f32 %v2904, 1e-05
      %v2913 = vadd.f32 %v2905, 1e-05
      %v2914 = vadd.f32 %v2906, 1e-05
      %v2915 = vadd.f32 %v2907, 1e-05
      %v2916 = vadd.f32 %v2908, 1e-05
      %v2917 = vadd.f32 %v2909, 1e-05
      %v2918 = vadd.f32 %v2910, 1e-05
      %v2919 = vrsqrt.pop %v2911
      %v2920 = vrsqrt.pop %v2912
      %v2921 = vrsqrt.pop %v2913
      %v2922 = vrsqrt.pop %v2914
      %v2923 = vrsqrt.pop %v2915
      %v2924 = vrsqrt.pop %v2916
      %v2925 = vrsqrt.pop %v2917
      %v2926 = vrsqrt.pop %v2918
      %v2927 = vmul.f32 %v2871, %v2919
      %v2928 = vmul.f32 %v2872, %v2920
      %v2929 = vmul.f32 %v2873, %v2921
      %v2930 = vmul.f32 %v2874, %v2922
      %v2931 = vmul.f32 %v2875, %v2923
      %v2932 = vmul.f32 %v2876, %v2924
      %v2933 = vmul.f32 %v2877, %v2925
      %v2934 = vmul.f32 %v2878, %v2926
      %v2936 = vlaneseq
      %v2937 = vshrl.u32 %v2936, 7
      %v2938 = vsub.s32 0, %v2937
      %v2939 = vrot.slane %v2845, %v2938
      %v2941 = vmul.f32 %v2927, %v2939
      %v2942 = vmul.f32 %v2928, %v2939
      %v2943 = vmul.f32 %v2929, %v2939
      %v2944 = vmul.f32 %v2930, %v2939
      %v2945 = vmul.f32 %v2931, %v2939
      %v2946 = vmul.f32 %v2932, %v2939
      %v2947 = vmul.f32 %v2933, %v2939
      %v2948 = vmul.f32 %v2934, %v2939
      %v2950 = vlaneseq
      %v2951 = vshrl.u32 %v2950, 7
      %v2952 = vsub.s32 0, %v2951
      %v2953 = vrot.slane %v2846, %v2952
      %v2955 = vadd.f32 %v2941, %v2953
      %v2956 = vadd.f32 %v2942, %v2953
      %v2957 = vadd.f32 %v2943, %v2953
      %v2958 = vadd.f32 %v2944, %v2953
      %v2959 = vadd.f32 %v2945, %v2953
      %v2960 = vadd.f32 %v2946, %v2953
      %v2961 = vadd.f32 %v2947, %v2953
      %v2962 = vadd.f32 %v2948, %v2953
      %v2963 = vld [vmem:[%s9] sm:$0xff]
      %v2964 = vld [vmem:[%s9 + $0x8] sm:$0xff]
      %v2965 = vld [vmem:[%s9 + $0x10] sm:$0xff]
      %v2966 = vld [vmem:[%s9 + $0x18] sm:$0xff]
      %v2967 = vld [vmem:[%s9 + $0x20] sm:$0xff]
      %v2968 = vld [vmem:[%s9 + $0x28] sm:$0xff]
      %v2969 = vld [vmem:[%s9 + $0x30] sm:$0xff]
      %v2970 = vld [vmem:[%s9 + $0x38] sm:$0xff]
      %v2971 = vld [vmem:[%s9 + $0x40] sm:$0xff]
      %v2972 = vld [vmem:[%s9 + $0x48] sm:$0xff]
      %v2973 = vld [vmem:[%s9 + $0x50] sm:$0xff]
      %v2974 = vld [vmem:[%s9 + $0x58] sm:$0xff]
      %v2975 = vld [vmem:[%s9 + $0x60] sm:$0xff]
      %v2976 = vld [vmem:[%s9 + $0x68] sm:$0xff]
      %v2977 = vld [vmem:[%s9 + $0x70] sm:$0xff]
      %v2978 = vld [vmem:[%s9 + $0x78] sm:$0xff]
      %v2979 = vld [vmem:[%s9 + $0x80] sm:$0xff]
      %v2980 = vld [vmem:[%s9 + $0x88] sm:$0xff]
      %v2981 = vld [vmem:[%s9 + $0x90] sm:$0xff]
      %v2982 = vld [vmem:[%s9 + $0x98] sm:$0xff]
      %v2983 = vld [vmem:[%s9 + $0xa0] sm:$0xff]
      %v2984 = vld [vmem:[%s9 + $0xa8] sm:$0xff]
      %v2985 = vld [vmem:[%s9 + $0xb0] sm:$0xff]
      %v2986 = vld [vmem:[%s9 + $0xb8] sm:$0xff]
      %v2987 = vld [vmem:[%s9 + $0xc0] sm:$0xff]
      %v2988 = vld [vmem:[%s9 + $0xc8] sm:$0xff]
      %v2989 = vld [vmem:[%s9 + $0xd0] sm:$0xff]
      %v2990 = vld [vmem:[%s9 + $0xd8] sm:$0xff]
      %v2991 = vld [vmem:[%s9 + $0xe0] sm:$0xff]
      %v2992 = vld [vmem:[%s9 + $0xe8] sm:$0xff]
      %v2993 = vld [vmem:[%s9 + $0xf0] sm:$0xff]
      %v2994 = vld [vmem:[%s9 + $0xf8] sm:$0xff]
      %v2995 = vld [vmem:[%s9 + $0x100] sm:$0xff]
      %v2996 = vld [vmem:[%s9 + $0x108] sm:$0xff]
      %v2997 = vld [vmem:[%s9 + $0x110] sm:$0xff]
      %v2998 = vld [vmem:[%s9 + $0x118] sm:$0xff]
      %v2999 = vld [vmem:[%s9 + $0x120] sm:$0xff]
      %v3000 = vld [vmem:[%s9 + $0x128] sm:$0xff]
      %v3001 = vld [vmem:[%s9 + $0x130] sm:$0xff]
      %v3002 = vld [vmem:[%s9 + $0x138] sm:$0xff]
      %v3003 = vld [vmem:[%s9 + $0x140] sm:$0xff]
      %v3004 = vld [vmem:[%s9 + $0x148] sm:$0xff]
      %v3005 = vld [vmem:[%s9 + $0x150] sm:$0xff]
      %v3006 = vld [vmem:[%s9 + $0x158] sm:$0xff]
      %v3007 = vld [vmem:[%s9 + $0x160] sm:$0xff]
      %v3008 = vld [vmem:[%s9 + $0x168] sm:$0xff]
      %v3009 = vld [vmem:[%s9 + $0x170] sm:$0xff]
      %v3010 = vld [vmem:[%s9 + $0x178] sm:$0xff]
      %v3011 = vld [vmem:[%s9 + $0x180] sm:$0xff]
      %v3012 = vld [vmem:[%s9 + $0x188] sm:$0xff]
      %v3013 = vld [vmem:[%s9 + $0x190] sm:$0xff]
      %v3014 = vld [vmem:[%s9 + $0x198] sm:$0xff]
      %v3015 = vld [vmem:[%s9 + $0x1a0] sm:$0xff]
      %v3016 = vld [vmem:[%s9 + $0x1a8] sm:$0xff]
      %v3017 = vld [vmem:[%s9 + $0x1b0] sm:$0xff]
      %v3018 = vld [vmem:[%s9 + $0x1b8] sm:$0xff]
      %v3019 = vld [vmem:[%s9 + $0x1c0] sm:$0xff]
      %v3020 = vld [vmem:[%s9 + $0x1c8] sm:$0xff]
      %v3021 = vld [vmem:[%s9 + $0x1d0] sm:$0xff]
      %v3022 = vld [vmem:[%s9 + $0x1d8] sm:$0xff]
      %v3023 = vld [vmem:[%s9 + $0x1e0] sm:$0xff]
      %v3024 = vld [vmem:[%s9 + $0x1e8] sm:$0xff]
      %v3025 = vld [vmem:[%s9 + $0x1f0] sm:$0xff]
      %v3026 = vld [vmem:[%s9 + $0x1f8] sm:$0xff]
      %v3027 = vld [vmem:[%s10] sm:$0xf]
      %v3029 = vlaneseq
      %v3030 = vshrl.u32 %v3029, 7
      %v3031 = vsub.s32 0, %v3030
      %v3032 = vrot.slane %v3027, %v3031
      %v3033 = vlaneseq
      %v3034 = vshrl.u32 %v3033, 7
      %v3035 = vsub.s32 1, %v3034
      %v3036 = vrot.slane %v3027, %v3035
      %v3037 = vlaneseq
      %v3038 = vshrl.u32 %v3037, 7
      %v3039 = vsub.s32 2, %v3038
      %v3040 = vrot.slane %v3027, %v3039
      %v3041 = vlaneseq
      %v3042 = vshrl.u32 %v3041, 7
      %v3043 = vsub.s32 3, %v3042
      %v3044 = vrot.slane %v3027, %v3043
      %3049 = vmatprep.subr.mxu0 %v2964
      %3050 = vmatpush1.msra.mxu0 %v2963
      %3051 = vmatprep.subr.mxu0 %v2968
      %3052 = vmatpush1.msra.mxu0 %v2967
      %3053 = vmatprep.subr.mxu0 %v2972
      %3054 = vmatpush1.msra.mxu0 %v2971
      %3055 = vmatprep.subr.mxu0 %v2976
      %3056 = vmatpush1.msra.mxu0 %v2975
      %3057 = vmatprep.subr.mxu0 %v2980
      %3058 = vmatpush1.msra.mxu0 %v2979
      %3059 = vmatprep.subr.mxu0 %v2984
      %3060 = vmatpush1.msra.mxu0 %v2983
      %3061 = vmatprep.subr.mxu0 %v2988
      %3062 = vmatpush1.msra.mxu0 %v2987
      %3063 = vmatprep.subr.mxu0 %v2992
      %3064 = vmatpush1.msra.mxu0 %v2991
      %3065 = vmatprep.subr.mxu0 %v2996
      %3066 = vmatpush1.msra.mxu0 %v2995
      %3067 = vmatprep.subr.mxu0 %v3000
      %3068 = vmatpush1.msra.mxu0 %v2999
      %3069 = vmatprep.subr.mxu0 %v3004
      %3070 = vmatpush1.msra.mxu0 %v3003
      %3071 = vmatprep.subr.mxu0 %v3008
      %3072 = vmatpush1.msra.mxu0 %v3007
      %3073 = vmatprep.subr.mxu0 %v3012
      %3074 = vmatpush1.msra.mxu0 %v3011
      %3075 = vmatprep.subr.mxu0 %v3016
      %3076 = vmatpush1.msra.mxu0 %v3015
      %3077 = vmatprep.subr.mxu0 %v3020
      %3078 = vmatpush1.msra.mxu0 %v3019
      %3079 = vmatprep.subr.mxu0 %v3024
      %3080 = vmatpush1.msra.mxu0 %v3023
      %3081 = vmatprep.subr.mxu0 0.0
      %3082 = vmatpush1.msra.mxu0 0.0
      %3083 = vmatprep.subr.mxu0 0.0
      %3084 = vmatpush1.msra.mxu0 0.0
      %3085 = vmatprep.subr.mxu0 0.0
      %3086 = vmatpush1.msra.mxu0 0.0
      %3087 = vmatprep.subr.mxu0 0.0
      %3088 = vmatpush1.msra.mxu0 0.0
      %3089 = vmatprep.subr.mxu0 0.0
      %3090 = vmatpush1.msra.mxu0 0.0
      %3091 = vmatprep.subr.mxu0 0.0
      %3092 = vmatpush1.msra.mxu0 0.0
      %3093 = vmatprep.subr.mxu0 0.0
      %3094 = vmatpush1.msra.mxu0 0.0
      %3095 = vmatprep.subr.mxu0 0.0
      %3096 = vmatpush1.msra.mxu0 0.0
      %3097 = vmatprep.subr.mxu0 0.0
      %3098 = vmatpush1.msra.mxu0 0.0
      %3099 = vmatprep.subr.mxu0 0.0
      %3100 = vmatpush1.msra.mxu0 0.0
      %3101 = vmatprep.subr.mxu0 0.0
      %3102 = vmatpush1.msra.mxu0 0.0
      %3103 = vmatprep.subr.mxu0 0.0
      %3104 = vmatpush1.msra.mxu0 0.0
      %3105 = vmatprep.subr.mxu0 0.0
      %3106 = vmatpush1.msra.mxu0 0.0
      %3107 = vmatprep.subr.mxu0 0.0
      %3108 = vmatpush1.msra.mxu0 0.0
      %3109 = vmatprep.subr.mxu0 0.0
      %3110 = vmatpush1.msra.mxu0 0.0
      %3111 = vmatprep.subr.mxu0 0.0
      %3112 = vmatpush1.msra.mxu0 0.0
      %3113 = vmatprep.mubr.f32.mxu0 0.0
      %3114 = vmatmul.mubr.f32.gmra.mrb[0].mxu0 %v2955
      %v3115 = vpop.f32.mrb[0].mxu0
      %v3116 = vadd.f32 %v3032, %v3115
      %v3117 = vpop.f32.mrb[0].mxu0
      %v3118 = vadd.f32 %v3036, %v3117
      %3119 = vmatprep.mubr.f32.mxu0 0.0
      %3120 = vmatmul.mubr.f32.gmra.mrb[0].mxu0 %v2956
      %v3121 = vpop.f32.mrb[0].mxu0
      %v3122 = vadd.f32 %v3032, %v3121
      %v3123 = vpop.f32.mrb[0].mxu0
      %v3124 = vadd.f32 %v3036, %v3123
      %3125 = vmatprep.mubr.f32.mxu0 0.0
      %3126 = vmatmul.mubr.f32.gmra.mrb[0].mxu0 %v2957
      %v3127 = vpop.f32.mrb[0].mxu0
      %v3128 = vadd.f32 %v3032, %v3127
      %v3129 = vpop.f32.mrb[0].mxu0
      %v3130 = vadd.f32 %v3036, %v3129
      %3131 = vmatprep.mubr.f32.mxu0 0.0
      %3132 = vmatmul.mubr.f32.gmra.mrb[0].mxu0 %v2958
      %v3133 = vpop.f32.mrb[0].mxu0
      %v3134 = vadd.f32 %v3032, %v3133
      %v3135 = vpop.f32.mrb[0].mxu0
      %v3136 = vadd.f32 %v3036, %v3135
      %3137 = vmatprep.mubr.f32.mxu0 0.0
      %3138 = vmatmul.mubr.f32.gmra.mrb[0].mxu0 %v2959
      %v3139 = vpop.f32.mrb[0].mxu0
      %v3140 = vadd.f32 %v3032, %v3139
      %v3141 = vpop.f32.mrb[0].mxu0
      %v3142 = vadd.f32 %v3036, %v3141
      %3143 = vmatprep.mubr.f32.mxu0 0.0
      %3144 = vmatmul.mubr.f32.gmra.mrb[0].mxu0 %v2960
      %v3145 = vpop.f32.mrb[0].mxu0
      %v3146 = vadd.f32 %v3032, %v3145
      %v3147 = vpop.f32.mrb[0].mxu0
      %v3148 = vadd.f32 %v3036, %v3147
      %3149 = vmatprep.mubr.f32.mxu0 0.0
      %3150 = vmatmul.mubr.f32.gmra.mrb[0].mxu0 %v2961
      %v3151 = vpop.f32.mrb[0].mxu0
      %v3152 = vadd.f32 %v3032, %v3151
      %v3153 = vpop.f32.mrb[0].mxu0
      %v3154 = vadd.f32 %v3036, %v3153
      %3155 = vmatprep.mubr.f32.mxu0 0.0
      %3156 = vmatmul.mubr.f32.gmra.mrb[0].mxu0 %v2962
      %v3157 = vpop.f32.mrb[0].mxu0
      %v3158 = vadd.f32 %v3032, %v3157
      %v3159 = vpop.f32.mrb[0].mxu0
      %v3160 = vadd.f32 %v3036, %v3159
      %3161 = vdwg.mxu0
      %3162 = vmatprep.subr.mxu0 %v2966
      %3163 = vmatpush1.msra.mxu0 %v2965
      %3164 = vmatprep.subr.mxu0 %v2970
      %3165 = vmatpush1.msra.mxu0 %v2969
      %3166 = vmatprep.subr.mxu0 %v2974
      %3167 = vmatpush1.msra.mxu0 %v2973
      %3168 = vmatprep.subr.mxu0 %v2978
      %3169 = vmatpush1.msra.mxu0 %v2977
      %3170 = vmatprep.subr.mxu0 %v2982
      %3171 = vmatpush1.msra.mxu0 %v2981
      %3172 = vmatprep.subr.mxu0 %v2986
      %3173 = vmatpush1.msra.mxu0 %v2985
      %3174 = vmatprep.subr.mxu0 %v2990
      %3175 = vmatpush1.msra.mxu0 %v2989
      %3176 = vmatprep.subr.mxu0 %v2994
      %3177 = vmatpush1.msra.mxu0 %v2993
      %3178 = vmatprep.subr.mxu0 %v2998
      %3179 = vmatpush1.msra.mxu0 %v2997
      %3180 = vmatprep.subr.mxu0 %v3002
      %3181 = vmatpush1.msra.mxu0 %v3001
      %3182 = vmatprep.subr.mxu0 %v3006
      %3183 = vmatpush1.msra.mxu0 %v3005
      %3184 = vmatprep.subr.mxu0 %v3010
      %3185 = vmatpush1.msra.mxu0 %v3009
      %3186 = vmatprep.subr.mxu0 %v3014
      %3187 = vmatpush1.msra.mxu0 %v3013
      %3188 = vmatprep.subr.mxu0 %v3018
      %3189 = vmatpush1.msra.mxu0 %v3017
      %3190 = vmatprep.subr.mxu0 %v3022
      %3191 = vmatpush1.msra.mxu0 %v3021
      %3192 = vmatprep.subr.mxu0 %v3026
      %3193 = vmatpush1.msra.mxu0 %v3025
      %3194 = vmatprep.subr.mxu0 0.0
      %3195 = vmatpush1.msra.mxu0 0.0
      %3196 = vmatprep.subr.mxu0 0.0
      %3197 = vmatpush1.msra.mxu0 0.0
      %3198 = vmatprep.subr.mxu0 0.0
      %3199 = vmatpush1.msra.mxu0 0.0
      %3200 = vmatprep.subr.mxu0 0.0
      %3201 = vmatpush1.msra.mxu0 0.0
      %3202 = vmatprep.subr.mxu0 0.0
      %3203 = vmatpush1.msra.mxu0 0.0
      %3204 = vmatprep.subr.mxu0 0.0
      %3205 = vmatpush1.msra.mxu0 0.0
      %3206 = vmatprep.subr.mxu0 0.0
      %3207 = vmatpush1.msra.mxu0 0.0
      %3208 = vmatprep.subr.mxu0 0.0
      %3209 = vmatpush1.msra.mxu0 0.0
      %3210 = vmatprep.subr.mxu0 0.0
      %3211 = vmatpush1.msra.mxu0 0.0
      %3212 = vmatprep.subr.mxu0 0.0
      %3213 = vmatpush1.msra.mxu0 0.0
      %3214 = vmatprep.subr.mxu0 0.0
      %3215 = vmatpush1.msra.mxu0 0.0
      %3216 = vmatprep.subr.mxu0 0.0
      %3217 = vmatpush1.msra.mxu0 0.0
      %3218 = vmatprep.subr.mxu0 0.0
      %3219 = vmatpush1.msra.mxu0 0.0
      %3220 = vmatprep.subr.mxu0 0.0
      %3221 = vmatpush1.msra.mxu0 0.0
      %3222 = vmatprep.subr.mxu0 0.0
      %3223 = vmatpush1.msra.mxu0 0.0
      %3224 = vmatprep.subr.mxu0 0.0
      %3225 = vmatpush1.msra.mxu0 0.0
      %3226 = vmatprep.mubr.f32.mxu0 0.0
      %3227 = vmatmul.mubr.f32.gmra.mrb[0].mxu0 %v2955
      %v3228 = vpop.f32.mrb[0].mxu0
      %v3229 = vadd.f32 %v3040, %v3228
      %v3230 = vpop.f32.mrb[0].mxu0
      %v3231 = vadd.f32 %v3044, %v3230
      %3232 = vmatprep.mubr.f32.mxu0 0.0
      %3233 = vmatmul.mubr.f32.gmra.mrb[0].mxu0 %v2956
      %v3234 = vpop.f32.mrb[0].mxu0
      %v3235 = vadd.f32 %v3040, %v3234
      %v3236 = vpop.f32.mrb[0].mxu0
      %v3237 = vadd.f32 %v3044, %v3236
      %3238 = vmatprep.mubr.f32.mxu0 0.0
      %3239 = vmatmul.mubr.f32.gmra.mrb[0].mxu0 %v2957
      %v3240 = vpop.f32.mrb[0].mxu0
      %v3241 = vadd.f32 %v3040, %v3240
      %v3242 = vpop.f32.mrb[0].mxu0
      %v3243 = vadd.f32 %v3044, %v3242
      %3244 = vmatprep.mubr.f32.mxu0 0.0
      %3245 = vmatmul.mubr.f32.gmra.mrb[0].mxu0 %v2958
      %v3246 = vpop.f32.mrb[0].mxu0
      %v3247 = vadd.f32 %v3040, %v3246
      %v3248 = vpop.f32.mrb[0].mxu0
      %v3249 = vadd.f32 %v3044, %v3248
      %3250 = vmatprep.mubr.f32.mxu0 0.0
      %3251 = vmatmul.mubr.f32.gmra.mrb[0].mxu0 %v2959
      %v3252 = vpop.f32.mrb[0].mxu0
      %v3253 = vadd.f32 %v3040, %v3252
      %v3254 = vpop.f32.mrb[0].mxu0
      %v3255 = vadd.f32 %v3044, %v3254
      %3256 = vmatprep.mubr.f32.mxu0 0.0
      %3257 = vmatmul.mubr.f32.gmra.mrb[0].mxu0 %v2960
      %v3258 = vpop.f32.mrb[0].mxu0
      %v3259 = vadd.f32 %v3040, %v3258
      %v3260 = vpop.f32.mrb[0].mxu0
      %v3261 = vadd.f32 %v3044, %v3260
      %3262 = vmatprep.mubr.f32.mxu0 0.0
      %3263 = vmatmul.mubr.f32.gmra.mrb[0].mxu0 %v2961
      %v3264 = vpop.f32.mrb[0].mxu0
      %v3265 = vadd.f32 %v3040, %v3264
      %v3266 = vpop.f32.mrb[0].mxu0
      %v3267 = vadd.f32 %v3044, %v3266
      %3268 = vmatprep.mubr.f32.mxu0 0.0
      %3269 = vmatmul.mubr.f32.gmra.mrb[0].mxu0 %v2962
      %v3270 = vpop.f32.mrb[0].mxu0
      %v3271 = vadd.f32 %v3040, %v3270
      %v3272 = vpop.f32.mrb[0].mxu0
      %v3273 = vadd.f32 %v3044, %v3272
      %3274 = vdwg.mxu0
      %v3275 = vmul.f32 %v3116, 0.5
      %v3276 = vmul.f32 %v3118, 0.5
      %v3277 = vmul.f32 %v3229, 0.5
      %v3278 = vmul.f32 %v3231, 0.5
      %v3279 = vmul.f32 %v3122, 0.5
      %v3280 = vmul.f32 %v3124, 0.5
      %v3281 = vmul.f32 %v3235, 0.5
      %v3282 = vmul.f32 %v3237, 0.5
      %v3283 = vmul.f32 %v3128, 0.5
      %v3284 = vmul.f32 %v3130, 0.5
      %v3285 = vmul.f32 %v3241, 0.5
      %v3286 = vmul.f32 %v3243, 0.5
      %v3287 = vmul.f32 %v3134, 0.5
      %v3288 = vmul.f32 %v3136, 0.5
      %v3289 = vmul.f32 %v3247, 0.5
      %v3290 = vmul.f32 %v3249, 0.5
      %v3291 = vmul.f32 %v3140, 0.5
      %v3292 = vmul.f32 %v3142, 0.5
      %v3293 = vmul.f32 %v3253, 0.5
      %v3294 = vmul.f32 %v3255, 0.5
      %v3295 = vmul.f32 %v3146, 0.5
      %v3296 = vmul.f32 %v3148, 0.5
      %v3297 = vmul.f32 %v3259, 0.5
      %v3298 = vmul.f32 %v3261, 0.5
      %v3299 = vmul.f32 %v3152, 0.5
      %v3300 = vmul.f32 %v3154, 0.5
      %v3301 = vmul.f32 %v3265, 0.5
      %v3302 = vmul.f32 %v3267, 0.5
      %v3303 = vmul.f32 %v3158, 0.5
      %v3304 = vmul.f32 %v3160, 0.5
      %v3305 = vmul.f32 %v3271, 0.5
      %v3306 = vmul.f32 %v3273, 0.5
      %v3307 = vmul.f32 %v3116, 0.70710677
      %v3308 = vmul.f32 %v3118, 0.70710677
      %v3309 = vmul.f32 %v3229, 0.70710677
      %v3310 = vmul.f32 %v3231, 0.70710677
      %v3311 = vmul.f32 %v3122, 0.70710677
      %v3312 = vmul.f32 %v3124, 0.70710677
      %v3313 = vmul.f32 %v3235, 0.70710677
      %v3314 = vmul.f32 %v3237, 0.70710677
      %v3315 = vmul.f32 %v3128, 0.70710677
      %v3316 = vmul.f32 %v3130, 0.70710677
      %v3317 = vmul.f32 %v3241, 0.70710677
      %v3318 = vmul.f32 %v3243, 0.70710677
      %v3319 = vmul.f32 %v3134, 0.70710677
      %v3320 = vmul.f32 %v3136, 0.70710677
      %v3321 = vmul.f32 %v3247, 0.70710677
      %v3322 = vmul.f32 %v3249, 0.70710677
      %v3323 = vmul.f32 %v3140, 0.70710677
      %v3324 = vmul.f32 %v3142, 0.70710677
      %v3325 = vmul.f32 %v3253, 0.70710677
      %v3326 = vmul.f32 %v3255, 0.70710677
      %v3327 = vmul.f32 %v3146, 0.70710677
      %v3328 = vmul.f32 %v3148, 0.70710677
      %v3329 = vmul.f32 %v3259, 0.70710677
      %v3330 = vmul.f32 %v3261, 0.70710677
      %v3331 = vmul.f32 %v3152, 0.70710677
      %v3332 = vmul.f32 %v3154, 0.70710677
      %v3333 = vmul.f32 %v3265, 0.70710677
      %v3334 = vmul.f32 %v3267, 0.70710677
      %v3335 = vmul.f32 %v3158, 0.70710677
      %v3336 = vmul.f32 %v3160, 0.70710677
      %v3337 = vmul.f32 %v3271, 0.70710677
      %v3338 = vmul.f32 %v3273, 0.70710677
      %v3339 = verf.f32.pop %v3307
      %v3340 = verf.f32.pop %v3308
      %v3341 = verf.f32.pop %v3309
      %v3342 = verf.f32.pop %v3310
      %v3343 = verf.f32.pop %v3311
      %v3344 = verf.f32.pop %v3312
      %v3345 = verf.f32.pop %v3313
      %v3346 = verf.f32.pop %v3314
      %v3347 = verf.f32.pop %v3315
      %v3348 = verf.f32.pop %v3316
      %v3349 = verf.f32.pop %v3317
      %v3350 = verf.f32.pop %v3318
      %v3351 = verf.f32.pop %v3319
      %v3352 = verf.f32.pop %v3320
      %v3353 = verf.f32.pop %v3321
      %v3354 = verf.f32.pop %v3322
      %v3355 = verf.f32.pop %v3323
      %v3356 = verf.f32.pop %v3324
      %v3357 = verf.f32.pop %v3325
      %v3358 = verf.f32.pop %v3326
      %v3359 = verf.f32.pop %v3327
      %v3360 = verf.f32.pop %v3328
      %v3361 = verf.f32.pop %v3329
      %v3362 = verf.f32.pop %v3330
      %v3363 = verf.f32.pop %v3331
      %v3364 = verf.f32.pop %v3332
      %v3365 = verf.f32.pop %v3333
      %v3366 = verf.f32.pop %v3334
      %v3367 = verf.f32.pop %v3335
      %v3368 = verf.f32.pop %v3336
      %v3369 = verf.f32.pop %v3337
      %v3370 = verf.f32.pop %v3338
      %v3371 = vadd.f32 %v3339, 1.0
      %v3372 = vadd.f32 %v3340, 1.0
      %v3373 = vadd.f32 %v3341, 1.0
      %v3374 = vadd.f32 %v3342, 1.0
      %v3375 = vadd.f32 %v3343, 1.0
      %v3376 = vadd.f32 %v3344, 1.0
      %v3377 = vadd.f32 %v3345, 1.0
      %v3378 = vadd.f32 %v3346, 1.0
      %v3379 = vadd.f32 %v3347, 1.0
      %v3380 = vadd.f32 %v3348, 1.0
      %v3381 = vadd.f32 %v3349, 1.0
      %v3382 = vadd.f32 %v3350, 1.0
      %v3383 = vadd.f32 %v3351, 1.0
      %v3384 = vadd.f32 %v3352, 1.0
      %v3385 = vadd.f32 %v3353, 1.0
      %v3386 = vadd.f32 %v3354, 1.0
      %v3387 = vadd.f32 %v3355, 1.0
      %v3388 = vadd.f32 %v3356, 1.0
      %v3389 = vadd.f32 %v3357, 1.0
      %v3390 = vadd.f32 %v3358, 1.0
      %v3391 = vadd.f32 %v3359, 1.0
      %v3392 = vadd.f32 %v3360, 1.0
      %v3393 = vadd.f32 %v3361, 1.0
      %v3394 = vadd.f32 %v3362, 1.0
      %v3395 = vadd.f32 %v3363, 1.0
      %v3396 = vadd.f32 %v3364, 1.0
      %v3397 = vadd.f32 %v3365, 1.0
      %v3398 = vadd.f32 %v3366, 1.0
      %v3399 = vadd.f32 %v3367, 1.0
      %v3400 = vadd.f32 %v3368, 1.0
      %v3401 = vadd.f32 %v3369, 1.0
      %v3402 = vadd.f32 %v3370, 1.0
      %v3403 = vmul.f32 %v3275, %v3371
      %v3404 = vmul.f32 %v3276, %v3372
      %v3405 = vmul.f32 %v3277, %v3373
      %v3406 = vmul.f32 %v3278, %v3374
      %v3407 = vmul.f32 %v3279, %v3375
      %v3408 = vmul.f32 %v3280, %v3376
      %v3409 = vmul.f32 %v3281, %v3377
      %v3410 = vmul.f32 %v3282, %v3378
      %v3411 = vmul.f32 %v3283, %v3379
      %v3412 = vmul.f32 %v3284, %v3380
      %v3413 = vmul.f32 %v3285, %v3381
      %v3414 = vmul.f32 %v3286, %v3382
      %v3415 = vmul.f32 %v3287, %v3383
      %v3416 = vmul.f32 %v3288, %v3384
      %v3417 = vmul.f32 %v3289, %v3385
      %v3418 = vmul.f32 %v3290, %v3386
      %v3419 = vmul.f32 %v3291, %v3387
      %v3420 = vmul.f32 %v3292, %v3388
      %v3421 = vmul.f32 %v3293, %v3389
      %v3422 = vmul.f32 %v3294, %v3390
      %v3423 = vmul.f32 %v3295, %v3391
      %v3424 = vmul.f32 %v3296, %v3392
      %v3425 = vmul.f32 %v3297, %v3393
      %v3426 = vmul.f32 %v3298, %v3394
      %v3427 = vmul.f32 %v3299, %v3395
      %v3428 = vmul.f32 %v3300, %v3396
      %v3429 = vmul.f32 %v3301, %v3397
      %v3430 = vmul.f32 %v3302, %v3398
      %v3431 = vmul.f32 %v3303, %v3399
      %v3432 = vmul.f32 %v3304, %v3400
      %v3433 = vmul.f32 %v3305, %v3401
      %v3434 = vmul.f32 %v3306, %v3402
      %v3435 = vld [vmem:[%s11] sm:$0xff]
      %v3436 = vld [vmem:[%s11 + $0x8] sm:$0xff]
      %v3437 = vld [vmem:[%s11 + $0x10] sm:$0xff]
      %v3438 = vld [vmem:[%s11 + $0x18] sm:$0xff]
      %v3439 = vld [vmem:[%s11 + $0x20] sm:$0xff]
      %v3440 = vld [vmem:[%s11 + $0x28] sm:$0xff]
      %v3441 = vld [vmem:[%s11 + $0x30] sm:$0xff]
      %v3442 = vld [vmem:[%s11 + $0x38] sm:$0xff]
      %v3443 = vld [vmem:[%s11 + $0x40] sm:$0xff]
      %v3444 = vld [vmem:[%s11 + $0x48] sm:$0xff]
      %v3445 = vld [vmem:[%s11 + $0x50] sm:$0xff]
      %v3446 = vld [vmem:[%s11 + $0x58] sm:$0xff]
      %v3447 = vld [vmem:[%s11 + $0x60] sm:$0xff]
      %v3448 = vld [vmem:[%s11 + $0x68] sm:$0xff]
      %v3449 = vld [vmem:[%s11 + $0x70] sm:$0xff]
      %v3450 = vld [vmem:[%s11 + $0x78] sm:$0xff]
      %v3451 = vld [vmem:[%s11 + $0x80] sm:$0xff]
      %v3452 = vld [vmem:[%s11 + $0x88] sm:$0xff]
      %v3453 = vld [vmem:[%s11 + $0x90] sm:$0xff]
      %v3454 = vld [vmem:[%s11 + $0x98] sm:$0xff]
      %v3455 = vld [vmem:[%s11 + $0xa0] sm:$0xff]
      %v3456 = vld [vmem:[%s11 + $0xa8] sm:$0xff]
      %v3457 = vld [vmem:[%s11 + $0xb0] sm:$0xff]
      %v3458 = vld [vmem:[%s11 + $0xb8] sm:$0xff]
      %v3459 = vld [vmem:[%s11 + $0xc0] sm:$0xff]
      %v3460 = vld [vmem:[%s11 + $0xc8] sm:$0xff]
      %v3461 = vld [vmem:[%s11 + $0xd0] sm:$0xff]
      %v3462 = vld [vmem:[%s11 + $0xd8] sm:$0xff]
      %v3463 = vld [vmem:[%s11 + $0xe0] sm:$0xff]
      %v3464 = vld [vmem:[%s11 + $0xe8] sm:$0xff]
      %v3465 = vld [vmem:[%s11 + $0xf0] sm:$0xff]
      %v3466 = vld [vmem:[%s11 + $0xf8] sm:$0xff]
      %v3467 = vld [vmem:[%s11 + $0x100] sm:$0xff]
      %v3468 = vld [vmem:[%s11 + $0x108] sm:$0xff]
      %v3469 = vld [vmem:[%s11 + $0x110] sm:$0xff]
      %v3470 = vld [vmem:[%s11 + $0x118] sm:$0xff]
      %v3471 = vld [vmem:[%s11 + $0x120] sm:$0xff]
      %v3472 = vld [vmem:[%s11 + $0x128] sm:$0xff]
      %v3473 = vld [vmem:[%s11 + $0x130] sm:$0xff]
      %v3474 = vld [vmem:[%s11 + $0x138] sm:$0xff]
      %v3475 = vld [vmem:[%s11 + $0x140] sm:$0xff]
      %v3476 = vld [vmem:[%s11 + $0x148] sm:$0xff]
      %v3477 = vld [vmem:[%s11 + $0x150] sm:$0xff]
      %v3478 = vld [vmem:[%s11 + $0x158] sm:$0xff]
      %v3479 = vld [vmem:[%s11 + $0x160] sm:$0xff]
      %v3480 = vld [vmem:[%s11 + $0x168] sm:$0xff]
      %v3481 = vld [vmem:[%s11 + $0x170] sm:$0xff]
      %v3482 = vld [vmem:[%s11 + $0x178] sm:$0xff]
      %v3483 = vld [vmem:[%s11 + $0x180] sm:$0xff]
      %v3484 = vld [vmem:[%s11 + $0x188] sm:$0xff]
      %v3485 = vld [vmem:[%s11 + $0x190] sm:$0xff]
      %v3486 = vld [vmem:[%s11 + $0x198] sm:$0xff]
      %v3487 = vld [vmem:[%s11 + $0x1a0] sm:$0xff]
      %v3488 = vld [vmem:[%s11 + $0x1a8] sm:$0xff]
      %v3489 = vld [vmem:[%s11 + $0x1b0] sm:$0xff]
      %v3490 = vld [vmem:[%s11 + $0x1b8] sm:$0xff]
      %v3491 = vld [vmem:[%s11 + $0x1c0] sm:$0xff]
      %v3492 = vld [vmem:[%s11 + $0x1c8] sm:$0xff]
      %v3493 = vld [vmem:[%s11 + $0x1d0] sm:$0xff]
      %v3494 = vld [vmem:[%s11 + $0x1d8] sm:$0xff]
      %v3495 = vld [vmem:[%s11 + $0x1e0] sm:$0xff]
      %v3496 = vld [vmem:[%s11 + $0x1e8] sm:$0xff]
      %v3497 = vld [vmem:[%s11 + $0x1f0] sm:$0xff]
      %v3498 = vld [vmem:[%s11 + $0x1f8] sm:$0xff]
      %v3499 = vld [vmem:[%s12] sm:$0x1]
      %v3501 = vlaneseq
      %v3502 = vshrl.u32 %v3501, 7
      %v3503 = vsub.s32 0, %v3502
      %v3504 = vrot.slane %v3499, %v3503
      %3506 = vmatprep.subr.mxu0 0.0
      %3507 = vmatpush1.msra.mxu0 %v3435
      %3508 = vmatprep.subr.mxu0 0.0
      %3509 = vmatpush1.msra.mxu0 %v3436
      %3510 = vmatprep.subr.mxu0 0.0
      %3511 = vmatpush1.msra.mxu0 %v3437
      %3512 = vmatprep.subr.mxu0 0.0
      %3513 = vmatpush1.msra.mxu0 %v3438
      %3514 = vmatprep.subr.mxu0 0.0
      %3515 = vmatpush1.msra.mxu0 %v3439
      %3516 = vmatprep.subr.mxu0 0.0
      %3517 = vmatpush1.msra.mxu0 %v3440
      %3518 = vmatprep.subr.mxu0 0.0
      %3519 = vmatpush1.msra.mxu0 %v3441
      %3520 = vmatprep.subr.mxu0 0.0
      %3521 = vmatpush1.msra.mxu0 %v3442
      %3522 = vmatprep.subr.mxu0 0.0
      %3523 = vmatpush1.msra.mxu0 %v3443
      %3524 = vmatprep.subr.mxu0 0.0
      %3525 = vmatpush1.msra.mxu0 %v3444
      %3526 = vmatprep.subr.mxu0 0.0
      %3527 = vmatpush1.msra.mxu0 %v3445
      %3528 = vmatprep.subr.mxu0 0.0
      %3529 = vmatpush1.msra.mxu0 %v3446
      %3530 = vmatprep.subr.mxu0 0.0
      %3531 = vmatpush1.msra.mxu0 %v3447
      %3532 = vmatprep.subr.mxu0 0.0
      %3533 = vmatpush1.msra.mxu0 %v3448
      %3534 = vmatprep.subr.mxu0 0.0
      %3535 = vmatpush1.msra.mxu0 %v3449
      %3536 = vmatprep.subr.mxu0 0.0
      %3537 = vmatpush1.msra.mxu0 %v3450
      %3538 = vmatprep.subr.mxu0 0.0
      %3539 = vmatpush1.msra.mxu0 %v3451
      %3540 = vmatprep.subr.mxu0 0.0
      %3541 = vmatpush1.msra.mxu0 %v3452
      %3542 = vmatprep.subr.mxu0 0.0
      %3543 = vmatpush1.msra.mxu0 %v3453
      %3544 = vmatprep.subr.mxu0 0.0
      %3545 = vmatpush1.msra.mxu0 %v3454
      %3546 = vmatprep.subr.mxu0 0.0
      %3547 = vmatpush1.msra.mxu0 %v3455
      %3548 = vmatprep.subr.mxu0 0.0
      %3549 = vmatpush1.msra.mxu0 %v3456
      %3550 = vmatprep.subr.mxu0 0.0
      %3551 = vmatpush1.msra.mxu0 %v3457
      %3552 = vmatprep.subr.mxu0 0.0
      %3553 = vmatpush1.msra.mxu0 %v3458
      %3554 = vmatprep.subr.mxu0 0.0
      %3555 = vmatpush1.msra.mxu0 %v3459
      %3556 = vmatprep.subr.mxu0 0.0
      %3557 = vmatpush1.msra.mxu0 %v3460
      %3558 = vmatprep.subr.mxu0 0.0
      %3559 = vmatpush1.msra.mxu0 %v3461
      %3560 = vmatprep.subr.mxu0 0.0
      %3561 = vmatpush1.msra.mxu0 %v3462
      %3562 = vmatprep.subr.mxu0 0.0
      %3563 = vmatpush1.msra.mxu0 %v3463
      %3564 = vmatprep.subr.mxu0 0.0
      %3565 = vmatpush1.msra.mxu0 %v3464
      %3566 = vmatprep.subr.mxu0 0.0
      %3567 = vmatpush1.msra.mxu0 %v3465
      %3568 = vmatprep.subr.mxu0 0.0
      %3569 = vmatpush1.msra.mxu0 %v3466
      %3570 = vmatprep.mubr.f32.mxu0 %v3404
      %3571 = vmatmul.mubr.f32.gmra.mrb[0].mxu0 %v3403
      %v3572 = vpop.f32.mrb[0].mxu0
      %v3573 = vadd.f32 %v3504, %v3572
      %v3574 = vpop.f32.mrb[0].mxu0
      %3575 = vmatprep.mubr.f32.mxu0 %v3408
      %3576 = vmatmul.mubr.f32.gmra.mrb[0].mxu0 %v3407
      %v3577 = vpop.f32.mrb[0].mxu0
      %v3578 = vadd.f32 %v3504, %v3577
      %v3579 = vpop.f32.mrb[0].mxu0
      %3580 = vmatprep.mubr.f32.mxu0 %v3412
      %3581 = vmatmul.mubr.f32.gmra.mrb[0].mxu0 %v3411
      %v3582 = vpop.f32.mrb[0].mxu0
      %v3583 = vadd.f32 %v3504, %v3582
      %v3584 = vpop.f32.mrb[0].mxu0
      %3585 = vmatprep.mubr.f32.mxu0 %v3416
      %3586 = vmatmul.mubr.f32.gmra.mrb[0].mxu0 %v3415
      %v3587 = vpop.f32.mrb[0].mxu0
      %v3588 = vadd.f32 %v3504, %v3587
      %v3589 = vpop.f32.mrb[0].mxu0
      %3590 = vmatprep.mubr.f32.mxu0 %v3420
      %3591 = vmatmul.mubr.f32.gmra.mrb[0].mxu0 %v3419
      %v3592 = vpop.f32.mrb[0].mxu0
      %v3593 = vadd.f32 %v3504, %v3592
      %v3594 = vpop.f32.mrb[0].mxu0
      %3595 = vmatprep.mubr.f32.mxu0 %v3424
      %3596 = vmatmul.mubr.f32.gmra.mrb[0].mxu0 %v3423
      %v3597 = vpop.f32.mrb[0].mxu0
      %v3598 = vadd.f32 %v3504, %v3597
      %v3599 = vpop.f32.mrb[0].mxu0
      %3600 = vmatprep.mubr.f32.mxu0 %v3428
      %3601 = vmatmul.mubr.f32.gmra.mrb[0].mxu0 %v3427
      %v3602 = vpop.f32.mrb[0].mxu0
      %v3603 = vadd.f32 %v3504, %v3602
      %v3604 = vpop.f32.mrb[0].mxu0
      %3605 = vmatprep.mubr.f32.mxu0 %v3432
      %3606 = vmatmul.mubr.f32.gmra.mrb[0].mxu0 %v3431
      %v3607 = vpop.f32.mrb[0].mxu0
      %v3608 = vadd.f32 %v3504, %v3607
      %v3609 = vpop.f32.mrb[0].mxu0
      %3610 = vdwg.mxu0
      %3611 = vmatprep.subr.mxu0 0.0
      %3612 = vmatpush1.msra.mxu0 %v3467
      %3613 = vmatprep.subr.mxu0 0.0
      %3614 = vmatpush1.msra.mxu0 %v3468
      %3615 = vmatprep.subr.mxu0 0.0
      %3616 = vmatpush1.msra.mxu0 %v3469
      %3617 = vmatprep.subr.mxu0 0.0
      %3618 = vmatpush1.msra.mxu0 %v3470
      %3619 = vmatprep.subr.mxu0 0.0
      %3620 = vmatpush1.msra.mxu0 %v3471
      %3621 = vmatprep.subr.mxu0 0.0
      %3622 = vmatpush1.msra.mxu0 %v3472
      %3623 = vmatprep.subr.mxu0 0.0
      %3624 = vmatpush1.msra.mxu0 %v3473
      %3625 = vmatprep.subr.mxu0 0.0
      %3626 = vmatpush1.msra.mxu0 %v3474
      %3627 = vmatprep.subr.mxu0 0.0
      %3628 = vmatpush1.msra.mxu0 %v3475
      %3629 = vmatprep.subr.mxu0 0.0
      %3630 = vmatpush1.msra.mxu0 %v3476
      %3631 = vmatprep.subr.mxu0 0.0
      %3632 = vmatpush1.msra.mxu0 %v3477
      %3633 = vmatprep.subr.mxu0 0.0
      %3634 = vmatpush1.msra.mxu0 %v3478
      %3635 = vmatprep.subr.mxu0 0.0
      %3636 = vmatpush1.msra.mxu0 %v3479
      %3637 = vmatprep.subr.mxu0 0.0
      %3638 = vmatpush1.msra.mxu0 %v3480
      %3639 = vmatprep.subr.mxu0 0.0
      %3640 = vmatpush1.msra.mxu0 %v3481
      %3641 = vmatprep.subr.mxu0 0.0
      %3642 = vmatpush1.msra.mxu0 %v3482
      %3643 = vmatprep.subr.mxu0 0.0
      %3644 = vmatpush1.msra.mxu0 %v3483
      %3645 = vmatprep.subr.mxu0 0.0
      %3646 = vmatpush1.msra.mxu0 %v3484
      %3647 = vmatprep.subr.mxu0 0.0
      %3648 = vmatpush1.msra.mxu0 %v3485
      %3649 = vmatprep.subr.mxu0 0.0
      %3650 = vmatpush1.msra.mxu0 %v3486
      %3651 = vmatprep.subr.mxu0 0.0
      %3652 = vmatpush1.msra.mxu0 %v3487
      %3653 = vmatprep.subr.mxu0 0.0
      %3654 = vmatpush1.msra.mxu0 %v3488
      %3655 = vmatprep.subr.mxu0 0.0
      %3656 = vmatpush1.msra.mxu0 %v3489
      %3657 = vmatprep.subr.mxu0 0.0
      %3658 = vmatpush1.msra.mxu0 %v3490
      %3659 = vmatprep.subr.mxu0 0.0
      %3660 = vmatpush1.msra.mxu0 %v3491
      %3661 = vmatprep.subr.mxu0 0.0
      %3662 = vmatpush1.msra.mxu0 %v3492
      %3663 = vmatprep.subr.mxu0 0.0
      %3664 = vmatpush1.msra.mxu0 %v3493
      %3665 = vmatprep.subr.mxu0 0.0
      %3666 = vmatpush1.msra.mxu0 %v3494
      %3667 = vmatprep.subr.mxu0 0.0
      %3668 = vmatpush1.msra.mxu0 %v3495
      %3669 = vmatprep.subr.mxu0 0.0
      %3670 = vmatpush1.msra.mxu0 %v3496
      %3671 = vmatprep.subr.mxu0 0.0
      %3672 = vmatpush1.msra.mxu0 %v3497
      %3673 = vmatprep.subr.mxu0 0.0
      %3674 = vmatpush1.msra.mxu0 %v3498
      %3675 = vmatprep.mubr.f32.mxu0 %v3406
      %3676 = vmatmul.mubr.f32.gmra.mrb[0].mxu0 %v3405
      %v3677 = vpop.f32.mrb[0].mxu0
      %v3678 = vadd.f32 %v3573, %v3677
      %v3679 = vpop.f32.mrb[0].mxu0
      %3680 = vmatprep.mubr.f32.mxu0 %v3410
      %3681 = vmatmul.mubr.f32.gmra.mrb[0].mxu0 %v3409
      %v3682 = vpop.f32.mrb[0].mxu0
      %v3683 = vadd.f32 %v3578, %v3682
      %v3684 = vpop.f32.mrb[0].mxu0
      %3685 = vmatprep.mubr.f32.mxu0 %v3414
      %3686 = vmatmul.mubr.f32.gmra.mrb[0].mxu0 %v3413
      %v3687 = vpop.f32.mrb[0].mxu0
      %v3688 = vadd.f32 %v3583, %v3687
      %v3689 = vpop.f32.mrb[0].mxu0
      %3690 = vmatprep.mubr.f32.mxu0 %v3418
      %3691 = vmatmul.mubr.f32.gmra.mrb[0].mxu0 %v3417
      %v3692 = vpop.f32.mrb[0].mxu0
      %v3693 = vadd.f32 %v3588, %v3692
      %v3694 = vpop.f32.mrb[0].mxu0
      %3695 = vmatprep.mubr.f32.mxu0 %v3422
      %3696 = vmatmul.mubr.f32.gmra.mrb[0].mxu0 %v3421
      %v3697 = vpop.f32.mrb[0].mxu0
      %v3698 = vadd.f32 %v3593, %v3697
      %v3699 = vpop.f32.mrb[0].mxu0
      %3700 = vmatprep.mubr.f32.mxu0 %v3426
      %3701 = vmatmul.mubr.f32.gmra.mrb[0].mxu0 %v3425
      %v3702 = vpop.f32.mrb[0].mxu0
      %v3703 = vadd.f32 %v3598, %v3702
      %v3704 = vpop.f32.mrb[0].mxu0
      %3705 = vmatprep.mubr.f32.mxu0 %v3430
      %3706 = vmatmul.mubr.f32.gmra.mrb[0].mxu0 %v3429
      %v3707 = vpop.f32.mrb[0].mxu0
      %v3708 = vadd.f32 %v3603, %v3707
      %v3709 = vpop.f32.mrb[0].mxu0
      %3710 = vmatprep.mubr.f32.mxu0 %v3434
      %3711 = vmatmul.mubr.f32.gmra.mrb[0].mxu0 %v3433
      %v3712 = vpop.f32.mrb[0].mxu0
      %v3713 = vadd.f32 %v3608, %v3712
      %v3714 = vpop.f32.mrb[0].mxu0
      %3715 = vdwg.mxu0
      %v3716 = vadd.f32 %v2837, %v3678
      %v3717 = vadd.f32 %v2838, %v3683
      %v3718 = vadd.f32 %v2839, %v3688
      %v3719 = vadd.f32 %v2840, %v3693
      %v3720 = vadd.f32 %v2841, %v3698
      %v3721 = vadd.f32 %v2842, %v3703
      %v3722 = vadd.f32 %v2843, %v3708
      %v3723 = vadd.f32 %v2844, %v3713
      %3724 = vst [vmem:[%s478] sm:$0xff] %v3716
      %3725 = vst [vmem:[%s478 + $0x8] sm:$0xff] %v3717
      %3726 = vst [vmem:[%s478 + $0x10] sm:$0xff] %v3718
      %3727 = vst [vmem:[%s478 + $0x18] sm:$0xff] %v3719
      %3728 = vst [vmem:[%s478 + $0x20] sm:$0xff] %v3720
      %3729 = vst [vmem:[%s478 + $0x28] sm:$0xff] %v3721
      %3730 = vst [vmem:[%s478 + $0x30] sm:$0xff] %v3722
      %3731 = vst [vmem:[%s478 + $0x38] sm:$0xff] %v3723
      %s3732 = smul.u32 8, %s29
      %p3733 = scmp.lt.s32.totalorder %s28, 1
      %s3734 = scalar_select %p3733, %s28, 1
      %p3735 = scmp.lt.s32.totalorder %s3732, 7
      %s3736 = scalar_select %p3735, %s3732, 7
      %s3737 = smul.addr %s3734, 8
      %s3738 = sadd.s32 %s3736, %s3737
      %s3739 = smul.addr %s3738, 8
      %s3740 = scalar_lea.vmem %s13, %s3739
      // Predicated region
      $region73: #{transformer_sr_forward.17} parent=71 // pred_check
        %p3741 = pneg %p336
      $region74: #{transformer_sr_forward.17} parent=71 // pred_check_branch
        %3743 = sbr.rel (%p3741) target = $region76
      $region75: #{transformer_sr_forward.17} parent=71 // pred_region
        %s3744 = smul.u32 8, %s29
      $region76: #{transformer_sr_forward.17} parent=71 // pred_fallthru
        _
    $region72: #{transformer_sr_forward.17} parent=5 // pred_fallthru
      _
    %p3745 = scmp.le.s32.totalorder 2, %s19
    // Predicated region
    $region77: #{transformer_sr_forward.17} parent=5 // pred_check
      %p3746 = pneg %p3745
    $region78: #{transformer_sr_forward.17} parent=5 // pred_check_branch
      %3748 = sbr.rel (%p3746) target = $region80
    $region79: #{transformer_sr_forward.17} parent=5 // pred_region
      %s3749 = ssub.s32 %s19, 2
      // Predicated region
      $region81: #{transformer_sr_forward.17} parent=79 // pred_check
        %p3750 = pneg %p342
      $region82: #{transformer_sr_forward.17} parent=79 // pred_check_branch
        %3752 = sbr.rel (%p3750) target = $region84
      $region83: #{transformer_sr_forward.17} parent=79 // pred_region
        %s3753 = smul.u32 8, %s31
        %p3754 = scmp.lt.s32.totalorder %s30, 1
        %s3755 = scalar_select %p3754, %s30, 1
        %p3756 = scmp.lt.s32.totalorder %s3753, 7
        %s3757 = scalar_select %p3756, %s3753, 7
        %s3758 = smul.addr %s3755, 8
        %s3759 = sadd.s32 %s3757, %s3758
        %s3760 = smul.addr %s3759, 8
        %s3761 = scalar_lea.vmem %s13, %s3760
      $region84: #{transformer_sr_forward.17} parent=79 // pred_fallthru
        _
    $region80: #{transformer_sr_forward.17} parent=5 // pred_fallthru
      _
  $region6: #{transformer_sr_forward.17} parent=0 // loop_footer
    %s23 = sadd.s32 1, %s19
  $region7: #{transformer_sr_forward.17} parent=0 // loop_footer_branch
    %18 = sbr.rel target = $region3
  $region8: #{transformer_sr_forward.17} parent=0 // loop_exit
    _

</llo_original>
